<compile_context>
chip_gen: v6e
topology: v6e:2x2x1
jax: 0.10.0
libtpu: 0.0.40
codegen_flags: <defaults>
</compile_context>

<pallas_src>
import functools

import jax
import jax.numpy as jnp
from jax.experimental import pallas as pl
from jax.experimental.pallas import tpu as pltpu


# ----------------------------------------------------------------------------
# VMEM budget (per generation)
# ----------------------------------------------------------------------------
def _vmem_limit_bytes():
    try:
        cap = int(pltpu.get_tpu_info().vmem_capacity_bytes)
        # ~75% of physical: 48 MiB on v7x (64 MiB), capped ~100 MiB on v5e/v6e (128 MiB).
        return min((cap * 3) // 4, 100 * 1024 * 1024)
    except Exception:
        return 48 * 1024 * 1024


_VMEM_LIMIT = _vmem_limit_bytes()


def _round_up(x, m):
    return ((x + m - 1) // m) * m


def _pick_tile_rows(h, wp, k, cout, halo, budget):
    """Largest divisor TH of h whose double-buffered pipeline blocks fit in `budget`."""
    best = 1
    for th in range(1, h + 1):
        if h % th:
            continue
        cost = (2 * (th + halo) * wp * k * 2      # double-buffered bf16 input block
                + 2 * th * wp * cout * 2          # double-buffered bf16 output block
                + th * wp * cout * 4)             # f32 accumulator / epilogue intermediate
        if cost <= budget:
            best = th
    return best


# ----------------------------------------------------------------------------
# Pallas kernel: fused 3x3 conv (dx folded into K, dy as sublane slices) + BN + ReLU
# ----------------------------------------------------------------------------
def _conv_bn_relu_kernel(x_ref, w_ref, s_ref, b_ref, o_ref, *, n_dy, row_stride):
    """One (batch element, row tile) grid step.

    x_ref: ((TH+halo)*Wp, K) bf16  -- flattened row slab (+halo rows); dx taps
                                      (and dy taps when n_dy==1) folded into K.
    w_ref: (n_dy, K, Cout)   bf16  -- one (K, Cout) matmul weight per vertical tap.
    s_ref: (1, Cout) f32           -- folded BN scale.
    b_ref: (1, Cout) f32           -- folded BN bias (includes conv bias).
    o_ref: (TH*Wp, Cout) bf16
    """
    m = o_ref.shape[0]
    # Whole-tile matmuls: M = TH*Wp, accumulated in f32 on the MXU.
    acc = jnp.dot(x_ref[pl.ds(0, m), :], w_ref[0], preferred_element_type=jnp.float32)
    for dy in range(1, n_dy):
        acc = acc + jnp.dot(x_ref[pl.ds(dy * row_stride, m), :], w_ref[dy],
                            preferred_element_type=jnp.float32)
    # Single fused f32 epilogue (folded BN affine + ReLU), single bf16 store.
    o_ref[...] = jnp.maximum(acc * s_ref[...] + b_ref[...], 0.0).astype(o_ref.dtype)


def _prep_conv_input(x, th, n_dy, wp):
    """(N, H, W, C) -> (N*nt, (TH+halo)*Wp, K) bf16.

    Zero-pads, folds the 3 horizontal taps (and the 3 vertical taps when n_dy==1)
    into the channel dim, pads W to a sublane multiple, and (only when TH < H)
    cuts overlapping row tiles with a halo.  At TH == H there is no duplicated
    HBM slab -- just a pad + concat + reshape fusion.
    """
    n, h, w, c = x.shape
    halo = 0 if n_dy == 1 else 2
    x = x.astype(jnp.bfloat16)
    xp = jnp.pad(x, ((0, 0), (1, 1), (1, 1), (0, 0)))                      # (N, H+2, W+2, C)
    xw = jnp.concatenate([xp[:, :, dx:dx + w, :] for dx in range(3)],
                         axis=-1)                                          # (N, H+2, W, 3C)
    if n_dy == 1:
        xw = jnp.concatenate([xw[:, dy:dy + h, :, :] for dy in range(3)],
                             axis=-1)                                      # (N, H, W, 9C)
    if wp != w:
        xw = jnp.pad(xw, ((0, 0), (0, 0), (0, wp - w), (0, 0)))            # pad W -> Wp
    k = xw.shape[-1]
    nt = h // th
    if nt == 1:
        xt = xw[:, None]                                                   # (N, 1, TH+halo, Wp, K)
    else:
        rows = jnp.arange(nt)[:, None] * th + jnp.arange(th + halo)[None, :]
        xt = xw[:, rows]                                                   # (N, nt, TH+halo, Wp, K)
    return xt.reshape(n * nt, (th + halo) * wp, k)


def conv3x3_bn_relu(x, w3, scale, bias):
    """Fused Conv2d(3x3, pad=1) + BatchNorm(eval) + ReLU.

    x:  (N, H, W, Cin) any float dtype -> (N, H, W, Cout) bf16.
    w3: (n_dy, K, Cout) bf16 with n_dy in {1, 3} (K = 9*Cin or 3*Cin).
    """
    n, h, w, _ = x.shape
    n_dy, k, cout = w3.shape
    halo = 0 if n_dy == 1 else 2
    wp = _round_up(w, 8)

    th = _pick_tile_rows(h, wp, k, cout, halo, budget=_VMEM_LIMIT // 2)
    nt = h // th
    m = th * wp

    xt = _prep_conv_input(x, th, n_dy, wp)                                 # (N*nt, (TH+halo)*Wp, K)

    kernel = functools.partial(_conv_bn_relu_kernel, n_dy=n_dy, row_stride=wp)
    cost = pl.CostEstimate(
        flops=int(2 * (n * nt) * m * k * cout * n_dy),
        transcendentals=0,
        bytes_accessed=int(xt.size * 2 + w3.size * 2
                           + (n * nt) * m * cout * 2 + 2 * cout * 4),
    )

    out = pl.pallas_call(
        kernel,
        out_shape=jax.ShapeDtypeStruct((n * nt, m, cout), jnp.bfloat16),
        grid=(n * nt,),
        in_specs=[
            # per-step activation slab: double-buffered by the pipeline
            pl.BlockSpec((None, (th + halo) * wp, k), lambda i: (i, 0, 0)),
            # weights / BN affine: constant index_map -> DMA'd once, VMEM-resident
            pl.BlockSpec((n_dy, k, cout), lambda i: (0, 0, 0)),
            pl.BlockSpec((1, cout), lambda i: (0, 0)),
            pl.BlockSpec((1, cout), lambda i: (0, 0)),
        ],
        out_specs=pl.BlockSpec((None, m, cout), lambda i: (i, 0, 0)),
        compiler_params=pltpu.CompilerParams(
            dimension_semantics=("parallel",),
            vmem_limit_bytes=_VMEM_LIMIT,
        ),
        cost_estimate=cost,
    )(xt, w3, scale, bias)

    # (N*nt, TH*Wp, Cout) -> (N, H, Wp, Cout) -> slice off the W padding.
    return out.reshape(n, h, wp, cout)[:, :, :w, :]


# ----------------------------------------------------------------------------
# Glue ops (cheap, plain JAX; fused by XLA around the conv calls)
# ----------------------------------------------------------------------------
def maxpool2x2(x):
    n, h, w, c = x.shape
    return x.reshape(n, h // 2, 2, w // 2, 2, c).max(axis=(2, 4))


def upsample2x_bilinear_align_corners(x):
    """nn.Upsample(scale_factor=2, mode='bilinear', align_corners=True)."""
    n, h, w, c = x.shape
    ho, wo = 2 * h, 2 * w
    ys = jnp.linspace(0.0, h - 1.0, ho)
    xs = jnp.linspace(0.0, w - 1.0, wo)
    y0 = jnp.clip(jnp.floor(ys).astype(jnp.int32), 0, h - 1)
    y1 = jnp.minimum(y0 + 1, h - 1)
    wy = ys - y0.astype(jnp.float32)
    x0 = jnp.clip(jnp.floor(xs).astype(jnp.int32), 0, w - 1)
    x1 = jnp.minimum(x0 + 1, w - 1)
    wx = xs - x0.astype(jnp.float32)
    r0 = x[:, y0, :, :].astype(jnp.float32)
    r1 = x[:, y1, :, :].astype(jnp.float32)
    rows = r0 * (1.0 - wy)[None, :, None, None] + r1 * wy[None, :, None, None]
    c0 = rows[:, :, x0, :]
    c1 = rows[:, :, x1, :]
    return c0 * (1.0 - wx)[None, None, :, None] + c1 * wx[None, None, :, None]


# ----------------------------------------------------------------------------
# Deterministic parameter init (synthetic; mirrors module shapes)
# ----------------------------------------------------------------------------
def _init_conv_bn(key, cin, cout, pad_cout_to=None, fold_dy=False, eps=1e-5):
    kw, kb = jax.random.split(key)
    # taps stored as (dy, dx, Cin, Cout)
    w = jax.random.normal(kw, (3, 3, cin, cout), jnp.float32) * jnp.sqrt(2.0 / (9 * cin))
    conv_b = jax.random.normal(kb, (cout,), jnp.float32) * 0.01
    gamma = jnp.ones((cout,), jnp.float32)
    beta = jnp.zeros((cout,), jnp.float32)
    run_mean = jnp.zeros((cout,), jnp.float32)
    run_var = jnp.ones((cout,), jnp.float32)
    scale = gamma / jnp.sqrt(run_var + eps)
    bias = (conv_b - run_mean) * scale + beta

    cout_p = cout if pad_cout_to is None else max(cout, pad_cout_to)
    if cout_p != cout:
        # Pad to lane-dense output channels: padded channels give ReLU(0*x + 0) = 0.
        w = jnp.pad(w, ((0, 0), (0, 0), (0, 0), (0, cout_p - cout)))
        scale = jnp.pad(scale, (0, cout_p - cout), constant_values=1.0)
        bias = jnp.pad(bias, (0, cout_p - cout))

    if fold_dy:
        # full 3x3 folded into K: (dy, dx, Cin, Cout) -> (1, 9*Cin, Cout)
        wk = w.reshape(1, 9 * cin, cout_p).astype(jnp.bfloat16)
    else:
        # dx folded into K: (dy, dx, Cin, Cout) -> (dy, 3*Cin, Cout)
        wk = w.reshape(3, 3 * cin, cout_p).astype(jnp.bfloat16)
    return (wk, scale.reshape(1, cout_p).astype(jnp.float32),
            bias.reshape(1, cout_p).astype(jnp.float32))


def init_drunet_params(key, in_channels, out_channels):
    # (cin, cout, pad_cout_to, fold_dy)
    arch = {
        # layer1's first conv folds the full 3x3 into K (Cin is tiny) -> deeper MXU K.
        "layer1_down": [(in_channels, 32, None, True), (32, 32, None, False)],
        "layer2_down": [(32, 64, None, False), (64, 64, None, False)],
        "latent": [(64, 128, None, False), (128, 128, None, False),
                   (128, 128, None, False), (128, 64, None, False)],
        "layer3_up": [(64, 64, None, False), (64, 32, None, False)],
        # final conv: pad Cout=2 -> 128 so the last-layer stores are lane-dense
        "layer4_up": [(32, 32, None, False), (32, 32, None, False),
                      (32, out_channels, 128, False)],
    }
    params = {}
    for name, convs in arch.items():
        layer = []
        for (cin, cout, pad_to, fold_dy) in convs:
            key, sub = jax.random.split(key)
            layer.append(_init_conv_bn(sub, cin, cout, pad_cout_to=pad_to, fold_dy=fold_dy))
        params[name] = layer
    return params


def _run_block(x, layer_params):
    for (wk, s, b) in layer_params:
        x = conv3x3_bn_relu(x, wk, s, b)
    return x


# ----------------------------------------------------------------------------
# Full forward pass
# ----------------------------------------------------------------------------
def drunet_var_forward(x_nchw, params, out_channels, variable="2m_temperature"):
    n, c, h, w = x_nchw.shape
    assert h % 4 == 0 and w % 4 == 0, "H and W must be divisible by 4 (two 2x2 maxpools)"

    x = jnp.transpose(x_nchw, (0, 2, 3, 1)).astype(jnp.float32)       # NCHW -> NHWC

    x1 = _run_block(x, params["layer1_down"])                          # (N, H,   W,   32)
    x2 = maxpool2x2(x1)
    x3 = _run_block(x2, params["layer2_down"])                         # (N, H/2, W/2, 64)
    x4 = maxpool2x2(x3)
    x5 = _run_block(x4, params["latent"])                              # (N, H/4, W/4, 64)
    x6 = upsample2x_bilinear_align_corners(x5)
    # residual adds are fused by XLA into the following conv's input-prep fusion
    x7 = _run_block(x6 + x3, params["layer3_up"])                      # (N, H/2, W/2, 32)
    x8 = upsample2x_bilinear_align_corners(x7)
    x9p = _run_block(x8 + x1, params["layer4_up"])                     # (N, H, W, 128) padded

    x9 = x9p[..., :out_channels].astype(jnp.float32)                   # drop channel padding
    x9_nchw = jnp.transpose(x9, (0, 3, 1, 2))                          # NHWC -> NCHW
    if variable in ("2m_temperature", "10m_wind_speed"):
        mu_var = x9_nchw[:, 0, :, :]
        std_var = jnp.exp(x9_nchw[:, 1, :, :])
    else:
        raise ValueError(f"unknown variable {variable!r}")
    # Normal(mu_var, std_var) is returned as its parameters.
    return x9_nchw, (mu_var, std_var)


if __name__ == "__main__":
    key = jax.random.PRNGKey(0)
    k_param, k_input = jax.random.split(key)

    batch, in_channels, out_channels = 2, 4, 2
    height, width = 16, 16                        # divisible by 4 (two 2x2 pools)

    params = init_drunet_params(k_param, in_channels, out_channels)
    x = jax.random.normal(k_input, (batch, in_channels, height, width), jnp.float32)

    fwd = jax.jit(functools.partial(drunet_var_forward,
                                    out_channels=out_channels,
                                    variable="2m_temperature"))
    x9, (mu, std) = fwd(x, params)
    jax.block_until_ready((x9, mu, std))

    assert x9.shape == (batch, out_channels, height, width)
    assert mu.shape == (batch, height, width)
    assert std.shape == (batch, height, width)
    assert bool(jnp.all(jnp.isfinite(x9)))
    assert bool(jnp.all(std > 0.0))

    print("KERNEL_OK")
</pallas_src>

<mosaic_0001>
module attributes {stable_mosaic.version = 11 : i64} {
  func.func @_conv_bn_relu_kernel(%arg0: i32, %arg1: memref<1x256x36xbf16, #tpu.memory_space<vmem>>, %arg2: memref<1x36x32xbf16, #tpu.memory_space<vmem>>, %arg3: memref<1x32xf32, #tpu.memory_space<vmem>>, %arg4: memref<1x32xf32, #tpu.memory_space<vmem>>, %arg5: memref<1x256x32xbf16, #tpu.memory_space<vmem>>) attributes {dimension_semantics = [#tpu.dimension_semantics<parallel>], iteration_bounds = array<i64: 2>, scalar_prefetch = 0 : i64, scratch_operands = 0 : i64, tpu.core_type = #tpu.core_type<tc>, window_params = [{transform_indices = @transform_0, window_bounds = array<i64: 1, 256, 36>}, {pipeline_mode = #tpu.pipeline_mode<synchronous>, transform_indices = @transform_1, window_bounds = array<i64: 1, 36, 32>}, {pipeline_mode = #tpu.pipeline_mode<synchronous>, transform_indices = @transform_2, window_bounds = array<i64: 1, 32>}, {pipeline_mode = #tpu.pipeline_mode<synchronous>, transform_indices = @transform_3, window_bounds = array<i64: 1, 32>}, {transform_indices = @transform_4, window_bounds = array<i64: 1, 256, 32>}]} {
    %c0 = arith.constant 0 : index
    %c0_0 = arith.constant 0 : index
    %c0_1 = arith.constant 0 : index
    %0 = vector.load %arg1[%c0, %c0_0, %c0_1] : memref<1x256x36xbf16, #tpu.memory_space<vmem>>, vector<1x256x36xbf16>
    %1 = vector.shape_cast %0 : vector<1x256x36xbf16> to vector<256x36xbf16>
    %c0_2 = arith.constant 0 : index
    %c0_3 = arith.constant 0 : index
    %c0_4 = arith.constant 0 : index
    %2 = vector.load %arg2[%c0_2, %c0_3, %c0_4] : memref<1x36x32xbf16, #tpu.memory_space<vmem>>, vector<1x36x32xbf16>
    %3 = vector.shape_cast %2 : vector<1x36x32xbf16> to vector<36x32xbf16>
    %cst = arith.constant dense<0.000000e+00> : vector<256x32xf32>
    %4 = tpu.matmul %1, %3, %cst {dimension_numbers = #tpu.dot_dimension_numbers<[1], [0], [0], [1], [0, 0, 1, 1], [], []>} : vector<256x36xbf16>, vector<36x32xbf16>, vector<256x32xf32> -> vector<256x32xf32>
    %c0_5 = arith.constant 0 : index
    %c0_6 = arith.constant 0 : index
    %5 = vector.load %arg3[%c0_5, %c0_6] : memref<1x32xf32, #tpu.memory_space<vmem>>, vector<1x32xf32>
    %6 = vector.broadcast %5 : vector<1x32xf32> to vector<256x32xf32>
    %7 = arith.mulf %4, %6 : vector<256x32xf32>
    %c0_7 = arith.constant 0 : index
    %c0_8 = arith.constant 0 : index
    %8 = vector.load %arg4[%c0_7, %c0_8] : memref<1x32xf32, #tpu.memory_space<vmem>>, vector<1x32xf32>
    %9 = vector.broadcast %8 : vector<1x32xf32> to vector<256x32xf32>
    %10 = arith.addf %7, %9 : vector<256x32xf32>
    %cst_9 = arith.constant 0.000000e+00 : f32
    %11 = vector.broadcast %cst_9 : f32 to vector<256x32xf32>
    %12 = arith.maximumf %10, %11 : vector<256x32xf32>
    %13 = arith.truncf %12 : vector<256x32xf32> to vector<256x32xbf16>
    %c0_10 = arith.constant 0 : index
    %c0_11 = arith.constant 0 : index
    %c0_12 = arith.constant 0 : index
    %14 = vector.load %arg5[%c0_10, %c0_11, %c0_12] : memref<1x256x32xbf16, #tpu.memory_space<vmem>>, vector<1x256x32xbf16>
    %15 = vector.shape_cast %14 : vector<1x256x32xbf16> to vector<256x32xbf16>
    %16 = vector.shape_cast %13 : vector<256x32xbf16> to vector<1x256x32xbf16>
    tpu.vector_store %arg5[%c0_10, %c0_11, %c0_12], %16 {strides = array<i32>} : memref<1x256x32xbf16, #tpu.memory_space<vmem>>, vector<1x256x32xbf16>,
    return
  }
  func.func @transform_0(%arg0: i32) -> (i32, i32, i32) {
    %c0_i32 = arith.constant 0 : i32
    %c0_i32_0 = arith.constant 0 : i32
    %c0_i32_1 = arith.constant 0 : i32
    return %arg0, %c0_i32, %c0_i32_0 : i32, i32, i32
  }
  func.func @transform_1(%arg0: i32) -> (i32, i32, i32) {
    %c0_i32 = arith.constant 0 : i32
    %c0_i32_0 = arith.constant 0 : i32
    %c0_i32_1 = arith.constant 0 : i32
    %c0_i32_2 = arith.constant 0 : i32
    return %c0_i32, %c0_i32_0, %c0_i32_1 : i32, i32, i32
  }
  func.func @transform_2(%arg0: i32) -> (i32, i32) {
    %c0_i32 = arith.constant 0 : i32
    %c0_i32_0 = arith.constant 0 : i32
    %c0_i32_1 = arith.constant 0 : i32
    return %c0_i32, %c0_i32_0 : i32, i32
  }
  func.func @transform_3(%arg0: i32) -> (i32, i32) {
    %c0_i32 = arith.constant 0 : i32
    %c0_i32_0 = arith.constant 0 : i32
    %c0_i32_1 = arith.constant 0 : i32
    return %c0_i32, %c0_i32_0 : i32, i32
  }
  func.func @transform_4(%arg0: i32) -> (i32, i32, i32) {
    %c0_i32 = arith.constant 0 : i32
    %c0_i32_0 = arith.constant 0 : i32
    %c0_i32_1 = arith.constant 0 : i32
    return %arg0, %c0_i32, %c0_i32_0 : i32, i32, i32
  }
}

module attributes {stable_mosaic.version = 11 : i64} {
  func.func @_conv_bn_relu_kernel(%arg0: i32, %arg1: memref<1x288x96xbf16, #tpu.memory_space<vmem>>, %arg2: memref<3x96x32xbf16, #tpu.memory_space<vmem>>, %arg3: memref<1x32xf32, #tpu.memory_space<vmem>>, %arg4: memref<1x32xf32, #tpu.memory_space<vmem>>, %arg5: memref<1x256x32xbf16, #tpu.memory_space<vmem>>) attributes {dimension_semantics = [#tpu.dimension_semantics<parallel>], iteration_bounds = array<i64: 2>, scalar_prefetch = 0 : i64, scratch_operands = 0 : i64, tpu.core_type = #tpu.core_type<tc>, window_params = [{transform_indices = @transform_0, window_bounds = array<i64: 1, 288, 96>}, {pipeline_mode = #tpu.pipeline_mode<synchronous>, transform_indices = @transform_1, window_bounds = array<i64: 3, 96, 32>}, {pipeline_mode = #tpu.pipeline_mode<synchronous>, transform_indices = @transform_2, window_bounds = array<i64: 1, 32>}, {pipeline_mode = #tpu.pipeline_mode<synchronous>, transform_indices = @transform_3, window_bounds = array<i64: 1, 32>}, {transform_indices = @transform_4, window_bounds = array<i64: 1, 256, 32>}]} {
    %c0 = arith.constant 0 : index
    %c0_0 = arith.constant 0 : index
    %c0_1 = arith.constant 0 : index
    %0 = vector.load %arg1[%c0, %c0_0, %c0_1] : memref<1x288x96xbf16, #tpu.memory_space<vmem>>, vector<1x256x96xbf16>
    %1 = vector.shape_cast %0 : vector<1x256x96xbf16> to vector<256x96xbf16>
    %c0_2 = arith.constant 0 : index
    %c0_3 = arith.constant 0 : index
    %c0_4 = arith.constant 0 : index
    %2 = vector.load %arg2[%c0_2, %c0_3, %c0_4] : memref<3x96x32xbf16, #tpu.memory_space<vmem>>, vector<1x96x32xbf16>
    %3 = vector.shape_cast %2 : vector<1x96x32xbf16> to vector<96x32xbf16>
    %cst = arith.constant dense<0.000000e+00> : vector<256x32xf32>
    %4 = tpu.matmul %1, %3, %cst {dimension_numbers = #tpu.dot_dimension_numbers<[1], [0], [0], [1], [0, 0, 1, 1], [], []>} : vector<256x96xbf16>, vector<96x32xbf16>, vector<256x32xf32> -> vector<256x32xf32>
    %c0_5 = arith.constant 0 : index
    %c16 = arith.constant 16 : index
    %c0_6 = arith.constant 0 : index
    %5 = vector.load %arg1[%c0_5, %c16, %c0_6] : memref<1x288x96xbf16, #tpu.memory_space<vmem>>, vector<1x256x96xbf16>
    %6 = vector.shape_cast %5 : vector<1x256x96xbf16> to vector<256x96xbf16>
    %c1 = arith.constant 1 : index
    %c0_7 = arith.constant 0 : index
    %c0_8 = arith.constant 0 : index
    %7 = vector.load %arg2[%c1, %c0_7, %c0_8] : memref<3x96x32xbf16, #tpu.memory_space<vmem>>, vector<1x96x32xbf16>
    %8 = vector.shape_cast %7 : vector<1x96x32xbf16> to vector<96x32xbf16>
    %cst_9 = arith.constant dense<0.000000e+00> : vector<256x32xf32>
    %9 = tpu.matmul %6, %8, %cst_9 {dimension_numbers = #tpu.dot_dimension_numbers<[1], [0], [0], [1], [0, 0, 1, 1], [], []>} : vector<256x96xbf16>, vector<96x32xbf16>, vector<256x32xf32> -> vector<256x32xf32>
    %10 = arith.addf %4, %9 : vector<256x32xf32>
    %c0_10 = arith.constant 0 : index
    %c32 = arith.constant 32 : index
    %c0_11 = arith.constant 0 : index
    %11 = vector.load %arg1[%c0_10, %c32, %c0_11] : memref<1x288x96xbf16, #tpu.memory_space<vmem>>, vector<1x256x96xbf16>
    %12 = vector.shape_cast %11 : vector<1x256x96xbf16> to vector<256x96xbf16>
    %c2 = arith.constant 2 : index
    %c0_12 = arith.constant 0 : index
    %c0_13 = arith.constant 0 : index
    %13 = vector.load %arg2[%c2, %c0_12, %c0_13] : memref<3x96x32xbf16, #tpu.memory_space<vmem>>, vector<1x96x32xbf16>
    %14 = vector.shape_cast %13 : vector<1x96x32xbf16> to vector<96x32xbf16>
    %cst_14 = arith.constant dense<0.000000e+00> : vector<256x32xf32>
    %15 = tpu.matmul %12, %14, %cst_14 {dimension_numbers = #tpu.dot_dimension_numbers<[1], [0], [0], [1], [0, 0, 1, 1], [], []>} : vector<256x96xbf16>, vector<96x32xbf16>, vector<256x32xf32> -> vector<256x32xf32>
    %16 = arith.addf %10, %15 : vector<256x32xf32>
    %c0_15 = arith.constant 0 : index
    %c0_16 = arith.constant 0 : index
    %17 = vector.load %arg3[%c0_15, %c0_16] : memref<1x32xf32, #tpu.memory_space<vmem>>, vector<1x32xf32>
    %18 = vector.broadcast %17 : vector<1x32xf32> to vector<256x32xf32>
    %19 = arith.mulf %16, %18 : vector<256x32xf32>
    %c0_17 = arith.constant 0 : index
    %c0_18 = arith.constant 0 : index
    %20 = vector.load %arg4[%c0_17, %c0_18] : memref<1x32xf32, #tpu.memory_space<vmem>>, vector<1x32xf32>
    %21 = vector.broadcast %20 : vector<1x32xf32> to vector<256x32xf32>
    %22 = arith.addf %19, %21 : vector<256x32xf32>
    %cst_19 = arith.constant 0.000000e+00 : f32
    %23 = vector.broadcast %cst_19 : f32 to vector<256x32xf32>
    %24 = arith.maximumf %22, %23 : vector<256x32xf32>
    %25 = arith.truncf %24 : vector<256x32xf32> to vector<256x32xbf16>
    %c0_20 = arith.constant 0 : index
    %c0_21 = arith.constant 0 : index
    %c0_22 = arith.constant 0 : index
    %26 = vector.load %arg5[%c0_20, %c0_21, %c0_22] : memref<1x256x32xbf16, #tpu.memory_space<vmem>>, vector<1x256x32xbf16>
    %27 = vector.shape_cast %26 : vector<1x256x32xbf16> to vector<256x32xbf16>
    %28 = vector.shape_cast %25 : vector<256x32xbf16> to vector<1x256x32xbf16>
    tpu.vector_store %arg5[%c0_20, %c0_21, %c0_22], %28 {strides = array<i32>} : memref<1x256x32xbf16, #tpu.memory_space<vmem>>, vector<1x256x32xbf16>,
    return
  }
  func.func @transform_0(%arg0: i32) -> (i32, i32, i32) {
    %c0_i32 = arith.constant 0 : i32
    %c0_i32_0 = arith.constant 0 : i32
    %c0_i32_1 = arith.constant 0 : i32
    return %arg0, %c0_i32, %c0_i32_0 : i32, i32, i32
  }
  func.func @transform_1(%arg0: i32) -> (i32, i32, i32) {
    %c0_i32 = arith.constant 0 : i32
    %c0_i32_0 = arith.constant 0 : i32
    %c0_i32_1 = arith.constant 0 : i32
    %c0_i32_2 = arith.constant 0 : i32
    return %c0_i32, %c0_i32_0, %c0_i32_1 : i32, i32, i32
  }
  func.func @transform_2(%arg0: i32) -> (i32, i32) {
    %c0_i32 = arith.constant 0 : i32
    %c0_i32_0 = arith.constant 0 : i32
    %c0_i32_1 = arith.constant 0 : i32
    return %c0_i32, %c0_i32_0 : i32, i32
  }
  func.func @transform_3(%arg0: i32) -> (i32, i32) {
    %c0_i32 = arith.constant 0 : i32
    %c0_i32_0 = arith.constant 0 : i32
    %c0_i32_1 = arith.constant 0 : i32
    return %c0_i32, %c0_i32_0 : i32, i32
  }
  func.func @transform_4(%arg0: i32) -> (i32, i32, i32) {
    %c0_i32 = arith.constant 0 : i32
    %c0_i32_0 = arith.constant 0 : i32
    %c0_i32_1 = arith.constant 0 : i32
    return %arg0, %c0_i32, %c0_i32_0 : i32, i32, i32
  }
}

module attributes {stable_mosaic.version = 11 : i64} {
  func.func @_conv_bn_relu_kernel(%arg0: i32, %arg1: memref<1x80x96xbf16, #tpu.memory_space<vmem>>, %arg2: memref<3x96x64xbf16, #tpu.memory_space<vmem>>, %arg3: memref<1x64xf32, #tpu.memory_space<vmem>>, %arg4: memref<1x64xf32, #tpu.memory_space<vmem>>, %arg5: memref<1x64x64xbf16, #tpu.memory_space<vmem>>) attributes {dimension_semantics = [#tpu.dimension_semantics<parallel>], iteration_bounds = array<i64: 2>, scalar_prefetch = 0 : i64, scratch_operands = 0 : i64, tpu.core_type = #tpu.core_type<tc>, window_params = [{transform_indices = @transform_0, window_bounds = array<i64: 1, 80, 96>}, {pipeline_mode = #tpu.pipeline_mode<synchronous>, transform_indices = @transform_1, window_bounds = array<i64: 3, 96, 64>}, {pipeline_mode = #tpu.pipeline_mode<synchronous>, transform_indices = @transform_2, window_bounds = array<i64: 1, 64>}, {pipeline_mode = #tpu.pipeline_mode<synchronous>, transform_indices = @transform_3, window_bounds = array<i64: 1, 64>}, {transform_indices = @transform_4, window_bounds = array<i64: 1, 64, 64>}]} {
    %c0 = arith.constant 0 : index
    %c0_0 = arith.constant 0 : index
    %c0_1 = arith.constant 0 : index
    %0 = vector.load %arg1[%c0, %c0_0, %c0_1] : memref<1x80x96xbf16, #tpu.memory_space<vmem>>, vector<1x64x96xbf16>
    %1 = vector.shape_cast %0 : vector<1x64x96xbf16> to vector<64x96xbf16>
    %c0_2 = arith.constant 0 : index
    %c0_3 = arith.constant 0 : index
    %c0_4 = arith.constant 0 : index
    %2 = vector.load %arg2[%c0_2, %c0_3, %c0_4] : memref<3x96x64xbf16, #tpu.memory_space<vmem>>, vector<1x96x64xbf16>
    %3 = vector.shape_cast %2 : vector<1x96x64xbf16> to vector<96x64xbf16>
    %cst = arith.constant dense<0.000000e+00> : vector<64x64xf32>
    %4 = tpu.matmul %1, %3, %cst {dimension_numbers = #tpu.dot_dimension_numbers<[1], [0], [0], [1], [0, 0, 1, 1], [], []>} : vector<64x96xbf16>, vector<96x64xbf16>, vector<64x64xf32> -> vector<64x64xf32>
    %c0_5 = arith.constant 0 : index
    %c8 = arith.constant 8 : index
    %c0_6 = arith.constant 0 : index
    %5 = vector.load %arg1[%c0_5, %c8, %c0_6] : memref<1x80x96xbf16, #tpu.memory_space<vmem>>, vector<1x64x96xbf16>
    %6 = vector.shape_cast %5 : vector<1x64x96xbf16> to vector<64x96xbf16>
    %c1 = arith.constant 1 : index
    %c0_7 = arith.constant 0 : index
    %c0_8 = arith.constant 0 : index
    %7 = vector.load %arg2[%c1, %c0_7, %c0_8] : memref<3x96x64xbf16, #tpu.memory_space<vmem>>, vector<1x96x64xbf16>
    %8 = vector.shape_cast %7 : vector<1x96x64xbf16> to vector<96x64xbf16>
    %cst_9 = arith.constant dense<0.000000e+00> : vector<64x64xf32>
    %9 = tpu.matmul %6, %8, %cst_9 {dimension_numbers = #tpu.dot_dimension_numbers<[1], [0], [0], [1], [0, 0, 1, 1], [], []>} : vector<64x96xbf16>, vector<96x64xbf16>, vector<64x64xf32> -> vector<64x64xf32>
    %10 = arith.addf %4, %9 : vector<64x64xf32>
    %c0_10 = arith.constant 0 : index
    %c16 = arith.constant 16 : index
    %c0_11 = arith.constant 0 : index
    %11 = vector.load %arg1[%c0_10, %c16, %c0_11] : memref<1x80x96xbf16, #tpu.memory_space<vmem>>, vector<1x64x96xbf16>
    %12 = vector.shape_cast %11 : vector<1x64x96xbf16> to vector<64x96xbf16>
    %c2 = arith.constant 2 : index
    %c0_12 = arith.constant 0 : index
    %c0_13 = arith.constant 0 : index
    %13 = vector.load %arg2[%c2, %c0_12, %c0_13] : memref<3x96x64xbf16, #tpu.memory_space<vmem>>, vector<1x96x64xbf16>
    %14 = vector.shape_cast %13 : vector<1x96x64xbf16> to vector<96x64xbf16>
    %cst_14 = arith.constant dense<0.000000e+00> : vector<64x64xf32>
    %15 = tpu.matmul %12, %14, %cst_14 {dimension_numbers = #tpu.dot_dimension_numbers<[1], [0], [0], [1], [0, 0, 1, 1], [], []>} : vector<64x96xbf16>, vector<96x64xbf16>, vector<64x64xf32> -> vector<64x64xf32>
    %16 = arith.addf %10, %15 : vector<64x64xf32>
    %c0_15 = arith.constant 0 : index
    %c0_16 = arith.constant 0 : index
    %17 = vector.load %arg3[%c0_15, %c0_16] : memref<1x64xf32, #tpu.memory_space<vmem>>, vector<1x64xf32>
    %18 = vector.broadcast %17 : vector<1x64xf32> to vector<64x64xf32>
    %19 = arith.mulf %16, %18 : vector<64x64xf32>
    %c0_17 = arith.constant 0 : index
    %c0_18 = arith.constant 0 : index
    %20 = vector.load %arg4[%c0_17, %c0_18] : memref<1x64xf32, #tpu.memory_space<vmem>>, vector<1x64xf32>
    %21 = vector.broadcast %20 : vector<1x64xf32> to vector<64x64xf32>
    %22 = arith.addf %19, %21 : vector<64x64xf32>
    %cst_19 = arith.constant 0.000000e+00 : f32
    %23 = vector.broadcast %cst_19 : f32 to vector<64x64xf32>
    %24 = arith.maximumf %22, %23 : vector<64x64xf32>
    %25 = arith.truncf %24 : vector<64x64xf32> to vector<64x64xbf16>
    %c0_20 = arith.constant 0 : index
    %c0_21 = arith.constant 0 : index
    %c0_22 = arith.constant 0 : index
    %26 = vector.load %arg5[%c0_20, %c0_21, %c0_22] : memref<1x64x64xbf16, #tpu.memory_space<vmem>>, vector<1x64x64xbf16>
    %27 = vector.shape_cast %26 : vector<1x64x64xbf16> to vector<64x64xbf16>
    %28 = vector.shape_cast %25 : vector<64x64xbf16> to vector<1x64x64xbf16>
    tpu.vector_store %arg5[%c0_20, %c0_21, %c0_22], %28 {strides = array<i32>} : memref<1x64x64xbf16, #tpu.memory_space<vmem>>, vector<1x64x64xbf16>,
    return
  }
  func.func @transform_0(%arg0: i32) -> (i32, i32, i32) {
    %c0_i32 = arith.constant 0 : i32
    %c0_i32_0 = arith.constant 0 : i32
    %c0_i32_1 = arith.constant 0 : i32
    return %arg0, %c0_i32, %c0_i32_0 : i32, i32, i32
  }
  func.func @transform_1(%arg0: i32) -> (i32, i32, i32) {
    %c0_i32 = arith.constant 0 : i32
    %c0_i32_0 = arith.constant 0 : i32
    %c0_i32_1 = arith.constant 0 : i32
    %c0_i32_2 = arith.constant 0 : i32
    return %c0_i32, %c0_i32_0, %c0_i32_1 : i32, i32, i32
  }
  func.func @transform_2(%arg0: i32) -> (i32, i32) {
    %c0_i32 = arith.constant 0 : i32
    %c0_i32_0 = arith.constant 0 : i32
    %c0_i32_1 = arith.constant 0 : i32
    return %c0_i32, %c0_i32_0 : i32, i32
  }
  func.func @transform_3(%arg0: i32) -> (i32, i32) {
    %c0_i32 = arith.constant 0 : i32
    %c0_i32_0 = arith.constant 0 : i32
    %c0_i32_1 = arith.constant 0 : i32
    return %c0_i32, %c0_i32_0 : i32, i32
  }
  func.func @transform_4(%arg0: i32) -> (i32, i32, i32) {
    %c0_i32 = arith.constant 0 : i32
    %c0_i32_0 = arith.constant 0 : i32
    %c0_i32_1 = arith.constant 0 : i32
    return %arg0, %c0_i32, %c0_i32_0 : i32, i32, i32
  }
}

module attributes {stable_mosaic.version = 11 : i64} {
  func.func @_conv_bn_relu_kernel(%arg0: i32, %arg1: memref<1x80x192xbf16, #tpu.memory_space<vmem>>, %arg2: memref<3x192x64xbf16, #tpu.memory_space<vmem>>, %arg3: memref<1x64xf32, #tpu.memory_space<vmem>>, %arg4: memref<1x64xf32, #tpu.memory_space<vmem>>, %arg5: memref<1x64x64xbf16, #tpu.memory_space<vmem>>) attributes {dimension_semantics = [#tpu.dimension_semantics<parallel>], iteration_bounds = array<i64: 2>, scalar_prefetch = 0 : i64, scratch_operands = 0 : i64, tpu.core_type = #tpu.core_type<tc>, window_params = [{transform_indices = @transform_0, window_bounds = array<i64: 1, 80, 192>}, {pipeline_mode = #tpu.pipeline_mode<synchronous>, transform_indices = @transform_1, window_bounds = array<i64: 3, 192, 64>}, {pipeline_mode = #tpu.pipeline_mode<synchronous>, transform_indices = @transform_2, window_bounds = array<i64: 1, 64>}, {pipeline_mode = #tpu.pipeline_mode<synchronous>, transform_indices = @transform_3, window_bounds = array<i64: 1, 64>}, {transform_indices = @transform_4, window_bounds = array<i64: 1, 64, 64>}]} {
    %c0 = arith.constant 0 : index
    %c0_0 = arith.constant 0 : index
    %c0_1 = arith.constant 0 : index
    %0 = vector.load %arg1[%c0, %c0_0, %c0_1] : memref<1x80x192xbf16, #tpu.memory_space<vmem>>, vector<1x64x192xbf16>
    %1 = vector.shape_cast %0 : vector<1x64x192xbf16> to vector<64x192xbf16>
    %c0_2 = arith.constant 0 : index
    %c0_3 = arith.constant 0 : index
    %c0_4 = arith.constant 0 : index
    %2 = vector.load %arg2[%c0_2, %c0_3, %c0_4] : memref<3x192x64xbf16, #tpu.memory_space<vmem>>, vector<1x192x64xbf16>
    %3 = vector.shape_cast %2 : vector<1x192x64xbf16> to vector<192x64xbf16>
    %cst = arith.constant dense<0.000000e+00> : vector<64x64xf32>
    %4 = tpu.matmul %1, %3, %cst {dimension_numbers = #tpu.dot_dimension_numbers<[1], [0], [0], [1], [0, 0, 1, 1], [], []>} : vector<64x192xbf16>, vector<192x64xbf16>, vector<64x64xf32> -> vector<64x64xf32>
    %c0_5 = arith.constant 0 : index
    %c8 = arith.constant 8 : index
    %c0_6 = arith.constant 0 : index
    %5 = vector.load %arg1[%c0_5, %c8, %c0_6] : memref<1x80x192xbf16, #tpu.memory_space<vmem>>, vector<1x64x192xbf16>
    %6 = vector.shape_cast %5 : vector<1x64x192xbf16> to vector<64x192xbf16>
    %c1 = arith.constant 1 : index
    %c0_7 = arith.constant 0 : index
    %c0_8 = arith.constant 0 : index
    %7 = vector.load %arg2[%c1, %c0_7, %c0_8] : memref<3x192x64xbf16, #tpu.memory_space<vmem>>, vector<1x192x64xbf16>
    %8 = vector.shape_cast %7 : vector<1x192x64xbf16> to vector<192x64xbf16>
    %cst_9 = arith.constant dense<0.000000e+00> : vector<64x64xf32>
    %9 = tpu.matmul %6, %8, %cst_9 {dimension_numbers = #tpu.dot_dimension_numbers<[1], [0], [0], [1], [0, 0, 1, 1], [], []>} : vector<64x192xbf16>, vector<192x64xbf16>, vector<64x64xf32> -> vector<64x64xf32>
    %10 = arith.addf %4, %9 : vector<64x64xf32>
    %c0_10 = arith.constant 0 : index
    %c16 = arith.constant 16 : index
    %c0_11 = arith.constant 0 : index
    %11 = vector.load %arg1[%c0_10, %c16, %c0_11] : memref<1x80x192xbf16, #tpu.memory_space<vmem>>, vector<1x64x192xbf16>
    %12 = vector.shape_cast %11 : vector<1x64x192xbf16> to vector<64x192xbf16>
    %c2 = arith.constant 2 : index
    %c0_12 = arith.constant 0 : index
    %c0_13 = arith.constant 0 : index
    %13 = vector.load %arg2[%c2, %c0_12, %c0_13] : memref<3x192x64xbf16, #tpu.memory_space<vmem>>, vector<1x192x64xbf16>
    %14 = vector.shape_cast %13 : vector<1x192x64xbf16> to vector<192x64xbf16>
    %cst_14 = arith.constant dense<0.000000e+00> : vector<64x64xf32>
    %15 = tpu.matmul %12, %14, %cst_14 {dimension_numbers = #tpu.dot_dimension_numbers<[1], [0], [0], [1], [0, 0, 1, 1], [], []>} : vector<64x192xbf16>, vector<192x64xbf16>, vector<64x64xf32> -> vector<64x64xf32>
    %16 = arith.addf %10, %15 : vector<64x64xf32>
    %c0_15 = arith.constant 0 : index
    %c0_16 = arith.constant 0 : index
    %17 = vector.load %arg3[%c0_15, %c0_16] : memref<1x64xf32, #tpu.memory_space<vmem>>, vector<1x64xf32>
    %18 = vector.broadcast %17 : vector<1x64xf32> to vector<64x64xf32>
    %19 = arith.mulf %16, %18 : vector<64x64xf32>
    %c0_17 = arith.constant 0 : index
    %c0_18 = arith.constant 0 : index
    %20 = vector.load %arg4[%c0_17, %c0_18] : memref<1x64xf32, #tpu.memory_space<vmem>>, vector<1x64xf32>
    %21 = vector.broadcast %20 : vector<1x64xf32> to vector<64x64xf32>
    %22 = arith.addf %19, %21 : vector<64x64xf32>
    %cst_19 = arith.constant 0.000000e+00 : f32
    %23 = vector.broadcast %cst_19 : f32 to vector<64x64xf32>
    %24 = arith.maximumf %22, %23 : vector<64x64xf32>
    %25 = arith.truncf %24 : vector<64x64xf32> to vector<64x64xbf16>
    %c0_20 = arith.constant 0 : index
    %c0_21 = arith.constant 0 : index
    %c0_22 = arith.constant 0 : index
    %26 = vector.load %arg5[%c0_20, %c0_21, %c0_22] : memref<1x64x64xbf16, #tpu.memory_space<vmem>>, vector<1x64x64xbf16>
    %27 = vector.shape_cast %26 : vector<1x64x64xbf16> to vector<64x64xbf16>
    %28 = vector.shape_cast %25 : vector<64x64xbf16> to vector<1x64x64xbf16>
    tpu.vector_store %arg5[%c0_20, %c0_21, %c0_22], %28 {strides = array<i32>} : memref<1x64x64xbf16, #tpu.memory_space<vmem>>, vector<1x64x64xbf16>,
    return
  }
  func.func @transform_0(%arg0: i32) -> (i32, i32, i32) {
    %c0_i32 = arith.constant 0 : i32
    %c0_i32_0 = arith.constant 0 : i32
    %c0_i32_1 = arith.constant 0 : i32
    return %arg0, %c0_i32, %c0_i32_0 : i32, i32, i32
  }
  func.func @transform_1(%arg0: i32) -> (i32, i32, i32) {
    %c0_i32 = arith.constant 0 : i32
    %c0_i32_0 = arith.constant 0 : i32
    %c0_i32_1 = arith.constant 0 : i32
    %c0_i32_2 = arith.constant 0 : i32
    return %c0_i32, %c0_i32_0, %c0_i32_1 : i32, i32, i32
  }
  func.func @transform_2(%arg0: i32) -> (i32, i32) {
    %c0_i32 = arith.constant 0 : i32
    %c0_i32_0 = arith.constant 0 : i32
    %c0_i32_1 = arith.constant 0 : i32
    return %c0_i32, %c0_i32_0 : i32, i32
  }
  func.func @transform_3(%arg0: i32) -> (i32, i32) {
    %c0_i32 = arith.constant 0 : i32
    %c0_i32_0 = arith.constant 0 : i32
    %c0_i32_1 = arith.constant 0 : i32
    return %c0_i32, %c0_i32_0 : i32, i32
  }
  func.func @transform_4(%arg0: i32) -> (i32, i32, i32) {
    %c0_i32 = arith.constant 0 : i32
    %c0_i32_0 = arith.constant 0 : i32
    %c0_i32_1 = arith.constant 0 : i32
    return %arg0, %c0_i32, %c0_i32_0 : i32, i32, i32
  }
}

module attributes {stable_mosaic.version = 11 : i64} {
  func.func @_conv_bn_relu_kernel(%arg0: i32, %arg1: memref<1x48x192xbf16, #tpu.memory_space<vmem>>, %arg2: memref<3x192x128xbf16, #tpu.memory_space<vmem>>, %arg3: memref<1x128xf32, #tpu.memory_space<vmem>>, %arg4: memref<1x128xf32, #tpu.memory_space<vmem>>, %arg5: memref<1x32x128xbf16, #tpu.memory_space<vmem>>) attributes {dimension_semantics = [#tpu.dimension_semantics<parallel>], iteration_bounds = array<i64: 2>, scalar_prefetch = 0 : i64, scratch_operands = 0 : i64, tpu.core_type = #tpu.core_type<tc>, window_params = [{transform_indices = @transform_0, window_bounds = array<i64: 1, 48, 192>}, {pipeline_mode = #tpu.pipeline_mode<synchronous>, transform_indices = @transform_1, window_bounds = array<i64: 3, 192, 128>}, {pipeline_mode = #tpu.pipeline_mode<synchronous>, transform_indices = @transform_2, window_bounds = array<i64: 1, 128>}, {pipeline_mode = #tpu.pipeline_mode<synchronous>, transform_indices = @transform_3, window_bounds = array<i64: 1, 128>}, {transform_indices = @transform_4, window_bounds = array<i64: 1, 32, 128>}]} {
    %c0 = arith.constant 0 : index
    %c0_0 = arith.constant 0 : index
    %c0_1 = arith.constant 0 : index
    %0 = vector.load %arg1[%c0, %c0_0, %c0_1] : memref<1x48x192xbf16, #tpu.memory_space<vmem>>, vector<1x32x192xbf16>
    %1 = vector.shape_cast %0 : vector<1x32x192xbf16> to vector<32x192xbf16>
    %c0_2 = arith.constant 0 : index
    %c0_3 = arith.constant 0 : index
    %c0_4 = arith.constant 0 : index
    %2 = vector.load %arg2[%c0_2, %c0_3, %c0_4] : memref<3x192x128xbf16, #tpu.memory_space<vmem>>, vector<1x192x128xbf16>
    %3 = vector.shape_cast %2 : vector<1x192x128xbf16> to vector<192x128xbf16>
    %cst = arith.constant dense<0.000000e+00> : vector<32x128xf32>
    %4 = tpu.matmul %1, %3, %cst {dimension_numbers = #tpu.dot_dimension_numbers<[1], [0], [0], [1], [0, 0, 1, 1], [], []>} : vector<32x192xbf16>, vector<192x128xbf16>, vector<32x128xf32> -> vector<32x128xf32>
    %c0_5 = arith.constant 0 : index
    %c8 = arith.constant 8 : index
    %c0_6 = arith.constant 0 : index
    %5 = vector.load %arg1[%c0_5, %c8, %c0_6] : memref<1x48x192xbf16, #tpu.memory_space<vmem>>, vector<1x32x192xbf16>
    %6 = vector.shape_cast %5 : vector<1x32x192xbf16> to vector<32x192xbf16>
    %c1 = arith.constant 1 : index
    %c0_7 = arith.constant 0 : index
    %c0_8 = arith.constant 0 : index
    %7 = vector.load %arg2[%c1, %c0_7, %c0_8] : memref<3x192x128xbf16, #tpu.memory_space<vmem>>, vector<1x192x128xbf16>
    %8 = vector.shape_cast %7 : vector<1x192x128xbf16> to vector<192x128xbf16>
    %cst_9 = arith.constant dense<0.000000e+00> : vector<32x128xf32>
    %9 = tpu.matmul %6, %8, %cst_9 {dimension_numbers = #tpu.dot_dimension_numbers<[1], [0], [0], [1], [0, 0, 1, 1], [], []>} : vector<32x192xbf16>, vector<192x128xbf16>, vector<32x128xf32> -> vector<32x128xf32>
    %10 = arith.addf %4, %9 : vector<32x128xf32>
    %c0_10 = arith.constant 0 : index
    %c16 = arith.constant 16 : index
    %c0_11 = arith.constant 0 : index
    %11 = vector.load %arg1[%c0_10, %c16, %c0_11] : memref<1x48x192xbf16, #tpu.memory_space<vmem>>, vector<1x32x192xbf16>
    %12 = vector.shape_cast %11 : vector<1x32x192xbf16> to vector<32x192xbf16>
    %c2 = arith.constant 2 : index
    %c0_12 = arith.constant 0 : index
    %c0_13 = arith.constant 0 : index
    %13 = vector.load %arg2[%c2, %c0_12, %c0_13] : memref<3x192x128xbf16, #tpu.memory_space<vmem>>, vector<1x192x128xbf16>
    %14 = vector.shape_cast %13 : vector<1x192x128xbf16> to vector<192x128xbf16>
    %cst_14 = arith.constant dense<0.000000e+00> : vector<32x128xf32>
    %15 = tpu.matmul %12, %14, %cst_14 {dimension_numbers = #tpu.dot_dimension_numbers<[1], [0], [0], [1], [0, 0, 1, 1], [], []>} : vector<32x192xbf16>, vector<192x128xbf16>, vector<32x128xf32> -> vector<32x128xf32>
    %16 = arith.addf %10, %15 : vector<32x128xf32>
    %c0_15 = arith.constant 0 : index
    %c0_16 = arith.constant 0 : index
    %17 = vector.load %arg3[%c0_15, %c0_16] : memref<1x128xf32, #tpu.memory_space<vmem>>, vector<1x128xf32>
    %18 = vector.broadcast %17 : vector<1x128xf32> to vector<32x128xf32>
    %19 = arith.mulf %16, %18 : vector<32x128xf32>
    %c0_17 = arith.constant 0 : index
    %c0_18 = arith.constant 0 : index
    %20 = vector.load %arg4[%c0_17, %c0_18] : memref<1x128xf32, #tpu.memory_space<vmem>>, vector<1x128xf32>
    %21 = vector.broadcast %20 : vector<1x128xf32> to vector<32x128xf32>
    %22 = arith.addf %19, %21 : vector<32x128xf32>
    %cst_19 = arith.constant 0.000000e+00 : f32
    %23 = vector.broadcast %cst_19 : f32 to vector<32x128xf32>
    %24 = arith.maximumf %22, %23 : vector<32x128xf32>
    %25 = arith.truncf %24 : vector<32x128xf32> to vector<32x128xbf16>
    %c0_20 = arith.constant 0 : index
    %c0_21 = arith.constant 0 : index
    %c0_22 = arith.constant 0 : index
    %26 = vector.load %arg5[%c0_20, %c0_21, %c0_22] : memref<1x32x128xbf16, #tpu.memory_space<vmem>>, vector<1x32x128xbf16>
    %27 = vector.shape_cast %26 : vector<1x32x128xbf16> to vector<32x128xbf16>
    %28 = vector.shape_cast %25 : vector<32x128xbf16> to vector<1x32x128xbf16>
    tpu.vector_store %arg5[%c0_20, %c0_21, %c0_22], %28 {strides = array<i32>} : memref<1x32x128xbf16, #tpu.memory_space<vmem>>, vector<1x32x128xbf16>,
    return
  }
  func.func @transform_0(%arg0: i32) -> (i32, i32, i32) {
    %c0_i32 = arith.constant 0 : i32
    %c0_i32_0 = arith.constant 0 : i32
    %c0_i32_1 = arith.constant 0 : i32
    return %arg0, %c0_i32, %c0_i32_0 : i32, i32, i32
  }
  func.func @transform_1(%arg0: i32) -> (i32, i32, i32) {
    %c0_i32 = arith.constant 0 : i32
    %c0_i32_0 = arith.constant 0 : i32
    %c0_i32_1 = arith.constant 0 : i32
    %c0_i32_2 = arith.constant 0 : i32
    return %c0_i32, %c0_i32_0, %c0_i32_1 : i32, i32, i32
  }
  func.func @transform_2(%arg0: i32) -> (i32, i32) {
    %c0_i32 = arith.constant 0 : i32
    %c0_i32_0 = arith.constant 0 : i32
    %c0_i32_1 = arith.constant 0 : i32
    return %c0_i32, %c0_i32_0 : i32, i32
  }
  func.func @transform_3(%arg0: i32) -> (i32, i32) {
    %c0_i32 = arith.constant 0 : i32
    %c0_i32_0 = arith.constant 0 : i32
    %c0_i32_1 = arith.constant 0 : i32
    return %c0_i32, %c0_i32_0 : i32, i32
  }
  func.func @transform_4(%arg0: i32) -> (i32, i32, i32) {
    %c0_i32 = arith.constant 0 : i32
    %c0_i32_0 = arith.constant 0 : i32
    %c0_i32_1 = arith.constant 0 : i32
    return %arg0, %c0_i32, %c0_i32_0 : i32, i32, i32
  }
}

module attributes {stable_mosaic.version = 11 : i64} {
  func.func @_conv_bn_relu_kernel(%arg0: i32, %arg1: memref<1x48x384xbf16, #tpu.memory_space<vmem>>, %arg2: memref<3x384x128xbf16, #tpu.memory_space<vmem>>, %arg3: memref<1x128xf32, #tpu.memory_space<vmem>>, %arg4: memref<1x128xf32, #tpu.memory_space<vmem>>, %arg5: memref<1x32x128xbf16, #tpu.memory_space<vmem>>) attributes {dimension_semantics = [#tpu.dimension_semantics<parallel>], iteration_bounds = array<i64: 2>, scalar_prefetch = 0 : i64, scratch_operands = 0 : i64, tpu.core_type = #tpu.core_type<tc>, window_params = [{transform_indices = @transform_0, window_bounds = array<i64: 1, 48, 384>}, {pipeline_mode = #tpu.pipeline_mode<synchronous>, transform_indices = @transform_1, window_bounds = array<i64: 3, 384, 128>}, {pipeline_mode = #tpu.pipeline_mode<synchronous>, transform_indices = @transform_2, window_bounds = array<i64: 1, 128>}, {pipeline_mode = #tpu.pipeline_mode<synchronous>, transform_indices = @transform_3, window_bounds = array<i64: 1, 128>}, {transform_indices = @transform_4, window_bounds = array<i64: 1, 32, 128>}]} {
    %c0 = arith.constant 0 : index
    %c0_0 = arith.constant 0 : index
    %c0_1 = arith.constant 0 : index
    %0 = vector.load %arg1[%c0, %c0_0, %c0_1] : memref<1x48x384xbf16, #tpu.memory_space<vmem>>, vector<1x32x384xbf16>
    %1 = vector.shape_cast %0 : vector<1x32x384xbf16> to vector<32x384xbf16>
    %c0_2 = arith.constant 0 : index
    %c0_3 = arith.constant 0 : index
    %c0_4 = arith.constant 0 : index
    %2 = vector.load %arg2[%c0_2, %c0_3, %c0_4] : memref<3x384x128xbf16, #tpu.memory_space<vmem>>, vector<1x384x128xbf16>
    %3 = vector.shape_cast %2 : vector<1x384x128xbf16> to vector<384x128xbf16>
    %cst = arith.constant dense<0.000000e+00> : vector<32x128xf32>
    %4 = tpu.matmul %1, %3, %cst {dimension_numbers = #tpu.dot_dimension_numbers<[1], [0], [0], [1], [0, 0, 1, 1], [], []>} : vector<32x384xbf16>, vector<384x128xbf16>, vector<32x128xf32> -> vector<32x128xf32>
    %c0_5 = arith.constant 0 : index
    %c8 = arith.constant 8 : index
    %c0_6 = arith.constant 0 : index
    %5 = vector.load %arg1[%c0_5, %c8, %c0_6] : memref<1x48x384xbf16, #tpu.memory_space<vmem>>, vector<1x32x384xbf16>
    %6 = vector.shape_cast %5 : vector<1x32x384xbf16> to vector<32x384xbf16>
    %c1 = arith.constant 1 : index
    %c0_7 = arith.constant 0 : index
    %c0_8 = arith.constant 0 : index
    %7 = vector.load %arg2[%c1, %c0_7, %c0_8] : memref<3x384x128xbf16, #tpu.memory_space<vmem>>, vector<1x384x128xbf16>
    %8 = vector.shape_cast %7 : vector<1x384x128xbf16> to vector<384x128xbf16>
    %cst_9 = arith.constant dense<0.000000e+00> : vector<32x128xf32>
    %9 = tpu.matmul %6, %8, %cst_9 {dimension_numbers = #tpu.dot_dimension_numbers<[1], [0], [0], [1], [0, 0, 1, 1], [], []>} : vector<32x384xbf16>, vector<384x128xbf16>, vector<32x128xf32> -> vector<32x128xf32>
    %10 = arith.addf %4, %9 : vector<32x128xf32>
    %c0_10 = arith.constant 0 : index
    %c16 = arith.constant 16 : index
    %c0_11 = arith.constant 0 : index
    %11 = vector.load %arg1[%c0_10, %c16, %c0_11] : memref<1x48x384xbf16, #tpu.memory_space<vmem>>, vector<1x32x384xbf16>
    %12 = vector.shape_cast %11 : vector<1x32x384xbf16> to vector<32x384xbf16>
    %c2 = arith.constant 2 : index
    %c0_12 = arith.constant 0 : index
    %c0_13 = arith.constant 0 : index
    %13 = vector.load %arg2[%c2, %c0_12, %c0_13] : memref<3x384x128xbf16, #tpu.memory_space<vmem>>, vector<1x384x128xbf16>
    %14 = vector.shape_cast %13 : vector<1x384x128xbf16> to vector<384x128xbf16>
    %cst_14 = arith.constant dense<0.000000e+00> : vector<32x128xf32>
    %15 = tpu.matmul %12, %14, %cst_14 {dimension_numbers = #tpu.dot_dimension_numbers<[1], [0], [0], [1], [0, 0, 1, 1], [], []>} : vector<32x384xbf16>, vector<384x128xbf16>, vector<32x128xf32> -> vector<32x128xf32>
    %16 = arith.addf %10, %15 : vector<32x128xf32>
    %c0_15 = arith.constant 0 : index
    %c0_16 = arith.constant 0 : index
    %17 = vector.load %arg3[%c0_15, %c0_16] : memref<1x128xf32, #tpu.memory_space<vmem>>, vector<1x128xf32>
    %18 = vector.broadcast %17 : vector<1x128xf32> to vector<32x128xf32>
    %19 = arith.mulf %16, %18 : vector<32x128xf32>
    %c0_17 = arith.constant 0 : index
    %c0_18 = arith.constant 0 : index
    %20 = vector.load %arg4[%c0_17, %c0_18] : memref<1x128xf32, #tpu.memory_space<vmem>>, vector<1x128xf32>
    %21 = vector.broadcast %20 : vector<1x128xf32> to vector<32x128xf32>
    %22 = arith.addf %19, %21 : vector<32x128xf32>
    %cst_19 = arith.constant 0.000000e+00 : f32
    %23 = vector.broadcast %cst_19 : f32 to vector<32x128xf32>
    %24 = arith.maximumf %22, %23 : vector<32x128xf32>
    %25 = arith.truncf %24 : vector<32x128xf32> to vector<32x128xbf16>
    %c0_20 = arith.constant 0 : index
    %c0_21 = arith.constant 0 : index
    %c0_22 = arith.constant 0 : index
    %26 = vector.load %arg5[%c0_20, %c0_21, %c0_22] : memref<1x32x128xbf16, #tpu.memory_space<vmem>>, vector<1x32x128xbf16>
    %27 = vector.shape_cast %26 : vector<1x32x128xbf16> to vector<32x128xbf16>
    %28 = vector.shape_cast %25 : vector<32x128xbf16> to vector<1x32x128xbf16>
    tpu.vector_store %arg5[%c0_20, %c0_21, %c0_22], %28 {strides = array<i32>} : memref<1x32x128xbf16, #tpu.memory_space<vmem>>, vector<1x32x128xbf16>,
    return
  }
  func.func @transform_0(%arg0: i32) -> (i32, i32, i32) {
    %c0_i32 = arith.constant 0 : i32
    %c0_i32_0 = arith.constant 0 : i32
    %c0_i32_1 = arith.constant 0 : i32
    return %arg0, %c0_i32, %c0_i32_0 : i32, i32, i32
  }
  func.func @transform_1(%arg0: i32) -> (i32, i32, i32) {
    %c0_i32 = arith.constant 0 : i32
    %c0_i32_0 = arith.constant 0 : i32
    %c0_i32_1 = arith.constant 0 : i32
    %c0_i32_2 = arith.constant 0 : i32
    return %c0_i32, %c0_i32_0, %c0_i32_1 : i32, i32, i32
  }
  func.func @transform_2(%arg0: i32) -> (i32, i32) {
    %c0_i32 = arith.constant 0 : i32
    %c0_i32_0 = arith.constant 0 : i32
    %c0_i32_1 = arith.constant 0 : i32
    return %c0_i32, %c0_i32_0 : i32, i32
  }
  func.func @transform_3(%arg0: i32) -> (i32, i32) {
    %c0_i32 = arith.constant 0 : i32
    %c0_i32_0 = arith.constant 0 : i32
    %c0_i32_1 = arith.constant 0 : i32
    return %c0_i32, %c0_i32_0 : i32, i32
  }
  func.func @transform_4(%arg0: i32) -> (i32, i32, i32) {
    %c0_i32 = arith.constant 0 : i32
    %c0_i32_0 = arith.constant 0 : i32
    %c0_i32_1 = arith.constant 0 : i32
    return %arg0, %c0_i32, %c0_i32_0 : i32, i32, i32
  }
}

module attributes {stable_mosaic.version = 11 : i64} {
  func.func @_conv_bn_relu_kernel(%arg0: i32, %arg1: memref<1x48x384xbf16, #tpu.memory_space<vmem>>, %arg2: memref<3x384x64xbf16, #tpu.memory_space<vmem>>, %arg3: memref<1x64xf32, #tpu.memory_space<vmem>>, %arg4: memref<1x64xf32, #tpu.memory_space<vmem>>, %arg5: memref<1x32x64xbf16, #tpu.memory_space<vmem>>) attributes {dimension_semantics = [#tpu.dimension_semantics<parallel>], iteration_bounds = array<i64: 2>, scalar_prefetch = 0 : i64, scratch_operands = 0 : i64, tpu.core_type = #tpu.core_type<tc>, window_params = [{transform_indices = @transform_0, window_bounds = array<i64: 1, 48, 384>}, {pipeline_mode = #tpu.pipeline_mode<synchronous>, transform_indices = @transform_1, window_bounds = array<i64: 3, 384, 64>}, {pipeline_mode = #tpu.pipeline_mode<synchronous>, transform_indices = @transform_2, window_bounds = array<i64: 1, 64>}, {pipeline_mode = #tpu.pipeline_mode<synchronous>, transform_indices = @transform_3, window_bounds = array<i64: 1, 64>}, {transform_indices = @transform_4, window_bounds = array<i64: 1, 32, 64>}]} {
    %c0 = arith.constant 0 : index
    %c0_0 = arith.constant 0 : index
    %c0_1 = arith.constant 0 : index
    %0 = vector.load %arg1[%c0, %c0_0, %c0_1] : memref<1x48x384xbf16, #tpu.memory_space<vmem>>, vector<1x32x384xbf16>
    %1 = vector.shape_cast %0 : vector<1x32x384xbf16> to vector<32x384xbf16>
    %c0_2 = arith.constant 0 : index
    %c0_3 = arith.constant 0 : index
    %c0_4 = arith.constant 0 : index
    %2 = vector.load %arg2[%c0_2, %c0_3, %c0_4] : memref<3x384x64xbf16, #tpu.memory_space<vmem>>, vector<1x384x64xbf16>
    %3 = vector.shape_cast %2 : vector<1x384x64xbf16> to vector<384x64xbf16>
    %cst = arith.constant dense<0.000000e+00> : vector<32x64xf32>
    %4 = tpu.matmul %1, %3, %cst {dimension_numbers = #tpu.dot_dimension_numbers<[1], [0], [0], [1], [0, 0, 1, 1], [], []>} : vector<32x384xbf16>, vector<384x64xbf16>, vector<32x64xf32> -> vector<32x64xf32>
    %c0_5 = arith.constant 0 : index
    %c8 = arith.constant 8 : index
    %c0_6 = arith.constant 0 : index
    %5 = vector.load %arg1[%c0_5, %c8, %c0_6] : memref<1x48x384xbf16, #tpu.memory_space<vmem>>, vector<1x32x384xbf16>
    %6 = vector.shape_cast %5 : vector<1x32x384xbf16> to vector<32x384xbf16>
    %c1 = arith.constant 1 : index
    %c0_7 = arith.constant 0 : index
    %c0_8 = arith.constant 0 : index
    %7 = vector.load %arg2[%c1, %c0_7, %c0_8] : memref<3x384x64xbf16, #tpu.memory_space<vmem>>, vector<1x384x64xbf16>
    %8 = vector.shape_cast %7 : vector<1x384x64xbf16> to vector<384x64xbf16>
    %cst_9 = arith.constant dense<0.000000e+00> : vector<32x64xf32>
    %9 = tpu.matmul %6, %8, %cst_9 {dimension_numbers = #tpu.dot_dimension_numbers<[1], [0], [0], [1], [0, 0, 1, 1], [], []>} : vector<32x384xbf16>, vector<384x64xbf16>, vector<32x64xf32> -> vector<32x64xf32>
    %10 = arith.addf %4, %9 : vector<32x64xf32>
    %c0_10 = arith.constant 0 : index
    %c16 = arith.constant 16 : index
    %c0_11 = arith.constant 0 : index
    %11 = vector.load %arg1[%c0_10, %c16, %c0_11] : memref<1x48x384xbf16, #tpu.memory_space<vmem>>, vector<1x32x384xbf16>
    %12 = vector.shape_cast %11 : vector<1x32x384xbf16> to vector<32x384xbf16>
    %c2 = arith.constant 2 : index
    %c0_12 = arith.constant 0 : index
    %c0_13 = arith.constant 0 : index
    %13 = vector.load %arg2[%c2, %c0_12, %c0_13] : memref<3x384x64xbf16, #tpu.memory_space<vmem>>, vector<1x384x64xbf16>
    %14 = vector.shape_cast %13 : vector<1x384x64xbf16> to vector<384x64xbf16>
    %cst_14 = arith.constant dense<0.000000e+00> : vector<32x64xf32>
    %15 = tpu.matmul %12, %14, %cst_14 {dimension_numbers = #tpu.dot_dimension_numbers<[1], [0], [0], [1], [0, 0, 1, 1], [], []>} : vector<32x384xbf16>, vector<384x64xbf16>, vector<32x64xf32> -> vector<32x64xf32>
    %16 = arith.addf %10, %15 : vector<32x64xf32>
    %c0_15 = arith.constant 0 : index
    %c0_16 = arith.constant 0 : index
    %17 = vector.load %arg3[%c0_15, %c0_16] : memref<1x64xf32, #tpu.memory_space<vmem>>, vector<1x64xf32>
    %18 = vector.broadcast %17 : vector<1x64xf32> to vector<32x64xf32>
    %19 = arith.mulf %16, %18 : vector<32x64xf32>
    %c0_17 = arith.constant 0 : index
    %c0_18 = arith.constant 0 : index
    %20 = vector.load %arg4[%c0_17, %c0_18] : memref<1x64xf32, #tpu.memory_space<vmem>>, vector<1x64xf32>
    %21 = vector.broadcast %20 : vector<1x64xf32> to vector<32x64xf32>
    %22 = arith.addf %19, %21 : vector<32x64xf32>
    %cst_19 = arith.constant 0.000000e+00 : f32
    %23 = vector.broadcast %cst_19 : f32 to vector<32x64xf32>
    %24 = arith.maximumf %22, %23 : vector<32x64xf32>
    %25 = arith.truncf %24 : vector<32x64xf32> to vector<32x64xbf16>
    %c0_20 = arith.constant 0 : index
    %c0_21 = arith.constant 0 : index
    %c0_22 = arith.constant 0 : index
    %26 = vector.load %arg5[%c0_20, %c0_21, %c0_22] : memref<1x32x64xbf16, #tpu.memory_space<vmem>>, vector<1x32x64xbf16>
    %27 = vector.shape_cast %26 : vector<1x32x64xbf16> to vector<32x64xbf16>
    %28 = vector.shape_cast %25 : vector<32x64xbf16> to vector<1x32x64xbf16>
    tpu.vector_store %arg5[%c0_20, %c0_21, %c0_22], %28 {strides = array<i32>} : memref<1x32x64xbf16, #tpu.memory_space<vmem>>, vector<1x32x64xbf16>,
    return
  }
  func.func @transform_0(%arg0: i32) -> (i32, i32, i32) {
    %c0_i32 = arith.constant 0 : i32
    %c0_i32_0 = arith.constant 0 : i32
    %c0_i32_1 = arith.constant 0 : i32
    return %arg0, %c0_i32, %c0_i32_0 : i32, i32, i32
  }
  func.func @transform_1(%arg0: i32) -> (i32, i32, i32) {
    %c0_i32 = arith.constant 0 : i32
    %c0_i32_0 = arith.constant 0 : i32
    %c0_i32_1 = arith.constant 0 : i32
    %c0_i32_2 = arith.constant 0 : i32
    return %c0_i32, %c0_i32_0, %c0_i32_1 : i32, i32, i32
  }
  func.func @transform_2(%arg0: i32) -> (i32, i32) {
    %c0_i32 = arith.constant 0 : i32
    %c0_i32_0 = arith.constant 0 : i32
    %c0_i32_1 = arith.constant 0 : i32
    return %c0_i32, %c0_i32_0 : i32, i32
  }
  func.func @transform_3(%arg0: i32) -> (i32, i32) {
    %c0_i32 = arith.constant 0 : i32
    %c0_i32_0 = arith.constant 0 : i32
    %c0_i32_1 = arith.constant 0 : i32
    return %c0_i32, %c0_i32_0 : i32, i32
  }
  func.func @transform_4(%arg0: i32) -> (i32, i32, i32) {
    %c0_i32 = arith.constant 0 : i32
    %c0_i32_0 = arith.constant 0 : i32
    %c0_i32_1 = arith.constant 0 : i32
    return %arg0, %c0_i32, %c0_i32_0 : i32, i32, i32
  }
}

module attributes {stable_mosaic.version = 11 : i64} {
  func.func @_conv_bn_relu_kernel(%arg0: i32, %arg1: memref<1x80x192xbf16, #tpu.memory_space<vmem>>, %arg2: memref<3x192x32xbf16, #tpu.memory_space<vmem>>, %arg3: memref<1x32xf32, #tpu.memory_space<vmem>>, %arg4: memref<1x32xf32, #tpu.memory_space<vmem>>, %arg5: memref<1x64x32xbf16, #tpu.memory_space<vmem>>) attributes {dimension_semantics = [#tpu.dimension_semantics<parallel>], iteration_bounds = array<i64: 2>, scalar_prefetch = 0 : i64, scratch_operands = 0 : i64, tpu.core_type = #tpu.core_type<tc>, window_params = [{transform_indices = @transform_0, window_bounds = array<i64: 1, 80, 192>}, {pipeline_mode = #tpu.pipeline_mode<synchronous>, transform_indices = @transform_1, window_bounds = array<i64: 3, 192, 32>}, {pipeline_mode = #tpu.pipeline_mode<synchronous>, transform_indices = @transform_2, window_bounds = array<i64: 1, 32>}, {pipeline_mode = #tpu.pipeline_mode<synchronous>, transform_indices = @transform_3, window_bounds = array<i64: 1, 32>}, {transform_indices = @transform_4, window_bounds = array<i64: 1, 64, 32>}]} {
    %c0 = arith.constant 0 : index
    %c0_0 = arith.constant 0 : index
    %c0_1 = arith.constant 0 : index
    %0 = vector.load %arg1[%c0, %c0_0, %c0_1] : memref<1x80x192xbf16, #tpu.memory_space<vmem>>, vector<1x64x192xbf16>
    %1 = vector.shape_cast %0 : vector<1x64x192xbf16> to vector<64x192xbf16>
    %c0_2 = arith.constant 0 : index
    %c0_3 = arith.constant 0 : index
    %c0_4 = arith.constant 0 : index
    %2 = vector.load %arg2[%c0_2, %c0_3, %c0_4] : memref<3x192x32xbf16, #tpu.memory_space<vmem>>, vector<1x192x32xbf16>
    %3 = vector.shape_cast %2 : vector<1x192x32xbf16> to vector<192x32xbf16>
    %cst = arith.constant dense<0.000000e+00> : vector<64x32xf32>
    %4 = tpu.matmul %1, %3, %cst {dimension_numbers = #tpu.dot_dimension_numbers<[1], [0], [0], [1], [0, 0, 1, 1], [], []>} : vector<64x192xbf16>, vector<192x32xbf16>, vector<64x32xf32> -> vector<64x32xf32>
    %c0_5 = arith.constant 0 : index
    %c8 = arith.constant 8 : index
    %c0_6 = arith.constant 0 : index
    %5 = vector.load %arg1[%c0_5, %c8, %c0_6] : memref<1x80x192xbf16, #tpu.memory_space<vmem>>, vector<1x64x192xbf16>
    %6 = vector.shape_cast %5 : vector<1x64x192xbf16> to vector<64x192xbf16>
    %c1 = arith.constant 1 : index
    %c0_7 = arith.constant 0 : index
    %c0_8 = arith.constant 0 : index
    %7 = vector.load %arg2[%c1, %c0_7, %c0_8] : memref<3x192x32xbf16, #tpu.memory_space<vmem>>, vector<1x192x32xbf16>
    %8 = vector.shape_cast %7 : vector<1x192x32xbf16> to vector<192x32xbf16>
    %cst_9 = arith.constant dense<0.000000e+00> : vector<64x32xf32>
    %9 = tpu.matmul %6, %8, %cst_9 {dimension_numbers = #tpu.dot_dimension_numbers<[1], [0], [0], [1], [0, 0, 1, 1], [], []>} : vector<64x192xbf16>, vector<192x32xbf16>, vector<64x32xf32> -> vector<64x32xf32>
    %10 = arith.addf %4, %9 : vector<64x32xf32>
    %c0_10 = arith.constant 0 : index
    %c16 = arith.constant 16 : index
    %c0_11 = arith.constant 0 : index
    %11 = vector.load %arg1[%c0_10, %c16, %c0_11] : memref<1x80x192xbf16, #tpu.memory_space<vmem>>, vector<1x64x192xbf16>
    %12 = vector.shape_cast %11 : vector<1x64x192xbf16> to vector<64x192xbf16>
    %c2 = arith.constant 2 : index
    %c0_12 = arith.constant 0 : index
    %c0_13 = arith.constant 0 : index
    %13 = vector.load %arg2[%c2, %c0_12, %c0_13] : memref<3x192x32xbf16, #tpu.memory_space<vmem>>, vector<1x192x32xbf16>
    %14 = vector.shape_cast %13 : vector<1x192x32xbf16> to vector<192x32xbf16>
    %cst_14 = arith.constant dense<0.000000e+00> : vector<64x32xf32>
    %15 = tpu.matmul %12, %14, %cst_14 {dimension_numbers = #tpu.dot_dimension_numbers<[1], [0], [0], [1], [0, 0, 1, 1], [], []>} : vector<64x192xbf16>, vector<192x32xbf16>, vector<64x32xf32> -> vector<64x32xf32>
    %16 = arith.addf %10, %15 : vector<64x32xf32>
    %c0_15 = arith.constant 0 : index
    %c0_16 = arith.constant 0 : index
    %17 = vector.load %arg3[%c0_15, %c0_16] : memref<1x32xf32, #tpu.memory_space<vmem>>, vector<1x32xf32>
    %18 = vector.broadcast %17 : vector<1x32xf32> to vector<64x32xf32>
    %19 = arith.mulf %16, %18 : vector<64x32xf32>
    %c0_17 = arith.constant 0 : index
    %c0_18 = arith.constant 0 : index
    %20 = vector.load %arg4[%c0_17, %c0_18] : memref<1x32xf32, #tpu.memory_space<vmem>>, vector<1x32xf32>
    %21 = vector.broadcast %20 : vector<1x32xf32> to vector<64x32xf32>
    %22 = arith.addf %19, %21 : vector<64x32xf32>
    %cst_19 = arith.constant 0.000000e+00 : f32
    %23 = vector.broadcast %cst_19 : f32 to vector<64x32xf32>
    %24 = arith.maximumf %22, %23 : vector<64x32xf32>
    %25 = arith.truncf %24 : vector<64x32xf32> to vector<64x32xbf16>
    %c0_20 = arith.constant 0 : index
    %c0_21 = arith.constant 0 : index
    %c0_22 = arith.constant 0 : index
    %26 = vector.load %arg5[%c0_20, %c0_21, %c0_22] : memref<1x64x32xbf16, #tpu.memory_space<vmem>>, vector<1x64x32xbf16>
    %27 = vector.shape_cast %26 : vector<1x64x32xbf16> to vector<64x32xbf16>
    %28 = vector.shape_cast %25 : vector<64x32xbf16> to vector<1x64x32xbf16>
    tpu.vector_store %arg5[%c0_20, %c0_21, %c0_22], %28 {strides = array<i32>} : memref<1x64x32xbf16, #tpu.memory_space<vmem>>, vector<1x64x32xbf16>,
    return
  }
  func.func @transform_0(%arg0: i32) -> (i32, i32, i32) {
    %c0_i32 = arith.constant 0 : i32
    %c0_i32_0 = arith.constant 0 : i32
    %c0_i32_1 = arith.constant 0 : i32
    return %arg0, %c0_i32, %c0_i32_0 : i32, i32, i32
  }
  func.func @transform_1(%arg0: i32) -> (i32, i32, i32) {
    %c0_i32 = arith.constant 0 : i32
    %c0_i32_0 = arith.constant 0 : i32
    %c0_i32_1 = arith.constant 0 : i32
    %c0_i32_2 = arith.constant 0 : i32
    return %c0_i32, %c0_i32_0, %c0_i32_1 : i32, i32, i32
  }
  func.func @transform_2(%arg0: i32) -> (i32, i32) {
    %c0_i32 = arith.constant 0 : i32
    %c0_i32_0 = arith.constant 0 : i32
    %c0_i32_1 = arith.constant 0 : i32
    return %c0_i32, %c0_i32_0 : i32, i32
  }
  func.func @transform_3(%arg0: i32) -> (i32, i32) {
    %c0_i32 = arith.constant 0 : i32
    %c0_i32_0 = arith.constant 0 : i32
    %c0_i32_1 = arith.constant 0 : i32
    return %c0_i32, %c0_i32_0 : i32, i32
  }
  func.func @transform_4(%arg0: i32) -> (i32, i32, i32) {
    %c0_i32 = arith.constant 0 : i32
    %c0_i32_0 = arith.constant 0 : i32
    %c0_i32_1 = arith.constant 0 : i32
    return %arg0, %c0_i32, %c0_i32_0 : i32, i32, i32
  }
}

module attributes {stable_mosaic.version = 11 : i64} {
  func.func @_conv_bn_relu_kernel(%arg0: i32, %arg1: memref<1x288x96xbf16, #tpu.memory_space<vmem>>, %arg2: memref<3x96x128xbf16, #tpu.memory_space<vmem>>, %arg3: memref<1x128xf32, #tpu.memory_space<vmem>>, %arg4: memref<1x128xf32, #tpu.memory_space<vmem>>, %arg5: memref<1x256x128xbf16, #tpu.memory_space<vmem>>) attributes {dimension_semantics = [#tpu.dimension_semantics<parallel>], iteration_bounds = array<i64: 2>, scalar_prefetch = 0 : i64, scratch_operands = 0 : i64, tpu.core_type = #tpu.core_type<tc>, window_params = [{transform_indices = @transform_0, window_bounds = array<i64: 1, 288, 96>}, {pipeline_mode = #tpu.pipeline_mode<synchronous>, transform_indices = @transform_1, window_bounds = array<i64: 3, 96, 128>}, {pipeline_mode = #tpu.pipeline_mode<synchronous>, transform_indices = @transform_2, window_bounds = array<i64: 1, 128>}, {pipeline_mode = #tpu.pipeline_mode<synchronous>, transform_indices = @transform_3, window_bounds = array<i64: 1, 128>}, {transform_indices = @transform_4, window_bounds = array<i64: 1, 256, 128>}]} {
    %c0 = arith.constant 0 : index
    %c0_0 = arith.constant 0 : index
    %c0_1 = arith.constant 0 : index
    %0 = vector.load %arg1[%c0, %c0_0, %c0_1] : memref<1x288x96xbf16, #tpu.memory_space<vmem>>, vector<1x256x96xbf16>
    %1 = vector.shape_cast %0 : vector<1x256x96xbf16> to vector<256x96xbf16>
    %c0_2 = arith.constant 0 : index
    %c0_3 = arith.constant 0 : index
    %c0_4 = arith.constant 0 : index
    %2 = vector.load %arg2[%c0_2, %c0_3, %c0_4] : memref<3x96x128xbf16, #tpu.memory_space<vmem>>, vector<1x96x128xbf16>
    %3 = vector.shape_cast %2 : vector<1x96x128xbf16> to vector<96x128xbf16>
    %cst = arith.constant dense<0.000000e+00> : vector<256x128xf32>
    %4 = tpu.matmul %1, %3, %cst {dimension_numbers = #tpu.dot_dimension_numbers<[1], [0], [0], [1], [0, 0, 1, 1], [], []>} : vector<256x96xbf16>, vector<96x128xbf16>, vector<256x128xf32> -> vector<256x128xf32>
    %c0_5 = arith.constant 0 : index
    %c16 = arith.constant 16 : index
    %c0_6 = arith.constant 0 : index
    %5 = vector.load %arg1[%c0_5, %c16, %c0_6] : memref<1x288x96xbf16, #tpu.memory_space<vmem>>, vector<1x256x96xbf16>
    %6 = vector.shape_cast %5 : vector<1x256x96xbf16> to vector<256x96xbf16>
    %c1 = arith.constant 1 : index
    %c0_7 = arith.constant 0 : index
    %c0_8 = arith.constant 0 : index
    %7 = vector.load %arg2[%c1, %c0_7, %c0_8] : memref<3x96x128xbf16, #tpu.memory_space<vmem>>, vector<1x96x128xbf16>
    %8 = vector.shape_cast %7 : vector<1x96x128xbf16> to vector<96x128xbf16>
    %cst_9 = arith.constant dense<0.000000e+00> : vector<256x128xf32>
    %9 = tpu.matmul %6, %8, %cst_9 {dimension_numbers = #tpu.dot_dimension_numbers<[1], [0], [0], [1], [0, 0, 1, 1], [], []>} : vector<256x96xbf16>, vector<96x128xbf16>, vector<256x128xf32> -> vector<256x128xf32>
    %10 = arith.addf %4, %9 : vector<256x128xf32>
    %c0_10 = arith.constant 0 : index
    %c32 = arith.constant 32 : index
    %c0_11 = arith.constant 0 : index
    %11 = vector.load %arg1[%c0_10, %c32, %c0_11] : memref<1x288x96xbf16, #tpu.memory_space<vmem>>, vector<1x256x96xbf16>
    %12 = vector.shape_cast %11 : vector<1x256x96xbf16> to vector<256x96xbf16>
    %c2 = arith.constant 2 : index
    %c0_12 = arith.constant 0 : index
    %c0_13 = arith.constant 0 : index
    %13 = vector.load %arg2[%c2, %c0_12, %c0_13] : memref<3x96x128xbf16, #tpu.memory_space<vmem>>, vector<1x96x128xbf16>
    %14 = vector.shape_cast %13 : vector<1x96x128xbf16> to vector<96x128xbf16>
    %cst_14 = arith.constant dense<0.000000e+00> : vector<256x128xf32>
    %15 = tpu.matmul %12, %14, %cst_14 {dimension_numbers = #tpu.dot_dimension_numbers<[1], [0], [0], [1], [0, 0, 1, 1], [], []>} : vector<256x96xbf16>, vector<96x128xbf16>, vector<256x128xf32> -> vector<256x128xf32>
    %16 = arith.addf %10, %15 : vector<256x128xf32>
    %c0_15 = arith.constant 0 : index
    %c0_16 = arith.constant 0 : index
    %17 = vector.load %arg3[%c0_15, %c0_16] : memref<1x128xf32, #tpu.memory_space<vmem>>, vector<1x128xf32>
    %18 = vector.broadcast %17 : vector<1x128xf32> to vector<256x128xf32>
    %19 = arith.mulf %16, %18 : vector<256x128xf32>
    %c0_17 = arith.constant 0 : index
    %c0_18 = arith.constant 0 : index
    %20 = vector.load %arg4[%c0_17, %c0_18] : memref<1x128xf32, #tpu.memory_space<vmem>>, vector<1x128xf32>
    %21 = vector.broadcast %20 : vector<1x128xf32> to vector<256x128xf32>
    %22 = arith.addf %19, %21 : vector<256x128xf32>
    %cst_19 = arith.constant 0.000000e+00 : f32
    %23 = vector.broadcast %cst_19 : f32 to vector<256x128xf32>
    %24 = arith.maximumf %22, %23 : vector<256x128xf32>
    %25 = arith.truncf %24 : vector<256x128xf32> to vector<256x128xbf16>
    %c0_20 = arith.constant 0 : index
    %c0_21 = arith.constant 0 : index
    %c0_22 = arith.constant 0 : index
    %26 = vector.load %arg5[%c0_20, %c0_21, %c0_22] : memref<1x256x128xbf16, #tpu.memory_space<vmem>>, vector<1x256x128xbf16>
    %27 = vector.shape_cast %26 : vector<1x256x128xbf16> to vector<256x128xbf16>
    %28 = vector.shape_cast %25 : vector<256x128xbf16> to vector<1x256x128xbf16>
    tpu.vector_store %arg5[%c0_20, %c0_21, %c0_22], %28 {strides = array<i32>} : memref<1x256x128xbf16, #tpu.memory_space<vmem>>, vector<1x256x128xbf16>,
    return
  }
  func.func @transform_0(%arg0: i32) -> (i32, i32, i32) {
    %c0_i32 = arith.constant 0 : i32
    %c0_i32_0 = arith.constant 0 : i32
    %c0_i32_1 = arith.constant 0 : i32
    return %arg0, %c0_i32, %c0_i32_0 : i32, i32, i32
  }
  func.func @transform_1(%arg0: i32) -> (i32, i32, i32) {
    %c0_i32 = arith.constant 0 : i32
    %c0_i32_0 = arith.constant 0 : i32
    %c0_i32_1 = arith.constant 0 : i32
    %c0_i32_2 = arith.constant 0 : i32
    return %c0_i32, %c0_i32_0, %c0_i32_1 : i32, i32, i32
  }
  func.func @transform_2(%arg0: i32) -> (i32, i32) {
    %c0_i32 = arith.constant 0 : i32
    %c0_i32_0 = arith.constant 0 : i32
    %c0_i32_1 = arith.constant 0 : i32
    return %c0_i32, %c0_i32_0 : i32, i32
  }
  func.func @transform_3(%arg0: i32) -> (i32, i32) {
    %c0_i32 = arith.constant 0 : i32
    %c0_i32_0 = arith.constant 0 : i32
    %c0_i32_1 = arith.constant 0 : i32
    return %c0_i32, %c0_i32_0 : i32, i32
  }
  func.func @transform_4(%arg0: i32) -> (i32, i32, i32) {
    %c0_i32 = arith.constant 0 : i32
    %c0_i32_0 = arith.constant 0 : i32
    %c0_i32_1 = arith.constant 0 : i32
    return %arg0, %c0_i32, %c0_i32_0 : i32, i32, i32
  }
}

</mosaic_0001>

<llo_original>
// kernel: drunet_var_forward.13
$region0: #{drunet_var_forward.13}
  #allocation0 [shape = 'u32[]', space=smem, size = 0x4, offset = 0x4, fixed_abs, tag = 'smem constant byte address 0x4 - core index']
  #allocation1 [shape = 'u32[144,128]{1,0:T(1,128)}', space=vmem, size = 0x12000, scoped, tag = 'internal scratch']
  %s0 = inlined_call_operand.vmem [shape: bf16[2,256,36], index: 0, kind: input, shape index: {}]
  %s1 = inlined_call_operand.vmem [shape: bf16[1,36,32], index: 1, kind: input, shape index: {}]
  %s2 = inlined_call_operand.vmem [shape: f32[1,32], index: 2, kind: input, shape index: {}]
  %s3 = inlined_call_operand.vmem [shape: f32[1,32], index: 3, kind: input, shape index: {}]
  %s4 = inlined_call_operand.vmem [shape: bf16[2,256,32], index: 4, kind: output, shape index: {}]
  %s5 = sld [smem:[#allocation0]]
  $region49: #{drunet_var_forward.13} parent=0
    _
  %s7 = ssub.s32 1, %s5
  %s8 = scalar_select 0, %s7, %s5
  loop: start=0, step=1, limit=4
  $region2: #{drunet_var_forward.13} parent=0 // loop_pre_header
    _
  $region3: #{drunet_var_forward.13} parent=0 // loop_header
    %s10 = sphi 0, %s14
    %p11 = scmp.ge.s32.totalorder %s10, 4
    %s20 = sphi 0, %s22
    %s23 = sphi 0, %s20
    %s24 = sphi 0, %s23
    %s40 = sphi 0, %s24
    %s44 = sphi 0, %s44
    %s46 = sphi 0, %s44
    %s47 = sphi 0, %s46
    %s61 = sphi 0, %s47
    %s65 = sphi 0, %s65
    %s67 = sphi 0, %s65
    %s68 = sphi 0, %s67
    %s82 = sphi 0, %s68
    %s86 = sphi 0, %s86
    %s88 = sphi 0, %s86
    %s89 = sphi 0, %s88
    %s103 = sphi 0, %s89
    %s109 = sphi 0, %s111
    %s112 = sphi 0, %s109
    %s113 = sphi 0, %s112
    %s129 = sphi 0, %s113
  $region4: #{drunet_var_forward.13} parent=0 // loop_header_branch
    %13 = sbr.rel (%p11) target = $region8
  $region5: #{drunet_var_forward.13} parent=0 // loop_body
    %s15 = ssub.s32 %s10, 1
    %s16 = ssub.s32 %s10, 2
    %s17 = sadd.s32 %s10, 1
    %s18 = ssub.s32 %s10, %s17
    %p19 = scmp.eq.s32.totalorder %s18, 0
    %s21 = sadd.s32 %s20, 1
    %s22 = scalar_select %p19, %s20, %s21
    %p25 = pneg %p19
    %p26 = scmp.eq.s32.totalorder %s10, 1
    %p27 = por %p25, %p26
    %p28 = scmp.ne.s32.totalorder %s20, %s23
    %p29 = scmp.eq.s32.totalorder %s10, 0
    %p30 = por %p28, %p29
    %p31 = scmp.ne.s32.totalorder %s20, %s23
    %p32 = scmp.eq.s32.totalorder %s15, 1
    %p33 = por %p31, %p32
    %p34 = scmp.ne.s32.totalorder %s23, %s24
    %p35 = scmp.eq.s32.totalorder %s15, 0
    %p36 = por %p34, %p35
    %p37 = scmp.ne.s32.totalorder %s23, %s24
    %p38 = scmp.eq.s32.totalorder %s16, 1
    %p39 = por %p37, %p38
    %p41 = scmp.ne.s32.totalorder %s24, %s40
    %p42 = scmp.eq.s32.totalorder %s16, 0
    %p43 = por %p41, %p42
    %s45 = sadd.s32 %s44, 1
    %p48 = scmp.eq.s32.totalorder %s10, 1
    %p49 = scmp.ne.s32.totalorder %s44, %s46
    %p50 = scmp.eq.s32.totalorder %s10, 0
    %p51 = por %p49, %p50
    %p52 = scmp.ne.s32.totalorder %s44, %s46
    %p53 = scmp.eq.s32.totalorder %s15, 1
    %p54 = por %p52, %p53
    %p55 = scmp.ne.s32.totalorder %s46, %s47
    %p56 = scmp.eq.s32.totalorder %s15, 0
    %p57 = por %p55, %p56
    %p58 = scmp.ne.s32.totalorder %s46, %s47
    %p59 = scmp.eq.s32.totalorder %s16, 1
    %p60 = por %p58, %p59
    %p62 = scmp.ne.s32.totalorder %s47, %s61
    %p63 = scmp.eq.s32.totalorder %s16, 0
    %p64 = por %p62, %p63
    %s66 = sadd.s32 %s65, 1
    %p69 = scmp.eq.s32.totalorder %s10, 1
    %p70 = scmp.ne.s32.totalorder %s65, %s67
    %p71 = scmp.eq.s32.totalorder %s10, 0
    %p72 = por %p70, %p71
    %p73 = scmp.ne.s32.totalorder %s65, %s67
    %p74 = scmp.eq.s32.totalorder %s15, 1
    %p75 = por %p73, %p74
    %p76 = scmp.ne.s32.totalorder %s67, %s68
    %p77 = scmp.eq.s32.totalorder %s15, 0
    %p78 = por %p76, %p77
    %p79 = scmp.ne.s32.totalorder %s67, %s68
    %p80 = scmp.eq.s32.totalorder %s16, 1
    %p81 = por %p79, %p80
    %p83 = scmp.ne.s32.totalorder %s68, %s82
    %p84 = scmp.eq.s32.totalorder %s16, 0
    %p85 = por %p83, %p84
    %s87 = sadd.s32 %s86, 1
    %p90 = scmp.eq.s32.totalorder %s10, 1
    %p91 = scmp.ne.s32.totalorder %s86, %s88
    %p92 = scmp.eq.s32.totalorder %s10, 0
    %p93 = por %p91, %p92
    %p94 = scmp.ne.s32.totalorder %s86, %s88
    %p95 = scmp.eq.s32.totalorder %s15, 1
    %p96 = por %p94, %p95
    %p97 = scmp.ne.s32.totalorder %s88, %s89
    %p98 = scmp.eq.s32.totalorder %s15, 0
    %p99 = por %p97, %p98
    %p100 = scmp.ne.s32.totalorder %s88, %s89
    %p101 = scmp.eq.s32.totalorder %s16, 1
    %p102 = por %p100, %p101
    %p104 = scmp.ne.s32.totalorder %s89, %s103
    %p105 = scmp.eq.s32.totalorder %s16, 0
    %p106 = por %p104, %p105
    %s107 = ssub.s32 %s10, %s17
    %p108 = scmp.eq.s32.totalorder %s107, 0
    %s110 = sadd.s32 %s109, 1
    %s111 = scalar_select %p108, %s109, %s110
    %p114 = pneg %p108
    %p115 = scmp.eq.s32.totalorder %s10, 1
    %p116 = por %p114, %p115
    %p117 = scmp.ne.s32.totalorder %s109, %s112
    %p118 = scmp.eq.s32.totalorder %s10, 0
    %p119 = por %p117, %p118
    %p120 = scmp.ne.s32.totalorder %s109, %s112
    %p121 = scmp.eq.s32.totalorder %s15, 1
    %p122 = por %p120, %p121
    %p123 = scmp.ne.s32.totalorder %s112, %s113
    %p124 = scmp.eq.s32.totalorder %s15, 0
    %p125 = por %p123, %p124
    %p126 = scmp.ne.s32.totalorder %s112, %s113
    %p127 = scmp.eq.s32.totalorder %s16, 1
    %p128 = por %p126, %p127
    %p130 = scmp.ne.s32.totalorder %s113, %s129
    %p131 = scmp.eq.s32.totalorder %s16, 0
    %p132 = por %p130, %p131
    %p133 = scmp.le.s32.totalorder 1, %s10
    %p134 = scmp.lt.s32.totalorder %s10, 3
    %p135 = pnand %p133, %p134
    %p136 = pneg %p135
    // Predicated region
    $region9: #{drunet_var_forward.13} parent=5 // pred_check
      _
    $region10: #{drunet_var_forward.13} parent=5 // pred_check_branch
      %138 = sbr.rel (%p135) target = $region12
    $region11: #{drunet_var_forward.13} parent=5 // pred_region
      %s139 = ssub.s32 %s10, 1
      // Predicated region
      $region13: #{drunet_var_forward.13} parent=11 // pred_check
        %p140 = pneg %p57
      $region14: #{drunet_var_forward.13} parent=11 // pred_check_branch
        %142 = sbr.rel (%p140) target = $region16
      $region15: #{drunet_var_forward.13} parent=11 // pred_region
        _
      $region16: #{drunet_var_forward.13} parent=11 // pred_fallthru
        _
      // Predicated region
      $region17: #{drunet_var_forward.13} parent=11 // pred_check
        %p143 = pneg %p78
      $region18: #{drunet_var_forward.13} parent=11 // pred_check_branch
        %145 = sbr.rel (%p143) target = $region20
      $region19: #{drunet_var_forward.13} parent=11 // pred_region
        _
      $region20: #{drunet_var_forward.13} parent=11 // pred_fallthru
        _
      // Predicated region
      $region21: #{drunet_var_forward.13} parent=11 // pred_check
        %p146 = pneg %p99
      $region22: #{drunet_var_forward.13} parent=11 // pred_check_branch
        %148 = sbr.rel (%p146) target = $region24
      $region23: #{drunet_var_forward.13} parent=11 // pred_region
        _
      $region24: #{drunet_var_forward.13} parent=11 // pred_fallthru
        _
    $region12: #{drunet_var_forward.13} parent=5 // pred_fallthru
      _
    %p149 = scmp.lt.s32.totalorder %s10, 2
    // Predicated region
    $region25: #{drunet_var_forward.13} parent=5 // pred_check
      %p150 = pneg %p149
    $region26: #{drunet_var_forward.13} parent=5 // pred_check_branch
      %152 = sbr.rel (%p150) target = $region28
    $region27: #{drunet_var_forward.13} parent=5 // pred_region
      // Predicated region
      $region29: #{drunet_var_forward.13} parent=27 // pred_check
        %p153 = pneg %p30
      $region30: #{drunet_var_forward.13} parent=27 // pred_check_branch
        %155 = sbr.rel (%p153) target = $region32
      $region31: #{drunet_var_forward.13} parent=27 // pred_region
        %p156 = scmp.lt.s32.totalorder %s10, 1
        %s157 = scalar_select %p156, %s10, 1
        %s158 = smul.addr %s157, 32
        %s159 = smul.addr %s158, 4
        %s160 = scalar_lea.vmem %s0, %s159
      $region32: #{drunet_var_forward.13} parent=27 // pred_fallthru
        _
    $region28: #{drunet_var_forward.13} parent=5 // pred_fallthru
      _
    %p161 = scmp.le.s32.totalorder 1, %s10
    %p162 = scmp.lt.s32.totalorder %s10, 3
    %p163 = pnand %p161, %p162
    %p164 = pneg %p163
    // Predicated region
    $region33: #{drunet_var_forward.13} parent=5 // pred_check
      _
    $region34: #{drunet_var_forward.13} parent=5 // pred_check_branch
      %166 = sbr.rel (%p163) target = $region36
    $region35: #{drunet_var_forward.13} parent=5 // pred_region
      %s167 = ssub.s32 %s10, 1
      %p168 = scmp.lt.s32.totalorder %s15, 1
      %s169 = scalar_select %p168, %s15, 1
      %s170 = smul.addr %s169, 32
      %s171 = smul.addr %s170, 4
      %s172 = scalar_lea.vmem %s0, %s171
      %p173 = pneg %p36
      %p174 = pneg %p33
      %p175 = pneg %p57
      %p176 = pneg %p54
      %p177 = pneg %p78
      %p178 = pneg %p75
      %p179 = pneg %p99
      %p180 = pneg %p96
      %p181 = pneg %p125
      %p182 = pneg %p122
      %p183 = scmp.lt.s32.totalorder %s15, 1
      %s184 = scalar_select %p183, %s15, 1
      %s185 = smul.addr %s184, 32
      %s186 = smul.addr %s185, 4
      %s187 = scalar_lea.vmem %s4, %s186
      %p188 = scmp.lt.s32.totalorder %s15, 1
      %s189 = scalar_select %p188, %s15, 1
      %s190 = smul.addr %s189, 32
      %s191 = smul.addr %s190, 4
      %s192 = scalar_lea.vmem %s0, %s191
      %p193 = scmp.lt.s32.totalorder %s15, 1
      %s194 = scalar_select %p193, %s15, 1
      %s195 = smul.addr %s194, 32
      %s196 = smul.addr %s195, 4
      %s197 = scalar_lea.vmem %s4, %s196
      %v199 = vld [vmem:[%s192] sm:$0xf]
      %v200 = vld [vmem:[%s192 + $0x4] sm:$0xf]
      %v201 = vld [vmem:[%s192 + $0x8] sm:$0xf]
      %v202 = vld [vmem:[%s192 + $0xc] sm:$0xf]
      %v203 = vld [vmem:[%s192 + $0x10] sm:$0xf]
      %v204 = vld [vmem:[%s192 + $0x14] sm:$0xf]
      %v205 = vld [vmem:[%s192 + $0x18] sm:$0xf]
      %v206 = vld [vmem:[%s192 + $0x1c] sm:$0xf]
      %v207 = vld [vmem:[%s192 + $0x20] sm:$0xf]
      %v208 = vld [vmem:[%s192 + $0x24] sm:$0xf]
      %v209 = vld [vmem:[%s192 + $0x28] sm:$0xf]
      %v210 = vld [vmem:[%s192 + $0x2c] sm:$0xf]
      %v211 = vld [vmem:[%s192 + $0x30] sm:$0xf]
      %v212 = vld [vmem:[%s192 + $0x34] sm:$0xf]
      %v213 = vld [vmem:[%s192 + $0x38] sm:$0xf]
      %v214 = vld [vmem:[%s192 + $0x3c] sm:$0xf]
      %v215 = vld [vmem:[%s192 + $0x40] sm:$0xf]
      %v216 = vld [vmem:[%s192 + $0x44] sm:$0xf]
      %v217 = vld [vmem:[%s192 + $0x48] sm:$0xf]
      %v218 = vld [vmem:[%s192 + $0x4c] sm:$0xf]
      %v219 = vld [vmem:[%s192 + $0x50] sm:$0xf]
      %v220 = vld [vmem:[%s192 + $0x54] sm:$0xf]
      %v221 = vld [vmem:[%s192 + $0x58] sm:$0xf]
      %v222 = vld [vmem:[%s192 + $0x5c] sm:$0xf]
      %v223 = vld [vmem:[%s192 + $0x60] sm:$0xf]
      %v224 = vld [vmem:[%s192 + $0x64] sm:$0xf]
      %v225 = vld [vmem:[%s192 + $0x68] sm:$0xf]
      %v226 = vld [vmem:[%s192 + $0x6c] sm:$0xf]
      %v227 = vld [vmem:[%s192 + $0x70] sm:$0xf]
      %v228 = vld [vmem:[%s192 + $0x74] sm:$0xf]
      %v229 = vld [vmem:[%s192 + $0x78] sm:$0xf]
      %v230 = vld [vmem:[%s192 + $0x7c] sm:$0xf]
      %v231 = vld [vmem:[%s1] sm:$0xf]
      %v232 = vld [vmem:[%s1 + $0x4] sm:$0xf]
      %v233 = vld [vmem:[%s1 + $0x8] sm:$0xf]
      %v234 = vld [vmem:[%s1 + $0xc] sm:$0xf]
      %v235 = vld [vmem:[%s1 + $0x10] sm:$0x3]
      %v268 = vunpack.c.l.b16 %v199
      %v269 = vunpack.c.l.b16 %v200
      %v270 = vunpack.c.l.b16 %v201
      %v271 = vunpack.c.l.b16 %v202
      %v272 = vunpack.c.l.b16 %v203
      %v273 = vunpack.c.l.b16 %v204
      %v274 = vunpack.c.l.b16 %v205
      %v275 = vunpack.c.l.b16 %v206
      %v276 = vunpack.c.l.b16 %v207
      %v277 = vunpack.c.l.b16 %v208
      %v278 = vunpack.c.l.b16 %v209
      %v279 = vunpack.c.l.b16 %v210
      %v280 = vunpack.c.l.b16 %v211
      %v281 = vunpack.c.l.b16 %v212
      %v282 = vunpack.c.l.b16 %v213
      %v283 = vunpack.c.l.b16 %v214
      %v284 = vunpack.c.l.b16 %v215
      %v285 = vunpack.c.l.b16 %v216
      %v286 = vunpack.c.l.b16 %v217
      %v287 = vunpack.c.l.b16 %v218
      %v288 = vunpack.c.l.b16 %v219
      %v289 = vunpack.c.l.b16 %v220
      %v290 = vunpack.c.l.b16 %v221
      %v291 = vunpack.c.l.b16 %v222
      %v292 = vunpack.c.l.b16 %v223
      %v293 = vunpack.c.l.b16 %v224
      %v294 = vunpack.c.l.b16 %v225
      %v295 = vunpack.c.l.b16 %v226
      %v296 = vunpack.c.l.b16 %v227
      %v297 = vunpack.c.l.b16 %v228
      %v298 = vunpack.c.l.b16 %v229
      %v299 = vunpack.c.l.b16 %v230
      %v300 = vpack.c.b16 %v269, %v268
      %v301 = vpack.c.b16 %v271, %v270
      %v302 = vpack.c.b16 %v273, %v272
      %v303 = vpack.c.b16 %v275, %v274
      %v304 = vpack.c.b16 %v277, %v276
      %v305 = vpack.c.b16 %v279, %v278
      %v306 = vpack.c.b16 %v281, %v280
      %v307 = vpack.c.b16 %v283, %v282
      %v308 = vpack.c.b16 %v285, %v284
      %v309 = vpack.c.b16 %v287, %v286
      %v310 = vpack.c.b16 %v289, %v288
      %v311 = vpack.c.b16 %v291, %v290
      %v312 = vpack.c.b16 %v293, %v292
      %v313 = vpack.c.b16 %v295, %v294
      %v314 = vpack.c.b16 %v297, %v296
      %v315 = vpack.c.b16 %v299, %v298
      %v321 = vunpack.c.l.b16 %v231
      %v322 = vunpack.c.l.b16 %v232
      %v323 = vunpack.c.l.b16 %v233
      %v324 = vunpack.c.l.b16 %v234
      %v325 = vunpack.c.l.b16 %v235
      %v326 = vpack.c.b16 %v322, %v321
      %v327 = vpack.c.b16 %v324, %v323
      %v328 = vpack.c.b16 %v325, %v325
      %vm331 = vcmask 293888
      %v333 = vsel %vm331, %v300, 0
      %v336 = vsel %vm331, %v301, 0
      %v339 = vsel %vm331, %v302, 0
      %v342 = vsel %vm331, %v303, 0
      %v345 = vsel %vm331, %v304, 0
      %v348 = vsel %vm331, %v305, 0
      %v351 = vsel %vm331, %v306, 0
      %v354 = vsel %vm331, %v307, 0
      %v357 = vsel %vm331, %v308, 0
      %v360 = vsel %vm331, %v309, 0
      %v363 = vsel %vm331, %v310, 0
      %v366 = vsel %vm331, %v311, 0
      %v369 = vsel %vm331, %v312, 0
      %v372 = vsel %vm331, %v313, 0
      %v375 = vsel %vm331, %v314, 0
      %v378 = vsel %vm331, %v315, 0
      %vm380 = vcmask 1041408
      %v382 = vsel %vm380, %v328, 0
      %384 = vmatprep.subr.bf16.mxu0 0
      %385 = vmatpush1.bf16.msra.mxu0 0
      %386 = vmatprep.subr.bf16.mxu0 0
      %387 = vmatpush1.bf16.msra.mxu0 0
      %388 = vmatprep.subr.bf16.mxu0 0
      %389 = vmatpush1.bf16.msra.mxu0 0
      %390 = vmatprep.subr.bf16.mxu0 0
      %391 = vmatpush1.bf16.msra.mxu0 0
      %392 = vmatprep.subr.bf16.mxu0 0
      %393 = vmatpush1.bf16.msra.mxu0 0
      %394 = vmatprep.subr.bf16.mxu0 0
      %395 = vmatpush1.bf16.msra.mxu0 %v382
      %396 = vmatprep.subr.bf16.mxu0 0
      %397 = vmatpush1.bf16.msra.mxu0 %v327
      %398 = vmatprep.subr.bf16.mxu0 0
      %399 = vmatpush1.bf16.msra.mxu0 %v326
      %400 = vmatprep.subr.bf16.mxu0 0
      %401 = vmatpush2.bf16.msra.mxu0 0
      %402 = vmatprep.subr.bf16.mxu0 0
      %403 = vmatpush2.bf16.msra.mxu0 0
      %404 = vmatprep.subr.bf16.mxu0 0
      %405 = vmatpush2.bf16.msra.mxu0 0
      %406 = vmatprep.subr.bf16.mxu0 0
      %407 = vmatpush2.bf16.msra.mxu0 0
      %408 = vmatprep.subr.bf16.mxu0 0
      %409 = vmatpush2.bf16.msra.mxu0 0
      %410 = vmatprep.subr.bf16.mxu0 0
      %411 = vmatpush2.bf16.msra.mxu0 0
      %412 = vmatprep.subr.bf16.mxu0 0
      %413 = vmatpush2.bf16.msra.mxu0 0
      %414 = vmatprep.subr.bf16.mxu0 0
      %415 = vmatpush2.bf16.msra.mxu0 0
      %416 = vmatprep.mubr.bf16.mxu0 0
      %417 = vmatmul.mubr.bf16.gmra.mxu0 %v333
      %v418 = vpop.f32.mrf.mxu0
      %v419 = vadd.f32 0.0, %v418
      %v420 = vpop.f32.mrf.mxu0
      %v421 = vpop.f32.mrf.mxu0
      %v422 = vadd.f32 0.0, %v421
      %v423 = vpop.f32.mrf.mxu0
      %424 = vmatprep.mubr.bf16.mxu0 0
      %425 = vmatmul.mubr.bf16.gmra.mxu0 %v336
      %v426 = vpop.f32.mrf.mxu0
      %v427 = vadd.f32 0.0, %v426
      %v428 = vpop.f32.mrf.mxu0
      %v429 = vpop.f32.mrf.mxu0
      %v430 = vadd.f32 0.0, %v429
      %v431 = vpop.f32.mrf.mxu0
      %432 = vmatprep.mubr.bf16.mxu0 0
      %433 = vmatmul.mubr.bf16.gmra.mxu0 %v339
      %v434 = vpop.f32.mrf.mxu0
      %v435 = vadd.f32 0.0, %v434
      %v436 = vpop.f32.mrf.mxu0
      %v437 = vpop.f32.mrf.mxu0
      %v438 = vadd.f32 0.0, %v437
      %v439 = vpop.f32.mrf.mxu0
      %440 = vmatprep.mubr.bf16.mxu0 0
      %441 = vmatmul.mubr.bf16.gmra.mxu0 %v342
      %v442 = vpop.f32.mrf.mxu0
      %v443 = vadd.f32 0.0, %v442
      %v444 = vpop.f32.mrf.mxu0
      %v445 = vpop.f32.mrf.mxu0
      %v446 = vadd.f32 0.0, %v445
      %v447 = vpop.f32.mrf.mxu0
      %448 = vmatprep.mubr.bf16.mxu0 0
      %449 = vmatmul.mubr.bf16.gmra.mxu0 %v345
      %v450 = vpop.f32.mrf.mxu0
      %v451 = vadd.f32 0.0, %v450
      %v452 = vpop.f32.mrf.mxu0
      %v453 = vpop.f32.mrf.mxu0
      %v454 = vadd.f32 0.0, %v453
      %v455 = vpop.f32.mrf.mxu0
      %456 = vmatprep.mubr.bf16.mxu0 0
      %457 = vmatmul.mubr.bf16.gmra.mxu0 %v348
      %v458 = vpop.f32.mrf.mxu0
      %v459 = vadd.f32 0.0, %v458
      %v460 = vpop.f32.mrf.mxu0
      %v461 = vpop.f32.mrf.mxu0
      %v462 = vadd.f32 0.0, %v461
      %v463 = vpop.f32.mrf.mxu0
      %464 = vmatprep.mubr.bf16.mxu0 0
      %465 = vmatmul.mubr.bf16.gmra.mxu0 %v351
      %v466 = vpop.f32.mrf.mxu0
      %v467 = vadd.f32 0.0, %v466
      %v468 = vpop.f32.mrf.mxu0
      %v469 = vpop.f32.mrf.mxu0
      %v470 = vadd.f32 0.0, %v469
      %v471 = vpop.f32.mrf.mxu0
      %472 = vmatprep.mubr.bf16.mxu0 0
      %473 = vmatmul.mubr.bf16.gmra.mxu0 %v354
      %v474 = vpop.f32.mrf.mxu0
      %v475 = vadd.f32 0.0, %v474
      %v476 = vpop.f32.mrf.mxu0
      %v477 = vpop.f32.mrf.mxu0
      %v478 = vadd.f32 0.0, %v477
      %v479 = vpop.f32.mrf.mxu0
      %480 = vmatprep.mubr.bf16.mxu0 0
      %481 = vmatmul.mubr.bf16.gmra.mxu0 %v357
      %v482 = vpop.f32.mrf.mxu0
      %v483 = vadd.f32 0.0, %v482
      %v484 = vpop.f32.mrf.mxu0
      %v485 = vpop.f32.mrf.mxu0
      %v486 = vadd.f32 0.0, %v485
      %v487 = vpop.f32.mrf.mxu0
      %488 = vmatprep.mubr.bf16.mxu0 0
      %489 = vmatmul.mubr.bf16.gmra.mxu0 %v360
      %v490 = vpop.f32.mrf.mxu0
      %v491 = vadd.f32 0.0, %v490
      %v492 = vpop.f32.mrf.mxu0
      %v493 = vpop.f32.mrf.mxu0
      %v494 = vadd.f32 0.0, %v493
      %v495 = vpop.f32.mrf.mxu0
      %496 = vmatprep.mubr.bf16.mxu0 0
      %497 = vmatmul.mubr.bf16.gmra.mxu0 %v363
      %v498 = vpop.f32.mrf.mxu0
      %v499 = vadd.f32 0.0, %v498
      %v500 = vpop.f32.mrf.mxu0
      %v501 = vpop.f32.mrf.mxu0
      %v502 = vadd.f32 0.0, %v501
      %v503 = vpop.f32.mrf.mxu0
      %504 = vmatprep.mubr.bf16.mxu0 0
      %505 = vmatmul.mubr.bf16.gmra.mxu0 %v366
      %v506 = vpop.f32.mrf.mxu0
      %v507 = vadd.f32 0.0, %v506
      %v508 = vpop.f32.mrf.mxu0
      %v509 = vpop.f32.mrf.mxu0
      %v510 = vadd.f32 0.0, %v509
      %v511 = vpop.f32.mrf.mxu0
      %512 = vmatprep.mubr.bf16.mxu0 0
      %513 = vmatmul.mubr.bf16.gmra.mxu0 %v369
      %v514 = vpop.f32.mrf.mxu0
      %v515 = vadd.f32 0.0, %v514
      %v516 = vpop.f32.mrf.mxu0
      %v517 = vpop.f32.mrf.mxu0
      %v518 = vadd.f32 0.0, %v517
      %v519 = vpop.f32.mrf.mxu0
      %520 = vmatprep.mubr.bf16.mxu0 0
      %521 = vmatmul.mubr.bf16.gmra.mxu0 %v372
      %v522 = vpop.f32.mrf.mxu0
      %v523 = vadd.f32 0.0, %v522
      %v524 = vpop.f32.mrf.mxu0
      %v525 = vpop.f32.mrf.mxu0
      %v526 = vadd.f32 0.0, %v525
      %v527 = vpop.f32.mrf.mxu0
      %528 = vmatprep.mubr.bf16.mxu0 0
      %529 = vmatmul.mubr.bf16.gmra.mxu0 %v375
      %v530 = vpop.f32.mrf.mxu0
      %v531 = vadd.f32 0.0, %v530
      %v532 = vpop.f32.mrf.mxu0
      %v533 = vpop.f32.mrf.mxu0
      %v534 = vadd.f32 0.0, %v533
      %v535 = vpop.f32.mrf.mxu0
      %536 = vmatprep.mubr.bf16.mxu0 0
      %537 = vmatmul.mubr.bf16.gmra.mxu0 %v378
      %v538 = vpop.f32.mrf.mxu0
      %v539 = vadd.f32 0.0, %v538
      %v540 = vpop.f32.mrf.mxu0
      %v541 = vpop.f32.mrf.mxu0
      %v542 = vadd.f32 0.0, %v541
      %v543 = vpop.f32.mrf.mxu0
      %544 = vdwg.mxu0
      %v545 = vld [vmem:[%s2] sm:$0x1]
      %v547 = vlaneseq
      %v548 = vshrl.u32 %v547, 7
      %v549 = vsub.s32 0, %v548
      %v550 = vrot.slane %v545, %v549
      %v552 = vmul.f32 %v419, %v550
      %v553 = vmul.f32 %v422, %v550
      %v554 = vmul.f32 %v427, %v550
      %v555 = vmul.f32 %v430, %v550
      %v556 = vmul.f32 %v435, %v550
      %v557 = vmul.f32 %v438, %v550
      %v558 = vmul.f32 %v443, %v550
      %v559 = vmul.f32 %v446, %v550
      %v560 = vmul.f32 %v451, %v550
      %v561 = vmul.f32 %v454, %v550
      %v562 = vmul.f32 %v459, %v550
      %v563 = vmul.f32 %v462, %v550
      %v564 = vmul.f32 %v467, %v550
      %v565 = vmul.f32 %v470, %v550
      %v566 = vmul.f32 %v475, %v550
      %v567 = vmul.f32 %v478, %v550
      %v568 = vmul.f32 %v483, %v550
      %v569 = vmul.f32 %v486, %v550
      %v570 = vmul.f32 %v491, %v550
      %v571 = vmul.f32 %v494, %v550
      %v572 = vmul.f32 %v499, %v550
      %v573 = vmul.f32 %v502, %v550
      %v574 = vmul.f32 %v507, %v550
      %v575 = vmul.f32 %v510, %v550
      %v576 = vmul.f32 %v515, %v550
      %v577 = vmul.f32 %v518, %v550
      %v578 = vmul.f32 %v523, %v550
      %v579 = vmul.f32 %v526, %v550
      %v580 = vmul.f32 %v531, %v550
      %v581 = vmul.f32 %v534, %v550
      %v582 = vmul.f32 %v539, %v550
      %v583 = vmul.f32 %v542, %v550
      %v584 = vld [vmem:[%s3] sm:$0x1]
      %v586 = vlaneseq
      %v587 = vshrl.u32 %v586, 7
      %v588 = vsub.s32 0, %v587
      %v589 = vrot.slane %v584, %v588
      %v591 = vadd.f32 %v552, %v589
      %v592 = vadd.f32 %v553, %v589
      %v593 = vadd.f32 %v554, %v589
      %v594 = vadd.f32 %v555, %v589
      %v595 = vadd.f32 %v556, %v589
      %v596 = vadd.f32 %v557, %v589
      %v597 = vadd.f32 %v558, %v589
      %v598 = vadd.f32 %v559, %v589
      %v599 = vadd.f32 %v560, %v589
      %v600 = vadd.f32 %v561, %v589
      %v601 = vadd.f32 %v562, %v589
      %v602 = vadd.f32 %v563, %v589
      %v603 = vadd.f32 %v564, %v589
      %v604 = vadd.f32 %v565, %v589
      %v605 = vadd.f32 %v566, %v589
      %v606 = vadd.f32 %v567, %v589
      %v607 = vadd.f32 %v568, %v589
      %v608 = vadd.f32 %v569, %v589
      %v609 = vadd.f32 %v570, %v589
      %v610 = vadd.f32 %v571, %v589
      %v611 = vadd.f32 %v572, %v589
      %v612 = vadd.f32 %v573, %v589
      %v613 = vadd.f32 %v574, %v589
      %v614 = vadd.f32 %v575, %v589
      %v615 = vadd.f32 %v576, %v589
      %v616 = vadd.f32 %v577, %v589
      %v617 = vadd.f32 %v578, %v589
      %v618 = vadd.f32 %v579, %v589
      %v619 = vadd.f32 %v580, %v589
      %v620 = vadd.f32 %v581, %v589
      %v621 = vadd.f32 %v582, %v589
      %v622 = vadd.f32 %v583, %v589
      %v623 = vmax.f32 %v591, 0.0
      %v624 = vmax.f32 %v592, 0.0
      %v625 = vmax.f32 %v593, 0.0
      %v626 = vmax.f32 %v594, 0.0
      %v627 = vmax.f32 %v595, 0.0
      %v628 = vmax.f32 %v596, 0.0
      %v629 = vmax.f32 %v597, 0.0
      %v630 = vmax.f32 %v598, 0.0
      %v631 = vmax.f32 %v599, 0.0
      %v632 = vmax.f32 %v600, 0.0
      %v633 = vmax.f32 %v601, 0.0
      %v634 = vmax.f32 %v602, 0.0
      %v635 = vmax.f32 %v603, 0.0
      %v636 = vmax.f32 %v604, 0.0
      %v637 = vmax.f32 %v605, 0.0
      %v638 = vmax.f32 %v606, 0.0
      %v639 = vmax.f32 %v607, 0.0
      %v640 = vmax.f32 %v608, 0.0
      %v641 = vmax.f32 %v609, 0.0
      %v642 = vmax.f32 %v610, 0.0
      %v643 = vmax.f32 %v611, 0.0
      %v644 = vmax.f32 %v612, 0.0
      %v645 = vmax.f32 %v613, 0.0
      %v646 = vmax.f32 %v614, 0.0
      %v647 = vmax.f32 %v615, 0.0
      %v648 = vmax.f32 %v616, 0.0
      %v649 = vmax.f32 %v617, 0.0
      %v650 = vmax.f32 %v618, 0.0
      %v651 = vmax.f32 %v619, 0.0
      %v652 = vmax.f32 %v620, 0.0
      %v653 = vmax.f32 %v621, 0.0
      %v654 = vmax.f32 %v622, 0.0
      %v655 = vpack.c.bf16 %v624, %v623
      %v656 = vpack.c.bf16 %v626, %v625
      %v657 = vpack.c.bf16 %v628, %v627
      %v658 = vpack.c.bf16 %v630, %v629
      %v659 = vpack.c.bf16 %v632, %v631
      %v660 = vpack.c.bf16 %v634, %v633
      %v661 = vpack.c.bf16 %v636, %v635
      %v662 = vpack.c.bf16 %v638, %v637
      %v663 = vpack.c.bf16 %v640, %v639
      %v664 = vpack.c.bf16 %v642, %v641
      %v665 = vpack.c.bf16 %v644, %v643
      %v666 = vpack.c.bf16 %v646, %v645
      %v667 = vpack.c.bf16 %v648, %v647
      %v668 = vpack.c.bf16 %v650, %v649
      %v669 = vpack.c.bf16 %v652, %v651
      %v670 = vpack.c.bf16 %v654, %v653
      %v687 = vunpack.c.l.b16 %v655
      %v688 = vunpack.c.h.b16 %v655
      %v689 = vunpack.c.l.b16 %v656
      %v690 = vunpack.c.h.b16 %v656
      %v691 = vunpack.c.l.b16 %v657
      %v692 = vunpack.c.h.b16 %v657
      %v693 = vunpack.c.l.b16 %v658
      %v694 = vunpack.c.h.b16 %v658
      %v695 = vunpack.c.l.b16 %v659
      %v696 = vunpack.c.h.b16 %v659
      %v697 = vunpack.c.l.b16 %v660
      %v698 = vunpack.c.h.b16 %v660
      %v699 = vunpack.c.l.b16 %v661
      %v700 = vunpack.c.h.b16 %v661
      %v701 = vunpack.c.l.b16 %v662
      %v702 = vunpack.c.h.b16 %v662
      %v703 = vunpack.c.l.b16 %v663
      %v704 = vunpack.c.h.b16 %v663
      %v705 = vunpack.c.l.b16 %v664
      %v706 = vunpack.c.h.b16 %v664
      %v707 = vunpack.c.l.b16 %v665
      %v708 = vunpack.c.h.b16 %v665
      %v709 = vunpack.c.l.b16 %v666
      %v710 = vunpack.c.h.b16 %v666
      %v711 = vunpack.c.l.b16 %v667
      %v712 = vunpack.c.h.b16 %v667
      %v713 = vunpack.c.l.b16 %v668
      %v714 = vunpack.c.h.b16 %v668
      %v715 = vunpack.c.l.b16 %v669
      %v716 = vunpack.c.h.b16 %v669
      %v717 = vunpack.c.l.b16 %v670
      %v718 = vunpack.c.h.b16 %v670
      %v719 = vpack.c.b16 %v687, %v687
      %v720 = vpack.c.b16 %v688, %v688
      %v721 = vpack.c.b16 %v689, %v689
      %v722 = vpack.c.b16 %v690, %v690
      %v723 = vpack.c.b16 %v691, %v691
      %v724 = vpack.c.b16 %v692, %v692
      %v725 = vpack.c.b16 %v693, %v693
      %v726 = vpack.c.b16 %v694, %v694
      %v727 = vpack.c.b16 %v695, %v695
      %v728 = vpack.c.b16 %v696, %v696
      %v729 = vpack.c.b16 %v697, %v697
      %v730 = vpack.c.b16 %v698, %v698
      %v731 = vpack.c.b16 %v699, %v699
      %v732 = vpack.c.b16 %v700, %v700
      %v733 = vpack.c.b16 %v701, %v701
      %v734 = vpack.c.b16 %v702, %v702
      %v735 = vpack.c.b16 %v703, %v703
      %v736 = vpack.c.b16 %v704, %v704
      %v737 = vpack.c.b16 %v705, %v705
      %v738 = vpack.c.b16 %v706, %v706
      %v739 = vpack.c.b16 %v707, %v707
      %v740 = vpack.c.b16 %v708, %v708
      %v741 = vpack.c.b16 %v709, %v709
      %v742 = vpack.c.b16 %v710, %v710
      %v743 = vpack.c.b16 %v711, %v711
      %v744 = vpack.c.b16 %v712, %v712
      %v745 = vpack.c.b16 %v713, %v713
      %v746 = vpack.c.b16 %v714, %v714
      %v747 = vpack.c.b16 %v715, %v715
      %v748 = vpack.c.b16 %v716, %v716
      %v749 = vpack.c.b16 %v717, %v717
      %v750 = vpack.c.b16 %v718, %v718
      %vm783 = vcmask 257024
      %784 = vst.msk [vmem:[%s197] sm:$0xf] %vm783, %v719
      %785 = vst.msk [vmem:[%s197 + $0x4] sm:$0xf] %vm783, %v720
      %786 = vst.msk [vmem:[%s197 + $0x8] sm:$0xf] %vm783, %v721
      %787 = vst.msk [vmem:[%s197 + $0xc] sm:$0xf] %vm783, %v722
      %788 = vst.msk [vmem:[%s197 + $0x10] sm:$0xf] %vm783, %v723
      %789 = vst.msk [vmem:[%s197 + $0x14] sm:$0xf] %vm783, %v724
      %790 = vst.msk [vmem:[%s197 + $0x18] sm:$0xf] %vm783, %v725
      %791 = vst.msk [vmem:[%s197 + $0x1c] sm:$0xf] %vm783, %v726
      %792 = vst.msk [vmem:[%s197 + $0x20] sm:$0xf] %vm783, %v727
      %793 = vst.msk [vmem:[%s197 + $0x24] sm:$0xf] %vm783, %v728
      %794 = vst.msk [vmem:[%s197 + $0x28] sm:$0xf] %vm783, %v729
      %795 = vst.msk [vmem:[%s197 + $0x2c] sm:$0xf] %vm783, %v730
      %796 = vst.msk [vmem:[%s197 + $0x30] sm:$0xf] %vm783, %v731
      %797 = vst.msk [vmem:[%s197 + $0x34] sm:$0xf] %vm783, %v732
      %798 = vst.msk [vmem:[%s197 + $0x38] sm:$0xf] %vm783, %v733
      %799 = vst.msk [vmem:[%s197 + $0x3c] sm:$0xf] %vm783, %v734
      %800 = vst.msk [vmem:[%s197 + $0x40] sm:$0xf] %vm783, %v735
      %801 = vst.msk [vmem:[%s197 + $0x44] sm:$0xf] %vm783, %v736
      %802 = vst.msk [vmem:[%s197 + $0x48] sm:$0xf] %vm783, %v737
      %803 = vst.msk [vmem:[%s197 + $0x4c] sm:$0xf] %vm783, %v738
      %804 = vst.msk [vmem:[%s197 + $0x50] sm:$0xf] %vm783, %v739
      %805 = vst.msk [vmem:[%s197 + $0x54] sm:$0xf] %vm783, %v740
      %806 = vst.msk [vmem:[%s197 + $0x58] sm:$0xf] %vm783, %v741
      %807 = vst.msk [vmem:[%s197 + $0x5c] sm:$0xf] %vm783, %v742
      %808 = vst.msk [vmem:[%s197 + $0x60] sm:$0xf] %vm783, %v743
      %809 = vst.msk [vmem:[%s197 + $0x64] sm:$0xf] %vm783, %v744
      %810 = vst.msk [vmem:[%s197 + $0x68] sm:$0xf] %vm783, %v745
      %811 = vst.msk [vmem:[%s197 + $0x6c] sm:$0xf] %vm783, %v746
      %812 = vst.msk [vmem:[%s197 + $0x70] sm:$0xf] %vm783, %v747
      %813 = vst.msk [vmem:[%s197 + $0x74] sm:$0xf] %vm783, %v748
      %814 = vst.msk [vmem:[%s197 + $0x78] sm:$0xf] %vm783, %v749
      %815 = vst.msk [vmem:[%s197 + $0x7c] sm:$0xf] %vm783, %v750
      %p816 = scmp.lt.s32.totalorder %s15, 1
      %s817 = scalar_select %p816, %s15, 1
      %s818 = smul.addr %s817, 32
      %s819 = smul.addr %s818, 4
      %s820 = scalar_lea.vmem %s4, %s819
      // Predicated region
      $region37: #{drunet_var_forward.13} parent=35 // pred_check
        %p821 = pneg %p122
      $region38: #{drunet_var_forward.13} parent=35 // pred_check_branch
        %823 = sbr.rel (%p821) target = $region40
      $region39: #{drunet_var_forward.13} parent=35 // pred_region
        _
      $region40: #{drunet_var_forward.13} parent=35 // pred_fallthru
        _
    $region36: #{drunet_var_forward.13} parent=5 // pred_fallthru
      _
    %p824 = scmp.le.s32.totalorder 2, %s10
    // Predicated region
    $region41: #{drunet_var_forward.13} parent=5 // pred_check
      %p825 = pneg %p824
    $region42: #{drunet_var_forward.13} parent=5 // pred_check_branch
      %827 = sbr.rel (%p825) target = $region44
    $region43: #{drunet_var_forward.13} parent=5 // pred_region
      %s828 = ssub.s32 %s10, 2
      // Predicated region
      $region45: #{drunet_var_forward.13} parent=43 // pred_check
        %p829 = pneg %p128
      $region46: #{drunet_var_forward.13} parent=43 // pred_check_branch
        %831 = sbr.rel (%p829) target = $region48
      $region47: #{drunet_var_forward.13} parent=43 // pred_region
        %p832 = scmp.lt.s32.totalorder %s16, 1
        %s833 = scalar_select %p832, %s16, 1
        %s834 = smul.addr %s833, 32
        %s835 = smul.addr %s834, 4
        %s836 = scalar_lea.vmem %s4, %s835
      $region48: #{drunet_var_forward.13} parent=43 // pred_fallthru
        _
    $region44: #{drunet_var_forward.13} parent=5 // pred_fallthru
      _
  $region6: #{drunet_var_forward.13} parent=0 // loop_footer
    %s14 = sadd.s32 1, %s10
  $region7: #{drunet_var_forward.13} parent=0 // loop_footer_branch
    %9 = sbr.rel target = $region3
  $region8: #{drunet_var_forward.13} parent=0 // loop_exit
    _

// kernel: drunet_var_forward.14
$region0: #{drunet_var_forward.14}
  #allocation0 [shape = 'u32[]', space=smem, size = 0x4, offset = 0x4, fixed_abs, tag = 'smem constant byte address 0x4 - core index']
  #allocation1 [shape = 'u32[144,128]{1,0:T(1,128)}', space=vmem, size = 0x12000, scoped, tag = 'internal scratch']
  %s0 = inlined_call_operand.vmem [shape: bf16[2,288,96], index: 0, kind: input, shape index: {}]
  %s1 = inlined_call_operand.vmem [shape: bf16[3,96,32], index: 1, kind: input, shape index: {}]
  %s2 = inlined_call_operand.vmem [shape: f32[1,32], index: 2, kind: input, shape index: {}]
  %s3 = inlined_call_operand.vmem [shape: f32[1,32], index: 3, kind: input, shape index: {}]
  %s4 = inlined_call_operand.vmem [shape: bf16[2,256,32], index: 4, kind: output, shape index: {}]
  %s5 = sld [smem:[#allocation0]]
  $region49: #{drunet_var_forward.14} parent=0
    _
  %s7 = ssub.s32 1, %s5
  %s8 = scalar_select 0, %s7, %s5
  loop: start=0, step=1, limit=4
  $region2: #{drunet_var_forward.14} parent=0 // loop_pre_header
    _
  $region3: #{drunet_var_forward.14} parent=0 // loop_header
    %s10 = sphi 0, %s14
    %p11 = scmp.ge.s32.totalorder %s10, 4
    %s20 = sphi 0, %s22
    %s23 = sphi 0, %s20
    %s24 = sphi 0, %s23
    %s40 = sphi 0, %s24
    %s44 = sphi 0, %s44
    %s46 = sphi 0, %s44
    %s47 = sphi 0, %s46
    %s61 = sphi 0, %s47
    %s65 = sphi 0, %s65
    %s67 = sphi 0, %s65
    %s68 = sphi 0, %s67
    %s82 = sphi 0, %s68
    %s86 = sphi 0, %s86
    %s88 = sphi 0, %s86
    %s89 = sphi 0, %s88
    %s103 = sphi 0, %s89
    %s109 = sphi 0, %s111
    %s112 = sphi 0, %s109
    %s113 = sphi 0, %s112
    %s129 = sphi 0, %s113
  $region4: #{drunet_var_forward.14} parent=0 // loop_header_branch
    %13 = sbr.rel (%p11) target = $region8
  $region5: #{drunet_var_forward.14} parent=0 // loop_body
    %s15 = ssub.s32 %s10, 1
    %s16 = ssub.s32 %s10, 2
    %s17 = sadd.s32 %s10, 1
    %s18 = ssub.s32 %s10, %s17
    %p19 = scmp.eq.s32.totalorder %s18, 0
    %s21 = sadd.s32 %s20, 1
    %s22 = scalar_select %p19, %s20, %s21
    %p25 = pneg %p19
    %p26 = scmp.eq.s32.totalorder %s10, 1
    %p27 = por %p25, %p26
    %p28 = scmp.ne.s32.totalorder %s20, %s23
    %p29 = scmp.eq.s32.totalorder %s10, 0
    %p30 = por %p28, %p29
    %p31 = scmp.ne.s32.totalorder %s20, %s23
    %p32 = scmp.eq.s32.totalorder %s15, 1
    %p33 = por %p31, %p32
    %p34 = scmp.ne.s32.totalorder %s23, %s24
    %p35 = scmp.eq.s32.totalorder %s15, 0
    %p36 = por %p34, %p35
    %p37 = scmp.ne.s32.totalorder %s23, %s24
    %p38 = scmp.eq.s32.totalorder %s16, 1
    %p39 = por %p37, %p38
    %p41 = scmp.ne.s32.totalorder %s24, %s40
    %p42 = scmp.eq.s32.totalorder %s16, 0
    %p43 = por %p41, %p42
    %s45 = sadd.s32 %s44, 1
    %p48 = scmp.eq.s32.totalorder %s10, 1
    %p49 = scmp.ne.s32.totalorder %s44, %s46
    %p50 = scmp.eq.s32.totalorder %s10, 0
    %p51 = por %p49, %p50
    %p52 = scmp.ne.s32.totalorder %s44, %s46
    %p53 = scmp.eq.s32.totalorder %s15, 1
    %p54 = por %p52, %p53
    %p55 = scmp.ne.s32.totalorder %s46, %s47
    %p56 = scmp.eq.s32.totalorder %s15, 0
    %p57 = por %p55, %p56
    %p58 = scmp.ne.s32.totalorder %s46, %s47
    %p59 = scmp.eq.s32.totalorder %s16, 1
    %p60 = por %p58, %p59
    %p62 = scmp.ne.s32.totalorder %s47, %s61
    %p63 = scmp.eq.s32.totalorder %s16, 0
    %p64 = por %p62, %p63
    %s66 = sadd.s32 %s65, 1
    %p69 = scmp.eq.s32.totalorder %s10, 1
    %p70 = scmp.ne.s32.totalorder %s65, %s67
    %p71 = scmp.eq.s32.totalorder %s10, 0
    %p72 = por %p70, %p71
    %p73 = scmp.ne.s32.totalorder %s65, %s67
    %p74 = scmp.eq.s32.totalorder %s15, 1
    %p75 = por %p73, %p74
    %p76 = scmp.ne.s32.totalorder %s67, %s68
    %p77 = scmp.eq.s32.totalorder %s15, 0
    %p78 = por %p76, %p77
    %p79 = scmp.ne.s32.totalorder %s67, %s68
    %p80 = scmp.eq.s32.totalorder %s16, 1
    %p81 = por %p79, %p80
    %p83 = scmp.ne.s32.totalorder %s68, %s82
    %p84 = scmp.eq.s32.totalorder %s16, 0
    %p85 = por %p83, %p84
    %s87 = sadd.s32 %s86, 1
    %p90 = scmp.eq.s32.totalorder %s10, 1
    %p91 = scmp.ne.s32.totalorder %s86, %s88
    %p92 = scmp.eq.s32.totalorder %s10, 0
    %p93 = por %p91, %p92
    %p94 = scmp.ne.s32.totalorder %s86, %s88
    %p95 = scmp.eq.s32.totalorder %s15, 1
    %p96 = por %p94, %p95
    %p97 = scmp.ne.s32.totalorder %s88, %s89
    %p98 = scmp.eq.s32.totalorder %s15, 0
    %p99 = por %p97, %p98
    %p100 = scmp.ne.s32.totalorder %s88, %s89
    %p101 = scmp.eq.s32.totalorder %s16, 1
    %p102 = por %p100, %p101
    %p104 = scmp.ne.s32.totalorder %s89, %s103
    %p105 = scmp.eq.s32.totalorder %s16, 0
    %p106 = por %p104, %p105
    %s107 = ssub.s32 %s10, %s17
    %p108 = scmp.eq.s32.totalorder %s107, 0
    %s110 = sadd.s32 %s109, 1
    %s111 = scalar_select %p108, %s109, %s110
    %p114 = pneg %p108
    %p115 = scmp.eq.s32.totalorder %s10, 1
    %p116 = por %p114, %p115
    %p117 = scmp.ne.s32.totalorder %s109, %s112
    %p118 = scmp.eq.s32.totalorder %s10, 0
    %p119 = por %p117, %p118
    %p120 = scmp.ne.s32.totalorder %s109, %s112
    %p121 = scmp.eq.s32.totalorder %s15, 1
    %p122 = por %p120, %p121
    %p123 = scmp.ne.s32.totalorder %s112, %s113
    %p124 = scmp.eq.s32.totalorder %s15, 0
    %p125 = por %p123, %p124
    %p126 = scmp.ne.s32.totalorder %s112, %s113
    %p127 = scmp.eq.s32.totalorder %s16, 1
    %p128 = por %p126, %p127
    %p130 = scmp.ne.s32.totalorder %s113, %s129
    %p131 = scmp.eq.s32.totalorder %s16, 0
    %p132 = por %p130, %p131
    %p133 = scmp.le.s32.totalorder 1, %s10
    %p134 = scmp.lt.s32.totalorder %s10, 3
    %p135 = pnand %p133, %p134
    %p136 = pneg %p135
    // Predicated region
    $region9: #{drunet_var_forward.14} parent=5 // pred_check
      _
    $region10: #{drunet_var_forward.14} parent=5 // pred_check_branch
      %138 = sbr.rel (%p135) target = $region12
    $region11: #{drunet_var_forward.14} parent=5 // pred_region
      %s139 = ssub.s32 %s10, 1
      // Predicated region
      $region13: #{drunet_var_forward.14} parent=11 // pred_check
        %p140 = pneg %p57
      $region14: #{drunet_var_forward.14} parent=11 // pred_check_branch
        %142 = sbr.rel (%p140) target = $region16
      $region15: #{drunet_var_forward.14} parent=11 // pred_region
        _
      $region16: #{drunet_var_forward.14} parent=11 // pred_fallthru
        _
      // Predicated region
      $region17: #{drunet_var_forward.14} parent=11 // pred_check
        %p143 = pneg %p78
      $region18: #{drunet_var_forward.14} parent=11 // pred_check_branch
        %145 = sbr.rel (%p143) target = $region20
      $region19: #{drunet_var_forward.14} parent=11 // pred_region
        _
      $region20: #{drunet_var_forward.14} parent=11 // pred_fallthru
        _
      // Predicated region
      $region21: #{drunet_var_forward.14} parent=11 // pred_check
        %p146 = pneg %p99
      $region22: #{drunet_var_forward.14} parent=11 // pred_check_branch
        %148 = sbr.rel (%p146) target = $region24
      $region23: #{drunet_var_forward.14} parent=11 // pred_region
        _
      $region24: #{drunet_var_forward.14} parent=11 // pred_fallthru
        _
    $region12: #{drunet_var_forward.14} parent=5 // pred_fallthru
      _
    %p149 = scmp.lt.s32.totalorder %s10, 2
    // Predicated region
    $region25: #{drunet_var_forward.14} parent=5 // pred_check
      %p150 = pneg %p149
    $region26: #{drunet_var_forward.14} parent=5 // pred_check_branch
      %152 = sbr.rel (%p150) target = $region28
    $region27: #{drunet_var_forward.14} parent=5 // pred_region
      // Predicated region
      $region29: #{drunet_var_forward.14} parent=27 // pred_check
        %p153 = pneg %p30
      $region30: #{drunet_var_forward.14} parent=27 // pred_check_branch
        %155 = sbr.rel (%p153) target = $region32
      $region31: #{drunet_var_forward.14} parent=27 // pred_region
        %p156 = scmp.lt.s32.totalorder %s10, 1
        %s157 = scalar_select %p156, %s10, 1
        %s158 = smul.addr %s157, 36
        %s159 = smul.addr %s158, 4
        %s160 = scalar_lea.vmem %s0, %s159
      $region32: #{drunet_var_forward.14} parent=27 // pred_fallthru
        _
    $region28: #{drunet_var_forward.14} parent=5 // pred_fallthru
      _
    %p161 = scmp.le.s32.totalorder 1, %s10
    %p162 = scmp.lt.s32.totalorder %s10, 3
    %p163 = pnand %p161, %p162
    %p164 = pneg %p163
    // Predicated region
    $region33: #{drunet_var_forward.14} parent=5 // pred_check
      _
    $region34: #{drunet_var_forward.14} parent=5 // pred_check_branch
      %166 = sbr.rel (%p163) target = $region36
    $region35: #{drunet_var_forward.14} parent=5 // pred_region
      %s167 = ssub.s32 %s10, 1
      %p168 = scmp.lt.s32.totalorder %s15, 1
      %s169 = scalar_select %p168, %s15, 1
      %s170 = smul.addr %s169, 36
      %s171 = smul.addr %s170, 4
      %s172 = scalar_lea.vmem %s0, %s171
      %p173 = pneg %p36
      %p174 = pneg %p33
      %p175 = pneg %p57
      %p176 = pneg %p54
      %p177 = pneg %p78
      %p178 = pneg %p75
      %p179 = pneg %p99
      %p180 = pneg %p96
      %p181 = pneg %p125
      %p182 = pneg %p122
      %p183 = scmp.lt.s32.totalorder %s15, 1
      %s184 = scalar_select %p183, %s15, 1
      %s185 = smul.addr %s184, 32
      %s186 = smul.addr %s185, 4
      %s187 = scalar_lea.vmem %s4, %s186
      %p188 = scmp.lt.s32.totalorder %s15, 1
      %s189 = scalar_select %p188, %s15, 1
      %s190 = smul.addr %s189, 36
      %s191 = smul.addr %s190, 4
      %s192 = scalar_lea.vmem %s0, %s191
      %p193 = scmp.lt.s32.totalorder %s15, 1
      %s194 = scalar_select %p193, %s15, 1
      %s195 = smul.addr %s194, 32
      %s196 = smul.addr %s195, 4
      %s197 = scalar_lea.vmem %s4, %s196
      %v199 = vld [vmem:[%s192] sm:$0xf]
      %v200 = vld [vmem:[%s192 + $0x4] sm:$0xf]
      %v201 = vld [vmem:[%s192 + $0x8] sm:$0xf]
      %v202 = vld [vmem:[%s192 + $0xc] sm:$0xf]
      %v203 = vld [vmem:[%s192 + $0x10] sm:$0xf]
      %v204 = vld [vmem:[%s192 + $0x14] sm:$0xf]
      %v205 = vld [vmem:[%s192 + $0x18] sm:$0xf]
      %v206 = vld [vmem:[%s192 + $0x1c] sm:$0xf]
      %v207 = vld [vmem:[%s192 + $0x20] sm:$0xf]
      %v208 = vld [vmem:[%s192 + $0x24] sm:$0xf]
      %v209 = vld [vmem:[%s192 + $0x28] sm:$0xf]
      %v210 = vld [vmem:[%s192 + $0x2c] sm:$0xf]
      %v211 = vld [vmem:[%s192 + $0x30] sm:$0xf]
      %v212 = vld [vmem:[%s192 + $0x34] sm:$0xf]
      %v213 = vld [vmem:[%s192 + $0x38] sm:$0xf]
      %v214 = vld [vmem:[%s192 + $0x3c] sm:$0xf]
      %v215 = vld [vmem:[%s192 + $0x40] sm:$0xf]
      %v216 = vld [vmem:[%s192 + $0x44] sm:$0xf]
      %v217 = vld [vmem:[%s192 + $0x48] sm:$0xf]
      %v218 = vld [vmem:[%s192 + $0x4c] sm:$0xf]
      %v219 = vld [vmem:[%s192 + $0x50] sm:$0xf]
      %v220 = vld [vmem:[%s192 + $0x54] sm:$0xf]
      %v221 = vld [vmem:[%s192 + $0x58] sm:$0xf]
      %v222 = vld [vmem:[%s192 + $0x5c] sm:$0xf]
      %v223 = vld [vmem:[%s192 + $0x60] sm:$0xf]
      %v224 = vld [vmem:[%s192 + $0x64] sm:$0xf]
      %v225 = vld [vmem:[%s192 + $0x68] sm:$0xf]
      %v226 = vld [vmem:[%s192 + $0x6c] sm:$0xf]
      %v227 = vld [vmem:[%s192 + $0x70] sm:$0xf]
      %v228 = vld [vmem:[%s192 + $0x74] sm:$0xf]
      %v229 = vld [vmem:[%s192 + $0x78] sm:$0xf]
      %v230 = vld [vmem:[%s192 + $0x7c] sm:$0xf]
      %v231 = vld [vmem:[%s1] sm:$0xf]
      %v232 = vld [vmem:[%s1 + $0x4] sm:$0xf]
      %v233 = vld [vmem:[%s1 + $0x8] sm:$0xf]
      %v234 = vld [vmem:[%s1 + $0xc] sm:$0xf]
      %v235 = vld [vmem:[%s1 + $0x10] sm:$0xf]
      %v236 = vld [vmem:[%s1 + $0x14] sm:$0xf]
      %v237 = vld [vmem:[%s1 + $0x18] sm:$0xf]
      %v238 = vld [vmem:[%s1 + $0x1c] sm:$0xf]
      %v239 = vld [vmem:[%s1 + $0x20] sm:$0xf]
      %v240 = vld [vmem:[%s1 + $0x24] sm:$0xf]
      %v241 = vld [vmem:[%s1 + $0x28] sm:$0xf]
      %v242 = vld [vmem:[%s1 + $0x2c] sm:$0xf]
      %v243 = vld [vmem:[%s192 + $0x80] sm:$0xf]
      %v244 = vld [vmem:[%s192 + $0x84] sm:$0xf]
      %s245 = scalar_lea.vmem %s1, 48
      %v246 = vld [vmem:[%s245] sm:$0xf]
      %v247 = vld [vmem:[%s245 + $0x4] sm:$0xf]
      %v248 = vld [vmem:[%s245 + $0x8] sm:$0xf]
      %v249 = vld [vmem:[%s245 + $0xc] sm:$0xf]
      %v250 = vld [vmem:[%s245 + $0x10] sm:$0xf]
      %v251 = vld [vmem:[%s245 + $0x14] sm:$0xf]
      %v252 = vld [vmem:[%s245 + $0x18] sm:$0xf]
      %v253 = vld [vmem:[%s245 + $0x1c] sm:$0xf]
      %v254 = vld [vmem:[%s245 + $0x20] sm:$0xf]
      %v255 = vld [vmem:[%s245 + $0x24] sm:$0xf]
      %v256 = vld [vmem:[%s245 + $0x28] sm:$0xf]
      %v257 = vld [vmem:[%s245 + $0x2c] sm:$0xf]
      %v290 = vunpack.c.l.b16 %v201
      %v291 = vunpack.c.l.b16 %v202
      %v292 = vunpack.c.l.b16 %v203
      %v293 = vunpack.c.l.b16 %v204
      %v294 = vunpack.c.l.b16 %v205
      %v295 = vunpack.c.l.b16 %v206
      %v296 = vunpack.c.l.b16 %v207
      %v297 = vunpack.c.l.b16 %v208
      %v298 = vunpack.c.l.b16 %v209
      %v299 = vunpack.c.l.b16 %v210
      %v300 = vunpack.c.l.b16 %v211
      %v301 = vunpack.c.l.b16 %v212
      %v302 = vunpack.c.l.b16 %v213
      %v303 = vunpack.c.l.b16 %v214
      %v304 = vunpack.c.l.b16 %v215
      %v305 = vunpack.c.l.b16 %v216
      %v306 = vunpack.c.l.b16 %v217
      %v307 = vunpack.c.l.b16 %v218
      %v308 = vunpack.c.l.b16 %v219
      %v309 = vunpack.c.l.b16 %v220
      %v310 = vunpack.c.l.b16 %v221
      %v311 = vunpack.c.l.b16 %v222
      %v312 = vunpack.c.l.b16 %v223
      %v313 = vunpack.c.l.b16 %v224
      %v314 = vunpack.c.l.b16 %v225
      %v315 = vunpack.c.l.b16 %v226
      %v316 = vunpack.c.l.b16 %v227
      %v317 = vunpack.c.l.b16 %v228
      %v318 = vunpack.c.l.b16 %v229
      %v319 = vunpack.c.l.b16 %v230
      %v320 = vunpack.c.l.b16 %v243
      %v321 = vunpack.c.l.b16 %v244
      %v322 = vpack.c.b16 %v291, %v290
      %v323 = vpack.c.b16 %v293, %v292
      %v324 = vpack.c.b16 %v295, %v294
      %v325 = vpack.c.b16 %v297, %v296
      %v326 = vpack.c.b16 %v299, %v298
      %v327 = vpack.c.b16 %v301, %v300
      %v328 = vpack.c.b16 %v303, %v302
      %v329 = vpack.c.b16 %v305, %v304
      %v330 = vpack.c.b16 %v307, %v306
      %v331 = vpack.c.b16 %v309, %v308
      %v332 = vpack.c.b16 %v311, %v310
      %v333 = vpack.c.b16 %v313, %v312
      %v334 = vpack.c.b16 %v315, %v314
      %v335 = vpack.c.b16 %v317, %v316
      %v336 = vpack.c.b16 %v319, %v318
      %v337 = vpack.c.b16 %v321, %v320
      %v350 = vunpack.c.l.b16 %v246
      %v351 = vunpack.c.l.b16 %v247
      %v352 = vunpack.c.l.b16 %v248
      %v353 = vunpack.c.l.b16 %v249
      %v354 = vunpack.c.l.b16 %v250
      %v355 = vunpack.c.l.b16 %v251
      %v356 = vunpack.c.l.b16 %v252
      %v357 = vunpack.c.l.b16 %v253
      %v358 = vunpack.c.l.b16 %v254
      %v359 = vunpack.c.l.b16 %v255
      %v360 = vunpack.c.l.b16 %v256
      %v361 = vunpack.c.l.b16 %v257
      %v362 = vpack.c.b16 %v351, %v350
      %v363 = vpack.c.b16 %v353, %v352
      %v364 = vpack.c.b16 %v355, %v354
      %v365 = vpack.c.b16 %v357, %v356
      %v366 = vpack.c.b16 %v359, %v358
      %v367 = vpack.c.b16 %v361, %v360
      %vm374 = vcmask 785408
      %v376 = vsel %vm374, %v322, 0
      %v379 = vsel %vm374, %v323, 0
      %v382 = vsel %vm374, %v324, 0
      %v385 = vsel %vm374, %v325, 0
      %v388 = vsel %vm374, %v326, 0
      %v391 = vsel %vm374, %v327, 0
      %v394 = vsel %vm374, %v328, 0
      %v397 = vsel %vm374, %v329, 0
      %v400 = vsel %vm374, %v330, 0
      %v403 = vsel %vm374, %v331, 0
      %v406 = vsel %vm374, %v332, 0
      %v409 = vsel %vm374, %v333, 0
      %v412 = vsel %vm374, %v334, 0
      %v415 = vsel %vm374, %v335, 0
      %v418 = vsel %vm374, %v336, 0
      %v421 = vsel %vm374, %v337, 0
      %423 = vmatprep.subr.bf16.mxu0 0
      %424 = vmatpush1.bf16.msra.mxu0 0
      %425 = vmatprep.subr.bf16.mxu0 0
      %426 = vmatpush1.bf16.msra.mxu0 0
      %427 = vmatprep.subr.bf16.mxu0 0
      %428 = vmatpush1.bf16.msra.mxu0 %v367
      %429 = vmatprep.subr.bf16.mxu0 0
      %430 = vmatpush1.bf16.msra.mxu0 %v366
      %431 = vmatprep.subr.bf16.mxu0 0
      %432 = vmatpush1.bf16.msra.mxu0 %v365
      %433 = vmatprep.subr.bf16.mxu0 0
      %434 = vmatpush1.bf16.msra.mxu0 %v364
      %435 = vmatprep.subr.bf16.mxu0 0
      %436 = vmatpush1.bf16.msra.mxu0 %v363
      %437 = vmatprep.subr.bf16.mxu0 0
      %438 = vmatpush1.bf16.msra.mxu0 %v362
      %439 = vmatprep.subr.bf16.mxu0 0
      %440 = vmatpush2.bf16.msra.mxu0 0
      %441 = vmatprep.subr.bf16.mxu0 0
      %442 = vmatpush2.bf16.msra.mxu0 0
      %443 = vmatprep.subr.bf16.mxu0 0
      %444 = vmatpush2.bf16.msra.mxu0 0
      %445 = vmatprep.subr.bf16.mxu0 0
      %446 = vmatpush2.bf16.msra.mxu0 0
      %447 = vmatprep.subr.bf16.mxu0 0
      %448 = vmatpush2.bf16.msra.mxu0 0
      %449 = vmatprep.subr.bf16.mxu0 0
      %450 = vmatpush2.bf16.msra.mxu0 0
      %451 = vmatprep.subr.bf16.mxu0 0
      %452 = vmatpush2.bf16.msra.mxu0 0
      %453 = vmatprep.subr.bf16.mxu0 0
      %454 = vmatpush2.bf16.msra.mxu0 0
      %455 = vmatprep.mubr.bf16.mxu0 0
      %456 = vmatmul.mubr.bf16.gmra.mxu0 %v376
      %v457 = vpop.f32.mrf.mxu0
      %v458 = vadd.f32 0.0, %v457
      %v459 = vpop.f32.mrf.mxu0
      %v460 = vpop.f32.mrf.mxu0
      %v461 = vadd.f32 0.0, %v460
      %v462 = vpop.f32.mrf.mxu0
      %463 = vmatprep.mubr.bf16.mxu0 0
      %464 = vmatmul.mubr.bf16.gmra.mxu0 %v379
      %v465 = vpop.f32.mrf.mxu0
      %v466 = vadd.f32 0.0, %v465
      %v467 = vpop.f32.mrf.mxu0
      %v468 = vpop.f32.mrf.mxu0
      %v469 = vadd.f32 0.0, %v468
      %v470 = vpop.f32.mrf.mxu0
      %471 = vmatprep.mubr.bf16.mxu0 0
      %472 = vmatmul.mubr.bf16.gmra.mxu0 %v382
      %v473 = vpop.f32.mrf.mxu0
      %v474 = vadd.f32 0.0, %v473
      %v475 = vpop.f32.mrf.mxu0
      %v476 = vpop.f32.mrf.mxu0
      %v477 = vadd.f32 0.0, %v476
      %v478 = vpop.f32.mrf.mxu0
      %479 = vmatprep.mubr.bf16.mxu0 0
      %480 = vmatmul.mubr.bf16.gmra.mxu0 %v385
      %v481 = vpop.f32.mrf.mxu0
      %v482 = vadd.f32 0.0, %v481
      %v483 = vpop.f32.mrf.mxu0
      %v484 = vpop.f32.mrf.mxu0
      %v485 = vadd.f32 0.0, %v484
      %v486 = vpop.f32.mrf.mxu0
      %487 = vmatprep.mubr.bf16.mxu0 0
      %488 = vmatmul.mubr.bf16.gmra.mxu0 %v388
      %v489 = vpop.f32.mrf.mxu0
      %v490 = vadd.f32 0.0, %v489
      %v491 = vpop.f32.mrf.mxu0
      %v492 = vpop.f32.mrf.mxu0
      %v493 = vadd.f32 0.0, %v492
      %v494 = vpop.f32.mrf.mxu0
      %495 = vmatprep.mubr.bf16.mxu0 0
      %496 = vmatmul.mubr.bf16.gmra.mxu0 %v391
      %v497 = vpop.f32.mrf.mxu0
      %v498 = vadd.f32 0.0, %v497
      %v499 = vpop.f32.mrf.mxu0
      %v500 = vpop.f32.mrf.mxu0
      %v501 = vadd.f32 0.0, %v500
      %v502 = vpop.f32.mrf.mxu0
      %503 = vmatprep.mubr.bf16.mxu0 0
      %504 = vmatmul.mubr.bf16.gmra.mxu0 %v394
      %v505 = vpop.f32.mrf.mxu0
      %v506 = vadd.f32 0.0, %v505
      %v507 = vpop.f32.mrf.mxu0
      %v508 = vpop.f32.mrf.mxu0
      %v509 = vadd.f32 0.0, %v508
      %v510 = vpop.f32.mrf.mxu0
      %511 = vmatprep.mubr.bf16.mxu0 0
      %512 = vmatmul.mubr.bf16.gmra.mxu0 %v397
      %v513 = vpop.f32.mrf.mxu0
      %v514 = vadd.f32 0.0, %v513
      %v515 = vpop.f32.mrf.mxu0
      %v516 = vpop.f32.mrf.mxu0
      %v517 = vadd.f32 0.0, %v516
      %v518 = vpop.f32.mrf.mxu0
      %519 = vmatprep.mubr.bf16.mxu0 0
      %520 = vmatmul.mubr.bf16.gmra.mxu0 %v400
      %v521 = vpop.f32.mrf.mxu0
      %v522 = vadd.f32 0.0, %v521
      %v523 = vpop.f32.mrf.mxu0
      %v524 = vpop.f32.mrf.mxu0
      %v525 = vadd.f32 0.0, %v524
      %v526 = vpop.f32.mrf.mxu0
      %527 = vmatprep.mubr.bf16.mxu0 0
      %528 = vmatmul.mubr.bf16.gmra.mxu0 %v403
      %v529 = vpop.f32.mrf.mxu0
      %v530 = vadd.f32 0.0, %v529
      %v531 = vpop.f32.mrf.mxu0
      %v532 = vpop.f32.mrf.mxu0
      %v533 = vadd.f32 0.0, %v532
      %v534 = vpop.f32.mrf.mxu0
      %535 = vmatprep.mubr.bf16.mxu0 0
      %536 = vmatmul.mubr.bf16.gmra.mxu0 %v406
      %v537 = vpop.f32.mrf.mxu0
      %v538 = vadd.f32 0.0, %v537
      %v539 = vpop.f32.mrf.mxu0
      %v540 = vpop.f32.mrf.mxu0
      %v541 = vadd.f32 0.0, %v540
      %v542 = vpop.f32.mrf.mxu0
      %543 = vmatprep.mubr.bf16.mxu0 0
      %544 = vmatmul.mubr.bf16.gmra.mxu0 %v409
      %v545 = vpop.f32.mrf.mxu0
      %v546 = vadd.f32 0.0, %v545
      %v547 = vpop.f32.mrf.mxu0
      %v548 = vpop.f32.mrf.mxu0
      %v549 = vadd.f32 0.0, %v548
      %v550 = vpop.f32.mrf.mxu0
      %551 = vmatprep.mubr.bf16.mxu0 0
      %552 = vmatmul.mubr.bf16.gmra.mxu0 %v412
      %v553 = vpop.f32.mrf.mxu0
      %v554 = vadd.f32 0.0, %v553
      %v555 = vpop.f32.mrf.mxu0
      %v556 = vpop.f32.mrf.mxu0
      %v557 = vadd.f32 0.0, %v556
      %v558 = vpop.f32.mrf.mxu0
      %559 = vmatprep.mubr.bf16.mxu0 0
      %560 = vmatmul.mubr.bf16.gmra.mxu0 %v415
      %v561 = vpop.f32.mrf.mxu0
      %v562 = vadd.f32 0.0, %v561
      %v563 = vpop.f32.mrf.mxu0
      %v564 = vpop.f32.mrf.mxu0
      %v565 = vadd.f32 0.0, %v564
      %v566 = vpop.f32.mrf.mxu0
      %567 = vmatprep.mubr.bf16.mxu0 0
      %568 = vmatmul.mubr.bf16.gmra.mxu0 %v418
      %v569 = vpop.f32.mrf.mxu0
      %v570 = vadd.f32 0.0, %v569
      %v571 = vpop.f32.mrf.mxu0
      %v572 = vpop.f32.mrf.mxu0
      %v573 = vadd.f32 0.0, %v572
      %v574 = vpop.f32.mrf.mxu0
      %575 = vmatprep.mubr.bf16.mxu0 0
      %576 = vmatmul.mubr.bf16.gmra.mxu0 %v421
      %v577 = vpop.f32.mrf.mxu0
      %v578 = vadd.f32 0.0, %v577
      %v579 = vpop.f32.mrf.mxu0
      %v580 = vpop.f32.mrf.mxu0
      %v581 = vadd.f32 0.0, %v580
      %v582 = vpop.f32.mrf.mxu0
      %583 = vdwg.mxu0
      %v586 = vunpack.c.l.b16 %v199
      %v587 = vunpack.c.l.b16 %v200
      %v588 = vpack.c.b16 %v587, %v586
      %v601 = vunpack.c.l.b16 %v231
      %v602 = vunpack.c.l.b16 %v232
      %v603 = vunpack.c.l.b16 %v233
      %v604 = vunpack.c.l.b16 %v234
      %v605 = vunpack.c.l.b16 %v235
      %v606 = vunpack.c.l.b16 %v236
      %v607 = vunpack.c.l.b16 %v237
      %v608 = vunpack.c.l.b16 %v238
      %v609 = vunpack.c.l.b16 %v239
      %v610 = vunpack.c.l.b16 %v240
      %v611 = vunpack.c.l.b16 %v241
      %v612 = vunpack.c.l.b16 %v242
      %v613 = vpack.c.b16 %v602, %v601
      %v614 = vpack.c.b16 %v604, %v603
      %v615 = vpack.c.b16 %v606, %v605
      %v616 = vpack.c.b16 %v608, %v607
      %v617 = vpack.c.b16 %v610, %v609
      %v618 = vpack.c.b16 %v612, %v611
      %v626 = vsel %vm374, %v588, 0
      %628 = vmatprep.subr.bf16.mxu0 0
      %629 = vmatpush1.bf16.msra.mxu0 0
      %630 = vmatprep.subr.bf16.mxu0 0
      %631 = vmatpush1.bf16.msra.mxu0 0
      %632 = vmatprep.subr.bf16.mxu0 0
      %633 = vmatpush1.bf16.msra.mxu0 %v618
      %634 = vmatprep.subr.bf16.mxu0 0
      %635 = vmatpush1.bf16.msra.mxu0 %v617
      %636 = vmatprep.subr.bf16.mxu0 0
      %637 = vmatpush1.bf16.msra.mxu0 %v616
      %638 = vmatprep.subr.bf16.mxu0 0
      %639 = vmatpush1.bf16.msra.mxu0 %v615
      %640 = vmatprep.subr.bf16.mxu0 0
      %641 = vmatpush1.bf16.msra.mxu0 %v614
      %642 = vmatprep.subr.bf16.mxu0 0
      %643 = vmatpush1.bf16.msra.mxu0 %v613
      %644 = vmatprep.subr.bf16.mxu0 0
      %645 = vmatpush2.bf16.msra.mxu0 0
      %646 = vmatprep.subr.bf16.mxu0 0
      %647 = vmatpush2.bf16.msra.mxu0 0
      %648 = vmatprep.subr.bf16.mxu0 0
      %649 = vmatpush2.bf16.msra.mxu0 0
      %650 = vmatprep.subr.bf16.mxu0 0
      %651 = vmatpush2.bf16.msra.mxu0 0
      %652 = vmatprep.subr.bf16.mxu0 0
      %653 = vmatpush2.bf16.msra.mxu0 0
      %654 = vmatprep.subr.bf16.mxu0 0
      %655 = vmatpush2.bf16.msra.mxu0 0
      %656 = vmatprep.subr.bf16.mxu0 0
      %657 = vmatpush2.bf16.msra.mxu0 0
      %658 = vmatprep.subr.bf16.mxu0 0
      %659 = vmatpush2.bf16.msra.mxu0 0
      %660 = vmatprep.mubr.bf16.mxu0 0
      %661 = vmatmul.mubr.bf16.gmra.mxu0 %v626
      %v662 = vpop.f32.mrf.mxu0
      %v663 = vadd.f32 %v458, %v662
      %v664 = vpop.f32.mrf.mxu0
      %v665 = vpop.f32.mrf.mxu0
      %v666 = vadd.f32 %v461, %v665
      %v667 = vpop.f32.mrf.mxu0
      %668 = vmatprep.mubr.bf16.mxu0 0
      %669 = vmatmul.mubr.bf16.gmra.mxu0 %v376
      %v670 = vpop.f32.mrf.mxu0
      %v671 = vadd.f32 %v466, %v670
      %v672 = vpop.f32.mrf.mxu0
      %v673 = vpop.f32.mrf.mxu0
      %v674 = vadd.f32 %v469, %v673
      %v675 = vpop.f32.mrf.mxu0
      %676 = vmatprep.mubr.bf16.mxu0 0
      %677 = vmatmul.mubr.bf16.gmra.mxu0 %v379
      %v678 = vpop.f32.mrf.mxu0
      %v679 = vadd.f32 %v474, %v678
      %v680 = vpop.f32.mrf.mxu0
      %v681 = vpop.f32.mrf.mxu0
      %v682 = vadd.f32 %v477, %v681
      %v683 = vpop.f32.mrf.mxu0
      %684 = vmatprep.mubr.bf16.mxu0 0
      %685 = vmatmul.mubr.bf16.gmra.mxu0 %v382
      %v686 = vpop.f32.mrf.mxu0
      %v687 = vadd.f32 %v482, %v686
      %v688 = vpop.f32.mrf.mxu0
      %v689 = vpop.f32.mrf.mxu0
      %v690 = vadd.f32 %v485, %v689
      %v691 = vpop.f32.mrf.mxu0
      %692 = vmatprep.mubr.bf16.mxu0 0
      %693 = vmatmul.mubr.bf16.gmra.mxu0 %v385
      %v694 = vpop.f32.mrf.mxu0
      %v695 = vadd.f32 %v490, %v694
      %v696 = vpop.f32.mrf.mxu0
      %v697 = vpop.f32.mrf.mxu0
      %v698 = vadd.f32 %v493, %v697
      %v699 = vpop.f32.mrf.mxu0
      %700 = vmatprep.mubr.bf16.mxu0 0
      %701 = vmatmul.mubr.bf16.gmra.mxu0 %v388
      %v702 = vpop.f32.mrf.mxu0
      %v703 = vadd.f32 %v498, %v702
      %v704 = vpop.f32.mrf.mxu0
      %v705 = vpop.f32.mrf.mxu0
      %v706 = vadd.f32 %v501, %v705
      %v707 = vpop.f32.mrf.mxu0
      %708 = vmatprep.mubr.bf16.mxu0 0
      %709 = vmatmul.mubr.bf16.gmra.mxu0 %v391
      %v710 = vpop.f32.mrf.mxu0
      %v711 = vadd.f32 %v506, %v710
      %v712 = vpop.f32.mrf.mxu0
      %v713 = vpop.f32.mrf.mxu0
      %v714 = vadd.f32 %v509, %v713
      %v715 = vpop.f32.mrf.mxu0
      %716 = vmatprep.mubr.bf16.mxu0 0
      %717 = vmatmul.mubr.bf16.gmra.mxu0 %v394
      %v718 = vpop.f32.mrf.mxu0
      %v719 = vadd.f32 %v514, %v718
      %v720 = vpop.f32.mrf.mxu0
      %v721 = vpop.f32.mrf.mxu0
      %v722 = vadd.f32 %v517, %v721
      %v723 = vpop.f32.mrf.mxu0
      %724 = vmatprep.mubr.bf16.mxu0 0
      %725 = vmatmul.mubr.bf16.gmra.mxu0 %v397
      %v726 = vpop.f32.mrf.mxu0
      %v727 = vadd.f32 %v522, %v726
      %v728 = vpop.f32.mrf.mxu0
      %v729 = vpop.f32.mrf.mxu0
      %v730 = vadd.f32 %v525, %v729
      %v731 = vpop.f32.mrf.mxu0
      %732 = vmatprep.mubr.bf16.mxu0 0
      %733 = vmatmul.mubr.bf16.gmra.mxu0 %v400
      %v734 = vpop.f32.mrf.mxu0
      %v735 = vadd.f32 %v530, %v734
      %v736 = vpop.f32.mrf.mxu0
      %v737 = vpop.f32.mrf.mxu0
      %v738 = vadd.f32 %v533, %v737
      %v739 = vpop.f32.mrf.mxu0
      %740 = vmatprep.mubr.bf16.mxu0 0
      %741 = vmatmul.mubr.bf16.gmra.mxu0 %v403
      %v742 = vpop.f32.mrf.mxu0
      %v743 = vadd.f32 %v538, %v742
      %v744 = vpop.f32.mrf.mxu0
      %v745 = vpop.f32.mrf.mxu0
      %v746 = vadd.f32 %v541, %v745
      %v747 = vpop.f32.mrf.mxu0
      %748 = vmatprep.mubr.bf16.mxu0 0
      %749 = vmatmul.mubr.bf16.gmra.mxu0 %v406
      %v750 = vpop.f32.mrf.mxu0
      %v751 = vadd.f32 %v546, %v750
      %v752 = vpop.f32.mrf.mxu0
      %v753 = vpop.f32.mrf.mxu0
      %v754 = vadd.f32 %v549, %v753
      %v755 = vpop.f32.mrf.mxu0
      %756 = vmatprep.mubr.bf16.mxu0 0
      %757 = vmatmul.mubr.bf16.gmra.mxu0 %v409
      %v758 = vpop.f32.mrf.mxu0
      %v759 = vadd.f32 %v554, %v758
      %v760 = vpop.f32.mrf.mxu0
      %v761 = vpop.f32.mrf.mxu0
      %v762 = vadd.f32 %v557, %v761
      %v763 = vpop.f32.mrf.mxu0
      %764 = vmatprep.mubr.bf16.mxu0 0
      %765 = vmatmul.mubr.bf16.gmra.mxu0 %v412
      %v766 = vpop.f32.mrf.mxu0
      %v767 = vadd.f32 %v562, %v766
      %v768 = vpop.f32.mrf.mxu0
      %v769 = vpop.f32.mrf.mxu0
      %v770 = vadd.f32 %v565, %v769
      %v771 = vpop.f32.mrf.mxu0
      %772 = vmatprep.mubr.bf16.mxu0 0
      %773 = vmatmul.mubr.bf16.gmra.mxu0 %v415
      %v774 = vpop.f32.mrf.mxu0
      %v775 = vadd.f32 %v570, %v774
      %v776 = vpop.f32.mrf.mxu0
      %v777 = vpop.f32.mrf.mxu0
      %v778 = vadd.f32 %v573, %v777
      %v779 = vpop.f32.mrf.mxu0
      %780 = vmatprep.mubr.bf16.mxu0 0
      %781 = vmatmul.mubr.bf16.gmra.mxu0 %v418
      %v782 = vpop.f32.mrf.mxu0
      %v783 = vadd.f32 %v578, %v782
      %v784 = vpop.f32.mrf.mxu0
      %v785 = vpop.f32.mrf.mxu0
      %v786 = vadd.f32 %v581, %v785
      %v787 = vpop.f32.mrf.mxu0
      %788 = vdwg.mxu0
      %v789 = vld [vmem:[%s192 + $0x10] sm:$0xf]
      %v790 = vld [vmem:[%s192 + $0x14] sm:$0xf]
      %v791 = vld [vmem:[%s192 + $0x18] sm:$0xf]
      %v792 = vld [vmem:[%s192 + $0x1c] sm:$0xf]
      %v793 = vld [vmem:[%s192 + $0x20] sm:$0xf]
      %v794 = vld [vmem:[%s192 + $0x24] sm:$0xf]
      %v795 = vld [vmem:[%s192 + $0x28] sm:$0xf]
      %v796 = vld [vmem:[%s192 + $0x2c] sm:$0xf]
      %v797 = vld [vmem:[%s192 + $0x30] sm:$0xf]
      %v798 = vld [vmem:[%s192 + $0x34] sm:$0xf]
      %v799 = vld [vmem:[%s192 + $0x38] sm:$0xf]
      %v800 = vld [vmem:[%s192 + $0x3c] sm:$0xf]
      %v801 = vld [vmem:[%s192 + $0x40] sm:$0xf]
      %v802 = vld [vmem:[%s192 + $0x44] sm:$0xf]
      %v803 = vld [vmem:[%s192 + $0x48] sm:$0xf]
      %v804 = vld [vmem:[%s192 + $0x4c] sm:$0xf]
      %v805 = vld [vmem:[%s192 + $0x50] sm:$0xf]
      %v806 = vld [vmem:[%s192 + $0x54] sm:$0xf]
      %v807 = vld [vmem:[%s192 + $0x58] sm:$0xf]
      %v808 = vld [vmem:[%s192 + $0x5c] sm:$0xf]
      %v809 = vld [vmem:[%s192 + $0x60] sm:$0xf]
      %v810 = vld [vmem:[%s192 + $0x64] sm:$0xf]
      %v811 = vld [vmem:[%s192 + $0x68] sm:$0xf]
      %v812 = vld [vmem:[%s192 + $0x6c] sm:$0xf]
      %v813 = vld [vmem:[%s192 + $0x70] sm:$0xf]
      %v814 = vld [vmem:[%s192 + $0x74] sm:$0xf]
      %v815 = vld [vmem:[%s192 + $0x78] sm:$0xf]
      %v816 = vld [vmem:[%s192 + $0x7c] sm:$0xf]
      %v817 = vld [vmem:[%s192 + $0x80] sm:$0xf]
      %v818 = vld [vmem:[%s192 + $0x84] sm:$0xf]
      %v819 = vld [vmem:[%s192 + $0x88] sm:$0xf]
      %v820 = vld [vmem:[%s192 + $0x8c] sm:$0xf]
      %s821 = scalar_lea.vmem %s1, 96
      %v822 = vld [vmem:[%s821] sm:$0xf]
      %v823 = vld [vmem:[%s821 + $0x4] sm:$0xf]
      %v824 = vld [vmem:[%s821 + $0x8] sm:$0xf]
      %v825 = vld [vmem:[%s821 + $0xc] sm:$0xf]
      %v826 = vld [vmem:[%s821 + $0x10] sm:$0xf]
      %v827 = vld [vmem:[%s821 + $0x14] sm:$0xf]
      %v828 = vld [vmem:[%s821 + $0x18] sm:$0xf]
      %v829 = vld [vmem:[%s821 + $0x1c] sm:$0xf]
      %v830 = vld [vmem:[%s821 + $0x20] sm:$0xf]
      %v831 = vld [vmem:[%s821 + $0x24] sm:$0xf]
      %v832 = vld [vmem:[%s821 + $0x28] sm:$0xf]
      %v833 = vld [vmem:[%s821 + $0x2c] sm:$0xf]
      %v866 = vunpack.c.l.b16 %v789
      %v867 = vunpack.c.l.b16 %v790
      %v868 = vunpack.c.l.b16 %v791
      %v869 = vunpack.c.l.b16 %v792
      %v870 = vunpack.c.l.b16 %v793
      %v871 = vunpack.c.l.b16 %v794
      %v872 = vunpack.c.l.b16 %v795
      %v873 = vunpack.c.l.b16 %v796
      %v874 = vunpack.c.l.b16 %v797
      %v875 = vunpack.c.l.b16 %v798
      %v876 = vunpack.c.l.b16 %v799
      %v877 = vunpack.c.l.b16 %v800
      %v878 = vunpack.c.l.b16 %v801
      %v879 = vunpack.c.l.b16 %v802
      %v880 = vunpack.c.l.b16 %v803
      %v881 = vunpack.c.l.b16 %v804
      %v882 = vunpack.c.l.b16 %v805
      %v883 = vunpack.c.l.b16 %v806
      %v884 = vunpack.c.l.b16 %v807
      %v885 = vunpack.c.l.b16 %v808
      %v886 = vunpack.c.l.b16 %v809
      %v887 = vunpack.c.l.b16 %v810
      %v888 = vunpack.c.l.b16 %v811
      %v889 = vunpack.c.l.b16 %v812
      %v890 = vunpack.c.l.b16 %v813
      %v891 = vunpack.c.l.b16 %v814
      %v892 = vunpack.c.l.b16 %v815
      %v893 = vunpack.c.l.b16 %v816
      %v894 = vunpack.c.l.b16 %v817
      %v895 = vunpack.c.l.b16 %v818
      %v896 = vunpack.c.l.b16 %v819
      %v897 = vunpack.c.l.b16 %v820
      %v898 = vpack.c.b16 %v867, %v866
      %v899 = vpack.c.b16 %v869, %v868
      %v900 = vpack.c.b16 %v871, %v870
      %v901 = vpack.c.b16 %v873, %v872
      %v902 = vpack.c.b16 %v875, %v874
      %v903 = vpack.c.b16 %v877, %v876
      %v904 = vpack.c.b16 %v879, %v878
      %v905 = vpack.c.b16 %v881, %v880
      %v906 = vpack.c.b16 %v883, %v882
      %v907 = vpack.c.b16 %v885, %v884
      %v908 = vpack.c.b16 %v887, %v886
      %v909 = vpack.c.b16 %v889, %v888
      %v910 = vpack.c.b16 %v891, %v890
      %v911 = vpack.c.b16 %v893, %v892
      %v912 = vpack.c.b16 %v895, %v894
      %v913 = vpack.c.b16 %v897, %v896
      %v926 = vunpack.c.l.b16 %v822
      %v927 = vunpack.c.l.b16 %v823
      %v928 = vunpack.c.l.b16 %v824
      %v929 = vunpack.c.l.b16 %v825
      %v930 = vunpack.c.l.b16 %v826
      %v931 = vunpack.c.l.b16 %v827
      %v932 = vunpack.c.l.b16 %v828
      %v933 = vunpack.c.l.b16 %v829
      %v934 = vunpack.c.l.b16 %v830
      %v935 = vunpack.c.l.b16 %v831
      %v936 = vunpack.c.l.b16 %v832
      %v937 = vunpack.c.l.b16 %v833
      %v938 = vpack.c.b16 %v927, %v926
      %v939 = vpack.c.b16 %v929, %v928
      %v940 = vpack.c.b16 %v931, %v930
      %v941 = vpack.c.b16 %v933, %v932
      %v942 = vpack.c.b16 %v935, %v934
      %v943 = vpack.c.b16 %v937, %v936
      %v951 = vsel %vm374, %v898, 0
      %v954 = vsel %vm374, %v899, 0
      %v957 = vsel %vm374, %v900, 0
      %v960 = vsel %vm374, %v901, 0
      %v963 = vsel %vm374, %v902, 0
      %v966 = vsel %vm374, %v903, 0
      %v969 = vsel %vm374, %v904, 0
      %v972 = vsel %vm374, %v905, 0
      %v975 = vsel %vm374, %v906, 0
      %v978 = vsel %vm374, %v907, 0
      %v981 = vsel %vm374, %v908, 0
      %v984 = vsel %vm374, %v909, 0
      %v987 = vsel %vm374, %v910, 0
      %v990 = vsel %vm374, %v911, 0
      %v993 = vsel %vm374, %v912, 0
      %v996 = vsel %vm374, %v913, 0
      %998 = vmatprep.subr.bf16.mxu0 0
      %999 = vmatpush1.bf16.msra.mxu0 0
      %1000 = vmatprep.subr.bf16.mxu0 0
      %1001 = vmatpush1.bf16.msra.mxu0 0
      %1002 = vmatprep.subr.bf16.mxu0 0
      %1003 = vmatpush1.bf16.msra.mxu0 %v943
      %1004 = vmatprep.subr.bf16.mxu0 0
      %1005 = vmatpush1.bf16.msra.mxu0 %v942
      %1006 = vmatprep.subr.bf16.mxu0 0
      %1007 = vmatpush1.bf16.msra.mxu0 %v941
      %1008 = vmatprep.subr.bf16.mxu0 0
      %1009 = vmatpush1.bf16.msra.mxu0 %v940
      %1010 = vmatprep.subr.bf16.mxu0 0
      %1011 = vmatpush1.bf16.msra.mxu0 %v939
      %1012 = vmatprep.subr.bf16.mxu0 0
      %1013 = vmatpush1.bf16.msra.mxu0 %v938
      %1014 = vmatprep.subr.bf16.mxu0 0
      %1015 = vmatpush2.bf16.msra.mxu0 0
      %1016 = vmatprep.subr.bf16.mxu0 0
      %1017 = vmatpush2.bf16.msra.mxu0 0
      %1018 = vmatprep.subr.bf16.mxu0 0
      %1019 = vmatpush2.bf16.msra.mxu0 0
      %1020 = vmatprep.subr.bf16.mxu0 0
      %1021 = vmatpush2.bf16.msra.mxu0 0
      %1022 = vmatprep.subr.bf16.mxu0 0
      %1023 = vmatpush2.bf16.msra.mxu0 0
      %1024 = vmatprep.subr.bf16.mxu0 0
      %1025 = vmatpush2.bf16.msra.mxu0 0
      %1026 = vmatprep.subr.bf16.mxu0 0
      %1027 = vmatpush2.bf16.msra.mxu0 0
      %1028 = vmatprep.subr.bf16.mxu0 0
      %1029 = vmatpush2.bf16.msra.mxu0 0
      %1030 = vmatprep.mubr.bf16.mxu0 0
      %1031 = vmatmul.mubr.bf16.gmra.mxu0 %v951
      %v1032 = vpop.f32.mrf.mxu0
      %v1033 = vadd.f32 0.0, %v1032
      %v1034 = vpop.f32.mrf.mxu0
      %v1035 = vpop.f32.mrf.mxu0
      %v1036 = vadd.f32 0.0, %v1035
      %v1037 = vpop.f32.mrf.mxu0
      %1038 = vmatprep.mubr.bf16.mxu0 0
      %1039 = vmatmul.mubr.bf16.gmra.mxu0 %v954
      %v1040 = vpop.f32.mrf.mxu0
      %v1041 = vadd.f32 0.0, %v1040
      %v1042 = vpop.f32.mrf.mxu0
      %v1043 = vpop.f32.mrf.mxu0
      %v1044 = vadd.f32 0.0, %v1043
      %v1045 = vpop.f32.mrf.mxu0
      %1046 = vmatprep.mubr.bf16.mxu0 0
      %1047 = vmatmul.mubr.bf16.gmra.mxu0 %v957
      %v1048 = vpop.f32.mrf.mxu0
      %v1049 = vadd.f32 0.0, %v1048
      %v1050 = vpop.f32.mrf.mxu0
      %v1051 = vpop.f32.mrf.mxu0
      %v1052 = vadd.f32 0.0, %v1051
      %v1053 = vpop.f32.mrf.mxu0
      %1054 = vmatprep.mubr.bf16.mxu0 0
      %1055 = vmatmul.mubr.bf16.gmra.mxu0 %v960
      %v1056 = vpop.f32.mrf.mxu0
      %v1057 = vadd.f32 0.0, %v1056
      %v1058 = vpop.f32.mrf.mxu0
      %v1059 = vpop.f32.mrf.mxu0
      %v1060 = vadd.f32 0.0, %v1059
      %v1061 = vpop.f32.mrf.mxu0
      %1062 = vmatprep.mubr.bf16.mxu0 0
      %1063 = vmatmul.mubr.bf16.gmra.mxu0 %v963
      %v1064 = vpop.f32.mrf.mxu0
      %v1065 = vadd.f32 0.0, %v1064
      %v1066 = vpop.f32.mrf.mxu0
      %v1067 = vpop.f32.mrf.mxu0
      %v1068 = vadd.f32 0.0, %v1067
      %v1069 = vpop.f32.mrf.mxu0
      %1070 = vmatprep.mubr.bf16.mxu0 0
      %1071 = vmatmul.mubr.bf16.gmra.mxu0 %v966
      %v1072 = vpop.f32.mrf.mxu0
      %v1073 = vadd.f32 0.0, %v1072
      %v1074 = vpop.f32.mrf.mxu0
      %v1075 = vpop.f32.mrf.mxu0
      %v1076 = vadd.f32 0.0, %v1075
      %v1077 = vpop.f32.mrf.mxu0
      %1078 = vmatprep.mubr.bf16.mxu0 0
      %1079 = vmatmul.mubr.bf16.gmra.mxu0 %v969
      %v1080 = vpop.f32.mrf.mxu0
      %v1081 = vadd.f32 0.0, %v1080
      %v1082 = vpop.f32.mrf.mxu0
      %v1083 = vpop.f32.mrf.mxu0
      %v1084 = vadd.f32 0.0, %v1083
      %v1085 = vpop.f32.mrf.mxu0
      %1086 = vmatprep.mubr.bf16.mxu0 0
      %1087 = vmatmul.mubr.bf16.gmra.mxu0 %v972
      %v1088 = vpop.f32.mrf.mxu0
      %v1089 = vadd.f32 0.0, %v1088
      %v1090 = vpop.f32.mrf.mxu0
      %v1091 = vpop.f32.mrf.mxu0
      %v1092 = vadd.f32 0.0, %v1091
      %v1093 = vpop.f32.mrf.mxu0
      %1094 = vmatprep.mubr.bf16.mxu0 0
      %1095 = vmatmul.mubr.bf16.gmra.mxu0 %v975
      %v1096 = vpop.f32.mrf.mxu0
      %v1097 = vadd.f32 0.0, %v1096
      %v1098 = vpop.f32.mrf.mxu0
      %v1099 = vpop.f32.mrf.mxu0
      %v1100 = vadd.f32 0.0, %v1099
      %v1101 = vpop.f32.mrf.mxu0
      %1102 = vmatprep.mubr.bf16.mxu0 0
      %1103 = vmatmul.mubr.bf16.gmra.mxu0 %v978
      %v1104 = vpop.f32.mrf.mxu0
      %v1105 = vadd.f32 0.0, %v1104
      %v1106 = vpop.f32.mrf.mxu0
      %v1107 = vpop.f32.mrf.mxu0
      %v1108 = vadd.f32 0.0, %v1107
      %v1109 = vpop.f32.mrf.mxu0
      %1110 = vmatprep.mubr.bf16.mxu0 0
      %1111 = vmatmul.mubr.bf16.gmra.mxu0 %v981
      %v1112 = vpop.f32.mrf.mxu0
      %v1113 = vadd.f32 0.0, %v1112
      %v1114 = vpop.f32.mrf.mxu0
      %v1115 = vpop.f32.mrf.mxu0
      %v1116 = vadd.f32 0.0, %v1115
      %v1117 = vpop.f32.mrf.mxu0
      %1118 = vmatprep.mubr.bf16.mxu0 0
      %1119 = vmatmul.mubr.bf16.gmra.mxu0 %v984
      %v1120 = vpop.f32.mrf.mxu0
      %v1121 = vadd.f32 0.0, %v1120
      %v1122 = vpop.f32.mrf.mxu0
      %v1123 = vpop.f32.mrf.mxu0
      %v1124 = vadd.f32 0.0, %v1123
      %v1125 = vpop.f32.mrf.mxu0
      %1126 = vmatprep.mubr.bf16.mxu0 0
      %1127 = vmatmul.mubr.bf16.gmra.mxu0 %v987
      %v1128 = vpop.f32.mrf.mxu0
      %v1129 = vadd.f32 0.0, %v1128
      %v1130 = vpop.f32.mrf.mxu0
      %v1131 = vpop.f32.mrf.mxu0
      %v1132 = vadd.f32 0.0, %v1131
      %v1133 = vpop.f32.mrf.mxu0
      %1134 = vmatprep.mubr.bf16.mxu0 0
      %1135 = vmatmul.mubr.bf16.gmra.mxu0 %v990
      %v1136 = vpop.f32.mrf.mxu0
      %v1137 = vadd.f32 0.0, %v1136
      %v1138 = vpop.f32.mrf.mxu0
      %v1139 = vpop.f32.mrf.mxu0
      %v1140 = vadd.f32 0.0, %v1139
      %v1141 = vpop.f32.mrf.mxu0
      %1142 = vmatprep.mubr.bf16.mxu0 0
      %1143 = vmatmul.mubr.bf16.gmra.mxu0 %v993
      %v1144 = vpop.f32.mrf.mxu0
      %v1145 = vadd.f32 0.0, %v1144
      %v1146 = vpop.f32.mrf.mxu0
      %v1147 = vpop.f32.mrf.mxu0
      %v1148 = vadd.f32 0.0, %v1147
      %v1149 = vpop.f32.mrf.mxu0
      %1150 = vmatprep.mubr.bf16.mxu0 0
      %1151 = vmatmul.mubr.bf16.gmra.mxu0 %v996
      %v1152 = vpop.f32.mrf.mxu0
      %v1153 = vadd.f32 0.0, %v1152
      %v1154 = vpop.f32.mrf.mxu0
      %v1155 = vpop.f32.mrf.mxu0
      %v1156 = vadd.f32 0.0, %v1155
      %v1157 = vpop.f32.mrf.mxu0
      %1158 = vdwg.mxu0
      %v1159 = vadd.f32 %v663, %v1033
      %v1160 = vadd.f32 %v666, %v1036
      %v1161 = vadd.f32 %v671, %v1041
      %v1162 = vadd.f32 %v674, %v1044
      %v1163 = vadd.f32 %v679, %v1049
      %v1164 = vadd.f32 %v682, %v1052
      %v1165 = vadd.f32 %v687, %v1057
      %v1166 = vadd.f32 %v690, %v1060
      %v1167 = vadd.f32 %v695, %v1065
      %v1168 = vadd.f32 %v698, %v1068
      %v1169 = vadd.f32 %v703, %v1073
      %v1170 = vadd.f32 %v706, %v1076
      %v1171 = vadd.f32 %v711, %v1081
      %v1172 = vadd.f32 %v714, %v1084
      %v1173 = vadd.f32 %v719, %v1089
      %v1174 = vadd.f32 %v722, %v1092
      %v1175 = vadd.f32 %v727, %v1097
      %v1176 = vadd.f32 %v730, %v1100
      %v1177 = vadd.f32 %v735, %v1105
      %v1178 = vadd.f32 %v738, %v1108
      %v1179 = vadd.f32 %v743, %v1113
      %v1180 = vadd.f32 %v746, %v1116
      %v1181 = vadd.f32 %v751, %v1121
      %v1182 = vadd.f32 %v754, %v1124
      %v1183 = vadd.f32 %v759, %v1129
      %v1184 = vadd.f32 %v762, %v1132
      %v1185 = vadd.f32 %v767, %v1137
      %v1186 = vadd.f32 %v770, %v1140
      %v1187 = vadd.f32 %v775, %v1145
      %v1188 = vadd.f32 %v778, %v1148
      %v1189 = vadd.f32 %v783, %v1153
      %v1190 = vadd.f32 %v786, %v1156
      %v1191 = vld [vmem:[%s2] sm:$0x1]
      %v1193 = vlaneseq
      %v1194 = vshrl.u32 %v1193, 7
      %v1195 = vsub.s32 0, %v1194
      %v1196 = vrot.slane %v1191, %v1195
      %v1198 = vmul.f32 %v1159, %v1196
      %v1199 = vmul.f32 %v1160, %v1196
      %v1200 = vmul.f32 %v1161, %v1196
      %v1201 = vmul.f32 %v1162, %v1196
      %v1202 = vmul.f32 %v1163, %v1196
      %v1203 = vmul.f32 %v1164, %v1196
      %v1204 = vmul.f32 %v1165, %v1196
      %v1205 = vmul.f32 %v1166, %v1196
      %v1206 = vmul.f32 %v1167, %v1196
      %v1207 = vmul.f32 %v1168, %v1196
      %v1208 = vmul.f32 %v1169, %v1196
      %v1209 = vmul.f32 %v1170, %v1196
      %v1210 = vmul.f32 %v1171, %v1196
      %v1211 = vmul.f32 %v1172, %v1196
      %v1212 = vmul.f32 %v1173, %v1196
      %v1213 = vmul.f32 %v1174, %v1196
      %v1214 = vmul.f32 %v1175, %v1196
      %v1215 = vmul.f32 %v1176, %v1196
      %v1216 = vmul.f32 %v1177, %v1196
      %v1217 = vmul.f32 %v1178, %v1196
      %v1218 = vmul.f32 %v1179, %v1196
      %v1219 = vmul.f32 %v1180, %v1196
      %v1220 = vmul.f32 %v1181, %v1196
      %v1221 = vmul.f32 %v1182, %v1196
      %v1222 = vmul.f32 %v1183, %v1196
      %v1223 = vmul.f32 %v1184, %v1196
      %v1224 = vmul.f32 %v1185, %v1196
      %v1225 = vmul.f32 %v1186, %v1196
      %v1226 = vmul.f32 %v1187, %v1196
      %v1227 = vmul.f32 %v1188, %v1196
      %v1228 = vmul.f32 %v1189, %v1196
      %v1229 = vmul.f32 %v1190, %v1196
      %v1230 = vld [vmem:[%s3] sm:$0x1]
      %v1232 = vlaneseq
      %v1233 = vshrl.u32 %v1232, 7
      %v1234 = vsub.s32 0, %v1233
      %v1235 = vrot.slane %v1230, %v1234
      %v1237 = vadd.f32 %v1198, %v1235
      %v1238 = vadd.f32 %v1199, %v1235
      %v1239 = vadd.f32 %v1200, %v1235
      %v1240 = vadd.f32 %v1201, %v1235
      %v1241 = vadd.f32 %v1202, %v1235
      %v1242 = vadd.f32 %v1203, %v1235
      %v1243 = vadd.f32 %v1204, %v1235
      %v1244 = vadd.f32 %v1205, %v1235
      %v1245 = vadd.f32 %v1206, %v1235
      %v1246 = vadd.f32 %v1207, %v1235
      %v1247 = vadd.f32 %v1208, %v1235
      %v1248 = vadd.f32 %v1209, %v1235
      %v1249 = vadd.f32 %v1210, %v1235
      %v1250 = vadd.f32 %v1211, %v1235
      %v1251 = vadd.f32 %v1212, %v1235
      %v1252 = vadd.f32 %v1213, %v1235
      %v1253 = vadd.f32 %v1214, %v1235
      %v1254 = vadd.f32 %v1215, %v1235
      %v1255 = vadd.f32 %v1216, %v1235
      %v1256 = vadd.f32 %v1217, %v1235
      %v1257 = vadd.f32 %v1218, %v1235
      %v1258 = vadd.f32 %v1219, %v1235
      %v1259 = vadd.f32 %v1220, %v1235
      %v1260 = vadd.f32 %v1221, %v1235
      %v1261 = vadd.f32 %v1222, %v1235
      %v1262 = vadd.f32 %v1223, %v1235
      %v1263 = vadd.f32 %v1224, %v1235
      %v1264 = vadd.f32 %v1225, %v1235
      %v1265 = vadd.f32 %v1226, %v1235
      %v1266 = vadd.f32 %v1227, %v1235
      %v1267 = vadd.f32 %v1228, %v1235
      %v1268 = vadd.f32 %v1229, %v1235
      %v1269 = vmax.f32 %v1237, 0.0
      %v1270 = vmax.f32 %v1238, 0.0
      %v1271 = vmax.f32 %v1239, 0.0
      %v1272 = vmax.f32 %v1240, 0.0
      %v1273 = vmax.f32 %v1241, 0.0
      %v1274 = vmax.f32 %v1242, 0.0
      %v1275 = vmax.f32 %v1243, 0.0
      %v1276 = vmax.f32 %v1244, 0.0
      %v1277 = vmax.f32 %v1245, 0.0
      %v1278 = vmax.f32 %v1246, 0.0
      %v1279 = vmax.f32 %v1247, 0.0
      %v1280 = vmax.f32 %v1248, 0.0
      %v1281 = vmax.f32 %v1249, 0.0
      %v1282 = vmax.f32 %v1250, 0.0
      %v1283 = vmax.f32 %v1251, 0.0
      %v1284 = vmax.f32 %v1252, 0.0
      %v1285 = vmax.f32 %v1253, 0.0
      %v1286 = vmax.f32 %v1254, 0.0
      %v1287 = vmax.f32 %v1255, 0.0
      %v1288 = vmax.f32 %v1256, 0.0
      %v1289 = vmax.f32 %v1257, 0.0
      %v1290 = vmax.f32 %v1258, 0.0
      %v1291 = vmax.f32 %v1259, 0.0
      %v1292 = vmax.f32 %v1260, 0.0
      %v1293 = vmax.f32 %v1261, 0.0
      %v1294 = vmax.f32 %v1262, 0.0
      %v1295 = vmax.f32 %v1263, 0.0
      %v1296 = vmax.f32 %v1264, 0.0
      %v1297 = vmax.f32 %v1265, 0.0
      %v1298 = vmax.f32 %v1266, 0.0
      %v1299 = vmax.f32 %v1267, 0.0
      %v1300 = vmax.f32 %v1268, 0.0
      %v1301 = vpack.c.bf16 %v1270, %v1269
      %v1302 = vpack.c.bf16 %v1272, %v1271
      %v1303 = vpack.c.bf16 %v1274, %v1273
      %v1304 = vpack.c.bf16 %v1276, %v1275
      %v1305 = vpack.c.bf16 %v1278, %v1277
      %v1306 = vpack.c.bf16 %v1280, %v1279
      %v1307 = vpack.c.bf16 %v1282, %v1281
      %v1308 = vpack.c.bf16 %v1284, %v1283
      %v1309 = vpack.c.bf16 %v1286, %v1285
      %v1310 = vpack.c.bf16 %v1288, %v1287
      %v1311 = vpack.c.bf16 %v1290, %v1289
      %v1312 = vpack.c.bf16 %v1292, %v1291
      %v1313 = vpack.c.bf16 %v1294, %v1293
      %v1314 = vpack.c.bf16 %v1296, %v1295
      %v1315 = vpack.c.bf16 %v1298, %v1297
      %v1316 = vpack.c.bf16 %v1300, %v1299
      %v1333 = vunpack.c.l.b16 %v1301
      %v1334 = vunpack.c.h.b16 %v1301
      %v1335 = vunpack.c.l.b16 %v1302
      %v1336 = vunpack.c.h.b16 %v1302
      %v1337 = vunpack.c.l.b16 %v1303
      %v1338 = vunpack.c.h.b16 %v1303
      %v1339 = vunpack.c.l.b16 %v1304
      %v1340 = vunpack.c.h.b16 %v1304
      %v1341 = vunpack.c.l.b16 %v1305
      %v1342 = vunpack.c.h.b16 %v1305
      %v1343 = vunpack.c.l.b16 %v1306
      %v1344 = vunpack.c.h.b16 %v1306
      %v1345 = vunpack.c.l.b16 %v1307
      %v1346 = vunpack.c.h.b16 %v1307
      %v1347 = vunpack.c.l.b16 %v1308
      %v1348 = vunpack.c.h.b16 %v1308
      %v1349 = vunpack.c.l.b16 %v1309
      %v1350 = vunpack.c.h.b16 %v1309
      %v1351 = vunpack.c.l.b16 %v1310
      %v1352 = vunpack.c.h.b16 %v1310
      %v1353 = vunpack.c.l.b16 %v1311
      %v1354 = vunpack.c.h.b16 %v1311
      %v1355 = vunpack.c.l.b16 %v1312
      %v1356 = vunpack.c.h.b16 %v1312
      %v1357 = vunpack.c.l.b16 %v1313
      %v1358 = vunpack.c.h.b16 %v1313
      %v1359 = vunpack.c.l.b16 %v1314
      %v1360 = vunpack.c.h.b16 %v1314
      %v1361 = vunpack.c.l.b16 %v1315
      %v1362 = vunpack.c.h.b16 %v1315
      %v1363 = vunpack.c.l.b16 %v1316
      %v1364 = vunpack.c.h.b16 %v1316
      %v1365 = vpack.c.b16 %v1333, %v1333
      %v1366 = vpack.c.b16 %v1334, %v1334
      %v1367 = vpack.c.b16 %v1335, %v1335
      %v1368 = vpack.c.b16 %v1336, %v1336
      %v1369 = vpack.c.b16 %v1337, %v1337
      %v1370 = vpack.c.b16 %v1338, %v1338
      %v1371 = vpack.c.b16 %v1339, %v1339
      %v1372 = vpack.c.b16 %v1340, %v1340
      %v1373 = vpack.c.b16 %v1341, %v1341
      %v1374 = vpack.c.b16 %v1342, %v1342
      %v1375 = vpack.c.b16 %v1343, %v1343
      %v1376 = vpack.c.b16 %v1344, %v1344
      %v1377 = vpack.c.b16 %v1345, %v1345
      %v1378 = vpack.c.b16 %v1346, %v1346
      %v1379 = vpack.c.b16 %v1347, %v1347
      %v1380 = vpack.c.b16 %v1348, %v1348
      %v1381 = vpack.c.b16 %v1349, %v1349
      %v1382 = vpack.c.b16 %v1350, %v1350
      %v1383 = vpack.c.b16 %v1351, %v1351
      %v1384 = vpack.c.b16 %v1352, %v1352
      %v1385 = vpack.c.b16 %v1353, %v1353
      %v1386 = vpack.c.b16 %v1354, %v1354
      %v1387 = vpack.c.b16 %v1355, %v1355
      %v1388 = vpack.c.b16 %v1356, %v1356
      %v1389 = vpack.c.b16 %v1357, %v1357
      %v1390 = vpack.c.b16 %v1358, %v1358
      %v1391 = vpack.c.b16 %v1359, %v1359
      %v1392 = vpack.c.b16 %v1360, %v1360
      %v1393 = vpack.c.b16 %v1361, %v1361
      %v1394 = vpack.c.b16 %v1362, %v1362
      %v1395 = vpack.c.b16 %v1363, %v1363
      %v1396 = vpack.c.b16 %v1364, %v1364
      %vm1429 = vcmask 257024
      %1430 = vst.msk [vmem:[%s197] sm:$0xf] %vm1429, %v1365
      %1431 = vst.msk [vmem:[%s197 + $0x4] sm:$0xf] %vm1429, %v1366
      %1432 = vst.msk [vmem:[%s197 + $0x8] sm:$0xf] %vm1429, %v1367
      %1433 = vst.msk [vmem:[%s197 + $0xc] sm:$0xf] %vm1429, %v1368
      %1434 = vst.msk [vmem:[%s197 + $0x10] sm:$0xf] %vm1429, %v1369
      %1435 = vst.msk [vmem:[%s197 + $0x14] sm:$0xf] %vm1429, %v1370
      %1436 = vst.msk [vmem:[%s197 + $0x18] sm:$0xf] %vm1429, %v1371
      %1437 = vst.msk [vmem:[%s197 + $0x1c] sm:$0xf] %vm1429, %v1372
      %1438 = vst.msk [vmem:[%s197 + $0x20] sm:$0xf] %vm1429, %v1373
      %1439 = vst.msk [vmem:[%s197 + $0x24] sm:$0xf] %vm1429, %v1374
      %1440 = vst.msk [vmem:[%s197 + $0x28] sm:$0xf] %vm1429, %v1375
      %1441 = vst.msk [vmem:[%s197 + $0x2c] sm:$0xf] %vm1429, %v1376
      %1442 = vst.msk [vmem:[%s197 + $0x30] sm:$0xf] %vm1429, %v1377
      %1443 = vst.msk [vmem:[%s197 + $0x34] sm:$0xf] %vm1429, %v1378
      %1444 = vst.msk [vmem:[%s197 + $0x38] sm:$0xf] %vm1429, %v1379
      %1445 = vst.msk [vmem:[%s197 + $0x3c] sm:$0xf] %vm1429, %v1380
      %1446 = vst.msk [vmem:[%s197 + $0x40] sm:$0xf] %vm1429, %v1381
      %1447 = vst.msk [vmem:[%s197 + $0x44] sm:$0xf] %vm1429, %v1382
      %1448 = vst.msk [vmem:[%s197 + $0x48] sm:$0xf] %vm1429, %v1383
      %1449 = vst.msk [vmem:[%s197 + $0x4c] sm:$0xf] %vm1429, %v1384
      %1450 = vst.msk [vmem:[%s197 + $0x50] sm:$0xf] %vm1429, %v1385
      %1451 = vst.msk [vmem:[%s197 + $0x54] sm:$0xf] %vm1429, %v1386
      %1452 = vst.msk [vmem:[%s197 + $0x58] sm:$0xf] %vm1429, %v1387
      %1453 = vst.msk [vmem:[%s197 + $0x5c] sm:$0xf] %vm1429, %v1388
      %1454 = vst.msk [vmem:[%s197 + $0x60] sm:$0xf] %vm1429, %v1389
      %1455 = vst.msk [vmem:[%s197 + $0x64] sm:$0xf] %vm1429, %v1390
      %1456 = vst.msk [vmem:[%s197 + $0x68] sm:$0xf] %vm1429, %v1391
      %1457 = vst.msk [vmem:[%s197 + $0x6c] sm:$0xf] %vm1429, %v1392
      %1458 = vst.msk [vmem:[%s197 + $0x70] sm:$0xf] %vm1429, %v1393
      %1459 = vst.msk [vmem:[%s197 + $0x74] sm:$0xf] %vm1429, %v1394
      %1460 = vst.msk [vmem:[%s197 + $0x78] sm:$0xf] %vm1429, %v1395
      %1461 = vst.msk [vmem:[%s197 + $0x7c] sm:$0xf] %vm1429, %v1396
      %p1462 = scmp.lt.s32.totalorder %s15, 1
      %s1463 = scalar_select %p1462, %s15, 1
      %s1464 = smul.addr %s1463, 32
      %s1465 = smul.addr %s1464, 4
      %s1466 = scalar_lea.vmem %s4, %s1465
      // Predicated region
      $region37: #{drunet_var_forward.14} parent=35 // pred_check
        %p1467 = pneg %p122
      $region38: #{drunet_var_forward.14} parent=35 // pred_check_branch
        %1469 = sbr.rel (%p1467) target = $region40
      $region39: #{drunet_var_forward.14} parent=35 // pred_region
        _
      $region40: #{drunet_var_forward.14} parent=35 // pred_fallthru
        _
    $region36: #{drunet_var_forward.14} parent=5 // pred_fallthru
      _
    %p1470 = scmp.le.s32.totalorder 2, %s10
    // Predicated region
    $region41: #{drunet_var_forward.14} parent=5 // pred_check
      %p1471 = pneg %p1470
    $region42: #{drunet_var_forward.14} parent=5 // pred_check_branch
      %1473 = sbr.rel (%p1471) target = $region44
    $region43: #{drunet_var_forward.14} parent=5 // pred_region
      %s1474 = ssub.s32 %s10, 2
      // Predicated region
      $region45: #{drunet_var_forward.14} parent=43 // pred_check
        %p1475 = pneg %p128
      $region46: #{drunet_var_forward.14} parent=43 // pred_check_branch
        %1477 = sbr.rel (%p1475) target = $region48
      $region47: #{drunet_var_forward.14} parent=43 // pred_region
        %p1478 = scmp.lt.s32.totalorder %s16, 1
        %s1479 = scalar_select %p1478, %s16, 1
        %s1480 = smul.addr %s1479, 32
        %s1481 = smul.addr %s1480, 4
        %s1482 = scalar_lea.vmem %s4, %s1481
      $region48: #{drunet_var_forward.14} parent=43 // pred_fallthru
        _
    $region44: #{drunet_var_forward.14} parent=5 // pred_fallthru
      _
  $region6: #{drunet_var_forward.14} parent=0 // loop_footer
    %s14 = sadd.s32 1, %s10
  $region7: #{drunet_var_forward.14} parent=0 // loop_footer_branch
    %9 = sbr.rel target = $region3
  $region8: #{drunet_var_forward.14} parent=0 // loop_exit
    _

// kernel: drunet_var_forward.15
$region0: #{drunet_var_forward.15}
  #allocation0 [shape = 'u32[]', space=smem, size = 0x4, offset = 0x4, fixed_abs, tag = 'smem constant byte address 0x4 - core index']
  #allocation1 [shape = 'u32[144,128]{1,0:T(1,128)}', space=vmem, size = 0x12000, scoped, tag = 'internal scratch']
  %s0 = inlined_call_operand.vmem [shape: bf16[2,80,96], index: 0, kind: input, shape index: {}]
  %s1 = inlined_call_operand.vmem [shape: bf16[3,96,64], index: 1, kind: input, shape index: {}]
  %s2 = inlined_call_operand.vmem [shape: f32[1,64], index: 2, kind: input, shape index: {}]
  %s3 = inlined_call_operand.vmem [shape: f32[1,64], index: 3, kind: input, shape index: {}]
  %s4 = inlined_call_operand.vmem [shape: bf16[2,64,64], index: 4, kind: output, shape index: {}]
  %s5 = sld [smem:[#allocation0]]
  $region49: #{drunet_var_forward.15} parent=0
    _
  %s7 = ssub.s32 1, %s5
  %s8 = scalar_select 0, %s7, %s5
  loop: start=0, step=1, limit=4
  $region2: #{drunet_var_forward.15} parent=0 // loop_pre_header
    _
  $region3: #{drunet_var_forward.15} parent=0 // loop_header
    %s10 = sphi 0, %s14
    %p11 = scmp.ge.s32.totalorder %s10, 4
    %s20 = sphi 0, %s22
    %s23 = sphi 0, %s20
    %s24 = sphi 0, %s23
    %s40 = sphi 0, %s24
    %s44 = sphi 0, %s44
    %s46 = sphi 0, %s44
    %s47 = sphi 0, %s46
    %s61 = sphi 0, %s47
    %s65 = sphi 0, %s65
    %s67 = sphi 0, %s65
    %s68 = sphi 0, %s67
    %s82 = sphi 0, %s68
    %s86 = sphi 0, %s86
    %s88 = sphi 0, %s86
    %s89 = sphi 0, %s88
    %s103 = sphi 0, %s89
    %s109 = sphi 0, %s111
    %s112 = sphi 0, %s109
    %s113 = sphi 0, %s112
    %s129 = sphi 0, %s113
  $region4: #{drunet_var_forward.15} parent=0 // loop_header_branch
    %13 = sbr.rel (%p11) target = $region8
  $region5: #{drunet_var_forward.15} parent=0 // loop_body
    %s15 = ssub.s32 %s10, 1
    %s16 = ssub.s32 %s10, 2
    %s17 = sadd.s32 %s10, 1
    %s18 = ssub.s32 %s10, %s17
    %p19 = scmp.eq.s32.totalorder %s18, 0
    %s21 = sadd.s32 %s20, 1
    %s22 = scalar_select %p19, %s20, %s21
    %p25 = pneg %p19
    %p26 = scmp.eq.s32.totalorder %s10, 1
    %p27 = por %p25, %p26
    %p28 = scmp.ne.s32.totalorder %s20, %s23
    %p29 = scmp.eq.s32.totalorder %s10, 0
    %p30 = por %p28, %p29
    %p31 = scmp.ne.s32.totalorder %s20, %s23
    %p32 = scmp.eq.s32.totalorder %s15, 1
    %p33 = por %p31, %p32
    %p34 = scmp.ne.s32.totalorder %s23, %s24
    %p35 = scmp.eq.s32.totalorder %s15, 0
    %p36 = por %p34, %p35
    %p37 = scmp.ne.s32.totalorder %s23, %s24
    %p38 = scmp.eq.s32.totalorder %s16, 1
    %p39 = por %p37, %p38
    %p41 = scmp.ne.s32.totalorder %s24, %s40
    %p42 = scmp.eq.s32.totalorder %s16, 0
    %p43 = por %p41, %p42
    %s45 = sadd.s32 %s44, 1
    %p48 = scmp.eq.s32.totalorder %s10, 1
    %p49 = scmp.ne.s32.totalorder %s44, %s46
    %p50 = scmp.eq.s32.totalorder %s10, 0
    %p51 = por %p49, %p50
    %p52 = scmp.ne.s32.totalorder %s44, %s46
    %p53 = scmp.eq.s32.totalorder %s15, 1
    %p54 = por %p52, %p53
    %p55 = scmp.ne.s32.totalorder %s46, %s47
    %p56 = scmp.eq.s32.totalorder %s15, 0
    %p57 = por %p55, %p56
    %p58 = scmp.ne.s32.totalorder %s46, %s47
    %p59 = scmp.eq.s32.totalorder %s16, 1
    %p60 = por %p58, %p59
    %p62 = scmp.ne.s32.totalorder %s47, %s61
    %p63 = scmp.eq.s32.totalorder %s16, 0
    %p64 = por %p62, %p63
    %s66 = sadd.s32 %s65, 1
    %p69 = scmp.eq.s32.totalorder %s10, 1
    %p70 = scmp.ne.s32.totalorder %s65, %s67
    %p71 = scmp.eq.s32.totalorder %s10, 0
    %p72 = por %p70, %p71
    %p73 = scmp.ne.s32.totalorder %s65, %s67
    %p74 = scmp.eq.s32.totalorder %s15, 1
    %p75 = por %p73, %p74
    %p76 = scmp.ne.s32.totalorder %s67, %s68
    %p77 = scmp.eq.s32.totalorder %s15, 0
    %p78 = por %p76, %p77
    %p79 = scmp.ne.s32.totalorder %s67, %s68
    %p80 = scmp.eq.s32.totalorder %s16, 1
    %p81 = por %p79, %p80
    %p83 = scmp.ne.s32.totalorder %s68, %s82
    %p84 = scmp.eq.s32.totalorder %s16, 0
    %p85 = por %p83, %p84
    %s87 = sadd.s32 %s86, 1
    %p90 = scmp.eq.s32.totalorder %s10, 1
    %p91 = scmp.ne.s32.totalorder %s86, %s88
    %p92 = scmp.eq.s32.totalorder %s10, 0
    %p93 = por %p91, %p92
    %p94 = scmp.ne.s32.totalorder %s86, %s88
    %p95 = scmp.eq.s32.totalorder %s15, 1
    %p96 = por %p94, %p95
    %p97 = scmp.ne.s32.totalorder %s88, %s89
    %p98 = scmp.eq.s32.totalorder %s15, 0
    %p99 = por %p97, %p98
    %p100 = scmp.ne.s32.totalorder %s88, %s89
    %p101 = scmp.eq.s32.totalorder %s16, 1
    %p102 = por %p100, %p101
    %p104 = scmp.ne.s32.totalorder %s89, %s103
    %p105 = scmp.eq.s32.totalorder %s16, 0
    %p106 = por %p104, %p105
    %s107 = ssub.s32 %s10, %s17
    %p108 = scmp.eq.s32.totalorder %s107, 0
    %s110 = sadd.s32 %s109, 1
    %s111 = scalar_select %p108, %s109, %s110
    %p114 = pneg %p108
    %p115 = scmp.eq.s32.totalorder %s10, 1
    %p116 = por %p114, %p115
    %p117 = scmp.ne.s32.totalorder %s109, %s112
    %p118 = scmp.eq.s32.totalorder %s10, 0
    %p119 = por %p117, %p118
    %p120 = scmp.ne.s32.totalorder %s109, %s112
    %p121 = scmp.eq.s32.totalorder %s15, 1
    %p122 = por %p120, %p121
    %p123 = scmp.ne.s32.totalorder %s112, %s113
    %p124 = scmp.eq.s32.totalorder %s15, 0
    %p125 = por %p123, %p124
    %p126 = scmp.ne.s32.totalorder %s112, %s113
    %p127 = scmp.eq.s32.totalorder %s16, 1
    %p128 = por %p126, %p127
    %p130 = scmp.ne.s32.totalorder %s113, %s129
    %p131 = scmp.eq.s32.totalorder %s16, 0
    %p132 = por %p130, %p131
    %p133 = scmp.le.s32.totalorder 1, %s10
    %p134 = scmp.lt.s32.totalorder %s10, 3
    %p135 = pnand %p133, %p134
    %p136 = pneg %p135
    // Predicated region
    $region9: #{drunet_var_forward.15} parent=5 // pred_check
      _
    $region10: #{drunet_var_forward.15} parent=5 // pred_check_branch
      %138 = sbr.rel (%p135) target = $region12
    $region11: #{drunet_var_forward.15} parent=5 // pred_region
      %s139 = ssub.s32 %s10, 1
      // Predicated region
      $region13: #{drunet_var_forward.15} parent=11 // pred_check
        %p140 = pneg %p57
      $region14: #{drunet_var_forward.15} parent=11 // pred_check_branch
        %142 = sbr.rel (%p140) target = $region16
      $region15: #{drunet_var_forward.15} parent=11 // pred_region
        _
      $region16: #{drunet_var_forward.15} parent=11 // pred_fallthru
        _
      // Predicated region
      $region17: #{drunet_var_forward.15} parent=11 // pred_check
        %p143 = pneg %p78
      $region18: #{drunet_var_forward.15} parent=11 // pred_check_branch
        %145 = sbr.rel (%p143) target = $region20
      $region19: #{drunet_var_forward.15} parent=11 // pred_region
        _
      $region20: #{drunet_var_forward.15} parent=11 // pred_fallthru
        _
      // Predicated region
      $region21: #{drunet_var_forward.15} parent=11 // pred_check
        %p146 = pneg %p99
      $region22: #{drunet_var_forward.15} parent=11 // pred_check_branch
        %148 = sbr.rel (%p146) target = $region24
      $region23: #{drunet_var_forward.15} parent=11 // pred_region
        _
      $region24: #{drunet_var_forward.15} parent=11 // pred_fallthru
        _
    $region12: #{drunet_var_forward.15} parent=5 // pred_fallthru
      _
    %p149 = scmp.lt.s32.totalorder %s10, 2
    // Predicated region
    $region25: #{drunet_var_forward.15} parent=5 // pred_check
      %p150 = pneg %p149
    $region26: #{drunet_var_forward.15} parent=5 // pred_check_branch
      %152 = sbr.rel (%p150) target = $region28
    $region27: #{drunet_var_forward.15} parent=5 // pred_region
      // Predicated region
      $region29: #{drunet_var_forward.15} parent=27 // pred_check
        %p153 = pneg %p30
      $region30: #{drunet_var_forward.15} parent=27 // pred_check_branch
        %155 = sbr.rel (%p153) target = $region32
      $region31: #{drunet_var_forward.15} parent=27 // pred_region
        %p156 = scmp.lt.s32.totalorder %s10, 1
        %s157 = scalar_select %p156, %s10, 1
        %s158 = smul.addr %s157, 10
        %s159 = smul.addr %s158, 4
        %s160 = scalar_lea.vmem %s0, %s159
      $region32: #{drunet_var_forward.15} parent=27 // pred_fallthru
        _
    $region28: #{drunet_var_forward.15} parent=5 // pred_fallthru
      _
    %p161 = scmp.le.s32.totalorder 1, %s10
    %p162 = scmp.lt.s32.totalorder %s10, 3
    %p163 = pnand %p161, %p162
    %p164 = pneg %p163
    // Predicated region
    $region33: #{drunet_var_forward.15} parent=5 // pred_check
      _
    $region34: #{drunet_var_forward.15} parent=5 // pred_check_branch
      %166 = sbr.rel (%p163) target = $region36
    $region35: #{drunet_var_forward.15} parent=5 // pred_region
      %s167 = ssub.s32 %s10, 1
      %p168 = scmp.lt.s32.totalorder %s15, 1
      %s169 = scalar_select %p168, %s15, 1
      %s170 = smul.addr %s169, 10
      %s171 = smul.addr %s170, 4
      %s172 = scalar_lea.vmem %s0, %s171
      %p173 = pneg %p36
      %p174 = pneg %p33
      %p175 = pneg %p57
      %p176 = pneg %p54
      %p177 = pneg %p78
      %p178 = pneg %p75
      %p179 = pneg %p99
      %p180 = pneg %p96
      %p181 = pneg %p125
      %p182 = pneg %p122
      %p183 = scmp.lt.s32.totalorder %s15, 1
      %s184 = scalar_select %p183, %s15, 1
      %s185 = smul.addr %s184, 8
      %s186 = smul.addr %s185, 4
      %s187 = scalar_lea.vmem %s4, %s186
      %p188 = scmp.lt.s32.totalorder %s15, 1
      %s189 = scalar_select %p188, %s15, 1
      %s190 = smul.addr %s189, 10
      %s191 = smul.addr %s190, 4
      %s192 = scalar_lea.vmem %s0, %s191
      %p193 = scmp.lt.s32.totalorder %s15, 1
      %s194 = scalar_select %p193, %s15, 1
      %s195 = smul.addr %s194, 8
      %s196 = smul.addr %s195, 4
      %s197 = scalar_lea.vmem %s4, %s196
      %v199 = vld [vmem:[%s192] sm:$0xf]
      %v200 = vld [vmem:[%s192 + $0x4] sm:$0xf]
      %v201 = vld [vmem:[%s192 + $0x8] sm:$0xf]
      %v202 = vld [vmem:[%s192 + $0xc] sm:$0xf]
      %v203 = vld [vmem:[%s192 + $0x10] sm:$0xf]
      %v204 = vld [vmem:[%s192 + $0x14] sm:$0xf]
      %v205 = vld [vmem:[%s192 + $0x18] sm:$0xf]
      %v206 = vld [vmem:[%s192 + $0x1c] sm:$0xf]
      %v207 = vld [vmem:[%s1] sm:$0xf]
      %v208 = vld [vmem:[%s1 + $0x4] sm:$0xf]
      %v209 = vld [vmem:[%s1 + $0x8] sm:$0xf]
      %v210 = vld [vmem:[%s1 + $0xc] sm:$0xf]
      %v211 = vld [vmem:[%s1 + $0x10] sm:$0xf]
      %v212 = vld [vmem:[%s1 + $0x14] sm:$0xf]
      %v213 = vld [vmem:[%s1 + $0x18] sm:$0xf]
      %v214 = vld [vmem:[%s1 + $0x1c] sm:$0xf]
      %v215 = vld [vmem:[%s1 + $0x20] sm:$0xf]
      %v216 = vld [vmem:[%s1 + $0x24] sm:$0xf]
      %v217 = vld [vmem:[%s1 + $0x28] sm:$0xf]
      %v218 = vld [vmem:[%s1 + $0x2c] sm:$0xf]
      %v219 = vld [vmem:[%s192 + $0x20] sm:$0xf]
      %s220 = scalar_lea.vmem %s1, 48
      %v221 = vld [vmem:[%s220] sm:$0xf]
      %v222 = vld [vmem:[%s220 + $0x4] sm:$0xf]
      %v223 = vld [vmem:[%s220 + $0x8] sm:$0xf]
      %v224 = vld [vmem:[%s220 + $0xc] sm:$0xf]
      %v225 = vld [vmem:[%s220 + $0x10] sm:$0xf]
      %v226 = vld [vmem:[%s220 + $0x14] sm:$0xf]
      %v227 = vld [vmem:[%s220 + $0x18] sm:$0xf]
      %v228 = vld [vmem:[%s220 + $0x1c] sm:$0xf]
      %v229 = vld [vmem:[%s220 + $0x20] sm:$0xf]
      %v230 = vld [vmem:[%s220 + $0x24] sm:$0xf]
      %v231 = vld [vmem:[%s220 + $0x28] sm:$0xf]
      %v232 = vld [vmem:[%s220 + $0x2c] sm:$0xf]
      %v241 = vunpack.c.l.b16 %v200
      %v242 = vunpack.c.l.b16 %v201
      %v243 = vunpack.c.l.b16 %v202
      %v244 = vunpack.c.l.b16 %v203
      %v245 = vunpack.c.l.b16 %v204
      %v246 = vunpack.c.l.b16 %v205
      %v247 = vunpack.c.l.b16 %v206
      %v248 = vunpack.c.l.b16 %v219
      %v249 = vpack.c.b16 %v242, %v241
      %v250 = vpack.c.b16 %v244, %v243
      %v251 = vpack.c.b16 %v246, %v245
      %v252 = vpack.c.b16 %v248, %v247
      %v265 = vunpack.c.l.b16 %v221
      %v266 = vunpack.c.l.b16 %v222
      %v267 = vunpack.c.l.b16 %v223
      %v268 = vunpack.c.l.b16 %v224
      %v269 = vunpack.c.l.b16 %v225
      %v270 = vunpack.c.l.b16 %v226
      %v271 = vunpack.c.l.b16 %v227
      %v272 = vunpack.c.l.b16 %v228
      %v273 = vunpack.c.l.b16 %v229
      %v274 = vunpack.c.l.b16 %v230
      %v275 = vunpack.c.l.b16 %v231
      %v276 = vunpack.c.l.b16 %v232
      %v277 = vpack.c.b16 %v266, %v265
      %v278 = vpack.c.b16 %v268, %v267
      %v279 = vpack.c.b16 %v270, %v269
      %v280 = vpack.c.b16 %v272, %v271
      %v281 = vpack.c.b16 %v274, %v273
      %v282 = vpack.c.b16 %v276, %v275
      %vm289 = vcmask 785408
      %v291 = vsel %vm289, %v249, 0
      %v294 = vsel %vm289, %v250, 0
      %v297 = vsel %vm289, %v251, 0
      %v300 = vsel %vm289, %v252, 0
      %302 = vmatprep.subr.bf16.mxu0 0
      %303 = vmatpush1.bf16.msra.mxu0 0
      %304 = vmatprep.subr.bf16.mxu0 0
      %305 = vmatpush1.bf16.msra.mxu0 0
      %306 = vmatprep.subr.bf16.mxu0 0
      %307 = vmatpush1.bf16.msra.mxu0 %v282
      %308 = vmatprep.subr.bf16.mxu0 0
      %309 = vmatpush1.bf16.msra.mxu0 %v281
      %310 = vmatprep.subr.bf16.mxu0 0
      %311 = vmatpush1.bf16.msra.mxu0 %v280
      %312 = vmatprep.subr.bf16.mxu0 0
      %313 = vmatpush1.bf16.msra.mxu0 %v279
      %314 = vmatprep.subr.bf16.mxu0 0
      %315 = vmatpush1.bf16.msra.mxu0 %v278
      %316 = vmatprep.subr.bf16.mxu0 0
      %317 = vmatpush1.bf16.msra.mxu0 %v277
      %318 = vmatprep.subr.bf16.mxu0 0
      %319 = vmatpush2.bf16.msra.mxu0 0
      %320 = vmatprep.subr.bf16.mxu0 0
      %321 = vmatpush2.bf16.msra.mxu0 0
      %322 = vmatprep.subr.bf16.mxu0 0
      %323 = vmatpush2.bf16.msra.mxu0 0
      %324 = vmatprep.subr.bf16.mxu0 0
      %325 = vmatpush2.bf16.msra.mxu0 0
      %326 = vmatprep.subr.bf16.mxu0 0
      %327 = vmatpush2.bf16.msra.mxu0 0
      %328 = vmatprep.subr.bf16.mxu0 0
      %329 = vmatpush2.bf16.msra.mxu0 0
      %330 = vmatprep.subr.bf16.mxu0 0
      %331 = vmatpush2.bf16.msra.mxu0 0
      %332 = vmatprep.subr.bf16.mxu0 0
      %333 = vmatpush2.bf16.msra.mxu0 0
      %334 = vmatprep.mubr.bf16.mxu0 0
      %335 = vmatmul.mubr.bf16.gmra.mxu0 %v291
      %v336 = vpop.f32.mrf.mxu0
      %v337 = vadd.f32 0.0, %v336
      %v338 = vpop.f32.mrf.mxu0
      %v339 = vpop.f32.mrf.mxu0
      %v340 = vadd.f32 0.0, %v339
      %v341 = vpop.f32.mrf.mxu0
      %342 = vmatprep.mubr.bf16.mxu0 0
      %343 = vmatmul.mubr.bf16.gmra.mxu0 %v294
      %v344 = vpop.f32.mrf.mxu0
      %v345 = vadd.f32 0.0, %v344
      %v346 = vpop.f32.mrf.mxu0
      %v347 = vpop.f32.mrf.mxu0
      %v348 = vadd.f32 0.0, %v347
      %v349 = vpop.f32.mrf.mxu0
      %350 = vmatprep.mubr.bf16.mxu0 0
      %351 = vmatmul.mubr.bf16.gmra.mxu0 %v297
      %v352 = vpop.f32.mrf.mxu0
      %v353 = vadd.f32 0.0, %v352
      %v354 = vpop.f32.mrf.mxu0
      %v355 = vpop.f32.mrf.mxu0
      %v356 = vadd.f32 0.0, %v355
      %v357 = vpop.f32.mrf.mxu0
      %358 = vmatprep.mubr.bf16.mxu0 0
      %359 = vmatmul.mubr.bf16.gmra.mxu0 %v300
      %v360 = vpop.f32.mrf.mxu0
      %v361 = vadd.f32 0.0, %v360
      %v362 = vpop.f32.mrf.mxu0
      %v363 = vpop.f32.mrf.mxu0
      %v364 = vadd.f32 0.0, %v363
      %v365 = vpop.f32.mrf.mxu0
      %366 = vdwg.mxu0
      %v368 = vunpack.c.l.b16 %v199
      %v369 = vpack.c.b16 %v241, %v368
      %v370 = vpack.c.b16 %v243, %v242
      %v371 = vpack.c.b16 %v245, %v244
      %v372 = vpack.c.b16 %v247, %v246
      %v385 = vunpack.c.l.b16 %v207
      %v386 = vunpack.c.l.b16 %v208
      %v387 = vunpack.c.l.b16 %v209
      %v388 = vunpack.c.l.b16 %v210
      %v389 = vunpack.c.l.b16 %v211
      %v390 = vunpack.c.l.b16 %v212
      %v391 = vunpack.c.l.b16 %v213
      %v392 = vunpack.c.l.b16 %v214
      %v393 = vunpack.c.l.b16 %v215
      %v394 = vunpack.c.l.b16 %v216
      %v395 = vunpack.c.l.b16 %v217
      %v396 = vunpack.c.l.b16 %v218
      %v397 = vpack.c.b16 %v386, %v385
      %v398 = vpack.c.b16 %v388, %v387
      %v399 = vpack.c.b16 %v390, %v389
      %v400 = vpack.c.b16 %v392, %v391
      %v401 = vpack.c.b16 %v394, %v393
      %v402 = vpack.c.b16 %v396, %v395
      %v410 = vsel %vm289, %v369, 0
      %v413 = vsel %vm289, %v370, 0
      %v416 = vsel %vm289, %v371, 0
      %v419 = vsel %vm289, %v372, 0
      %421 = vmatprep.subr.bf16.mxu0 0
      %422 = vmatpush1.bf16.msra.mxu0 0
      %423 = vmatprep.subr.bf16.mxu0 0
      %424 = vmatpush1.bf16.msra.mxu0 0
      %425 = vmatprep.subr.bf16.mxu0 0
      %426 = vmatpush1.bf16.msra.mxu0 %v402
      %427 = vmatprep.subr.bf16.mxu0 0
      %428 = vmatpush1.bf16.msra.mxu0 %v401
      %429 = vmatprep.subr.bf16.mxu0 0
      %430 = vmatpush1.bf16.msra.mxu0 %v400
      %431 = vmatprep.subr.bf16.mxu0 0
      %432 = vmatpush1.bf16.msra.mxu0 %v399
      %433 = vmatprep.subr.bf16.mxu0 0
      %434 = vmatpush1.bf16.msra.mxu0 %v398
      %435 = vmatprep.subr.bf16.mxu0 0
      %436 = vmatpush1.bf16.msra.mxu0 %v397
      %437 = vmatprep.subr.bf16.mxu0 0
      %438 = vmatpush2.bf16.msra.mxu0 0
      %439 = vmatprep.subr.bf16.mxu0 0
      %440 = vmatpush2.bf16.msra.mxu0 0
      %441 = vmatprep.subr.bf16.mxu0 0
      %442 = vmatpush2.bf16.msra.mxu0 0
      %443 = vmatprep.subr.bf16.mxu0 0
      %444 = vmatpush2.bf16.msra.mxu0 0
      %445 = vmatprep.subr.bf16.mxu0 0
      %446 = vmatpush2.bf16.msra.mxu0 0
      %447 = vmatprep.subr.bf16.mxu0 0
      %448 = vmatpush2.bf16.msra.mxu0 0
      %449 = vmatprep.subr.bf16.mxu0 0
      %450 = vmatpush2.bf16.msra.mxu0 0
      %451 = vmatprep.subr.bf16.mxu0 0
      %452 = vmatpush2.bf16.msra.mxu0 0
      %453 = vmatprep.mubr.bf16.mxu0 0
      %454 = vmatmul.mubr.bf16.gmra.mxu0 %v410
      %v455 = vpop.f32.mrf.mxu0
      %v456 = vadd.f32 %v337, %v455
      %v457 = vpop.f32.mrf.mxu0
      %v458 = vpop.f32.mrf.mxu0
      %v459 = vadd.f32 %v340, %v458
      %v460 = vpop.f32.mrf.mxu0
      %461 = vmatprep.mubr.bf16.mxu0 0
      %462 = vmatmul.mubr.bf16.gmra.mxu0 %v413
      %v463 = vpop.f32.mrf.mxu0
      %v464 = vadd.f32 %v345, %v463
      %v465 = vpop.f32.mrf.mxu0
      %v466 = vpop.f32.mrf.mxu0
      %v467 = vadd.f32 %v348, %v466
      %v468 = vpop.f32.mrf.mxu0
      %469 = vmatprep.mubr.bf16.mxu0 0
      %470 = vmatmul.mubr.bf16.gmra.mxu0 %v416
      %v471 = vpop.f32.mrf.mxu0
      %v472 = vadd.f32 %v353, %v471
      %v473 = vpop.f32.mrf.mxu0
      %v474 = vpop.f32.mrf.mxu0
      %v475 = vadd.f32 %v356, %v474
      %v476 = vpop.f32.mrf.mxu0
      %477 = vmatprep.mubr.bf16.mxu0 0
      %478 = vmatmul.mubr.bf16.gmra.mxu0 %v419
      %v479 = vpop.f32.mrf.mxu0
      %v480 = vadd.f32 %v361, %v479
      %v481 = vpop.f32.mrf.mxu0
      %v482 = vpop.f32.mrf.mxu0
      %v483 = vadd.f32 %v364, %v482
      %v484 = vpop.f32.mrf.mxu0
      %485 = vdwg.mxu0
      %v486 = vld [vmem:[%s192 + $0x8] sm:$0xf]
      %v487 = vld [vmem:[%s192 + $0xc] sm:$0xf]
      %v488 = vld [vmem:[%s192 + $0x10] sm:$0xf]
      %v489 = vld [vmem:[%s192 + $0x14] sm:$0xf]
      %v490 = vld [vmem:[%s192 + $0x18] sm:$0xf]
      %v491 = vld [vmem:[%s192 + $0x1c] sm:$0xf]
      %v492 = vld [vmem:[%s192 + $0x20] sm:$0xf]
      %v493 = vld [vmem:[%s192 + $0x24] sm:$0xf]
      %s494 = scalar_lea.vmem %s1, 96
      %v495 = vld [vmem:[%s494] sm:$0xf]
      %v496 = vld [vmem:[%s494 + $0x4] sm:$0xf]
      %v497 = vld [vmem:[%s494 + $0x8] sm:$0xf]
      %v498 = vld [vmem:[%s494 + $0xc] sm:$0xf]
      %v499 = vld [vmem:[%s494 + $0x10] sm:$0xf]
      %v500 = vld [vmem:[%s494 + $0x14] sm:$0xf]
      %v501 = vld [vmem:[%s494 + $0x18] sm:$0xf]
      %v502 = vld [vmem:[%s494 + $0x1c] sm:$0xf]
      %v503 = vld [vmem:[%s494 + $0x20] sm:$0xf]
      %v504 = vld [vmem:[%s494 + $0x24] sm:$0xf]
      %v505 = vld [vmem:[%s494 + $0x28] sm:$0xf]
      %v506 = vld [vmem:[%s494 + $0x2c] sm:$0xf]
      %v515 = vunpack.c.l.b16 %v486
      %v516 = vunpack.c.l.b16 %v487
      %v517 = vunpack.c.l.b16 %v488
      %v518 = vunpack.c.l.b16 %v489
      %v519 = vunpack.c.l.b16 %v490
      %v520 = vunpack.c.l.b16 %v491
      %v521 = vunpack.c.l.b16 %v492
      %v522 = vunpack.c.l.b16 %v493
      %v523 = vpack.c.b16 %v516, %v515
      %v524 = vpack.c.b16 %v518, %v517
      %v525 = vpack.c.b16 %v520, %v519
      %v526 = vpack.c.b16 %v522, %v521
      %v539 = vunpack.c.l.b16 %v495
      %v540 = vunpack.c.l.b16 %v496
      %v541 = vunpack.c.l.b16 %v497
      %v542 = vunpack.c.l.b16 %v498
      %v543 = vunpack.c.l.b16 %v499
      %v544 = vunpack.c.l.b16 %v500
      %v545 = vunpack.c.l.b16 %v501
      %v546 = vunpack.c.l.b16 %v502
      %v547 = vunpack.c.l.b16 %v503
      %v548 = vunpack.c.l.b16 %v504
      %v549 = vunpack.c.l.b16 %v505
      %v550 = vunpack.c.l.b16 %v506
      %v551 = vpack.c.b16 %v540, %v539
      %v552 = vpack.c.b16 %v542, %v541
      %v553 = vpack.c.b16 %v544, %v543
      %v554 = vpack.c.b16 %v546, %v545
      %v555 = vpack.c.b16 %v548, %v547
      %v556 = vpack.c.b16 %v550, %v549
      %v564 = vsel %vm289, %v523, 0
      %v567 = vsel %vm289, %v524, 0
      %v570 = vsel %vm289, %v525, 0
      %v573 = vsel %vm289, %v526, 0
      %575 = vmatprep.subr.bf16.mxu0 0
      %576 = vmatpush1.bf16.msra.mxu0 0
      %577 = vmatprep.subr.bf16.mxu0 0
      %578 = vmatpush1.bf16.msra.mxu0 0
      %579 = vmatprep.subr.bf16.mxu0 0
      %580 = vmatpush1.bf16.msra.mxu0 %v556
      %581 = vmatprep.subr.bf16.mxu0 0
      %582 = vmatpush1.bf16.msra.mxu0 %v555
      %583 = vmatprep.subr.bf16.mxu0 0
      %584 = vmatpush1.bf16.msra.mxu0 %v554
      %585 = vmatprep.subr.bf16.mxu0 0
      %586 = vmatpush1.bf16.msra.mxu0 %v553
      %587 = vmatprep.subr.bf16.mxu0 0
      %588 = vmatpush1.bf16.msra.mxu0 %v552
      %589 = vmatprep.subr.bf16.mxu0 0
      %590 = vmatpush1.bf16.msra.mxu0 %v551
      %591 = vmatprep.subr.bf16.mxu0 0
      %592 = vmatpush2.bf16.msra.mxu0 0
      %593 = vmatprep.subr.bf16.mxu0 0
      %594 = vmatpush2.bf16.msra.mxu0 0
      %595 = vmatprep.subr.bf16.mxu0 0
      %596 = vmatpush2.bf16.msra.mxu0 0
      %597 = vmatprep.subr.bf16.mxu0 0
      %598 = vmatpush2.bf16.msra.mxu0 0
      %599 = vmatprep.subr.bf16.mxu0 0
      %600 = vmatpush2.bf16.msra.mxu0 0
      %601 = vmatprep.subr.bf16.mxu0 0
      %602 = vmatpush2.bf16.msra.mxu0 0
      %603 = vmatprep.subr.bf16.mxu0 0
      %604 = vmatpush2.bf16.msra.mxu0 0
      %605 = vmatprep.subr.bf16.mxu0 0
      %606 = vmatpush2.bf16.msra.mxu0 0
      %607 = vmatprep.mubr.bf16.mxu0 0
      %608 = vmatmul.mubr.bf16.gmra.mxu0 %v564
      %v609 = vpop.f32.mrf.mxu0
      %v610 = vadd.f32 0.0, %v609
      %v611 = vpop.f32.mrf.mxu0
      %v612 = vpop.f32.mrf.mxu0
      %v613 = vadd.f32 0.0, %v612
      %v614 = vpop.f32.mrf.mxu0
      %615 = vmatprep.mubr.bf16.mxu0 0
      %616 = vmatmul.mubr.bf16.gmra.mxu0 %v567
      %v617 = vpop.f32.mrf.mxu0
      %v618 = vadd.f32 0.0, %v617
      %v619 = vpop.f32.mrf.mxu0
      %v620 = vpop.f32.mrf.mxu0
      %v621 = vadd.f32 0.0, %v620
      %v622 = vpop.f32.mrf.mxu0
      %623 = vmatprep.mubr.bf16.mxu0 0
      %624 = vmatmul.mubr.bf16.gmra.mxu0 %v570
      %v625 = vpop.f32.mrf.mxu0
      %v626 = vadd.f32 0.0, %v625
      %v627 = vpop.f32.mrf.mxu0
      %v628 = vpop.f32.mrf.mxu0
      %v629 = vadd.f32 0.0, %v628
      %v630 = vpop.f32.mrf.mxu0
      %631 = vmatprep.mubr.bf16.mxu0 0
      %632 = vmatmul.mubr.bf16.gmra.mxu0 %v573
      %v633 = vpop.f32.mrf.mxu0
      %v634 = vadd.f32 0.0, %v633
      %v635 = vpop.f32.mrf.mxu0
      %v636 = vpop.f32.mrf.mxu0
      %v637 = vadd.f32 0.0, %v636
      %v638 = vpop.f32.mrf.mxu0
      %639 = vdwg.mxu0
      %v640 = vadd.f32 %v456, %v610
      %v641 = vadd.f32 %v459, %v613
      %v642 = vadd.f32 %v464, %v618
      %v643 = vadd.f32 %v467, %v621
      %v644 = vadd.f32 %v472, %v626
      %v645 = vadd.f32 %v475, %v629
      %v646 = vadd.f32 %v480, %v634
      %v647 = vadd.f32 %v483, %v637
      %v648 = vld [vmem:[%s2] sm:$0x1]
      %v650 = vlaneseq
      %v651 = vshrl.u32 %v650, 7
      %v652 = vsub.s32 0, %v651
      %v653 = vrot.slane %v648, %v652
      %v655 = vmul.f32 %v640, %v653
      %v656 = vmul.f32 %v641, %v653
      %v657 = vmul.f32 %v642, %v653
      %v658 = vmul.f32 %v643, %v653
      %v659 = vmul.f32 %v644, %v653
      %v660 = vmul.f32 %v645, %v653
      %v661 = vmul.f32 %v646, %v653
      %v662 = vmul.f32 %v647, %v653
      %v663 = vld [vmem:[%s3] sm:$0x1]
      %v665 = vlaneseq
      %v666 = vshrl.u32 %v665, 7
      %v667 = vsub.s32 0, %v666
      %v668 = vrot.slane %v663, %v667
      %v670 = vadd.f32 %v655, %v668
      %v671 = vadd.f32 %v656, %v668
      %v672 = vadd.f32 %v657, %v668
      %v673 = vadd.f32 %v658, %v668
      %v674 = vadd.f32 %v659, %v668
      %v675 = vadd.f32 %v660, %v668
      %v676 = vadd.f32 %v661, %v668
      %v677 = vadd.f32 %v662, %v668
      %v678 = vmax.f32 %v670, 0.0
      %v679 = vmax.f32 %v671, 0.0
      %v680 = vmax.f32 %v672, 0.0
      %v681 = vmax.f32 %v673, 0.0
      %v682 = vmax.f32 %v674, 0.0
      %v683 = vmax.f32 %v675, 0.0
      %v684 = vmax.f32 %v676, 0.0
      %v685 = vmax.f32 %v677, 0.0
      %v686 = vpack.c.bf16 %v679, %v678
      %v687 = vpack.c.bf16 %v681, %v680
      %v688 = vpack.c.bf16 %v683, %v682
      %v689 = vpack.c.bf16 %v685, %v684
      %v694 = vunpack.c.l.b16 %v686
      %v695 = vunpack.c.h.b16 %v686
      %v696 = vunpack.c.l.b16 %v687
      %v697 = vunpack.c.h.b16 %v687
      %v698 = vunpack.c.l.b16 %v688
      %v699 = vunpack.c.h.b16 %v688
      %v700 = vunpack.c.l.b16 %v689
      %v701 = vunpack.c.h.b16 %v689
      %v702 = vpack.c.b16 %v694, %v694
      %v703 = vpack.c.b16 %v695, %v695
      %v704 = vpack.c.b16 %v696, %v696
      %v705 = vpack.c.b16 %v697, %v697
      %v706 = vpack.c.b16 %v698, %v698
      %v707 = vpack.c.b16 %v699, %v699
      %v708 = vpack.c.b16 %v700, %v700
      %v709 = vpack.c.b16 %v701, %v701
      %vm718 = vcmask 519168
      %719 = vst.msk [vmem:[%s197] sm:$0xf] %vm718, %v702
      %720 = vst.msk [vmem:[%s197 + $0x4] sm:$0xf] %vm718, %v703
      %721 = vst.msk [vmem:[%s197 + $0x8] sm:$0xf] %vm718, %v704
      %722 = vst.msk [vmem:[%s197 + $0xc] sm:$0xf] %vm718, %v705
      %723 = vst.msk [vmem:[%s197 + $0x10] sm:$0xf] %vm718, %v706
      %724 = vst.msk [vmem:[%s197 + $0x14] sm:$0xf] %vm718, %v707
      %725 = vst.msk [vmem:[%s197 + $0x18] sm:$0xf] %vm718, %v708
      %726 = vst.msk [vmem:[%s197 + $0x1c] sm:$0xf] %vm718, %v709
      %p727 = scmp.lt.s32.totalorder %s15, 1
      %s728 = scalar_select %p727, %s15, 1
      %s729 = smul.addr %s728, 8
      %s730 = smul.addr %s729, 4
      %s731 = scalar_lea.vmem %s4, %s730
      // Predicated region
      $region37: #{drunet_var_forward.15} parent=35 // pred_check
        %p732 = pneg %p122
      $region38: #{drunet_var_forward.15} parent=35 // pred_check_branch
        %734 = sbr.rel (%p732) target = $region40
      $region39: #{drunet_var_forward.15} parent=35 // pred_region
        _
      $region40: #{drunet_var_forward.15} parent=35 // pred_fallthru
        _
    $region36: #{drunet_var_forward.15} parent=5 // pred_fallthru
      _
    %p735 = scmp.le.s32.totalorder 2, %s10
    // Predicated region
    $region41: #{drunet_var_forward.15} parent=5 // pred_check
      %p736 = pneg %p735
    $region42: #{drunet_var_forward.15} parent=5 // pred_check_branch
      %738 = sbr.rel (%p736) target = $region44
    $region43: #{drunet_var_forward.15} parent=5 // pred_region
      %s739 = ssub.s32 %s10, 2
      // Predicated region
      $region45: #{drunet_var_forward.15} parent=43 // pred_check
        %p740 = pneg %p128
      $region46: #{drunet_var_forward.15} parent=43 // pred_check_branch
        %742 = sbr.rel (%p740) target = $region48
      $region47: #{drunet_var_forward.15} parent=43 // pred_region
        %p743 = scmp.lt.s32.totalorder %s16, 1
        %s744 = scalar_select %p743, %s16, 1
        %s745 = smul.addr %s744, 8
        %s746 = smul.addr %s745, 4
        %s747 = scalar_lea.vmem %s4, %s746
      $region48: #{drunet_var_forward.15} parent=43 // pred_fallthru
        _
    $region44: #{drunet_var_forward.15} parent=5 // pred_fallthru
      _
  $region6: #{drunet_var_forward.15} parent=0 // loop_footer
    %s14 = sadd.s32 1, %s10
  $region7: #{drunet_var_forward.15} parent=0 // loop_footer_branch
    %9 = sbr.rel target = $region3
  $region8: #{drunet_var_forward.15} parent=0 // loop_exit
    _

// kernel: drunet_var_forward.16
$region0: #{drunet_var_forward.16}
  #allocation0 [shape = 'u32[]', space=smem, size = 0x4, offset = 0x4, fixed_abs, tag = 'smem constant byte address 0x4 - core index']
  #allocation1 [shape = 'u32[144,128]{1,0:T(1,128)}', space=vmem, size = 0x12000, scoped, tag = 'internal scratch']
  %s0 = inlined_call_operand.vmem [shape: bf16[2,80,192], index: 0, kind: input, shape index: {}]
  %s1 = inlined_call_operand.vmem [shape: bf16[3,192,64], index: 1, kind: input, shape index: {}]
  %s2 = inlined_call_operand.vmem [shape: f32[1,64], index: 2, kind: input, shape index: {}]
  %s3 = inlined_call_operand.vmem [shape: f32[1,64], index: 3, kind: input, shape index: {}]
  %s4 = inlined_call_operand.vmem [shape: bf16[2,64,64], index: 4, kind: output, shape index: {}]
  %s5 = sld [smem:[#allocation0]]
  $region49: #{drunet_var_forward.16} parent=0
    _
  %s7 = ssub.s32 1, %s5
  %s8 = scalar_select 0, %s7, %s5
  loop: start=0, step=1, limit=4
  $region2: #{drunet_var_forward.16} parent=0 // loop_pre_header
    _
  $region3: #{drunet_var_forward.16} parent=0 // loop_header
    %s10 = sphi 0, %s14
    %p11 = scmp.ge.s32.totalorder %s10, 4
    %s20 = sphi 0, %s22
    %s23 = sphi 0, %s20
    %s24 = sphi 0, %s23
    %s40 = sphi 0, %s24
    %s44 = sphi 0, %s44
    %s46 = sphi 0, %s44
    %s47 = sphi 0, %s46
    %s61 = sphi 0, %s47
    %s65 = sphi 0, %s65
    %s67 = sphi 0, %s65
    %s68 = sphi 0, %s67
    %s82 = sphi 0, %s68
    %s86 = sphi 0, %s86
    %s88 = sphi 0, %s86
    %s89 = sphi 0, %s88
    %s103 = sphi 0, %s89
    %s109 = sphi 0, %s111
    %s112 = sphi 0, %s109
    %s113 = sphi 0, %s112
    %s129 = sphi 0, %s113
  $region4: #{drunet_var_forward.16} parent=0 // loop_header_branch
    %13 = sbr.rel (%p11) target = $region8
  $region5: #{drunet_var_forward.16} parent=0 // loop_body
    %s15 = ssub.s32 %s10, 1
    %s16 = ssub.s32 %s10, 2
    %s17 = sadd.s32 %s10, 1
    %s18 = ssub.s32 %s10, %s17
    %p19 = scmp.eq.s32.totalorder %s18, 0
    %s21 = sadd.s32 %s20, 1
    %s22 = scalar_select %p19, %s20, %s21
    %p25 = pneg %p19
    %p26 = scmp.eq.s32.totalorder %s10, 1
    %p27 = por %p25, %p26
    %p28 = scmp.ne.s32.totalorder %s20, %s23
    %p29 = scmp.eq.s32.totalorder %s10, 0
    %p30 = por %p28, %p29
    %p31 = scmp.ne.s32.totalorder %s20, %s23
    %p32 = scmp.eq.s32.totalorder %s15, 1
    %p33 = por %p31, %p32
    %p34 = scmp.ne.s32.totalorder %s23, %s24
    %p35 = scmp.eq.s32.totalorder %s15, 0
    %p36 = por %p34, %p35
    %p37 = scmp.ne.s32.totalorder %s23, %s24
    %p38 = scmp.eq.s32.totalorder %s16, 1
    %p39 = por %p37, %p38
    %p41 = scmp.ne.s32.totalorder %s24, %s40
    %p42 = scmp.eq.s32.totalorder %s16, 0
    %p43 = por %p41, %p42
    %s45 = sadd.s32 %s44, 1
    %p48 = scmp.eq.s32.totalorder %s10, 1
    %p49 = scmp.ne.s32.totalorder %s44, %s46
    %p50 = scmp.eq.s32.totalorder %s10, 0
    %p51 = por %p49, %p50
    %p52 = scmp.ne.s32.totalorder %s44, %s46
    %p53 = scmp.eq.s32.totalorder %s15, 1
    %p54 = por %p52, %p53
    %p55 = scmp.ne.s32.totalorder %s46, %s47
    %p56 = scmp.eq.s32.totalorder %s15, 0
    %p57 = por %p55, %p56
    %p58 = scmp.ne.s32.totalorder %s46, %s47
    %p59 = scmp.eq.s32.totalorder %s16, 1
    %p60 = por %p58, %p59
    %p62 = scmp.ne.s32.totalorder %s47, %s61
    %p63 = scmp.eq.s32.totalorder %s16, 0
    %p64 = por %p62, %p63
    %s66 = sadd.s32 %s65, 1
    %p69 = scmp.eq.s32.totalorder %s10, 1
    %p70 = scmp.ne.s32.totalorder %s65, %s67
    %p71 = scmp.eq.s32.totalorder %s10, 0
    %p72 = por %p70, %p71
    %p73 = scmp.ne.s32.totalorder %s65, %s67
    %p74 = scmp.eq.s32.totalorder %s15, 1
    %p75 = por %p73, %p74
    %p76 = scmp.ne.s32.totalorder %s67, %s68
    %p77 = scmp.eq.s32.totalorder %s15, 0
    %p78 = por %p76, %p77
    %p79 = scmp.ne.s32.totalorder %s67, %s68
    %p80 = scmp.eq.s32.totalorder %s16, 1
    %p81 = por %p79, %p80
    %p83 = scmp.ne.s32.totalorder %s68, %s82
    %p84 = scmp.eq.s32.totalorder %s16, 0
    %p85 = por %p83, %p84
    %s87 = sadd.s32 %s86, 1
    %p90 = scmp.eq.s32.totalorder %s10, 1
    %p91 = scmp.ne.s32.totalorder %s86, %s88
    %p92 = scmp.eq.s32.totalorder %s10, 0
    %p93 = por %p91, %p92
    %p94 = scmp.ne.s32.totalorder %s86, %s88
    %p95 = scmp.eq.s32.totalorder %s15, 1
    %p96 = por %p94, %p95
    %p97 = scmp.ne.s32.totalorder %s88, %s89
    %p98 = scmp.eq.s32.totalorder %s15, 0
    %p99 = por %p97, %p98
    %p100 = scmp.ne.s32.totalorder %s88, %s89
    %p101 = scmp.eq.s32.totalorder %s16, 1
    %p102 = por %p100, %p101
    %p104 = scmp.ne.s32.totalorder %s89, %s103
    %p105 = scmp.eq.s32.totalorder %s16, 0
    %p106 = por %p104, %p105
    %s107 = ssub.s32 %s10, %s17
    %p108 = scmp.eq.s32.totalorder %s107, 0
    %s110 = sadd.s32 %s109, 1
    %s111 = scalar_select %p108, %s109, %s110
    %p114 = pneg %p108
    %p115 = scmp.eq.s32.totalorder %s10, 1
    %p116 = por %p114, %p115
    %p117 = scmp.ne.s32.totalorder %s109, %s112
    %p118 = scmp.eq.s32.totalorder %s10, 0
    %p119 = por %p117, %p118
    %p120 = scmp.ne.s32.totalorder %s109, %s112
    %p121 = scmp.eq.s32.totalorder %s15, 1
    %p122 = por %p120, %p121
    %p123 = scmp.ne.s32.totalorder %s112, %s113
    %p124 = scmp.eq.s32.totalorder %s15, 0
    %p125 = por %p123, %p124
    %p126 = scmp.ne.s32.totalorder %s112, %s113
    %p127 = scmp.eq.s32.totalorder %s16, 1
    %p128 = por %p126, %p127
    %p130 = scmp.ne.s32.totalorder %s113, %s129
    %p131 = scmp.eq.s32.totalorder %s16, 0
    %p132 = por %p130, %p131
    %p133 = scmp.le.s32.totalorder 1, %s10
    %p134 = scmp.lt.s32.totalorder %s10, 3
    %p135 = pnand %p133, %p134
    %p136 = pneg %p135
    // Predicated region
    $region9: #{drunet_var_forward.16} parent=5 // pred_check
      _
    $region10: #{drunet_var_forward.16} parent=5 // pred_check_branch
      %138 = sbr.rel (%p135) target = $region12
    $region11: #{drunet_var_forward.16} parent=5 // pred_region
      %s139 = ssub.s32 %s10, 1
      // Predicated region
      $region13: #{drunet_var_forward.16} parent=11 // pred_check
        %p140 = pneg %p57
      $region14: #{drunet_var_forward.16} parent=11 // pred_check_branch
        %142 = sbr.rel (%p140) target = $region16
      $region15: #{drunet_var_forward.16} parent=11 // pred_region
        _
      $region16: #{drunet_var_forward.16} parent=11 // pred_fallthru
        _
      // Predicated region
      $region17: #{drunet_var_forward.16} parent=11 // pred_check
        %p143 = pneg %p78
      $region18: #{drunet_var_forward.16} parent=11 // pred_check_branch
        %145 = sbr.rel (%p143) target = $region20
      $region19: #{drunet_var_forward.16} parent=11 // pred_region
        _
      $region20: #{drunet_var_forward.16} parent=11 // pred_fallthru
        _
      // Predicated region
      $region21: #{drunet_var_forward.16} parent=11 // pred_check
        %p146 = pneg %p99
      $region22: #{drunet_var_forward.16} parent=11 // pred_check_branch
        %148 = sbr.rel (%p146) target = $region24
      $region23: #{drunet_var_forward.16} parent=11 // pred_region
        _
      $region24: #{drunet_var_forward.16} parent=11 // pred_fallthru
        _
    $region12: #{drunet_var_forward.16} parent=5 // pred_fallthru
      _
    %p149 = scmp.lt.s32.totalorder %s10, 2
    // Predicated region
    $region25: #{drunet_var_forward.16} parent=5 // pred_check
      %p150 = pneg %p149
    $region26: #{drunet_var_forward.16} parent=5 // pred_check_branch
      %152 = sbr.rel (%p150) target = $region28
    $region27: #{drunet_var_forward.16} parent=5 // pred_region
      // Predicated region
      $region29: #{drunet_var_forward.16} parent=27 // pred_check
        %p153 = pneg %p30
      $region30: #{drunet_var_forward.16} parent=27 // pred_check_branch
        %155 = sbr.rel (%p153) target = $region32
      $region31: #{drunet_var_forward.16} parent=27 // pred_region
        %p156 = scmp.lt.s32.totalorder %s10, 1
        %s157 = scalar_select %p156, %s10, 1
        %s158 = smul.addr %s157, 20
        %s159 = smul.addr %s158, 4
        %s160 = scalar_lea.vmem %s0, %s159
      $region32: #{drunet_var_forward.16} parent=27 // pred_fallthru
        _
    $region28: #{drunet_var_forward.16} parent=5 // pred_fallthru
      _
    %p161 = scmp.le.s32.totalorder 1, %s10
    %p162 = scmp.lt.s32.totalorder %s10, 3
    %p163 = pnand %p161, %p162
    %p164 = pneg %p163
    // Predicated region
    $region33: #{drunet_var_forward.16} parent=5 // pred_check
      _
    $region34: #{drunet_var_forward.16} parent=5 // pred_check_branch
      %166 = sbr.rel (%p163) target = $region36
    $region35: #{drunet_var_forward.16} parent=5 // pred_region
      %s167 = ssub.s32 %s10, 1
      %p168 = scmp.lt.s32.totalorder %s15, 1
      %s169 = scalar_select %p168, %s15, 1
      %s170 = smul.addr %s169, 20
      %s171 = smul.addr %s170, 4
      %s172 = scalar_lea.vmem %s0, %s171
      %p173 = pneg %p36
      %p174 = pneg %p33
      %p175 = pneg %p57
      %p176 = pneg %p54
      %p177 = pneg %p78
      %p178 = pneg %p75
      %p179 = pneg %p99
      %p180 = pneg %p96
      %p181 = pneg %p125
      %p182 = pneg %p122
      %p183 = scmp.lt.s32.totalorder %s15, 1
      %s184 = scalar_select %p183, %s15, 1
      %s185 = smul.addr %s184, 8
      %s186 = smul.addr %s185, 4
      %s187 = scalar_lea.vmem %s4, %s186
      %p188 = scmp.lt.s32.totalorder %s15, 1
      %s189 = scalar_select %p188, %s15, 1
      %s190 = smul.addr %s189, 20
      %s191 = smul.addr %s190, 4
      %s192 = scalar_lea.vmem %s0, %s191
      %p193 = scmp.lt.s32.totalorder %s15, 1
      %s194 = scalar_select %p193, %s15, 1
      %s195 = smul.addr %s194, 8
      %s196 = smul.addr %s195, 4
      %s197 = scalar_lea.vmem %s4, %s196
      %v199 = vld [vmem:[%s192] sm:$0xff]
      %v200 = vld [vmem:[%s192 + $0x8] sm:$0xff]
      %v201 = vld [vmem:[%s192 + $0x10] sm:$0xff]
      %v202 = vld [vmem:[%s192 + $0x18] sm:$0xff]
      %v203 = vld [vmem:[%s192 + $0x20] sm:$0xff]
      %v204 = vld [vmem:[%s192 + $0x28] sm:$0xff]
      %v205 = vld [vmem:[%s192 + $0x30] sm:$0xff]
      %v206 = vld [vmem:[%s192 + $0x38] sm:$0xff]
      %v207 = vld [vmem:[%s1] sm:$0xf]
      %v208 = vld [vmem:[%s1 + $0x4] sm:$0xf]
      %v209 = vld [vmem:[%s1 + $0x8] sm:$0xf]
      %v210 = vld [vmem:[%s1 + $0xc] sm:$0xf]
      %v211 = vld [vmem:[%s1 + $0x10] sm:$0xf]
      %v212 = vld [vmem:[%s1 + $0x14] sm:$0xf]
      %v213 = vld [vmem:[%s1 + $0x18] sm:$0xf]
      %v214 = vld [vmem:[%s1 + $0x1c] sm:$0xf]
      %v215 = vld [vmem:[%s1 + $0x20] sm:$0xf]
      %v216 = vld [vmem:[%s1 + $0x24] sm:$0xf]
      %v217 = vld [vmem:[%s1 + $0x28] sm:$0xf]
      %v218 = vld [vmem:[%s1 + $0x2c] sm:$0xf]
      %v219 = vld [vmem:[%s1 + $0x30] sm:$0xf]
      %v220 = vld [vmem:[%s1 + $0x34] sm:$0xf]
      %v221 = vld [vmem:[%s1 + $0x38] sm:$0xf]
      %v222 = vld [vmem:[%s1 + $0x3c] sm:$0xf]
      %v223 = vld [vmem:[%s1 + $0x40] sm:$0xf]
      %v224 = vld [vmem:[%s1 + $0x44] sm:$0xf]
      %v225 = vld [vmem:[%s1 + $0x48] sm:$0xf]
      %v226 = vld [vmem:[%s1 + $0x4c] sm:$0xf]
      %v227 = vld [vmem:[%s1 + $0x50] sm:$0xf]
      %v228 = vld [vmem:[%s1 + $0x54] sm:$0xf]
      %v229 = vld [vmem:[%s1 + $0x58] sm:$0xf]
      %v230 = vld [vmem:[%s1 + $0x5c] sm:$0xf]
      %v231 = vld [vmem:[%s192 + $0x40] sm:$0xff]
      %s232 = scalar_lea.vmem %s1, 96
      %v233 = vld [vmem:[%s232] sm:$0xf]
      %v234 = vld [vmem:[%s232 + $0x4] sm:$0xf]
      %v235 = vld [vmem:[%s232 + $0x8] sm:$0xf]
      %v236 = vld [vmem:[%s232 + $0xc] sm:$0xf]
      %v237 = vld [vmem:[%s232 + $0x10] sm:$0xf]
      %v238 = vld [vmem:[%s232 + $0x14] sm:$0xf]
      %v239 = vld [vmem:[%s232 + $0x18] sm:$0xf]
      %v240 = vld [vmem:[%s232 + $0x1c] sm:$0xf]
      %v241 = vld [vmem:[%s232 + $0x20] sm:$0xf]
      %v242 = vld [vmem:[%s232 + $0x24] sm:$0xf]
      %v243 = vld [vmem:[%s232 + $0x28] sm:$0xf]
      %v244 = vld [vmem:[%s232 + $0x2c] sm:$0xf]
      %v245 = vld [vmem:[%s232 + $0x30] sm:$0xf]
      %v246 = vld [vmem:[%s232 + $0x34] sm:$0xf]
      %v247 = vld [vmem:[%s232 + $0x38] sm:$0xf]
      %v248 = vld [vmem:[%s232 + $0x3c] sm:$0xf]
      %v249 = vld [vmem:[%s232 + $0x40] sm:$0xf]
      %v250 = vld [vmem:[%s232 + $0x44] sm:$0xf]
      %v251 = vld [vmem:[%s232 + $0x48] sm:$0xf]
      %v252 = vld [vmem:[%s232 + $0x4c] sm:$0xf]
      %v253 = vld [vmem:[%s232 + $0x50] sm:$0xf]
      %v254 = vld [vmem:[%s232 + $0x54] sm:$0xf]
      %v255 = vld [vmem:[%s232 + $0x58] sm:$0xf]
      %v256 = vld [vmem:[%s232 + $0x5c] sm:$0xf]
      %v265 = vunpack.c.l.b16 %v200
      %v266 = vunpack.c.h.b16 %v200
      %v267 = vunpack.c.l.b16 %v201
      %v268 = vunpack.c.h.b16 %v201
      %v269 = vunpack.c.l.b16 %v202
      %v270 = vunpack.c.h.b16 %v202
      %v271 = vunpack.c.l.b16 %v203
      %v272 = vunpack.c.h.b16 %v203
      %v273 = vunpack.c.l.b16 %v204
      %v274 = vunpack.c.h.b16 %v204
      %v275 = vunpack.c.l.b16 %v205
      %v276 = vunpack.c.h.b16 %v205
      %v277 = vunpack.c.l.b16 %v206
      %v278 = vunpack.c.h.b16 %v206
      %v279 = vunpack.c.l.b16 %v231
      %v280 = vunpack.c.h.b16 %v231
      %v281 = vpack.c.b16 %v267, %v265
      %v282 = vpack.c.b16 %v268, %v266
      %v283 = vpack.c.b16 %v271, %v269
      %v284 = vpack.c.b16 %v272, %v270
      %v285 = vpack.c.b16 %v275, %v273
      %v286 = vpack.c.b16 %v276, %v274
      %v287 = vpack.c.b16 %v279, %v277
      %v288 = vpack.c.b16 %v280, %v278
      %v317 = vunpack.c.l.b16 %v233
      %v318 = vunpack.c.l.b16 %v234
      %v319 = vunpack.c.l.b16 %v235
      %v320 = vunpack.c.l.b16 %v236
      %v321 = vunpack.c.l.b16 %v237
      %v322 = vunpack.c.l.b16 %v238
      %v323 = vunpack.c.l.b16 %v239
      %v324 = vunpack.c.l.b16 %v240
      %v325 = vunpack.c.l.b16 %v241
      %v326 = vunpack.c.l.b16 %v242
      %v327 = vunpack.c.l.b16 %v243
      %v328 = vunpack.c.l.b16 %v244
      %v329 = vunpack.c.l.b16 %v245
      %v330 = vunpack.c.l.b16 %v246
      %v331 = vunpack.c.l.b16 %v247
      %v332 = vunpack.c.l.b16 %v248
      %v333 = vunpack.c.l.b16 %v249
      %v334 = vunpack.c.l.b16 %v250
      %v335 = vunpack.c.l.b16 %v251
      %v336 = vunpack.c.l.b16 %v252
      %v337 = vunpack.c.l.b16 %v253
      %v338 = vunpack.c.l.b16 %v254
      %v339 = vunpack.c.l.b16 %v255
      %v340 = vunpack.c.l.b16 %v256
      %v341 = vpack.c.b16 %v318, %v317
      %v342 = vpack.c.b16 %v320, %v319
      %v343 = vpack.c.b16 %v322, %v321
      %v344 = vpack.c.b16 %v324, %v323
      %v345 = vpack.c.b16 %v326, %v325
      %v346 = vpack.c.b16 %v328, %v327
      %v347 = vpack.c.b16 %v330, %v329
      %v348 = vpack.c.b16 %v332, %v331
      %v349 = vpack.c.b16 %v334, %v333
      %v350 = vpack.c.b16 %v336, %v335
      %v351 = vpack.c.b16 %v338, %v337
      %v352 = vpack.c.b16 %v340, %v339
      %vm365 = vcmask 523264
      %v367 = vsel %vm365, %v282, 0
      %v370 = vsel %vm365, %v284, 0
      %v373 = vsel %vm365, %v286, 0
      %v376 = vsel %vm365, %v288, 0
      %378 = vmatprep.subr.bf16.mxu0 0
      %379 = vmatpush1.bf16.msra.mxu0 %v348
      %380 = vmatprep.subr.bf16.mxu0 0
      %381 = vmatpush1.bf16.msra.mxu0 %v347
      %382 = vmatprep.subr.bf16.mxu0 0
      %383 = vmatpush1.bf16.msra.mxu0 %v346
      %384 = vmatprep.subr.bf16.mxu0 0
      %385 = vmatpush1.bf16.msra.mxu0 %v345
      %386 = vmatprep.subr.bf16.mxu0 0
      %387 = vmatpush1.bf16.msra.mxu0 %v344
      %388 = vmatprep.subr.bf16.mxu0 0
      %389 = vmatpush1.bf16.msra.mxu0 %v343
      %390 = vmatprep.subr.bf16.mxu0 0
      %391 = vmatpush1.bf16.msra.mxu0 %v342
      %392 = vmatprep.subr.bf16.mxu0 0
      %393 = vmatpush1.bf16.msra.mxu0 %v341
      %394 = vmatprep.subr.bf16.mxu0 0
      %395 = vmatpush2.bf16.msra.mxu0 0
      %396 = vmatprep.subr.bf16.mxu0 0
      %397 = vmatpush2.bf16.msra.mxu0 0
      %398 = vmatprep.subr.bf16.mxu0 0
      %399 = vmatpush2.bf16.msra.mxu0 0
      %400 = vmatprep.subr.bf16.mxu0 0
      %401 = vmatpush2.bf16.msra.mxu0 0
      %402 = vmatprep.subr.bf16.mxu0 0
      %403 = vmatpush2.bf16.msra.mxu0 %v352
      %404 = vmatprep.subr.bf16.mxu0 0
      %405 = vmatpush2.bf16.msra.mxu0 %v351
      %406 = vmatprep.subr.bf16.mxu0 0
      %407 = vmatpush2.bf16.msra.mxu0 %v350
      %408 = vmatprep.subr.bf16.mxu0 0
      %409 = vmatpush2.bf16.msra.mxu0 %v349
      %410 = vmatprep.mubr.bf16.mxu0 %v367
      %411 = vmatmul.mubr.bf16.gmra.mxu0 %v281
      %v412 = vpop.f32.mrf.mxu0
      %v413 = vadd.f32 0.0, %v412
      %v414 = vpop.f32.mrf.mxu0
      %v415 = vpop.f32.mrf.mxu0
      %v416 = vadd.f32 0.0, %v415
      %v417 = vpop.f32.mrf.mxu0
      %418 = vmatprep.mubr.bf16.mxu0 %v370
      %419 = vmatmul.mubr.bf16.gmra.mxu0 %v283
      %v420 = vpop.f32.mrf.mxu0
      %v421 = vadd.f32 0.0, %v420
      %v422 = vpop.f32.mrf.mxu0
      %v423 = vpop.f32.mrf.mxu0
      %v424 = vadd.f32 0.0, %v423
      %v425 = vpop.f32.mrf.mxu0
      %426 = vmatprep.mubr.bf16.mxu0 %v373
      %427 = vmatmul.mubr.bf16.gmra.mxu0 %v285
      %v428 = vpop.f32.mrf.mxu0
      %v429 = vadd.f32 0.0, %v428
      %v430 = vpop.f32.mrf.mxu0
      %v431 = vpop.f32.mrf.mxu0
      %v432 = vadd.f32 0.0, %v431
      %v433 = vpop.f32.mrf.mxu0
      %434 = vmatprep.mubr.bf16.mxu0 %v376
      %435 = vmatmul.mubr.bf16.gmra.mxu0 %v287
      %v436 = vpop.f32.mrf.mxu0
      %v437 = vadd.f32 0.0, %v436
      %v438 = vpop.f32.mrf.mxu0
      %v439 = vpop.f32.mrf.mxu0
      %v440 = vadd.f32 0.0, %v439
      %v441 = vpop.f32.mrf.mxu0
      %442 = vdwg.mxu0
      %v444 = vunpack.c.l.b16 %v199
      %v445 = vunpack.c.h.b16 %v199
      %v446 = vpack.c.b16 %v265, %v444
      %v447 = vpack.c.b16 %v266, %v445
      %v448 = vpack.c.b16 %v269, %v267
      %v449 = vpack.c.b16 %v270, %v268
      %v450 = vpack.c.b16 %v273, %v271
      %v451 = vpack.c.b16 %v274, %v272
      %v452 = vpack.c.b16 %v277, %v275
      %v453 = vpack.c.b16 %v278, %v276
      %v482 = vunpack.c.l.b16 %v207
      %v483 = vunpack.c.l.b16 %v208
      %v484 = vunpack.c.l.b16 %v209
      %v485 = vunpack.c.l.b16 %v210
      %v486 = vunpack.c.l.b16 %v211
      %v487 = vunpack.c.l.b16 %v212
      %v488 = vunpack.c.l.b16 %v213
      %v489 = vunpack.c.l.b16 %v214
      %v490 = vunpack.c.l.b16 %v215
      %v491 = vunpack.c.l.b16 %v216
      %v492 = vunpack.c.l.b16 %v217
      %v493 = vunpack.c.l.b16 %v218
      %v494 = vunpack.c.l.b16 %v219
      %v495 = vunpack.c.l.b16 %v220
      %v496 = vunpack.c.l.b16 %v221
      %v497 = vunpack.c.l.b16 %v222
      %v498 = vunpack.c.l.b16 %v223
      %v499 = vunpack.c.l.b16 %v224
      %v500 = vunpack.c.l.b16 %v225
      %v501 = vunpack.c.l.b16 %v226
      %v502 = vunpack.c.l.b16 %v227
      %v503 = vunpack.c.l.b16 %v228
      %v504 = vunpack.c.l.b16 %v229
      %v505 = vunpack.c.l.b16 %v230
      %v506 = vpack.c.b16 %v483, %v482
      %v507 = vpack.c.b16 %v485, %v484
      %v508 = vpack.c.b16 %v487, %v486
      %v509 = vpack.c.b16 %v489, %v488
      %v510 = vpack.c.b16 %v491, %v490
      %v511 = vpack.c.b16 %v493, %v492
      %v512 = vpack.c.b16 %v495, %v494
      %v513 = vpack.c.b16 %v497, %v496
      %v514 = vpack.c.b16 %v499, %v498
      %v515 = vpack.c.b16 %v501, %v500
      %v516 = vpack.c.b16 %v503, %v502
      %v517 = vpack.c.b16 %v505, %v504
      %v531 = vsel %vm365, %v447, 0
      %v534 = vsel %vm365, %v449, 0
      %v537 = vsel %vm365, %v451, 0
      %v540 = vsel %vm365, %v453, 0
      %542 = vmatprep.subr.bf16.mxu0 0
      %543 = vmatpush1.bf16.msra.mxu0 %v513
      %544 = vmatprep.subr.bf16.mxu0 0
      %545 = vmatpush1.bf16.msra.mxu0 %v512
      %546 = vmatprep.subr.bf16.mxu0 0
      %547 = vmatpush1.bf16.msra.mxu0 %v511
      %548 = vmatprep.subr.bf16.mxu0 0
      %549 = vmatpush1.bf16.msra.mxu0 %v510
      %550 = vmatprep.subr.bf16.mxu0 0
      %551 = vmatpush1.bf16.msra.mxu0 %v509
      %552 = vmatprep.subr.bf16.mxu0 0
      %553 = vmatpush1.bf16.msra.mxu0 %v508
      %554 = vmatprep.subr.bf16.mxu0 0
      %555 = vmatpush1.bf16.msra.mxu0 %v507
      %556 = vmatprep.subr.bf16.mxu0 0
      %557 = vmatpush1.bf16.msra.mxu0 %v506
      %558 = vmatprep.subr.bf16.mxu0 0
      %559 = vmatpush2.bf16.msra.mxu0 0
      %560 = vmatprep.subr.bf16.mxu0 0
      %561 = vmatpush2.bf16.msra.mxu0 0
      %562 = vmatprep.subr.bf16.mxu0 0
      %563 = vmatpush2.bf16.msra.mxu0 0
      %564 = vmatprep.subr.bf16.mxu0 0
      %565 = vmatpush2.bf16.msra.mxu0 0
      %566 = vmatprep.subr.bf16.mxu0 0
      %567 = vmatpush2.bf16.msra.mxu0 %v517
      %568 = vmatprep.subr.bf16.mxu0 0
      %569 = vmatpush2.bf16.msra.mxu0 %v516
      %570 = vmatprep.subr.bf16.mxu0 0
      %571 = vmatpush2.bf16.msra.mxu0 %v515
      %572 = vmatprep.subr.bf16.mxu0 0
      %573 = vmatpush2.bf16.msra.mxu0 %v514
      %574 = vmatprep.mubr.bf16.mxu0 %v531
      %575 = vmatmul.mubr.bf16.gmra.mxu0 %v446
      %v576 = vpop.f32.mrf.mxu0
      %v577 = vadd.f32 %v413, %v576
      %v578 = vpop.f32.mrf.mxu0
      %v579 = vpop.f32.mrf.mxu0
      %v580 = vadd.f32 %v416, %v579
      %v581 = vpop.f32.mrf.mxu0
      %582 = vmatprep.mubr.bf16.mxu0 %v534
      %583 = vmatmul.mubr.bf16.gmra.mxu0 %v448
      %v584 = vpop.f32.mrf.mxu0
      %v585 = vadd.f32 %v421, %v584
      %v586 = vpop.f32.mrf.mxu0
      %v587 = vpop.f32.mrf.mxu0
      %v588 = vadd.f32 %v424, %v587
      %v589 = vpop.f32.mrf.mxu0
      %590 = vmatprep.mubr.bf16.mxu0 %v537
      %591 = vmatmul.mubr.bf16.gmra.mxu0 %v450
      %v592 = vpop.f32.mrf.mxu0
      %v593 = vadd.f32 %v429, %v592
      %v594 = vpop.f32.mrf.mxu0
      %v595 = vpop.f32.mrf.mxu0
      %v596 = vadd.f32 %v432, %v595
      %v597 = vpop.f32.mrf.mxu0
      %598 = vmatprep.mubr.bf16.mxu0 %v540
      %599 = vmatmul.mubr.bf16.gmra.mxu0 %v452
      %v600 = vpop.f32.mrf.mxu0
      %v601 = vadd.f32 %v437, %v600
      %v602 = vpop.f32.mrf.mxu0
      %v603 = vpop.f32.mrf.mxu0
      %v604 = vadd.f32 %v440, %v603
      %v605 = vpop.f32.mrf.mxu0
      %606 = vdwg.mxu0
      %v607 = vld [vmem:[%s192 + $0x10] sm:$0xff]
      %v608 = vld [vmem:[%s192 + $0x18] sm:$0xff]
      %v609 = vld [vmem:[%s192 + $0x20] sm:$0xff]
      %v610 = vld [vmem:[%s192 + $0x28] sm:$0xff]
      %v611 = vld [vmem:[%s192 + $0x30] sm:$0xff]
      %v612 = vld [vmem:[%s192 + $0x38] sm:$0xff]
      %v613 = vld [vmem:[%s192 + $0x40] sm:$0xff]
      %v614 = vld [vmem:[%s192 + $0x48] sm:$0xff]
      %s615 = scalar_lea.vmem %s1, 192
      %v616 = vld [vmem:[%s615] sm:$0xf]
      %v617 = vld [vmem:[%s615 + $0x4] sm:$0xf]
      %v618 = vld [vmem:[%s615 + $0x8] sm:$0xf]
      %v619 = vld [vmem:[%s615 + $0xc] sm:$0xf]
      %v620 = vld [vmem:[%s615 + $0x10] sm:$0xf]
      %v621 = vld [vmem:[%s615 + $0x14] sm:$0xf]
      %v622 = vld [vmem:[%s615 + $0x18] sm:$0xf]
      %v623 = vld [vmem:[%s615 + $0x1c] sm:$0xf]
      %v624 = vld [vmem:[%s615 + $0x20] sm:$0xf]
      %v625 = vld [vmem:[%s615 + $0x24] sm:$0xf]
      %v626 = vld [vmem:[%s615 + $0x28] sm:$0xf]
      %v627 = vld [vmem:[%s615 + $0x2c] sm:$0xf]
      %v628 = vld [vmem:[%s615 + $0x30] sm:$0xf]
      %v629 = vld [vmem:[%s615 + $0x34] sm:$0xf]
      %v630 = vld [vmem:[%s615 + $0x38] sm:$0xf]
      %v631 = vld [vmem:[%s615 + $0x3c] sm:$0xf]
      %v632 = vld [vmem:[%s615 + $0x40] sm:$0xf]
      %v633 = vld [vmem:[%s615 + $0x44] sm:$0xf]
      %v634 = vld [vmem:[%s615 + $0x48] sm:$0xf]
      %v635 = vld [vmem:[%s615 + $0x4c] sm:$0xf]
      %v636 = vld [vmem:[%s615 + $0x50] sm:$0xf]
      %v637 = vld [vmem:[%s615 + $0x54] sm:$0xf]
      %v638 = vld [vmem:[%s615 + $0x58] sm:$0xf]
      %v639 = vld [vmem:[%s615 + $0x5c] sm:$0xf]
      %v648 = vunpack.c.l.b16 %v607
      %v649 = vunpack.c.h.b16 %v607
      %v650 = vunpack.c.l.b16 %v608
      %v651 = vunpack.c.h.b16 %v608
      %v652 = vunpack.c.l.b16 %v609
      %v653 = vunpack.c.h.b16 %v609
      %v654 = vunpack.c.l.b16 %v610
      %v655 = vunpack.c.h.b16 %v610
      %v656 = vunpack.c.l.b16 %v611
      %v657 = vunpack.c.h.b16 %v611
      %v658 = vunpack.c.l.b16 %v612
      %v659 = vunpack.c.h.b16 %v612
      %v660 = vunpack.c.l.b16 %v613
      %v661 = vunpack.c.h.b16 %v613
      %v662 = vunpack.c.l.b16 %v614
      %v663 = vunpack.c.h.b16 %v614
      %v664 = vpack.c.b16 %v650, %v648
      %v665 = vpack.c.b16 %v651, %v649
      %v666 = vpack.c.b16 %v654, %v652
      %v667 = vpack.c.b16 %v655, %v653
      %v668 = vpack.c.b16 %v658, %v656
      %v669 = vpack.c.b16 %v659, %v657
      %v670 = vpack.c.b16 %v662, %v660
      %v671 = vpack.c.b16 %v663, %v661
      %v700 = vunpack.c.l.b16 %v616
      %v701 = vunpack.c.l.b16 %v617
      %v702 = vunpack.c.l.b16 %v618
      %v703 = vunpack.c.l.b16 %v619
      %v704 = vunpack.c.l.b16 %v620
      %v705 = vunpack.c.l.b16 %v621
      %v706 = vunpack.c.l.b16 %v622
      %v707 = vunpack.c.l.b16 %v623
      %v708 = vunpack.c.l.b16 %v624
      %v709 = vunpack.c.l.b16 %v625
      %v710 = vunpack.c.l.b16 %v626
      %v711 = vunpack.c.l.b16 %v627
      %v712 = vunpack.c.l.b16 %v628
      %v713 = vunpack.c.l.b16 %v629
      %v714 = vunpack.c.l.b16 %v630
      %v715 = vunpack.c.l.b16 %v631
      %v716 = vunpack.c.l.b16 %v632
      %v717 = vunpack.c.l.b16 %v633
      %v718 = vunpack.c.l.b16 %v634
      %v719 = vunpack.c.l.b16 %v635
      %v720 = vunpack.c.l.b16 %v636
      %v721 = vunpack.c.l.b16 %v637
      %v722 = vunpack.c.l.b16 %v638
      %v723 = vunpack.c.l.b16 %v639
      %v724 = vpack.c.b16 %v701, %v700
      %v725 = vpack.c.b16 %v703, %v702
      %v726 = vpack.c.b16 %v705, %v704
      %v727 = vpack.c.b16 %v707, %v706
      %v728 = vpack.c.b16 %v709, %v708
      %v729 = vpack.c.b16 %v711, %v710
      %v730 = vpack.c.b16 %v713, %v712
      %v731 = vpack.c.b16 %v715, %v714
      %v732 = vpack.c.b16 %v717, %v716
      %v733 = vpack.c.b16 %v719, %v718
      %v734 = vpack.c.b16 %v721, %v720
      %v735 = vpack.c.b16 %v723, %v722
      %v749 = vsel %vm365, %v665, 0
      %v752 = vsel %vm365, %v667, 0
      %v755 = vsel %vm365, %v669, 0
      %v758 = vsel %vm365, %v671, 0
      %760 = vmatprep.subr.bf16.mxu0 0
      %761 = vmatpush1.bf16.msra.mxu0 %v731
      %762 = vmatprep.subr.bf16.mxu0 0
      %763 = vmatpush1.bf16.msra.mxu0 %v730
      %764 = vmatprep.subr.bf16.mxu0 0
      %765 = vmatpush1.bf16.msra.mxu0 %v729
      %766 = vmatprep.subr.bf16.mxu0 0
      %767 = vmatpush1.bf16.msra.mxu0 %v728
      %768 = vmatprep.subr.bf16.mxu0 0
      %769 = vmatpush1.bf16.msra.mxu0 %v727
      %770 = vmatprep.subr.bf16.mxu0 0
      %771 = vmatpush1.bf16.msra.mxu0 %v726
      %772 = vmatprep.subr.bf16.mxu0 0
      %773 = vmatpush1.bf16.msra.mxu0 %v725
      %774 = vmatprep.subr.bf16.mxu0 0
      %775 = vmatpush1.bf16.msra.mxu0 %v724
      %776 = vmatprep.subr.bf16.mxu0 0
      %777 = vmatpush2.bf16.msra.mxu0 0
      %778 = vmatprep.subr.bf16.mxu0 0
      %779 = vmatpush2.bf16.msra.mxu0 0
      %780 = vmatprep.subr.bf16.mxu0 0
      %781 = vmatpush2.bf16.msra.mxu0 0
      %782 = vmatprep.subr.bf16.mxu0 0
      %783 = vmatpush2.bf16.msra.mxu0 0
      %784 = vmatprep.subr.bf16.mxu0 0
      %785 = vmatpush2.bf16.msra.mxu0 %v735
      %786 = vmatprep.subr.bf16.mxu0 0
      %787 = vmatpush2.bf16.msra.mxu0 %v734
      %788 = vmatprep.subr.bf16.mxu0 0
      %789 = vmatpush2.bf16.msra.mxu0 %v733
      %790 = vmatprep.subr.bf16.mxu0 0
      %791 = vmatpush2.bf16.msra.mxu0 %v732
      %792 = vmatprep.mubr.bf16.mxu0 %v749
      %793 = vmatmul.mubr.bf16.gmra.mxu0 %v664
      %v794 = vpop.f32.mrf.mxu0
      %v795 = vadd.f32 0.0, %v794
      %v796 = vpop.f32.mrf.mxu0
      %v797 = vpop.f32.mrf.mxu0
      %v798 = vadd.f32 0.0, %v797
      %v799 = vpop.f32.mrf.mxu0
      %800 = vmatprep.mubr.bf16.mxu0 %v752
      %801 = vmatmul.mubr.bf16.gmra.mxu0 %v666
      %v802 = vpop.f32.mrf.mxu0
      %v803 = vadd.f32 0.0, %v802
      %v804 = vpop.f32.mrf.mxu0
      %v805 = vpop.f32.mrf.mxu0
      %v806 = vadd.f32 0.0, %v805
      %v807 = vpop.f32.mrf.mxu0
      %808 = vmatprep.mubr.bf16.mxu0 %v755
      %809 = vmatmul.mubr.bf16.gmra.mxu0 %v668
      %v810 = vpop.f32.mrf.mxu0
      %v811 = vadd.f32 0.0, %v810
      %v812 = vpop.f32.mrf.mxu0
      %v813 = vpop.f32.mrf.mxu0
      %v814 = vadd.f32 0.0, %v813
      %v815 = vpop.f32.mrf.mxu0
      %816 = vmatprep.mubr.bf16.mxu0 %v758
      %817 = vmatmul.mubr.bf16.gmra.mxu0 %v670
      %v818 = vpop.f32.mrf.mxu0
      %v819 = vadd.f32 0.0, %v818
      %v820 = vpop.f32.mrf.mxu0
      %v821 = vpop.f32.mrf.mxu0
      %v822 = vadd.f32 0.0, %v821
      %v823 = vpop.f32.mrf.mxu0
      %824 = vdwg.mxu0
      %v825 = vadd.f32 %v577, %v795
      %v826 = vadd.f32 %v580, %v798
      %v827 = vadd.f32 %v585, %v803
      %v828 = vadd.f32 %v588, %v806
      %v829 = vadd.f32 %v593, %v811
      %v830 = vadd.f32 %v596, %v814
      %v831 = vadd.f32 %v601, %v819
      %v832 = vadd.f32 %v604, %v822
      %v833 = vld [vmem:[%s2] sm:$0x1]
      %v835 = vlaneseq
      %v836 = vshrl.u32 %v835, 7
      %v837 = vsub.s32 0, %v836
      %v838 = vrot.slane %v833, %v837
      %v840 = vmul.f32 %v825, %v838
      %v841 = vmul.f32 %v826, %v838
      %v842 = vmul.f32 %v827, %v838
      %v843 = vmul.f32 %v828, %v838
      %v844 = vmul.f32 %v829, %v838
      %v845 = vmul.f32 %v830, %v838
      %v846 = vmul.f32 %v831, %v838
      %v847 = vmul.f32 %v832, %v838
      %v848 = vld [vmem:[%s3] sm:$0x1]
      %v850 = vlaneseq
      %v851 = vshrl.u32 %v850, 7
      %v852 = vsub.s32 0, %v851
      %v853 = vrot.slane %v848, %v852
      %v855 = vadd.f32 %v840, %v853
      %v856 = vadd.f32 %v841, %v853
      %v857 = vadd.f32 %v842, %v853
      %v858 = vadd.f32 %v843, %v853
      %v859 = vadd.f32 %v844, %v853
      %v860 = vadd.f32 %v845, %v853
      %v861 = vadd.f32 %v846, %v853
      %v862 = vadd.f32 %v847, %v853
      %v863 = vmax.f32 %v855, 0.0
      %v864 = vmax.f32 %v856, 0.0
      %v865 = vmax.f32 %v857, 0.0
      %v866 = vmax.f32 %v858, 0.0
      %v867 = vmax.f32 %v859, 0.0
      %v868 = vmax.f32 %v860, 0.0
      %v869 = vmax.f32 %v861, 0.0
      %v870 = vmax.f32 %v862, 0.0
      %v871 = vpack.c.bf16 %v864, %v863
      %v872 = vpack.c.bf16 %v866, %v865
      %v873 = vpack.c.bf16 %v868, %v867
      %v874 = vpack.c.bf16 %v870, %v869
      %v879 = vunpack.c.l.b16 %v871
      %v880 = vunpack.c.h.b16 %v871
      %v881 = vunpack.c.l.b16 %v872
      %v882 = vunpack.c.h.b16 %v872
      %v883 = vunpack.c.l.b16 %v873
      %v884 = vunpack.c.h.b16 %v873
      %v885 = vunpack.c.l.b16 %v874
      %v886 = vunpack.c.h.b16 %v874
      %v887 = vpack.c.b16 %v879, %v879
      %v888 = vpack.c.b16 %v880, %v880
      %v889 = vpack.c.b16 %v881, %v881
      %v890 = vpack.c.b16 %v882, %v882
      %v891 = vpack.c.b16 %v883, %v883
      %v892 = vpack.c.b16 %v884, %v884
      %v893 = vpack.c.b16 %v885, %v885
      %v894 = vpack.c.b16 %v886, %v886
      %vm903 = vcmask 519168
      %904 = vst.msk [vmem:[%s197] sm:$0xf] %vm903, %v887
      %905 = vst.msk [vmem:[%s197 + $0x4] sm:$0xf] %vm903, %v888
      %906 = vst.msk [vmem:[%s197 + $0x8] sm:$0xf] %vm903, %v889
      %907 = vst.msk [vmem:[%s197 + $0xc] sm:$0xf] %vm903, %v890
      %908 = vst.msk [vmem:[%s197 + $0x10] sm:$0xf] %vm903, %v891
      %909 = vst.msk [vmem:[%s197 + $0x14] sm:$0xf] %vm903, %v892
      %910 = vst.msk [vmem:[%s197 + $0x18] sm:$0xf] %vm903, %v893
      %911 = vst.msk [vmem:[%s197 + $0x1c] sm:$0xf] %vm903, %v894
      %p912 = scmp.lt.s32.totalorder %s15, 1
      %s913 = scalar_select %p912, %s15, 1
      %s914 = smul.addr %s913, 8
      %s915 = smul.addr %s914, 4
      %s916 = scalar_lea.vmem %s4, %s915
      // Predicated region
      $region37: #{drunet_var_forward.16} parent=35 // pred_check
        %p917 = pneg %p122
      $region38: #{drunet_var_forward.16} parent=35 // pred_check_branch
        %919 = sbr.rel (%p917) target = $region40
      $region39: #{drunet_var_forward.16} parent=35 // pred_region
        _
      $region40: #{drunet_var_forward.16} parent=35 // pred_fallthru
        _
    $region36: #{drunet_var_forward.16} parent=5 // pred_fallthru
      _
    %p920 = scmp.le.s32.totalorder 2, %s10
    // Predicated region
    $region41: #{drunet_var_forward.16} parent=5 // pred_check
      %p921 = pneg %p920
    $region42: #{drunet_var_forward.16} parent=5 // pred_check_branch
      %923 = sbr.rel (%p921) target = $region44
    $region43: #{drunet_var_forward.16} parent=5 // pred_region
      %s924 = ssub.s32 %s10, 2
      // Predicated region
      $region45: #{drunet_var_forward.16} parent=43 // pred_check
        %p925 = pneg %p128
      $region46: #{drunet_var_forward.16} parent=43 // pred_check_branch
        %927 = sbr.rel (%p925) target = $region48
      $region47: #{drunet_var_forward.16} parent=43 // pred_region
        %p928 = scmp.lt.s32.totalorder %s16, 1
        %s929 = scalar_select %p928, %s16, 1
        %s930 = smul.addr %s929, 8
        %s931 = smul.addr %s930, 4
        %s932 = scalar_lea.vmem %s4, %s931
      $region48: #{drunet_var_forward.16} parent=43 // pred_fallthru
        _
    $region44: #{drunet_var_forward.16} parent=5 // pred_fallthru
      _
  $region6: #{drunet_var_forward.16} parent=0 // loop_footer
    %s14 = sadd.s32 1, %s10
  $region7: #{drunet_var_forward.16} parent=0 // loop_footer_branch
    %9 = sbr.rel target = $region3
  $region8: #{drunet_var_forward.16} parent=0 // loop_exit
    _

// kernel: drunet_var_forward.17
$region0: #{drunet_var_forward.17}
  #allocation0 [shape = 'u32[]', space=smem, size = 0x4, offset = 0x4, fixed_abs, tag = 'smem constant byte address 0x4 - core index']
  #allocation1 [shape = 'u32[144,128]{1,0:T(1,128)}', space=vmem, size = 0x12000, scoped, tag = 'internal scratch']
  %s0 = inlined_call_operand.vmem [shape: bf16[2,48,192], index: 0, kind: input, shape index: {}]
  %s1 = inlined_call_operand.vmem [shape: bf16[3,192,128], index: 1, kind: input, shape index: {}]
  %s2 = inlined_call_operand.vmem [shape: f32[1,128], index: 2, kind: input, shape index: {}]
  %s3 = inlined_call_operand.vmem [shape: f32[1,128], index: 3, kind: input, shape index: {}]
  %s4 = inlined_call_operand.vmem [shape: bf16[2,32,128], index: 4, kind: output, shape index: {}]
  %s5 = sld [smem:[#allocation0]]
  $region49: #{drunet_var_forward.17} parent=0
    _
  %s7 = ssub.s32 1, %s5
  %s8 = scalar_select 0, %s7, %s5
  loop: start=0, step=1, limit=4
  $region2: #{drunet_var_forward.17} parent=0 // loop_pre_header
    _
  $region3: #{drunet_var_forward.17} parent=0 // loop_header
    %s10 = sphi 0, %s14
    %p11 = scmp.ge.s32.totalorder %s10, 4
    %s20 = sphi 0, %s22
    %s23 = sphi 0, %s20
    %s24 = sphi 0, %s23
    %s40 = sphi 0, %s24
    %s44 = sphi 0, %s44
    %s46 = sphi 0, %s44
    %s47 = sphi 0, %s46
    %s61 = sphi 0, %s47
    %s65 = sphi 0, %s65
    %s67 = sphi 0, %s65
    %s68 = sphi 0, %s67
    %s82 = sphi 0, %s68
    %s86 = sphi 0, %s86
    %s88 = sphi 0, %s86
    %s89 = sphi 0, %s88
    %s103 = sphi 0, %s89
    %s109 = sphi 0, %s111
    %s112 = sphi 0, %s109
    %s113 = sphi 0, %s112
    %s129 = sphi 0, %s113
  $region4: #{drunet_var_forward.17} parent=0 // loop_header_branch
    %13 = sbr.rel (%p11) target = $region8
  $region5: #{drunet_var_forward.17} parent=0 // loop_body
    %s15 = ssub.s32 %s10, 1
    %s16 = ssub.s32 %s10, 2
    %s17 = sadd.s32 %s10, 1
    %s18 = ssub.s32 %s10, %s17
    %p19 = scmp.eq.s32.totalorder %s18, 0
    %s21 = sadd.s32 %s20, 1
    %s22 = scalar_select %p19, %s20, %s21
    %p25 = pneg %p19
    %p26 = scmp.eq.s32.totalorder %s10, 1
    %p27 = por %p25, %p26
    %p28 = scmp.ne.s32.totalorder %s20, %s23
    %p29 = scmp.eq.s32.totalorder %s10, 0
    %p30 = por %p28, %p29
    %p31 = scmp.ne.s32.totalorder %s20, %s23
    %p32 = scmp.eq.s32.totalorder %s15, 1
    %p33 = por %p31, %p32
    %p34 = scmp.ne.s32.totalorder %s23, %s24
    %p35 = scmp.eq.s32.totalorder %s15, 0
    %p36 = por %p34, %p35
    %p37 = scmp.ne.s32.totalorder %s23, %s24
    %p38 = scmp.eq.s32.totalorder %s16, 1
    %p39 = por %p37, %p38
    %p41 = scmp.ne.s32.totalorder %s24, %s40
    %p42 = scmp.eq.s32.totalorder %s16, 0
    %p43 = por %p41, %p42
    %s45 = sadd.s32 %s44, 1
    %p48 = scmp.eq.s32.totalorder %s10, 1
    %p49 = scmp.ne.s32.totalorder %s44, %s46
    %p50 = scmp.eq.s32.totalorder %s10, 0
    %p51 = por %p49, %p50
    %p52 = scmp.ne.s32.totalorder %s44, %s46
    %p53 = scmp.eq.s32.totalorder %s15, 1
    %p54 = por %p52, %p53
    %p55 = scmp.ne.s32.totalorder %s46, %s47
    %p56 = scmp.eq.s32.totalorder %s15, 0
    %p57 = por %p55, %p56
    %p58 = scmp.ne.s32.totalorder %s46, %s47
    %p59 = scmp.eq.s32.totalorder %s16, 1
    %p60 = por %p58, %p59
    %p62 = scmp.ne.s32.totalorder %s47, %s61
    %p63 = scmp.eq.s32.totalorder %s16, 0
    %p64 = por %p62, %p63
    %s66 = sadd.s32 %s65, 1
    %p69 = scmp.eq.s32.totalorder %s10, 1
    %p70 = scmp.ne.s32.totalorder %s65, %s67
    %p71 = scmp.eq.s32.totalorder %s10, 0
    %p72 = por %p70, %p71
    %p73 = scmp.ne.s32.totalorder %s65, %s67
    %p74 = scmp.eq.s32.totalorder %s15, 1
    %p75 = por %p73, %p74
    %p76 = scmp.ne.s32.totalorder %s67, %s68
    %p77 = scmp.eq.s32.totalorder %s15, 0
    %p78 = por %p76, %p77
    %p79 = scmp.ne.s32.totalorder %s67, %s68
    %p80 = scmp.eq.s32.totalorder %s16, 1
    %p81 = por %p79, %p80
    %p83 = scmp.ne.s32.totalorder %s68, %s82
    %p84 = scmp.eq.s32.totalorder %s16, 0
    %p85 = por %p83, %p84
    %s87 = sadd.s32 %s86, 1
    %p90 = scmp.eq.s32.totalorder %s10, 1
    %p91 = scmp.ne.s32.totalorder %s86, %s88
    %p92 = scmp.eq.s32.totalorder %s10, 0
    %p93 = por %p91, %p92
    %p94 = scmp.ne.s32.totalorder %s86, %s88
    %p95 = scmp.eq.s32.totalorder %s15, 1
    %p96 = por %p94, %p95
    %p97 = scmp.ne.s32.totalorder %s88, %s89
    %p98 = scmp.eq.s32.totalorder %s15, 0
    %p99 = por %p97, %p98
    %p100 = scmp.ne.s32.totalorder %s88, %s89
    %p101 = scmp.eq.s32.totalorder %s16, 1
    %p102 = por %p100, %p101
    %p104 = scmp.ne.s32.totalorder %s89, %s103
    %p105 = scmp.eq.s32.totalorder %s16, 0
    %p106 = por %p104, %p105
    %s107 = ssub.s32 %s10, %s17
    %p108 = scmp.eq.s32.totalorder %s107, 0
    %s110 = sadd.s32 %s109, 1
    %s111 = scalar_select %p108, %s109, %s110
    %p114 = pneg %p108
    %p115 = scmp.eq.s32.totalorder %s10, 1
    %p116 = por %p114, %p115
    %p117 = scmp.ne.s32.totalorder %s109, %s112
    %p118 = scmp.eq.s32.totalorder %s10, 0
    %p119 = por %p117, %p118
    %p120 = scmp.ne.s32.totalorder %s109, %s112
    %p121 = scmp.eq.s32.totalorder %s15, 1
    %p122 = por %p120, %p121
    %p123 = scmp.ne.s32.totalorder %s112, %s113
    %p124 = scmp.eq.s32.totalorder %s15, 0
    %p125 = por %p123, %p124
    %p126 = scmp.ne.s32.totalorder %s112, %s113
    %p127 = scmp.eq.s32.totalorder %s16, 1
    %p128 = por %p126, %p127
    %p130 = scmp.ne.s32.totalorder %s113, %s129
    %p131 = scmp.eq.s32.totalorder %s16, 0
    %p132 = por %p130, %p131
    %p133 = scmp.le.s32.totalorder 1, %s10
    %p134 = scmp.lt.s32.totalorder %s10, 3
    %p135 = pnand %p133, %p134
    %p136 = pneg %p135
    // Predicated region
    $region9: #{drunet_var_forward.17} parent=5 // pred_check
      _
    $region10: #{drunet_var_forward.17} parent=5 // pred_check_branch
      %138 = sbr.rel (%p135) target = $region12
    $region11: #{drunet_var_forward.17} parent=5 // pred_region
      %s139 = ssub.s32 %s10, 1
      // Predicated region
      $region13: #{drunet_var_forward.17} parent=11 // pred_check
        %p140 = pneg %p57
      $region14: #{drunet_var_forward.17} parent=11 // pred_check_branch
        %142 = sbr.rel (%p140) target = $region16
      $region15: #{drunet_var_forward.17} parent=11 // pred_region
        _
      $region16: #{drunet_var_forward.17} parent=11 // pred_fallthru
        _
      // Predicated region
      $region17: #{drunet_var_forward.17} parent=11 // pred_check
        %p143 = pneg %p78
      $region18: #{drunet_var_forward.17} parent=11 // pred_check_branch
        %145 = sbr.rel (%p143) target = $region20
      $region19: #{drunet_var_forward.17} parent=11 // pred_region
        _
      $region20: #{drunet_var_forward.17} parent=11 // pred_fallthru
        _
      // Predicated region
      $region21: #{drunet_var_forward.17} parent=11 // pred_check
        %p146 = pneg %p99
      $region22: #{drunet_var_forward.17} parent=11 // pred_check_branch
        %148 = sbr.rel (%p146) target = $region24
      $region23: #{drunet_var_forward.17} parent=11 // pred_region
        _
      $region24: #{drunet_var_forward.17} parent=11 // pred_fallthru
        _
    $region12: #{drunet_var_forward.17} parent=5 // pred_fallthru
      _
    %p149 = scmp.lt.s32.totalorder %s10, 2
    // Predicated region
    $region25: #{drunet_var_forward.17} parent=5 // pred_check
      %p150 = pneg %p149
    $region26: #{drunet_var_forward.17} parent=5 // pred_check_branch
      %152 = sbr.rel (%p150) target = $region28
    $region27: #{drunet_var_forward.17} parent=5 // pred_region
      // Predicated region
      $region29: #{drunet_var_forward.17} parent=27 // pred_check
        %p153 = pneg %p30
      $region30: #{drunet_var_forward.17} parent=27 // pred_check_branch
        %155 = sbr.rel (%p153) target = $region32
      $region31: #{drunet_var_forward.17} parent=27 // pred_region
        %p156 = scmp.lt.s32.totalorder %s10, 1
        %s157 = scalar_select %p156, %s10, 1
        %s158 = smul.addr %s157, 12
        %s159 = smul.addr %s158, 4
        %s160 = scalar_lea.vmem %s0, %s159
      $region32: #{drunet_var_forward.17} parent=27 // pred_fallthru
        _
    $region28: #{drunet_var_forward.17} parent=5 // pred_fallthru
      _
    %p161 = scmp.le.s32.totalorder 1, %s10
    %p162 = scmp.lt.s32.totalorder %s10, 3
    %p163 = pnand %p161, %p162
    %p164 = pneg %p163
    // Predicated region
    $region33: #{drunet_var_forward.17} parent=5 // pred_check
      _
    $region34: #{drunet_var_forward.17} parent=5 // pred_check_branch
      %166 = sbr.rel (%p163) target = $region36
    $region35: #{drunet_var_forward.17} parent=5 // pred_region
      %s167 = ssub.s32 %s10, 1
      %p168 = scmp.lt.s32.totalorder %s15, 1
      %s169 = scalar_select %p168, %s15, 1
      %s170 = smul.addr %s169, 12
      %s171 = smul.addr %s170, 4
      %s172 = scalar_lea.vmem %s0, %s171
      %p173 = pneg %p36
      %p174 = pneg %p33
      %p175 = pneg %p57
      %p176 = pneg %p54
      %p177 = pneg %p78
      %p178 = pneg %p75
      %p179 = pneg %p99
      %p180 = pneg %p96
      %p181 = pneg %p125
      %p182 = pneg %p122
      %p183 = scmp.lt.s32.totalorder %s15, 1
      %s184 = scalar_select %p183, %s15, 1
      %s185 = smul.addr %s184, 4
      %s186 = smul.addr %s185, 4
      %s187 = scalar_lea.vmem %s4, %s186
      %p188 = scmp.lt.s32.totalorder %s15, 1
      %s189 = scalar_select %p188, %s15, 1
      %s190 = smul.addr %s189, 12
      %s191 = smul.addr %s190, 4
      %s192 = scalar_lea.vmem %s0, %s191
      %p193 = scmp.lt.s32.totalorder %s15, 1
      %s194 = scalar_select %p193, %s15, 1
      %s195 = smul.addr %s194, 4
      %s196 = smul.addr %s195, 4
      %s197 = scalar_lea.vmem %s4, %s196
      %v199 = vld [vmem:[%s192] sm:$0xff]
      %v200 = vld [vmem:[%s192 + $0x8] sm:$0xff]
      %v201 = vld [vmem:[%s192 + $0x10] sm:$0xff]
      %v202 = vld [vmem:[%s192 + $0x18] sm:$0xff]
      %v203 = vld [vmem:[%s1] sm:$0xf]
      %v204 = vld [vmem:[%s1 + $0x4] sm:$0xf]
      %v205 = vld [vmem:[%s1 + $0x8] sm:$0xf]
      %v206 = vld [vmem:[%s1 + $0xc] sm:$0xf]
      %v207 = vld [vmem:[%s1 + $0x10] sm:$0xf]
      %v208 = vld [vmem:[%s1 + $0x14] sm:$0xf]
      %v209 = vld [vmem:[%s1 + $0x18] sm:$0xf]
      %v210 = vld [vmem:[%s1 + $0x1c] sm:$0xf]
      %v211 = vld [vmem:[%s1 + $0x20] sm:$0xf]
      %v212 = vld [vmem:[%s1 + $0x24] sm:$0xf]
      %v213 = vld [vmem:[%s1 + $0x28] sm:$0xf]
      %v214 = vld [vmem:[%s1 + $0x2c] sm:$0xf]
      %v215 = vld [vmem:[%s1 + $0x30] sm:$0xf]
      %v216 = vld [vmem:[%s1 + $0x34] sm:$0xf]
      %v217 = vld [vmem:[%s1 + $0x38] sm:$0xf]
      %v218 = vld [vmem:[%s1 + $0x3c] sm:$0xf]
      %v219 = vld [vmem:[%s1 + $0x40] sm:$0xf]
      %v220 = vld [vmem:[%s1 + $0x44] sm:$0xf]
      %v221 = vld [vmem:[%s1 + $0x48] sm:$0xf]
      %v222 = vld [vmem:[%s1 + $0x4c] sm:$0xf]
      %v223 = vld [vmem:[%s1 + $0x50] sm:$0xf]
      %v224 = vld [vmem:[%s1 + $0x54] sm:$0xf]
      %v225 = vld [vmem:[%s1 + $0x58] sm:$0xf]
      %v226 = vld [vmem:[%s1 + $0x5c] sm:$0xf]
      %v227 = vld [vmem:[%s192 + $0x20] sm:$0xff]
      %s228 = scalar_lea.vmem %s1, 96
      %v229 = vld [vmem:[%s228] sm:$0xf]
      %v230 = vld [vmem:[%s228 + $0x4] sm:$0xf]
      %v231 = vld [vmem:[%s228 + $0x8] sm:$0xf]
      %v232 = vld [vmem:[%s228 + $0xc] sm:$0xf]
      %v233 = vld [vmem:[%s228 + $0x10] sm:$0xf]
      %v234 = vld [vmem:[%s228 + $0x14] sm:$0xf]
      %v235 = vld [vmem:[%s228 + $0x18] sm:$0xf]
      %v236 = vld [vmem:[%s228 + $0x1c] sm:$0xf]
      %v237 = vld [vmem:[%s228 + $0x20] sm:$0xf]
      %v238 = vld [vmem:[%s228 + $0x24] sm:$0xf]
      %v239 = vld [vmem:[%s228 + $0x28] sm:$0xf]
      %v240 = vld [vmem:[%s228 + $0x2c] sm:$0xf]
      %v241 = vld [vmem:[%s228 + $0x30] sm:$0xf]
      %v242 = vld [vmem:[%s228 + $0x34] sm:$0xf]
      %v243 = vld [vmem:[%s228 + $0x38] sm:$0xf]
      %v244 = vld [vmem:[%s228 + $0x3c] sm:$0xf]
      %v245 = vld [vmem:[%s228 + $0x40] sm:$0xf]
      %v246 = vld [vmem:[%s228 + $0x44] sm:$0xf]
      %v247 = vld [vmem:[%s228 + $0x48] sm:$0xf]
      %v248 = vld [vmem:[%s228 + $0x4c] sm:$0xf]
      %v249 = vld [vmem:[%s228 + $0x50] sm:$0xf]
      %v250 = vld [vmem:[%s228 + $0x54] sm:$0xf]
      %v251 = vld [vmem:[%s228 + $0x58] sm:$0xf]
      %v252 = vld [vmem:[%s228 + $0x5c] sm:$0xf]
      %v257 = vunpack.c.l.b16 %v200
      %v258 = vunpack.c.h.b16 %v200
      %v259 = vunpack.c.l.b16 %v201
      %v260 = vunpack.c.h.b16 %v201
      %v261 = vunpack.c.l.b16 %v202
      %v262 = vunpack.c.h.b16 %v202
      %v263 = vunpack.c.l.b16 %v227
      %v264 = vunpack.c.h.b16 %v227
      %v265 = vpack.c.b16 %v259, %v257
      %v266 = vpack.c.b16 %v260, %v258
      %v267 = vpack.c.b16 %v263, %v261
      %v268 = vpack.c.b16 %v264, %v262
      %v295 = vunpack.c.l.b16 %v229
      %v296 = vunpack.c.l.b16 %v230
      %v297 = vunpack.c.l.b16 %v231
      %v298 = vunpack.c.l.b16 %v232
      %v299 = vunpack.c.l.b16 %v233
      %v300 = vunpack.c.l.b16 %v234
      %v301 = vunpack.c.l.b16 %v235
      %v302 = vunpack.c.l.b16 %v236
      %v303 = vunpack.c.l.b16 %v237
      %v304 = vunpack.c.l.b16 %v238
      %v305 = vunpack.c.l.b16 %v239
      %v306 = vunpack.c.l.b16 %v240
      %v307 = vunpack.c.l.b16 %v241
      %v308 = vunpack.c.l.b16 %v242
      %v309 = vunpack.c.l.b16 %v243
      %v310 = vunpack.c.l.b16 %v244
      %v311 = vunpack.c.l.b16 %v245
      %v312 = vunpack.c.l.b16 %v246
      %v313 = vunpack.c.l.b16 %v247
      %v314 = vunpack.c.l.b16 %v248
      %v315 = vunpack.c.l.b16 %v249
      %v316 = vunpack.c.l.b16 %v250
      %v317 = vunpack.c.l.b16 %v251
      %v318 = vunpack.c.l.b16 %v252
      %v319 = vpack.c.b16 %v296, %v295
      %v320 = vpack.c.b16 %v298, %v297
      %v321 = vpack.c.b16 %v300, %v299
      %v322 = vpack.c.b16 %v302, %v301
      %v323 = vpack.c.b16 %v304, %v303
      %v324 = vpack.c.b16 %v306, %v305
      %v325 = vpack.c.b16 %v308, %v307
      %v326 = vpack.c.b16 %v310, %v309
      %v327 = vpack.c.b16 %v312, %v311
      %v328 = vpack.c.b16 %v314, %v313
      %v329 = vpack.c.b16 %v316, %v315
      %v330 = vpack.c.b16 %v318, %v317
      %vm343 = vcmask 523264
      %v345 = vsel %vm343, %v266, 0
      %v348 = vsel %vm343, %v268, 0
      %350 = vmatprep.subr.bf16.mxu0 0
      %351 = vmatpush1.bf16.msra.mxu0 %v326
      %352 = vmatprep.subr.bf16.mxu0 0
      %353 = vmatpush1.bf16.msra.mxu0 %v325
      %354 = vmatprep.subr.bf16.mxu0 0
      %355 = vmatpush1.bf16.msra.mxu0 %v324
      %356 = vmatprep.subr.bf16.mxu0 0
      %357 = vmatpush1.bf16.msra.mxu0 %v323
      %358 = vmatprep.subr.bf16.mxu0 0
      %359 = vmatpush1.bf16.msra.mxu0 %v322
      %360 = vmatprep.subr.bf16.mxu0 0
      %361 = vmatpush1.bf16.msra.mxu0 %v321
      %362 = vmatprep.subr.bf16.mxu0 0
      %363 = vmatpush1.bf16.msra.mxu0 %v320
      %364 = vmatprep.subr.bf16.mxu0 0
      %365 = vmatpush1.bf16.msra.mxu0 %v319
      %366 = vmatprep.subr.bf16.mxu0 0
      %367 = vmatpush2.bf16.msra.mxu0 0
      %368 = vmatprep.subr.bf16.mxu0 0
      %369 = vmatpush2.bf16.msra.mxu0 0
      %370 = vmatprep.subr.bf16.mxu0 0
      %371 = vmatpush2.bf16.msra.mxu0 0
      %372 = vmatprep.subr.bf16.mxu0 0
      %373 = vmatpush2.bf16.msra.mxu0 0
      %374 = vmatprep.subr.bf16.mxu0 0
      %375 = vmatpush2.bf16.msra.mxu0 %v330
      %376 = vmatprep.subr.bf16.mxu0 0
      %377 = vmatpush2.bf16.msra.mxu0 %v329
      %378 = vmatprep.subr.bf16.mxu0 0
      %379 = vmatpush2.bf16.msra.mxu0 %v328
      %380 = vmatprep.subr.bf16.mxu0 0
      %381 = vmatpush2.bf16.msra.mxu0 %v327
      %382 = vmatprep.mubr.bf16.mxu0 %v345
      %383 = vmatmul.mubr.bf16.gmra.mxu0 %v265
      %v384 = vpop.f32.mrf.mxu0
      %v385 = vadd.f32 0.0, %v384
      %v386 = vpop.f32.mrf.mxu0
      %v387 = vpop.f32.mrf.mxu0
      %v388 = vadd.f32 0.0, %v387
      %v389 = vpop.f32.mrf.mxu0
      %390 = vmatprep.mubr.bf16.mxu0 %v348
      %391 = vmatmul.mubr.bf16.gmra.mxu0 %v267
      %v392 = vpop.f32.mrf.mxu0
      %v393 = vadd.f32 0.0, %v392
      %v394 = vpop.f32.mrf.mxu0
      %v395 = vpop.f32.mrf.mxu0
      %v396 = vadd.f32 0.0, %v395
      %v397 = vpop.f32.mrf.mxu0
      %398 = vdwg.mxu0
      %v400 = vunpack.c.l.b16 %v199
      %v401 = vunpack.c.h.b16 %v199
      %v402 = vpack.c.b16 %v257, %v400
      %v403 = vpack.c.b16 %v258, %v401
      %v404 = vpack.c.b16 %v261, %v259
      %v405 = vpack.c.b16 %v262, %v260
      %v432 = vunpack.c.l.b16 %v203
      %v433 = vunpack.c.l.b16 %v204
      %v434 = vunpack.c.l.b16 %v205
      %v435 = vunpack.c.l.b16 %v206
      %v436 = vunpack.c.l.b16 %v207
      %v437 = vunpack.c.l.b16 %v208
      %v438 = vunpack.c.l.b16 %v209
      %v439 = vunpack.c.l.b16 %v210
      %v440 = vunpack.c.l.b16 %v211
      %v441 = vunpack.c.l.b16 %v212
      %v442 = vunpack.c.l.b16 %v213
      %v443 = vunpack.c.l.b16 %v214
      %v444 = vunpack.c.l.b16 %v215
      %v445 = vunpack.c.l.b16 %v216
      %v446 = vunpack.c.l.b16 %v217
      %v447 = vunpack.c.l.b16 %v218
      %v448 = vunpack.c.l.b16 %v219
      %v449 = vunpack.c.l.b16 %v220
      %v450 = vunpack.c.l.b16 %v221
      %v451 = vunpack.c.l.b16 %v222
      %v452 = vunpack.c.l.b16 %v223
      %v453 = vunpack.c.l.b16 %v224
      %v454 = vunpack.c.l.b16 %v225
      %v455 = vunpack.c.l.b16 %v226
      %v456 = vpack.c.b16 %v433, %v432
      %v457 = vpack.c.b16 %v435, %v434
      %v458 = vpack.c.b16 %v437, %v436
      %v459 = vpack.c.b16 %v439, %v438
      %v460 = vpack.c.b16 %v441, %v440
      %v461 = vpack.c.b16 %v443, %v442
      %v462 = vpack.c.b16 %v445, %v444
      %v463 = vpack.c.b16 %v447, %v446
      %v464 = vpack.c.b16 %v449, %v448
      %v465 = vpack.c.b16 %v451, %v450
      %v466 = vpack.c.b16 %v453, %v452
      %v467 = vpack.c.b16 %v455, %v454
      %v481 = vsel %vm343, %v403, 0
      %v484 = vsel %vm343, %v405, 0
      %486 = vmatprep.subr.bf16.mxu0 0
      %487 = vmatpush1.bf16.msra.mxu0 %v463
      %488 = vmatprep.subr.bf16.mxu0 0
      %489 = vmatpush1.bf16.msra.mxu0 %v462
      %490 = vmatprep.subr.bf16.mxu0 0
      %491 = vmatpush1.bf16.msra.mxu0 %v461
      %492 = vmatprep.subr.bf16.mxu0 0
      %493 = vmatpush1.bf16.msra.mxu0 %v460
      %494 = vmatprep.subr.bf16.mxu0 0
      %495 = vmatpush1.bf16.msra.mxu0 %v459
      %496 = vmatprep.subr.bf16.mxu0 0
      %497 = vmatpush1.bf16.msra.mxu0 %v458
      %498 = vmatprep.subr.bf16.mxu0 0
      %499 = vmatpush1.bf16.msra.mxu0 %v457
      %500 = vmatprep.subr.bf16.mxu0 0
      %501 = vmatpush1.bf16.msra.mxu0 %v456
      %502 = vmatprep.subr.bf16.mxu0 0
      %503 = vmatpush2.bf16.msra.mxu0 0
      %504 = vmatprep.subr.bf16.mxu0 0
      %505 = vmatpush2.bf16.msra.mxu0 0
      %506 = vmatprep.subr.bf16.mxu0 0
      %507 = vmatpush2.bf16.msra.mxu0 0
      %508 = vmatprep.subr.bf16.mxu0 0
      %509 = vmatpush2.bf16.msra.mxu0 0
      %510 = vmatprep.subr.bf16.mxu0 0
      %511 = vmatpush2.bf16.msra.mxu0 %v467
      %512 = vmatprep.subr.bf16.mxu0 0
      %513 = vmatpush2.bf16.msra.mxu0 %v466
      %514 = vmatprep.subr.bf16.mxu0 0
      %515 = vmatpush2.bf16.msra.mxu0 %v465
      %516 = vmatprep.subr.bf16.mxu0 0
      %517 = vmatpush2.bf16.msra.mxu0 %v464
      %518 = vmatprep.mubr.bf16.mxu0 %v481
      %519 = vmatmul.mubr.bf16.gmra.mxu0 %v402
      %v520 = vpop.f32.mrf.mxu0
      %v521 = vadd.f32 %v385, %v520
      %v522 = vpop.f32.mrf.mxu0
      %v523 = vpop.f32.mrf.mxu0
      %v524 = vadd.f32 %v388, %v523
      %v525 = vpop.f32.mrf.mxu0
      %526 = vmatprep.mubr.bf16.mxu0 %v484
      %527 = vmatmul.mubr.bf16.gmra.mxu0 %v404
      %v528 = vpop.f32.mrf.mxu0
      %v529 = vadd.f32 %v393, %v528
      %v530 = vpop.f32.mrf.mxu0
      %v531 = vpop.f32.mrf.mxu0
      %v532 = vadd.f32 %v396, %v531
      %v533 = vpop.f32.mrf.mxu0
      %534 = vdwg.mxu0
      %v535 = vld [vmem:[%s192 + $0x10] sm:$0xff]
      %v536 = vld [vmem:[%s192 + $0x18] sm:$0xff]
      %v537 = vld [vmem:[%s192 + $0x20] sm:$0xff]
      %v538 = vld [vmem:[%s192 + $0x28] sm:$0xff]
      %s539 = scalar_lea.vmem %s1, 192
      %v540 = vld [vmem:[%s539] sm:$0xf]
      %v541 = vld [vmem:[%s539 + $0x4] sm:$0xf]
      %v542 = vld [vmem:[%s539 + $0x8] sm:$0xf]
      %v543 = vld [vmem:[%s539 + $0xc] sm:$0xf]
      %v544 = vld [vmem:[%s539 + $0x10] sm:$0xf]
      %v545 = vld [vmem:[%s539 + $0x14] sm:$0xf]
      %v546 = vld [vmem:[%s539 + $0x18] sm:$0xf]
      %v547 = vld [vmem:[%s539 + $0x1c] sm:$0xf]
      %v548 = vld [vmem:[%s539 + $0x20] sm:$0xf]
      %v549 = vld [vmem:[%s539 + $0x24] sm:$0xf]
      %v550 = vld [vmem:[%s539 + $0x28] sm:$0xf]
      %v551 = vld [vmem:[%s539 + $0x2c] sm:$0xf]
      %v552 = vld [vmem:[%s539 + $0x30] sm:$0xf]
      %v553 = vld [vmem:[%s539 + $0x34] sm:$0xf]
      %v554 = vld [vmem:[%s539 + $0x38] sm:$0xf]
      %v555 = vld [vmem:[%s539 + $0x3c] sm:$0xf]
      %v556 = vld [vmem:[%s539 + $0x40] sm:$0xf]
      %v557 = vld [vmem:[%s539 + $0x44] sm:$0xf]
      %v558 = vld [vmem:[%s539 + $0x48] sm:$0xf]
      %v559 = vld [vmem:[%s539 + $0x4c] sm:$0xf]
      %v560 = vld [vmem:[%s539 + $0x50] sm:$0xf]
      %v561 = vld [vmem:[%s539 + $0x54] sm:$0xf]
      %v562 = vld [vmem:[%s539 + $0x58] sm:$0xf]
      %v563 = vld [vmem:[%s539 + $0x5c] sm:$0xf]
      %v568 = vunpack.c.l.b16 %v535
      %v569 = vunpack.c.h.b16 %v535
      %v570 = vunpack.c.l.b16 %v536
      %v571 = vunpack.c.h.b16 %v536
      %v572 = vunpack.c.l.b16 %v537
      %v573 = vunpack.c.h.b16 %v537
      %v574 = vunpack.c.l.b16 %v538
      %v575 = vunpack.c.h.b16 %v538
      %v576 = vpack.c.b16 %v570, %v568
      %v577 = vpack.c.b16 %v571, %v569
      %v578 = vpack.c.b16 %v574, %v572
      %v579 = vpack.c.b16 %v575, %v573
      %v606 = vunpack.c.l.b16 %v540
      %v607 = vunpack.c.l.b16 %v541
      %v608 = vunpack.c.l.b16 %v542
      %v609 = vunpack.c.l.b16 %v543
      %v610 = vunpack.c.l.b16 %v544
      %v611 = vunpack.c.l.b16 %v545
      %v612 = vunpack.c.l.b16 %v546
      %v613 = vunpack.c.l.b16 %v547
      %v614 = vunpack.c.l.b16 %v548
      %v615 = vunpack.c.l.b16 %v549
      %v616 = vunpack.c.l.b16 %v550
      %v617 = vunpack.c.l.b16 %v551
      %v618 = vunpack.c.l.b16 %v552
      %v619 = vunpack.c.l.b16 %v553
      %v620 = vunpack.c.l.b16 %v554
      %v621 = vunpack.c.l.b16 %v555
      %v622 = vunpack.c.l.b16 %v556
      %v623 = vunpack.c.l.b16 %v557
      %v624 = vunpack.c.l.b16 %v558
      %v625 = vunpack.c.l.b16 %v559
      %v626 = vunpack.c.l.b16 %v560
      %v627 = vunpack.c.l.b16 %v561
      %v628 = vunpack.c.l.b16 %v562
      %v629 = vunpack.c.l.b16 %v563
      %v630 = vpack.c.b16 %v607, %v606
      %v631 = vpack.c.b16 %v609, %v608
      %v632 = vpack.c.b16 %v611, %v610
      %v633 = vpack.c.b16 %v613, %v612
      %v634 = vpack.c.b16 %v615, %v614
      %v635 = vpack.c.b16 %v617, %v616
      %v636 = vpack.c.b16 %v619, %v618
      %v637 = vpack.c.b16 %v621, %v620
      %v638 = vpack.c.b16 %v623, %v622
      %v639 = vpack.c.b16 %v625, %v624
      %v640 = vpack.c.b16 %v627, %v626
      %v641 = vpack.c.b16 %v629, %v628
      %v655 = vsel %vm343, %v577, 0
      %v658 = vsel %vm343, %v579, 0
      %660 = vmatprep.subr.bf16.mxu0 0
      %661 = vmatpush1.bf16.msra.mxu0 %v637
      %662 = vmatprep.subr.bf16.mxu0 0
      %663 = vmatpush1.bf16.msra.mxu0 %v636
      %664 = vmatprep.subr.bf16.mxu0 0
      %665 = vmatpush1.bf16.msra.mxu0 %v635
      %666 = vmatprep.subr.bf16.mxu0 0
      %667 = vmatpush1.bf16.msra.mxu0 %v634
      %668 = vmatprep.subr.bf16.mxu0 0
      %669 = vmatpush1.bf16.msra.mxu0 %v633
      %670 = vmatprep.subr.bf16.mxu0 0
      %671 = vmatpush1.bf16.msra.mxu0 %v632
      %672 = vmatprep.subr.bf16.mxu0 0
      %673 = vmatpush1.bf16.msra.mxu0 %v631
      %674 = vmatprep.subr.bf16.mxu0 0
      %675 = vmatpush1.bf16.msra.mxu0 %v630
      %676 = vmatprep.subr.bf16.mxu0 0
      %677 = vmatpush2.bf16.msra.mxu0 0
      %678 = vmatprep.subr.bf16.mxu0 0
      %679 = vmatpush2.bf16.msra.mxu0 0
      %680 = vmatprep.subr.bf16.mxu0 0
      %681 = vmatpush2.bf16.msra.mxu0 0
      %682 = vmatprep.subr.bf16.mxu0 0
      %683 = vmatpush2.bf16.msra.mxu0 0
      %684 = vmatprep.subr.bf16.mxu0 0
      %685 = vmatpush2.bf16.msra.mxu0 %v641
      %686 = vmatprep.subr.bf16.mxu0 0
      %687 = vmatpush2.bf16.msra.mxu0 %v640
      %688 = vmatprep.subr.bf16.mxu0 0
      %689 = vmatpush2.bf16.msra.mxu0 %v639
      %690 = vmatprep.subr.bf16.mxu0 0
      %691 = vmatpush2.bf16.msra.mxu0 %v638
      %692 = vmatprep.mubr.bf16.mxu0 %v655
      %693 = vmatmul.mubr.bf16.gmra.mxu0 %v576
      %v694 = vpop.f32.mrf.mxu0
      %v695 = vadd.f32 0.0, %v694
      %v696 = vpop.f32.mrf.mxu0
      %v697 = vpop.f32.mrf.mxu0
      %v698 = vadd.f32 0.0, %v697
      %v699 = vpop.f32.mrf.mxu0
      %700 = vmatprep.mubr.bf16.mxu0 %v658
      %701 = vmatmul.mubr.bf16.gmra.mxu0 %v578
      %v702 = vpop.f32.mrf.mxu0
      %v703 = vadd.f32 0.0, %v702
      %v704 = vpop.f32.mrf.mxu0
      %v705 = vpop.f32.mrf.mxu0
      %v706 = vadd.f32 0.0, %v705
      %v707 = vpop.f32.mrf.mxu0
      %708 = vdwg.mxu0
      %v709 = vadd.f32 %v521, %v695
      %v710 = vadd.f32 %v524, %v698
      %v711 = vadd.f32 %v529, %v703
      %v712 = vadd.f32 %v532, %v706
      %v713 = vld [vmem:[%s2] sm:$0x1]
      %v715 = vlaneseq
      %v716 = vshrl.u32 %v715, 7
      %v717 = vsub.s32 0, %v716
      %v718 = vrot.slane %v713, %v717
      %v720 = vmul.f32 %v709, %v718
      %v721 = vmul.f32 %v710, %v718
      %v722 = vmul.f32 %v711, %v718
      %v723 = vmul.f32 %v712, %v718
      %v724 = vld [vmem:[%s3] sm:$0x1]
      %v726 = vlaneseq
      %v727 = vshrl.u32 %v726, 7
      %v728 = vsub.s32 0, %v727
      %v729 = vrot.slane %v724, %v728
      %v731 = vadd.f32 %v720, %v729
      %v732 = vadd.f32 %v721, %v729
      %v733 = vadd.f32 %v722, %v729
      %v734 = vadd.f32 %v723, %v729
      %v735 = vmax.f32 %v731, 0.0
      %v736 = vmax.f32 %v732, 0.0
      %v737 = vmax.f32 %v733, 0.0
      %v738 = vmax.f32 %v734, 0.0
      %v739 = vpack.c.bf16 %v736, %v735
      %v740 = vpack.c.bf16 %v738, %v737
      %v743 = vunpack.c.l.b16 %v739
      %v744 = vunpack.c.h.b16 %v739
      %v745 = vunpack.c.l.b16 %v740
      %v746 = vunpack.c.h.b16 %v740
      %v747 = vpack.c.b16 %v743, %v743
      %v748 = vpack.c.b16 %v744, %v744
      %v749 = vpack.c.b16 %v745, %v745
      %v750 = vpack.c.b16 %v746, %v746
      %755 = vst [vmem:[%s197] sm:$0xf] %v747
      %756 = vst [vmem:[%s197 + $0x4] sm:$0xf] %v748
      %757 = vst [vmem:[%s197 + $0x8] sm:$0xf] %v749
      %758 = vst [vmem:[%s197 + $0xc] sm:$0xf] %v750
      %p759 = scmp.lt.s32.totalorder %s15, 1
      %s760 = scalar_select %p759, %s15, 1
      %s761 = smul.addr %s760, 4
      %s762 = smul.addr %s761, 4
      %s763 = scalar_lea.vmem %s4, %s762
      // Predicated region
      $region37: #{drunet_var_forward.17} parent=35 // pred_check
        %p764 = pneg %p122
      $region38: #{drunet_var_forward.17} parent=35 // pred_check_branch
        %766 = sbr.rel (%p764) target = $region40
      $region39: #{drunet_var_forward.17} parent=35 // pred_region
        _
      $region40: #{drunet_var_forward.17} parent=35 // pred_fallthru
        _
    $region36: #{drunet_var_forward.17} parent=5 // pred_fallthru
      _
    %p767 = scmp.le.s32.totalorder 2, %s10
    // Predicated region
    $region41: #{drunet_var_forward.17} parent=5 // pred_check
      %p768 = pneg %p767
    $region42: #{drunet_var_forward.17} parent=5 // pred_check_branch
      %770 = sbr.rel (%p768) target = $region44
    $region43: #{drunet_var_forward.17} parent=5 // pred_region
      %s771 = ssub.s32 %s10, 2
      // Predicated region
      $region45: #{drunet_var_forward.17} parent=43 // pred_check
        %p772 = pneg %p128
      $region46: #{drunet_var_forward.17} parent=43 // pred_check_branch
        %774 = sbr.rel (%p772) target = $region48
      $region47: #{drunet_var_forward.17} parent=43 // pred_region
        %p775 = scmp.lt.s32.totalorder %s16, 1
        %s776 = scalar_select %p775, %s16, 1
        %s777 = smul.addr %s776, 4
        %s778 = smul.addr %s777, 4
        %s779 = scalar_lea.vmem %s4, %s778
      $region48: #{drunet_var_forward.17} parent=43 // pred_fallthru
        _
    $region44: #{drunet_var_forward.17} parent=5 // pred_fallthru
      _
  $region6: #{drunet_var_forward.17} parent=0 // loop_footer
    %s14 = sadd.s32 1, %s10
  $region7: #{drunet_var_forward.17} parent=0 // loop_footer_branch
    %9 = sbr.rel target = $region3
  $region8: #{drunet_var_forward.17} parent=0 // loop_exit
    _

// kernel: drunet_var_forward.18
$region0: #{drunet_var_forward.18}
  #allocation0 [shape = 'u32[]', space=smem, size = 0x4, offset = 0x4, fixed_abs, tag = 'smem constant byte address 0x4 - core index']
  #allocation1 [shape = 'u32[144,128]{1,0:T(1,128)}', space=vmem, size = 0x12000, scoped, tag = 'internal scratch']
  %s0 = inlined_call_operand.vmem [shape: bf16[2,48,384], index: 0, kind: input, shape index: {}]
  %s1 = inlined_call_operand.vmem [shape: bf16[3,384,128], index: 1, kind: input, shape index: {}]
  %s2 = inlined_call_operand.vmem [shape: f32[1,128], index: 2, kind: input, shape index: {}]
  %s3 = inlined_call_operand.vmem [shape: f32[1,128], index: 3, kind: input, shape index: {}]
  %s4 = inlined_call_operand.vmem [shape: bf16[2,32,128], index: 4, kind: output, shape index: {}]
  %s5 = sld [smem:[#allocation0]]
  $region49: #{drunet_var_forward.18} parent=0
    _
  %s7 = ssub.s32 1, %s5
  %s8 = scalar_select 0, %s7, %s5
  loop: start=0, step=1, limit=4
  $region2: #{drunet_var_forward.18} parent=0 // loop_pre_header
    _
  $region3: #{drunet_var_forward.18} parent=0 // loop_header
    %s10 = sphi 0, %s14
    %p11 = scmp.ge.s32.totalorder %s10, 4
    %s20 = sphi 0, %s22
    %s23 = sphi 0, %s20
    %s24 = sphi 0, %s23
    %s40 = sphi 0, %s24
    %s44 = sphi 0, %s44
    %s46 = sphi 0, %s44
    %s47 = sphi 0, %s46
    %s61 = sphi 0, %s47
    %s65 = sphi 0, %s65
    %s67 = sphi 0, %s65
    %s68 = sphi 0, %s67
    %s82 = sphi 0, %s68
    %s86 = sphi 0, %s86
    %s88 = sphi 0, %s86
    %s89 = sphi 0, %s88
    %s103 = sphi 0, %s89
    %s109 = sphi 0, %s111
    %s112 = sphi 0, %s109
    %s113 = sphi 0, %s112
    %s129 = sphi 0, %s113
  $region4: #{drunet_var_forward.18} parent=0 // loop_header_branch
    %13 = sbr.rel (%p11) target = $region8
  $region5: #{drunet_var_forward.18} parent=0 // loop_body
    %s15 = ssub.s32 %s10, 1
    %s16 = ssub.s32 %s10, 2
    %s17 = sadd.s32 %s10, 1
    %s18 = ssub.s32 %s10, %s17
    %p19 = scmp.eq.s32.totalorder %s18, 0
    %s21 = sadd.s32 %s20, 1
    %s22 = scalar_select %p19, %s20, %s21
    %p25 = pneg %p19
    %p26 = scmp.eq.s32.totalorder %s10, 1
    %p27 = por %p25, %p26
    %p28 = scmp.ne.s32.totalorder %s20, %s23
    %p29 = scmp.eq.s32.totalorder %s10, 0
    %p30 = por %p28, %p29
    %p31 = scmp.ne.s32.totalorder %s20, %s23
    %p32 = scmp.eq.s32.totalorder %s15, 1
    %p33 = por %p31, %p32
    %p34 = scmp.ne.s32.totalorder %s23, %s24
    %p35 = scmp.eq.s32.totalorder %s15, 0
    %p36 = por %p34, %p35
    %p37 = scmp.ne.s32.totalorder %s23, %s24
    %p38 = scmp.eq.s32.totalorder %s16, 1
    %p39 = por %p37, %p38
    %p41 = scmp.ne.s32.totalorder %s24, %s40
    %p42 = scmp.eq.s32.totalorder %s16, 0
    %p43 = por %p41, %p42
    %s45 = sadd.s32 %s44, 1
    %p48 = scmp.eq.s32.totalorder %s10, 1
    %p49 = scmp.ne.s32.totalorder %s44, %s46
    %p50 = scmp.eq.s32.totalorder %s10, 0
    %p51 = por %p49, %p50
    %p52 = scmp.ne.s32.totalorder %s44, %s46
    %p53 = scmp.eq.s32.totalorder %s15, 1
    %p54 = por %p52, %p53
    %p55 = scmp.ne.s32.totalorder %s46, %s47
    %p56 = scmp.eq.s32.totalorder %s15, 0
    %p57 = por %p55, %p56
    %p58 = scmp.ne.s32.totalorder %s46, %s47
    %p59 = scmp.eq.s32.totalorder %s16, 1
    %p60 = por %p58, %p59
    %p62 = scmp.ne.s32.totalorder %s47, %s61
    %p63 = scmp.eq.s32.totalorder %s16, 0
    %p64 = por %p62, %p63
    %s66 = sadd.s32 %s65, 1
    %p69 = scmp.eq.s32.totalorder %s10, 1
    %p70 = scmp.ne.s32.totalorder %s65, %s67
    %p71 = scmp.eq.s32.totalorder %s10, 0
    %p72 = por %p70, %p71
    %p73 = scmp.ne.s32.totalorder %s65, %s67
    %p74 = scmp.eq.s32.totalorder %s15, 1
    %p75 = por %p73, %p74
    %p76 = scmp.ne.s32.totalorder %s67, %s68
    %p77 = scmp.eq.s32.totalorder %s15, 0
    %p78 = por %p76, %p77
    %p79 = scmp.ne.s32.totalorder %s67, %s68
    %p80 = scmp.eq.s32.totalorder %s16, 1
    %p81 = por %p79, %p80
    %p83 = scmp.ne.s32.totalorder %s68, %s82
    %p84 = scmp.eq.s32.totalorder %s16, 0
    %p85 = por %p83, %p84
    %s87 = sadd.s32 %s86, 1
    %p90 = scmp.eq.s32.totalorder %s10, 1
    %p91 = scmp.ne.s32.totalorder %s86, %s88
    %p92 = scmp.eq.s32.totalorder %s10, 0
    %p93 = por %p91, %p92
    %p94 = scmp.ne.s32.totalorder %s86, %s88
    %p95 = scmp.eq.s32.totalorder %s15, 1
    %p96 = por %p94, %p95
    %p97 = scmp.ne.s32.totalorder %s88, %s89
    %p98 = scmp.eq.s32.totalorder %s15, 0
    %p99 = por %p97, %p98
    %p100 = scmp.ne.s32.totalorder %s88, %s89
    %p101 = scmp.eq.s32.totalorder %s16, 1
    %p102 = por %p100, %p101
    %p104 = scmp.ne.s32.totalorder %s89, %s103
    %p105 = scmp.eq.s32.totalorder %s16, 0
    %p106 = por %p104, %p105
    %s107 = ssub.s32 %s10, %s17
    %p108 = scmp.eq.s32.totalorder %s107, 0
    %s110 = sadd.s32 %s109, 1
    %s111 = scalar_select %p108, %s109, %s110
    %p114 = pneg %p108
    %p115 = scmp.eq.s32.totalorder %s10, 1
    %p116 = por %p114, %p115
    %p117 = scmp.ne.s32.totalorder %s109, %s112
    %p118 = scmp.eq.s32.totalorder %s10, 0
    %p119 = por %p117, %p118
    %p120 = scmp.ne.s32.totalorder %s109, %s112
    %p121 = scmp.eq.s32.totalorder %s15, 1
    %p122 = por %p120, %p121
    %p123 = scmp.ne.s32.totalorder %s112, %s113
    %p124 = scmp.eq.s32.totalorder %s15, 0
    %p125 = por %p123, %p124
    %p126 = scmp.ne.s32.totalorder %s112, %s113
    %p127 = scmp.eq.s32.totalorder %s16, 1
    %p128 = por %p126, %p127
    %p130 = scmp.ne.s32.totalorder %s113, %s129
    %p131 = scmp.eq.s32.totalorder %s16, 0
    %p132 = por %p130, %p131
    %p133 = scmp.le.s32.totalorder 1, %s10
    %p134 = scmp.lt.s32.totalorder %s10, 3
    %p135 = pnand %p133, %p134
    %p136 = pneg %p135
    // Predicated region
    $region9: #{drunet_var_forward.18} parent=5 // pred_check
      _
    $region10: #{drunet_var_forward.18} parent=5 // pred_check_branch
      %138 = sbr.rel (%p135) target = $region12
    $region11: #{drunet_var_forward.18} parent=5 // pred_region
      %s139 = ssub.s32 %s10, 1
      // Predicated region
      $region13: #{drunet_var_forward.18} parent=11 // pred_check
        %p140 = pneg %p57
      $region14: #{drunet_var_forward.18} parent=11 // pred_check_branch
        %142 = sbr.rel (%p140) target = $region16
      $region15: #{drunet_var_forward.18} parent=11 // pred_region
        _
      $region16: #{drunet_var_forward.18} parent=11 // pred_fallthru
        _
      // Predicated region
      $region17: #{drunet_var_forward.18} parent=11 // pred_check
        %p143 = pneg %p78
      $region18: #{drunet_var_forward.18} parent=11 // pred_check_branch
        %145 = sbr.rel (%p143) target = $region20
      $region19: #{drunet_var_forward.18} parent=11 // pred_region
        _
      $region20: #{drunet_var_forward.18} parent=11 // pred_fallthru
        _
      // Predicated region
      $region21: #{drunet_var_forward.18} parent=11 // pred_check
        %p146 = pneg %p99
      $region22: #{drunet_var_forward.18} parent=11 // pred_check_branch
        %148 = sbr.rel (%p146) target = $region24
      $region23: #{drunet_var_forward.18} parent=11 // pred_region
        _
      $region24: #{drunet_var_forward.18} parent=11 // pred_fallthru
        _
    $region12: #{drunet_var_forward.18} parent=5 // pred_fallthru
      _
    %p149 = scmp.lt.s32.totalorder %s10, 2
    // Predicated region
    $region25: #{drunet_var_forward.18} parent=5 // pred_check
      %p150 = pneg %p149
    $region26: #{drunet_var_forward.18} parent=5 // pred_check_branch
      %152 = sbr.rel (%p150) target = $region28
    $region27: #{drunet_var_forward.18} parent=5 // pred_region
      // Predicated region
      $region29: #{drunet_var_forward.18} parent=27 // pred_check
        %p153 = pneg %p30
      $region30: #{drunet_var_forward.18} parent=27 // pred_check_branch
        %155 = sbr.rel (%p153) target = $region32
      $region31: #{drunet_var_forward.18} parent=27 // pred_region
        %p156 = scmp.lt.s32.totalorder %s10, 1
        %s157 = scalar_select %p156, %s10, 1
        %s158 = smul.addr %s157, 18
        %s159 = smul.addr %s158, 4
        %s160 = scalar_lea.vmem %s0, %s159
      $region32: #{drunet_var_forward.18} parent=27 // pred_fallthru
        _
    $region28: #{drunet_var_forward.18} parent=5 // pred_fallthru
      _
    %p161 = scmp.le.s32.totalorder 1, %s10
    %p162 = scmp.lt.s32.totalorder %s10, 3
    %p163 = pnand %p161, %p162
    %p164 = pneg %p163
    // Predicated region
    $region33: #{drunet_var_forward.18} parent=5 // pred_check
      _
    $region34: #{drunet_var_forward.18} parent=5 // pred_check_branch
      %166 = sbr.rel (%p163) target = $region36
    $region35: #{drunet_var_forward.18} parent=5 // pred_region
      %s167 = ssub.s32 %s10, 1
      %p168 = scmp.lt.s32.totalorder %s15, 1
      %s169 = scalar_select %p168, %s15, 1
      %s170 = smul.addr %s169, 18
      %s171 = smul.addr %s170, 4
      %s172 = scalar_lea.vmem %s0, %s171
      %p173 = pneg %p36
      %p174 = pneg %p33
      %p175 = pneg %p57
      %p176 = pneg %p54
      %p177 = pneg %p78
      %p178 = pneg %p75
      %p179 = pneg %p99
      %p180 = pneg %p96
      %p181 = pneg %p125
      %p182 = pneg %p122
      %p183 = scmp.lt.s32.totalorder %s15, 1
      %s184 = scalar_select %p183, %s15, 1
      %s185 = smul.addr %s184, 4
      %s186 = smul.addr %s185, 4
      %s187 = scalar_lea.vmem %s4, %s186
      %p188 = scmp.lt.s32.totalorder %s15, 1
      %s189 = scalar_select %p188, %s15, 1
      %s190 = smul.addr %s189, 18
      %s191 = smul.addr %s190, 4
      %s192 = scalar_lea.vmem %s0, %s191
      %p193 = scmp.lt.s32.totalorder %s15, 1
      %s194 = scalar_select %p193, %s15, 1
      %s195 = smul.addr %s194, 4
      %s196 = smul.addr %s195, 4
      %s197 = scalar_lea.vmem %s4, %s196
      %v199 = vld [vmem:[%s192] sm:$0xff]
      %v200 = vld [vmem:[%s192 + $0x8] sm:$0xf]
      %v201 = vld [vmem:[%s192 + $0xc] sm:$0xff]
      %v202 = vld [vmem:[%s192 + $0x14] sm:$0xf]
      %v203 = vld [vmem:[%s192 + $0x18] sm:$0xff]
      %v204 = vld [vmem:[%s192 + $0x20] sm:$0xf]
      %v205 = vld [vmem:[%s192 + $0x24] sm:$0xff]
      %v206 = vld [vmem:[%s192 + $0x2c] sm:$0xf]
      %v207 = vld [vmem:[%s1] sm:$0xf]
      %v208 = vld [vmem:[%s1 + $0x4] sm:$0xf]
      %v209 = vld [vmem:[%s1 + $0x8] sm:$0xf]
      %v210 = vld [vmem:[%s1 + $0xc] sm:$0xf]
      %v211 = vld [vmem:[%s1 + $0x10] sm:$0xf]
      %v212 = vld [vmem:[%s1 + $0x14] sm:$0xf]
      %v213 = vld [vmem:[%s1 + $0x18] sm:$0xf]
      %v214 = vld [vmem:[%s1 + $0x1c] sm:$0xf]
      %v215 = vld [vmem:[%s1 + $0x20] sm:$0xf]
      %v216 = vld [vmem:[%s1 + $0x24] sm:$0xf]
      %v217 = vld [vmem:[%s1 + $0x28] sm:$0xf]
      %v218 = vld [vmem:[%s1 + $0x2c] sm:$0xf]
      %v219 = vld [vmem:[%s1 + $0x30] sm:$0xf]
      %v220 = vld [vmem:[%s1 + $0x34] sm:$0xf]
      %v221 = vld [vmem:[%s1 + $0x38] sm:$0xf]
      %v222 = vld [vmem:[%s1 + $0x3c] sm:$0xf]
      %v223 = vld [vmem:[%s1 + $0x40] sm:$0xf]
      %v224 = vld [vmem:[%s1 + $0x44] sm:$0xf]
      %v225 = vld [vmem:[%s1 + $0x48] sm:$0xf]
      %v226 = vld [vmem:[%s1 + $0x4c] sm:$0xf]
      %v227 = vld [vmem:[%s1 + $0x50] sm:$0xf]
      %v228 = vld [vmem:[%s1 + $0x54] sm:$0xf]
      %v229 = vld [vmem:[%s1 + $0x58] sm:$0xf]
      %v230 = vld [vmem:[%s1 + $0x5c] sm:$0xf]
      %v231 = vld [vmem:[%s1 + $0x60] sm:$0xf]
      %v232 = vld [vmem:[%s1 + $0x64] sm:$0xf]
      %v233 = vld [vmem:[%s1 + $0x68] sm:$0xf]
      %v234 = vld [vmem:[%s1 + $0x6c] sm:$0xf]
      %v235 = vld [vmem:[%s1 + $0x70] sm:$0xf]
      %v236 = vld [vmem:[%s1 + $0x74] sm:$0xf]
      %v237 = vld [vmem:[%s1 + $0x78] sm:$0xf]
      %v238 = vld [vmem:[%s1 + $0x7c] sm:$0xf]
      %v239 = vld [vmem:[%s1 + $0x80] sm:$0xf]
      %v240 = vld [vmem:[%s1 + $0x84] sm:$0xf]
      %v241 = vld [vmem:[%s1 + $0x88] sm:$0xf]
      %v242 = vld [vmem:[%s1 + $0x8c] sm:$0xf]
      %v243 = vld [vmem:[%s1 + $0x90] sm:$0xf]
      %v244 = vld [vmem:[%s1 + $0x94] sm:$0xf]
      %v245 = vld [vmem:[%s1 + $0x98] sm:$0xf]
      %v246 = vld [vmem:[%s1 + $0x9c] sm:$0xf]
      %v247 = vld [vmem:[%s1 + $0xa0] sm:$0xf]
      %v248 = vld [vmem:[%s1 + $0xa4] sm:$0xf]
      %v249 = vld [vmem:[%s1 + $0xa8] sm:$0xf]
      %v250 = vld [vmem:[%s1 + $0xac] sm:$0xf]
      %v251 = vld [vmem:[%s1 + $0xb0] sm:$0xf]
      %v252 = vld [vmem:[%s1 + $0xb4] sm:$0xf]
      %v253 = vld [vmem:[%s1 + $0xb8] sm:$0xf]
      %v254 = vld [vmem:[%s1 + $0xbc] sm:$0xf]
      %v255 = vld [vmem:[%s192 + $0x30] sm:$0xff]
      %v256 = vld [vmem:[%s192 + $0x38] sm:$0xf]
      %s257 = scalar_lea.vmem %s1, 192
      %v258 = vld [vmem:[%s257] sm:$0xf]
      %v259 = vld [vmem:[%s257 + $0x4] sm:$0xf]
      %v260 = vld [vmem:[%s257 + $0x8] sm:$0xf]
      %v261 = vld [vmem:[%s257 + $0xc] sm:$0xf]
      %v262 = vld [vmem:[%s257 + $0x10] sm:$0xf]
      %v263 = vld [vmem:[%s257 + $0x14] sm:$0xf]
      %v264 = vld [vmem:[%s257 + $0x18] sm:$0xf]
      %v265 = vld [vmem:[%s257 + $0x1c] sm:$0xf]
      %v266 = vld [vmem:[%s257 + $0x20] sm:$0xf]
      %v267 = vld [vmem:[%s257 + $0x24] sm:$0xf]
      %v268 = vld [vmem:[%s257 + $0x28] sm:$0xf]
      %v269 = vld [vmem:[%s257 + $0x2c] sm:$0xf]
      %v270 = vld [vmem:[%s257 + $0x30] sm:$0xf]
      %v271 = vld [vmem:[%s257 + $0x34] sm:$0xf]
      %v272 = vld [vmem:[%s257 + $0x38] sm:$0xf]
      %v273 = vld [vmem:[%s257 + $0x3c] sm:$0xf]
      %v274 = vld [vmem:[%s257 + $0x40] sm:$0xf]
      %v275 = vld [vmem:[%s257 + $0x44] sm:$0xf]
      %v276 = vld [vmem:[%s257 + $0x48] sm:$0xf]
      %v277 = vld [vmem:[%s257 + $0x4c] sm:$0xf]
      %v278 = vld [vmem:[%s257 + $0x50] sm:$0xf]
      %v279 = vld [vmem:[%s257 + $0x54] sm:$0xf]
      %v280 = vld [vmem:[%s257 + $0x58] sm:$0xf]
      %v281 = vld [vmem:[%s257 + $0x5c] sm:$0xf]
      %v282 = vld [vmem:[%s257 + $0x60] sm:$0xf]
      %v283 = vld [vmem:[%s257 + $0x64] sm:$0xf]
      %v284 = vld [vmem:[%s257 + $0x68] sm:$0xf]
      %v285 = vld [vmem:[%s257 + $0x6c] sm:$0xf]
      %v286 = vld [vmem:[%s257 + $0x70] sm:$0xf]
      %v287 = vld [vmem:[%s257 + $0x74] sm:$0xf]
      %v288 = vld [vmem:[%s257 + $0x78] sm:$0xf]
      %v289 = vld [vmem:[%s257 + $0x7c] sm:$0xf]
      %v290 = vld [vmem:[%s257 + $0x80] sm:$0xf]
      %v291 = vld [vmem:[%s257 + $0x84] sm:$0xf]
      %v292 = vld [vmem:[%s257 + $0x88] sm:$0xf]
      %v293 = vld [vmem:[%s257 + $0x8c] sm:$0xf]
      %v294 = vld [vmem:[%s257 + $0x90] sm:$0xf]
      %v295 = vld [vmem:[%s257 + $0x94] sm:$0xf]
      %v296 = vld [vmem:[%s257 + $0x98] sm:$0xf]
      %v297 = vld [vmem:[%s257 + $0x9c] sm:$0xf]
      %v298 = vld [vmem:[%s257 + $0xa0] sm:$0xf]
      %v299 = vld [vmem:[%s257 + $0xa4] sm:$0xf]
      %v300 = vld [vmem:[%s257 + $0xa8] sm:$0xf]
      %v301 = vld [vmem:[%s257 + $0xac] sm:$0xf]
      %v302 = vld [vmem:[%s257 + $0xb0] sm:$0xf]
      %v303 = vld [vmem:[%s257 + $0xb4] sm:$0xf]
      %v304 = vld [vmem:[%s257 + $0xb8] sm:$0xf]
      %v305 = vld [vmem:[%s257 + $0xbc] sm:$0xf]
      %v314 = vunpack.c.l.b16 %v201
      %v315 = vunpack.c.h.b16 %v201
      %v316 = vunpack.c.l.b16 %v202
      %v317 = vunpack.c.l.b16 %v203
      %v318 = vunpack.c.h.b16 %v203
      %v319 = vunpack.c.l.b16 %v204
      %v320 = vunpack.c.l.b16 %v205
      %v321 = vunpack.c.h.b16 %v205
      %v322 = vunpack.c.l.b16 %v206
      %v323 = vunpack.c.l.b16 %v255
      %v324 = vunpack.c.h.b16 %v255
      %v325 = vunpack.c.l.b16 %v256
      %v326 = vpack.c.b16 %v317, %v314
      %v327 = vpack.c.b16 %v318, %v315
      %v328 = vpack.c.b16 %v319, %v316
      %v329 = vpack.c.b16 %v323, %v320
      %v330 = vpack.c.b16 %v324, %v321
      %v331 = vpack.c.b16 %v325, %v322
      %v386 = vunpack.c.l.b16 %v258
      %v387 = vunpack.c.l.b16 %v259
      %v388 = vunpack.c.l.b16 %v260
      %v389 = vunpack.c.l.b16 %v261
      %v390 = vunpack.c.l.b16 %v262
      %v391 = vunpack.c.l.b16 %v263
      %v392 = vunpack.c.l.b16 %v264
      %v393 = vunpack.c.l.b16 %v265
      %v394 = vunpack.c.l.b16 %v266
      %v395 = vunpack.c.l.b16 %v267
      %v396 = vunpack.c.l.b16 %v268
      %v397 = vunpack.c.l.b16 %v269
      %v398 = vunpack.c.l.b16 %v270
      %v399 = vunpack.c.l.b16 %v271
      %v400 = vunpack.c.l.b16 %v272
      %v401 = vunpack.c.l.b16 %v273
      %v402 = vunpack.c.l.b16 %v274
      %v403 = vunpack.c.l.b16 %v275
      %v404 = vunpack.c.l.b16 %v276
      %v405 = vunpack.c.l.b16 %v277
      %v406 = vunpack.c.l.b16 %v278
      %v407 = vunpack.c.l.b16 %v279
      %v408 = vunpack.c.l.b16 %v280
      %v409 = vunpack.c.l.b16 %v281
      %v410 = vunpack.c.l.b16 %v282
      %v411 = vunpack.c.l.b16 %v283
      %v412 = vunpack.c.l.b16 %v284
      %v413 = vunpack.c.l.b16 %v285
      %v414 = vunpack.c.l.b16 %v286
      %v415 = vunpack.c.l.b16 %v287
      %v416 = vunpack.c.l.b16 %v288
      %v417 = vunpack.c.l.b16 %v289
      %v418 = vunpack.c.l.b16 %v290
      %v419 = vunpack.c.l.b16 %v291
      %v420 = vunpack.c.l.b16 %v292
      %v421 = vunpack.c.l.b16 %v293
      %v422 = vunpack.c.l.b16 %v294
      %v423 = vunpack.c.l.b16 %v295
      %v424 = vunpack.c.l.b16 %v296
      %v425 = vunpack.c.l.b16 %v297
      %v426 = vunpack.c.l.b16 %v298
      %v427 = vunpack.c.l.b16 %v299
      %v428 = vunpack.c.l.b16 %v300
      %v429 = vunpack.c.l.b16 %v301
      %v430 = vunpack.c.l.b16 %v302
      %v431 = vunpack.c.l.b16 %v303
      %v432 = vunpack.c.l.b16 %v304
      %v433 = vunpack.c.l.b16 %v305
      %v434 = vpack.c.b16 %v387, %v386
      %v435 = vpack.c.b16 %v389, %v388
      %v436 = vpack.c.b16 %v391, %v390
      %v437 = vpack.c.b16 %v393, %v392
      %v438 = vpack.c.b16 %v395, %v394
      %v439 = vpack.c.b16 %v397, %v396
      %v440 = vpack.c.b16 %v399, %v398
      %v441 = vpack.c.b16 %v401, %v400
      %v442 = vpack.c.b16 %v403, %v402
      %v443 = vpack.c.b16 %v405, %v404
      %v444 = vpack.c.b16 %v407, %v406
      %v445 = vpack.c.b16 %v409, %v408
      %v446 = vpack.c.b16 %v411, %v410
      %v447 = vpack.c.b16 %v413, %v412
      %v448 = vpack.c.b16 %v415, %v414
      %v449 = vpack.c.b16 %v417, %v416
      %v450 = vpack.c.b16 %v419, %v418
      %v451 = vpack.c.b16 %v421, %v420
      %v452 = vpack.c.b16 %v423, %v422
      %v453 = vpack.c.b16 %v425, %v424
      %v454 = vpack.c.b16 %v427, %v426
      %v455 = vpack.c.b16 %v429, %v428
      %v456 = vpack.c.b16 %v431, %v430
      %v457 = vpack.c.b16 %v433, %v432
      %482 = vmatprep.subr.bf16.mxu0 0
      %483 = vmatpush1.bf16.msra.mxu0 %v441
      %484 = vmatprep.subr.bf16.mxu0 0
      %485 = vmatpush1.bf16.msra.mxu0 %v440
      %486 = vmatprep.subr.bf16.mxu0 0
      %487 = vmatpush1.bf16.msra.mxu0 %v439
      %488 = vmatprep.subr.bf16.mxu0 0
      %489 = vmatpush1.bf16.msra.mxu0 %v438
      %490 = vmatprep.subr.bf16.mxu0 0
      %491 = vmatpush1.bf16.msra.mxu0 %v437
      %492 = vmatprep.subr.bf16.mxu0 0
      %493 = vmatpush1.bf16.msra.mxu0 %v436
      %494 = vmatprep.subr.bf16.mxu0 0
      %495 = vmatpush1.bf16.msra.mxu0 %v435
      %496 = vmatprep.subr.bf16.mxu0 0
      %497 = vmatpush1.bf16.msra.mxu0 %v434
      %498 = vmatprep.subr.bf16.mxu0 0
      %499 = vmatpush2.bf16.msra.mxu0 %v449
      %500 = vmatprep.subr.bf16.mxu0 0
      %501 = vmatpush2.bf16.msra.mxu0 %v448
      %502 = vmatprep.subr.bf16.mxu0 0
      %503 = vmatpush2.bf16.msra.mxu0 %v447
      %504 = vmatprep.subr.bf16.mxu0 0
      %505 = vmatpush2.bf16.msra.mxu0 %v446
      %506 = vmatprep.subr.bf16.mxu0 0
      %507 = vmatpush2.bf16.msra.mxu0 %v445
      %508 = vmatprep.subr.bf16.mxu0 0
      %509 = vmatpush2.bf16.msra.mxu0 %v444
      %510 = vmatprep.subr.bf16.mxu0 0
      %511 = vmatpush2.bf16.msra.mxu0 %v443
      %512 = vmatprep.subr.bf16.mxu0 0
      %513 = vmatpush2.bf16.msra.mxu0 %v442
      %514 = vmatprep.mubr.bf16.mxu0 %v327
      %515 = vmatmul.mubr.bf16.gmra.mxu0 %v326
      %v516 = vpop.f32.mrf.mxu0
      %v517 = vadd.f32 0.0, %v516
      %v518 = vpop.f32.mrf.mxu0
      %v519 = vpop.f32.mrf.mxu0
      %v520 = vadd.f32 0.0, %v519
      %v521 = vpop.f32.mrf.mxu0
      %522 = vmatprep.mubr.bf16.mxu0 %v330
      %523 = vmatmul.mubr.bf16.gmra.mxu0 %v329
      %v524 = vpop.f32.mrf.mxu0
      %v525 = vadd.f32 0.0, %v524
      %v526 = vpop.f32.mrf.mxu0
      %v527 = vpop.f32.mrf.mxu0
      %v528 = vadd.f32 0.0, %v527
      %v529 = vpop.f32.mrf.mxu0
      %530 = vdwg.mxu0
      %531 = vmatprep.subr.bf16.mxu0 0
      %532 = vmatpush1.bf16.msra.mxu0 %v457
      %533 = vmatprep.subr.bf16.mxu0 0
      %534 = vmatpush1.bf16.msra.mxu0 %v456
      %535 = vmatprep.subr.bf16.mxu0 0
      %536 = vmatpush1.bf16.msra.mxu0 %v455
      %537 = vmatprep.subr.bf16.mxu0 0
      %538 = vmatpush1.bf16.msra.mxu0 %v454
      %539 = vmatprep.subr.bf16.mxu0 0
      %540 = vmatpush1.bf16.msra.mxu0 %v453
      %541 = vmatprep.subr.bf16.mxu0 0
      %542 = vmatpush1.bf16.msra.mxu0 %v452
      %543 = vmatprep.subr.bf16.mxu0 0
      %544 = vmatpush1.bf16.msra.mxu0 %v451
      %545 = vmatprep.subr.bf16.mxu0 0
      %546 = vmatpush1.bf16.msra.mxu0 %v450
      %547 = vmatprep.subr.bf16.mxu0 0
      %548 = vmatpush2.bf16.msra.mxu0 0
      %549 = vmatprep.subr.bf16.mxu0 0
      %550 = vmatpush2.bf16.msra.mxu0 0
      %551 = vmatprep.subr.bf16.mxu0 0
      %552 = vmatpush2.bf16.msra.mxu0 0
      %553 = vmatprep.subr.bf16.mxu0 0
      %554 = vmatpush2.bf16.msra.mxu0 0
      %555 = vmatprep.subr.bf16.mxu0 0
      %556 = vmatpush2.bf16.msra.mxu0 0
      %557 = vmatprep.subr.bf16.mxu0 0
      %558 = vmatpush2.bf16.msra.mxu0 0
      %559 = vmatprep.subr.bf16.mxu0 0
      %560 = vmatpush2.bf16.msra.mxu0 0
      %561 = vmatprep.subr.bf16.mxu0 0
      %562 = vmatpush2.bf16.msra.mxu0 0
      %563 = vmatprep.mubr.bf16.mxu0 0
      %564 = vmatmul.mubr.bf16.gmra.mxu0 %v328
      %v565 = vpop.f32.mrf.mxu0
      %v566 = vadd.f32 %v517, %v565
      %v567 = vpop.f32.mrf.mxu0
      %v568 = vpop.f32.mrf.mxu0
      %v569 = vadd.f32 %v520, %v568
      %v570 = vpop.f32.mrf.mxu0
      %571 = vmatprep.mubr.bf16.mxu0 0
      %572 = vmatmul.mubr.bf16.gmra.mxu0 %v331
      %v573 = vpop.f32.mrf.mxu0
      %v574 = vadd.f32 %v525, %v573
      %v575 = vpop.f32.mrf.mxu0
      %v576 = vpop.f32.mrf.mxu0
      %v577 = vadd.f32 %v528, %v576
      %v578 = vpop.f32.mrf.mxu0
      %579 = vdwg.mxu0
      %v582 = vunpack.c.l.b16 %v199
      %v583 = vunpack.c.h.b16 %v199
      %v584 = vunpack.c.l.b16 %v200
      %v585 = vpack.c.b16 %v314, %v582
      %v586 = vpack.c.b16 %v315, %v583
      %v587 = vpack.c.b16 %v316, %v584
      %v588 = vpack.c.b16 %v320, %v317
      %v589 = vpack.c.b16 %v321, %v318
      %v590 = vpack.c.b16 %v322, %v319
      %v645 = vunpack.c.l.b16 %v207
      %v646 = vunpack.c.l.b16 %v208
      %v647 = vunpack.c.l.b16 %v209
      %v648 = vunpack.c.l.b16 %v210
      %v649 = vunpack.c.l.b16 %v211
      %v650 = vunpack.c.l.b16 %v212
      %v651 = vunpack.c.l.b16 %v213
      %v652 = vunpack.c.l.b16 %v214
      %v653 = vunpack.c.l.b16 %v215
      %v654 = vunpack.c.l.b16 %v216
      %v655 = vunpack.c.l.b16 %v217
      %v656 = vunpack.c.l.b16 %v218
      %v657 = vunpack.c.l.b16 %v219
      %v658 = vunpack.c.l.b16 %v220
      %v659 = vunpack.c.l.b16 %v221
      %v660 = vunpack.c.l.b16 %v222
      %v661 = vunpack.c.l.b16 %v223
      %v662 = vunpack.c.l.b16 %v224
      %v663 = vunpack.c.l.b16 %v225
      %v664 = vunpack.c.l.b16 %v226
      %v665 = vunpack.c.l.b16 %v227
      %v666 = vunpack.c.l.b16 %v228
      %v667 = vunpack.c.l.b16 %v229
      %v668 = vunpack.c.l.b16 %v230
      %v669 = vunpack.c.l.b16 %v231
      %v670 = vunpack.c.l.b16 %v232
      %v671 = vunpack.c.l.b16 %v233
      %v672 = vunpack.c.l.b16 %v234
      %v673 = vunpack.c.l.b16 %v235
      %v674 = vunpack.c.l.b16 %v236
      %v675 = vunpack.c.l.b16 %v237
      %v676 = vunpack.c.l.b16 %v238
      %v677 = vunpack.c.l.b16 %v239
      %v678 = vunpack.c.l.b16 %v240
      %v679 = vunpack.c.l.b16 %v241
      %v680 = vunpack.c.l.b16 %v242
      %v681 = vunpack.c.l.b16 %v243
      %v682 = vunpack.c.l.b16 %v244
      %v683 = vunpack.c.l.b16 %v245
      %v684 = vunpack.c.l.b16 %v246
      %v685 = vunpack.c.l.b16 %v247
      %v686 = vunpack.c.l.b16 %v248
      %v687 = vunpack.c.l.b16 %v249
      %v688 = vunpack.c.l.b16 %v250
      %v689 = vunpack.c.l.b16 %v251
      %v690 = vunpack.c.l.b16 %v252
      %v691 = vunpack.c.l.b16 %v253
      %v692 = vunpack.c.l.b16 %v254
      %v693 = vpack.c.b16 %v646, %v645
      %v694 = vpack.c.b16 %v648, %v647
      %v695 = vpack.c.b16 %v650, %v649
      %v696 = vpack.c.b16 %v652, %v651
      %v697 = vpack.c.b16 %v654, %v653
      %v698 = vpack.c.b16 %v656, %v655
      %v699 = vpack.c.b16 %v658, %v657
      %v700 = vpack.c.b16 %v660, %v659
      %v701 = vpack.c.b16 %v662, %v661
      %v702 = vpack.c.b16 %v664, %v663
      %v703 = vpack.c.b16 %v666, %v665
      %v704 = vpack.c.b16 %v668, %v667
      %v705 = vpack.c.b16 %v670, %v669
      %v706 = vpack.c.b16 %v672, %v671
      %v707 = vpack.c.b16 %v674, %v673
      %v708 = vpack.c.b16 %v676, %v675
      %v709 = vpack.c.b16 %v678, %v677
      %v710 = vpack.c.b16 %v680, %v679
      %v711 = vpack.c.b16 %v682, %v681
      %v712 = vpack.c.b16 %v684, %v683
      %v713 = vpack.c.b16 %v686, %v685
      %v714 = vpack.c.b16 %v688, %v687
      %v715 = vpack.c.b16 %v690, %v689
      %v716 = vpack.c.b16 %v692, %v691
      %741 = vmatprep.subr.bf16.mxu0 0
      %742 = vmatpush1.bf16.msra.mxu0 %v700
      %743 = vmatprep.subr.bf16.mxu0 0
      %744 = vmatpush1.bf16.msra.mxu0 %v699
      %745 = vmatprep.subr.bf16.mxu0 0
      %746 = vmatpush1.bf16.msra.mxu0 %v698
      %747 = vmatprep.subr.bf16.mxu0 0
      %748 = vmatpush1.bf16.msra.mxu0 %v697
      %749 = vmatprep.subr.bf16.mxu0 0
      %750 = vmatpush1.bf16.msra.mxu0 %v696
      %751 = vmatprep.subr.bf16.mxu0 0
      %752 = vmatpush1.bf16.msra.mxu0 %v695
      %753 = vmatprep.subr.bf16.mxu0 0
      %754 = vmatpush1.bf16.msra.mxu0 %v694
      %755 = vmatprep.subr.bf16.mxu0 0
      %756 = vmatpush1.bf16.msra.mxu0 %v693
      %757 = vmatprep.subr.bf16.mxu0 0
      %758 = vmatpush2.bf16.msra.mxu0 %v708
      %759 = vmatprep.subr.bf16.mxu0 0
      %760 = vmatpush2.bf16.msra.mxu0 %v707
      %761 = vmatprep.subr.bf16.mxu0 0
      %762 = vmatpush2.bf16.msra.mxu0 %v706
      %763 = vmatprep.subr.bf16.mxu0 0
      %764 = vmatpush2.bf16.msra.mxu0 %v705
      %765 = vmatprep.subr.bf16.mxu0 0
      %766 = vmatpush2.bf16.msra.mxu0 %v704
      %767 = vmatprep.subr.bf16.mxu0 0
      %768 = vmatpush2.bf16.msra.mxu0 %v703
      %769 = vmatprep.subr.bf16.mxu0 0
      %770 = vmatpush2.bf16.msra.mxu0 %v702
      %771 = vmatprep.subr.bf16.mxu0 0
      %772 = vmatpush2.bf16.msra.mxu0 %v701
      %773 = vmatprep.mubr.bf16.mxu0 %v586
      %774 = vmatmul.mubr.bf16.gmra.mxu0 %v585
      %v775 = vpop.f32.mrf.mxu0
      %v776 = vadd.f32 %v566, %v775
      %v777 = vpop.f32.mrf.mxu0
      %v778 = vpop.f32.mrf.mxu0
      %v779 = vadd.f32 %v569, %v778
      %v780 = vpop.f32.mrf.mxu0
      %781 = vmatprep.mubr.bf16.mxu0 %v589
      %782 = vmatmul.mubr.bf16.gmra.mxu0 %v588
      %v783 = vpop.f32.mrf.mxu0
      %v784 = vadd.f32 %v574, %v783
      %v785 = vpop.f32.mrf.mxu0
      %v786 = vpop.f32.mrf.mxu0
      %v787 = vadd.f32 %v577, %v786
      %v788 = vpop.f32.mrf.mxu0
      %789 = vdwg.mxu0
      %790 = vmatprep.subr.bf16.mxu0 0
      %791 = vmatpush1.bf16.msra.mxu0 %v716
      %792 = vmatprep.subr.bf16.mxu0 0
      %793 = vmatpush1.bf16.msra.mxu0 %v715
      %794 = vmatprep.subr.bf16.mxu0 0
      %795 = vmatpush1.bf16.msra.mxu0 %v714
      %796 = vmatprep.subr.bf16.mxu0 0
      %797 = vmatpush1.bf16.msra.mxu0 %v713
      %798 = vmatprep.subr.bf16.mxu0 0
      %799 = vmatpush1.bf16.msra.mxu0 %v712
      %800 = vmatprep.subr.bf16.mxu0 0
      %801 = vmatpush1.bf16.msra.mxu0 %v711
      %802 = vmatprep.subr.bf16.mxu0 0
      %803 = vmatpush1.bf16.msra.mxu0 %v710
      %804 = vmatprep.subr.bf16.mxu0 0
      %805 = vmatpush1.bf16.msra.mxu0 %v709
      %806 = vmatprep.subr.bf16.mxu0 0
      %807 = vmatpush2.bf16.msra.mxu0 0
      %808 = vmatprep.subr.bf16.mxu0 0
      %809 = vmatpush2.bf16.msra.mxu0 0
      %810 = vmatprep.subr.bf16.mxu0 0
      %811 = vmatpush2.bf16.msra.mxu0 0
      %812 = vmatprep.subr.bf16.mxu0 0
      %813 = vmatpush2.bf16.msra.mxu0 0
      %814 = vmatprep.subr.bf16.mxu0 0
      %815 = vmatpush2.bf16.msra.mxu0 0
      %816 = vmatprep.subr.bf16.mxu0 0
      %817 = vmatpush2.bf16.msra.mxu0 0
      %818 = vmatprep.subr.bf16.mxu0 0
      %819 = vmatpush2.bf16.msra.mxu0 0
      %820 = vmatprep.subr.bf16.mxu0 0
      %821 = vmatpush2.bf16.msra.mxu0 0
      %822 = vmatprep.mubr.bf16.mxu0 0
      %823 = vmatmul.mubr.bf16.gmra.mxu0 %v587
      %v824 = vpop.f32.mrf.mxu0
      %v825 = vadd.f32 %v776, %v824
      %v826 = vpop.f32.mrf.mxu0
      %v827 = vpop.f32.mrf.mxu0
      %v828 = vadd.f32 %v779, %v827
      %v829 = vpop.f32.mrf.mxu0
      %830 = vmatprep.mubr.bf16.mxu0 0
      %831 = vmatmul.mubr.bf16.gmra.mxu0 %v590
      %v832 = vpop.f32.mrf.mxu0
      %v833 = vadd.f32 %v784, %v832
      %v834 = vpop.f32.mrf.mxu0
      %v835 = vpop.f32.mrf.mxu0
      %v836 = vadd.f32 %v787, %v835
      %v837 = vpop.f32.mrf.mxu0
      %838 = vdwg.mxu0
      %v839 = vld [vmem:[%s192 + $0x18] sm:$0xff]
      %v840 = vld [vmem:[%s192 + $0x20] sm:$0xf]
      %v841 = vld [vmem:[%s192 + $0x24] sm:$0xff]
      %v842 = vld [vmem:[%s192 + $0x2c] sm:$0xf]
      %v843 = vld [vmem:[%s192 + $0x30] sm:$0xff]
      %v844 = vld [vmem:[%s192 + $0x38] sm:$0xf]
      %v845 = vld [vmem:[%s192 + $0x3c] sm:$0xff]
      %v846 = vld [vmem:[%s192 + $0x44] sm:$0xf]
      %s847 = scalar_lea.vmem %s1, 384
      %v848 = vld [vmem:[%s847] sm:$0xf]
      %v849 = vld [vmem:[%s847 + $0x4] sm:$0xf]
      %v850 = vld [vmem:[%s847 + $0x8] sm:$0xf]
      %v851 = vld [vmem:[%s847 + $0xc] sm:$0xf]
      %v852 = vld [vmem:[%s847 + $0x10] sm:$0xf]
      %v853 = vld [vmem:[%s847 + $0x14] sm:$0xf]
      %v854 = vld [vmem:[%s847 + $0x18] sm:$0xf]
      %v855 = vld [vmem:[%s847 + $0x1c] sm:$0xf]
      %v856 = vld [vmem:[%s847 + $0x20] sm:$0xf]
      %v857 = vld [vmem:[%s847 + $0x24] sm:$0xf]
      %v858 = vld [vmem:[%s847 + $0x28] sm:$0xf]
      %v859 = vld [vmem:[%s847 + $0x2c] sm:$0xf]
      %v860 = vld [vmem:[%s847 + $0x30] sm:$0xf]
      %v861 = vld [vmem:[%s847 + $0x34] sm:$0xf]
      %v862 = vld [vmem:[%s847 + $0x38] sm:$0xf]
      %v863 = vld [vmem:[%s847 + $0x3c] sm:$0xf]
      %v864 = vld [vmem:[%s847 + $0x40] sm:$0xf]
      %v865 = vld [vmem:[%s847 + $0x44] sm:$0xf]
      %v866 = vld [vmem:[%s847 + $0x48] sm:$0xf]
      %v867 = vld [vmem:[%s847 + $0x4c] sm:$0xf]
      %v868 = vld [vmem:[%s847 + $0x50] sm:$0xf]
      %v869 = vld [vmem:[%s847 + $0x54] sm:$0xf]
      %v870 = vld [vmem:[%s847 + $0x58] sm:$0xf]
      %v871 = vld [vmem:[%s847 + $0x5c] sm:$0xf]
      %v872 = vld [vmem:[%s847 + $0x60] sm:$0xf]
      %v873 = vld [vmem:[%s847 + $0x64] sm:$0xf]
      %v874 = vld [vmem:[%s847 + $0x68] sm:$0xf]
      %v875 = vld [vmem:[%s847 + $0x6c] sm:$0xf]
      %v876 = vld [vmem:[%s847 + $0x70] sm:$0xf]
      %v877 = vld [vmem:[%s847 + $0x74] sm:$0xf]
      %v878 = vld [vmem:[%s847 + $0x78] sm:$0xf]
      %v879 = vld [vmem:[%s847 + $0x7c] sm:$0xf]
      %v880 = vld [vmem:[%s847 + $0x80] sm:$0xf]
      %v881 = vld [vmem:[%s847 + $0x84] sm:$0xf]
      %v882 = vld [vmem:[%s847 + $0x88] sm:$0xf]
      %v883 = vld [vmem:[%s847 + $0x8c] sm:$0xf]
      %v884 = vld [vmem:[%s847 + $0x90] sm:$0xf]
      %v885 = vld [vmem:[%s847 + $0x94] sm:$0xf]
      %v886 = vld [vmem:[%s847 + $0x98] sm:$0xf]
      %v887 = vld [vmem:[%s847 + $0x9c] sm:$0xf]
      %v888 = vld [vmem:[%s847 + $0xa0] sm:$0xf]
      %v889 = vld [vmem:[%s847 + $0xa4] sm:$0xf]
      %v890 = vld [vmem:[%s847 + $0xa8] sm:$0xf]
      %v891 = vld [vmem:[%s847 + $0xac] sm:$0xf]
      %v892 = vld [vmem:[%s847 + $0xb0] sm:$0xf]
      %v893 = vld [vmem:[%s847 + $0xb4] sm:$0xf]
      %v894 = vld [vmem:[%s847 + $0xb8] sm:$0xf]
      %v895 = vld [vmem:[%s847 + $0xbc] sm:$0xf]
      %v904 = vunpack.c.l.b16 %v839
      %v905 = vunpack.c.h.b16 %v839
      %v906 = vunpack.c.l.b16 %v840
      %v907 = vunpack.c.l.b16 %v841
      %v908 = vunpack.c.h.b16 %v841
      %v909 = vunpack.c.l.b16 %v842
      %v910 = vunpack.c.l.b16 %v843
      %v911 = vunpack.c.h.b16 %v843
      %v912 = vunpack.c.l.b16 %v844
      %v913 = vunpack.c.l.b16 %v845
      %v914 = vunpack.c.h.b16 %v845
      %v915 = vunpack.c.l.b16 %v846
      %v916 = vpack.c.b16 %v907, %v904
      %v917 = vpack.c.b16 %v908, %v905
      %v918 = vpack.c.b16 %v909, %v906
      %v919 = vpack.c.b16 %v913, %v910
      %v920 = vpack.c.b16 %v914, %v911
      %v921 = vpack.c.b16 %v915, %v912
      %v976 = vunpack.c.l.b16 %v848
      %v977 = vunpack.c.l.b16 %v849
      %v978 = vunpack.c.l.b16 %v850
      %v979 = vunpack.c.l.b16 %v851
      %v980 = vunpack.c.l.b16 %v852
      %v981 = vunpack.c.l.b16 %v853
      %v982 = vunpack.c.l.b16 %v854
      %v983 = vunpack.c.l.b16 %v855
      %v984 = vunpack.c.l.b16 %v856
      %v985 = vunpack.c.l.b16 %v857
      %v986 = vunpack.c.l.b16 %v858
      %v987 = vunpack.c.l.b16 %v859
      %v988 = vunpack.c.l.b16 %v860
      %v989 = vunpack.c.l.b16 %v861
      %v990 = vunpack.c.l.b16 %v862
      %v991 = vunpack.c.l.b16 %v863
      %v992 = vunpack.c.l.b16 %v864
      %v993 = vunpack.c.l.b16 %v865
      %v994 = vunpack.c.l.b16 %v866
      %v995 = vunpack.c.l.b16 %v867
      %v996 = vunpack.c.l.b16 %v868
      %v997 = vunpack.c.l.b16 %v869
      %v998 = vunpack.c.l.b16 %v870
      %v999 = vunpack.c.l.b16 %v871
      %v1000 = vunpack.c.l.b16 %v872
      %v1001 = vunpack.c.l.b16 %v873
      %v1002 = vunpack.c.l.b16 %v874
      %v1003 = vunpack.c.l.b16 %v875
      %v1004 = vunpack.c.l.b16 %v876
      %v1005 = vunpack.c.l.b16 %v877
      %v1006 = vunpack.c.l.b16 %v878
      %v1007 = vunpack.c.l.b16 %v879
      %v1008 = vunpack.c.l.b16 %v880
      %v1009 = vunpack.c.l.b16 %v881
      %v1010 = vunpack.c.l.b16 %v882
      %v1011 = vunpack.c.l.b16 %v883
      %v1012 = vunpack.c.l.b16 %v884
      %v1013 = vunpack.c.l.b16 %v885
      %v1014 = vunpack.c.l.b16 %v886
      %v1015 = vunpack.c.l.b16 %v887
      %v1016 = vunpack.c.l.b16 %v888
      %v1017 = vunpack.c.l.b16 %v889
      %v1018 = vunpack.c.l.b16 %v890
      %v1019 = vunpack.c.l.b16 %v891
      %v1020 = vunpack.c.l.b16 %v892
      %v1021 = vunpack.c.l.b16 %v893
      %v1022 = vunpack.c.l.b16 %v894
      %v1023 = vunpack.c.l.b16 %v895
      %v1024 = vpack.c.b16 %v977, %v976
      %v1025 = vpack.c.b16 %v979, %v978
      %v1026 = vpack.c.b16 %v981, %v980
      %v1027 = vpack.c.b16 %v983, %v982
      %v1028 = vpack.c.b16 %v985, %v984
      %v1029 = vpack.c.b16 %v987, %v986
      %v1030 = vpack.c.b16 %v989, %v988
      %v1031 = vpack.c.b16 %v991, %v990
      %v1032 = vpack.c.b16 %v993, %v992
      %v1033 = vpack.c.b16 %v995, %v994
      %v1034 = vpack.c.b16 %v997, %v996
      %v1035 = vpack.c.b16 %v999, %v998
      %v1036 = vpack.c.b16 %v1001, %v1000
      %v1037 = vpack.c.b16 %v1003, %v1002
      %v1038 = vpack.c.b16 %v1005, %v1004
      %v1039 = vpack.c.b16 %v1007, %v1006
      %v1040 = vpack.c.b16 %v1009, %v1008
      %v1041 = vpack.c.b16 %v1011, %v1010
      %v1042 = vpack.c.b16 %v1013, %v1012
      %v1043 = vpack.c.b16 %v1015, %v1014
      %v1044 = vpack.c.b16 %v1017, %v1016
      %v1045 = vpack.c.b16 %v1019, %v1018
      %v1046 = vpack.c.b16 %v1021, %v1020
      %v1047 = vpack.c.b16 %v1023, %v1022
      %1072 = vmatprep.subr.bf16.mxu0 0
      %1073 = vmatpush1.bf16.msra.mxu0 %v1031
      %1074 = vmatprep.subr.bf16.mxu0 0
      %1075 = vmatpush1.bf16.msra.mxu0 %v1030
      %1076 = vmatprep.subr.bf16.mxu0 0
      %1077 = vmatpush1.bf16.msra.mxu0 %v1029
      %1078 = vmatprep.subr.bf16.mxu0 0
      %1079 = vmatpush1.bf16.msra.mxu0 %v1028
      %1080 = vmatprep.subr.bf16.mxu0 0
      %1081 = vmatpush1.bf16.msra.mxu0 %v1027
      %1082 = vmatprep.subr.bf16.mxu0 0
      %1083 = vmatpush1.bf16.msra.mxu0 %v1026
      %1084 = vmatprep.subr.bf16.mxu0 0
      %1085 = vmatpush1.bf16.msra.mxu0 %v1025
      %1086 = vmatprep.subr.bf16.mxu0 0
      %1087 = vmatpush1.bf16.msra.mxu0 %v1024
      %1088 = vmatprep.subr.bf16.mxu0 0
      %1089 = vmatpush2.bf16.msra.mxu0 %v1039
      %1090 = vmatprep.subr.bf16.mxu0 0
      %1091 = vmatpush2.bf16.msra.mxu0 %v1038
      %1092 = vmatprep.subr.bf16.mxu0 0
      %1093 = vmatpush2.bf16.msra.mxu0 %v1037
      %1094 = vmatprep.subr.bf16.mxu0 0
      %1095 = vmatpush2.bf16.msra.mxu0 %v1036
      %1096 = vmatprep.subr.bf16.mxu0 0
      %1097 = vmatpush2.bf16.msra.mxu0 %v1035
      %1098 = vmatprep.subr.bf16.mxu0 0
      %1099 = vmatpush2.bf16.msra.mxu0 %v1034
      %1100 = vmatprep.subr.bf16.mxu0 0
      %1101 = vmatpush2.bf16.msra.mxu0 %v1033
      %1102 = vmatprep.subr.bf16.mxu0 0
      %1103 = vmatpush2.bf16.msra.mxu0 %v1032
      %1104 = vmatprep.mubr.bf16.mxu0 %v917
      %1105 = vmatmul.mubr.bf16.gmra.mxu0 %v916
      %v1106 = vpop.f32.mrf.mxu0
      %v1107 = vadd.f32 0.0, %v1106
      %v1108 = vpop.f32.mrf.mxu0
      %v1109 = vpop.f32.mrf.mxu0
      %v1110 = vadd.f32 0.0, %v1109
      %v1111 = vpop.f32.mrf.mxu0
      %1112 = vmatprep.mubr.bf16.mxu0 %v920
      %1113 = vmatmul.mubr.bf16.gmra.mxu0 %v919
      %v1114 = vpop.f32.mrf.mxu0
      %v1115 = vadd.f32 0.0, %v1114
      %v1116 = vpop.f32.mrf.mxu0
      %v1117 = vpop.f32.mrf.mxu0
      %v1118 = vadd.f32 0.0, %v1117
      %v1119 = vpop.f32.mrf.mxu0
      %1120 = vdwg.mxu0
      %1121 = vmatprep.subr.bf16.mxu0 0
      %1122 = vmatpush1.bf16.msra.mxu0 %v1047
      %1123 = vmatprep.subr.bf16.mxu0 0
      %1124 = vmatpush1.bf16.msra.mxu0 %v1046
      %1125 = vmatprep.subr.bf16.mxu0 0
      %1126 = vmatpush1.bf16.msra.mxu0 %v1045
      %1127 = vmatprep.subr.bf16.mxu0 0
      %1128 = vmatpush1.bf16.msra.mxu0 %v1044
      %1129 = vmatprep.subr.bf16.mxu0 0
      %1130 = vmatpush1.bf16.msra.mxu0 %v1043
      %1131 = vmatprep.subr.bf16.mxu0 0
      %1132 = vmatpush1.bf16.msra.mxu0 %v1042
      %1133 = vmatprep.subr.bf16.mxu0 0
      %1134 = vmatpush1.bf16.msra.mxu0 %v1041
      %1135 = vmatprep.subr.bf16.mxu0 0
      %1136 = vmatpush1.bf16.msra.mxu0 %v1040
      %1137 = vmatprep.subr.bf16.mxu0 0
      %1138 = vmatpush2.bf16.msra.mxu0 0
      %1139 = vmatprep.subr.bf16.mxu0 0
      %1140 = vmatpush2.bf16.msra.mxu0 0
      %1141 = vmatprep.subr.bf16.mxu0 0
      %1142 = vmatpush2.bf16.msra.mxu0 0
      %1143 = vmatprep.subr.bf16.mxu0 0
      %1144 = vmatpush2.bf16.msra.mxu0 0
      %1145 = vmatprep.subr.bf16.mxu0 0
      %1146 = vmatpush2.bf16.msra.mxu0 0
      %1147 = vmatprep.subr.bf16.mxu0 0
      %1148 = vmatpush2.bf16.msra.mxu0 0
      %1149 = vmatprep.subr.bf16.mxu0 0
      %1150 = vmatpush2.bf16.msra.mxu0 0
      %1151 = vmatprep.subr.bf16.mxu0 0
      %1152 = vmatpush2.bf16.msra.mxu0 0
      %1153 = vmatprep.mubr.bf16.mxu0 0
      %1154 = vmatmul.mubr.bf16.gmra.mxu0 %v918
      %v1155 = vpop.f32.mrf.mxu0
      %v1156 = vadd.f32 %v1107, %v1155
      %v1157 = vpop.f32.mrf.mxu0
      %v1158 = vpop.f32.mrf.mxu0
      %v1159 = vadd.f32 %v1110, %v1158
      %v1160 = vpop.f32.mrf.mxu0
      %1161 = vmatprep.mubr.bf16.mxu0 0
      %1162 = vmatmul.mubr.bf16.gmra.mxu0 %v921
      %v1163 = vpop.f32.mrf.mxu0
      %v1164 = vadd.f32 %v1115, %v1163
      %v1165 = vpop.f32.mrf.mxu0
      %v1166 = vpop.f32.mrf.mxu0
      %v1167 = vadd.f32 %v1118, %v1166
      %v1168 = vpop.f32.mrf.mxu0
      %1169 = vdwg.mxu0
      %v1170 = vadd.f32 %v825, %v1156
      %v1171 = vadd.f32 %v828, %v1159
      %v1172 = vadd.f32 %v833, %v1164
      %v1173 = vadd.f32 %v836, %v1167
      %v1174 = vld [vmem:[%s2] sm:$0x1]
      %v1176 = vlaneseq
      %v1177 = vshrl.u32 %v1176, 7
      %v1178 = vsub.s32 0, %v1177
      %v1179 = vrot.slane %v1174, %v1178
      %v1181 = vmul.f32 %v1170, %v1179
      %v1182 = vmul.f32 %v1171, %v1179
      %v1183 = vmul.f32 %v1172, %v1179
      %v1184 = vmul.f32 %v1173, %v1179
      %v1185 = vld [vmem:[%s3] sm:$0x1]
      %v1187 = vlaneseq
      %v1188 = vshrl.u32 %v1187, 7
      %v1189 = vsub.s32 0, %v1188
      %v1190 = vrot.slane %v1185, %v1189
      %v1192 = vadd.f32 %v1181, %v1190
      %v1193 = vadd.f32 %v1182, %v1190
      %v1194 = vadd.f32 %v1183, %v1190
      %v1195 = vadd.f32 %v1184, %v1190
      %v1196 = vmax.f32 %v1192, 0.0
      %v1197 = vmax.f32 %v1193, 0.0
      %v1198 = vmax.f32 %v1194, 0.0
      %v1199 = vmax.f32 %v1195, 0.0
      %v1200 = vpack.c.bf16 %v1197, %v1196
      %v1201 = vpack.c.bf16 %v1199, %v1198
      %v1204 = vunpack.c.l.b16 %v1200
      %v1205 = vunpack.c.h.b16 %v1200
      %v1206 = vunpack.c.l.b16 %v1201
      %v1207 = vunpack.c.h.b16 %v1201
      %v1208 = vpack.c.b16 %v1204, %v1204
      %v1209 = vpack.c.b16 %v1205, %v1205
      %v1210 = vpack.c.b16 %v1206, %v1206
      %v1211 = vpack.c.b16 %v1207, %v1207
      %1216 = vst [vmem:[%s197] sm:$0xf] %v1208
      %1217 = vst [vmem:[%s197 + $0x4] sm:$0xf] %v1209
      %1218 = vst [vmem:[%s197 + $0x8] sm:$0xf] %v1210
      %1219 = vst [vmem:[%s197 + $0xc] sm:$0xf] %v1211
      %p1220 = scmp.lt.s32.totalorder %s15, 1
      %s1221 = scalar_select %p1220, %s15, 1
      %s1222 = smul.addr %s1221, 4
      %s1223 = smul.addr %s1222, 4
      %s1224 = scalar_lea.vmem %s4, %s1223
      // Predicated region
      $region37: #{drunet_var_forward.18} parent=35 // pred_check
        %p1225 = pneg %p122
      $region38: #{drunet_var_forward.18} parent=35 // pred_check_branch
        %1227 = sbr.rel (%p1225) target = $region40
      $region39: #{drunet_var_forward.18} parent=35 // pred_region
        _
      $region40: #{drunet_var_forward.18} parent=35 // pred_fallthru
        _
    $region36: #{drunet_var_forward.18} parent=5 // pred_fallthru
      _
    %p1228 = scmp.le.s32.totalorder 2, %s10
    // Predicated region
    $region41: #{drunet_var_forward.18} parent=5 // pred_check
      %p1229 = pneg %p1228
    $region42: #{drunet_var_forward.18} parent=5 // pred_check_branch
      %1231 = sbr.rel (%p1229) target = $region44
    $region43: #{drunet_var_forward.18} parent=5 // pred_region
      %s1232 = ssub.s32 %s10, 2
      // Predicated region
      $region45: #{drunet_var_forward.18} parent=43 // pred_check
        %p1233 = pneg %p128
      $region46: #{drunet_var_forward.18} parent=43 // pred_check_branch
        %1235 = sbr.rel (%p1233) target = $region48
      $region47: #{drunet_var_forward.18} parent=43 // pred_region
        %p1236 = scmp.lt.s32.totalorder %s16, 1
        %s1237 = scalar_select %p1236, %s16, 1
        %s1238 = smul.addr %s1237, 4
        %s1239 = smul.addr %s1238, 4
        %s1240 = scalar_lea.vmem %s4, %s1239
      $region48: #{drunet_var_forward.18} parent=43 // pred_fallthru
        _
    $region44: #{drunet_var_forward.18} parent=5 // pred_fallthru
      _
  $region6: #{drunet_var_forward.18} parent=0 // loop_footer
    %s14 = sadd.s32 1, %s10
  $region7: #{drunet_var_forward.18} parent=0 // loop_footer_branch
    %9 = sbr.rel target = $region3
  $region8: #{drunet_var_forward.18} parent=0 // loop_exit
    _

// kernel: drunet_var_forward.20
$region0: #{drunet_var_forward.20}
  #allocation0 [shape = 'u32[]', space=smem, size = 0x4, offset = 0x4, fixed_abs, tag = 'smem constant byte address 0x4 - core index']
  #allocation1 [shape = 'u32[144,128]{1,0:T(1,128)}', space=vmem, size = 0x12000, scoped, tag = 'internal scratch']
  %s0 = inlined_call_operand.vmem [shape: bf16[2,48,384], index: 0, kind: input, shape index: {}]
  %s1 = inlined_call_operand.vmem [shape: bf16[3,384,64], index: 1, kind: input, shape index: {}]
  %s2 = inlined_call_operand.vmem [shape: f32[1,64], index: 2, kind: input, shape index: {}]
  %s3 = inlined_call_operand.vmem [shape: f32[1,64], index: 3, kind: input, shape index: {}]
  %s4 = inlined_call_operand.vmem [shape: bf16[2,32,64], index: 4, kind: output, shape index: {}]
  %s5 = sld [smem:[#allocation0]]
  $region49: #{drunet_var_forward.20} parent=0
    _
  %s7 = ssub.s32 1, %s5
  %s8 = scalar_select 0, %s7, %s5
  loop: start=0, step=1, limit=4
  $region2: #{drunet_var_forward.20} parent=0 // loop_pre_header
    _
  $region3: #{drunet_var_forward.20} parent=0 // loop_header
    %s10 = sphi 0, %s14
    %p11 = scmp.ge.s32.totalorder %s10, 4
    %s20 = sphi 0, %s22
    %s23 = sphi 0, %s20
    %s24 = sphi 0, %s23
    %s40 = sphi 0, %s24
    %s44 = sphi 0, %s44
    %s46 = sphi 0, %s44
    %s47 = sphi 0, %s46
    %s61 = sphi 0, %s47
    %s65 = sphi 0, %s65
    %s67 = sphi 0, %s65
    %s68 = sphi 0, %s67
    %s82 = sphi 0, %s68
    %s86 = sphi 0, %s86
    %s88 = sphi 0, %s86
    %s89 = sphi 0, %s88
    %s103 = sphi 0, %s89
    %s109 = sphi 0, %s111
    %s112 = sphi 0, %s109
    %s113 = sphi 0, %s112
    %s129 = sphi 0, %s113
  $region4: #{drunet_var_forward.20} parent=0 // loop_header_branch
    %13 = sbr.rel (%p11) target = $region8
  $region5: #{drunet_var_forward.20} parent=0 // loop_body
    %s15 = ssub.s32 %s10, 1
    %s16 = ssub.s32 %s10, 2
    %s17 = sadd.s32 %s10, 1
    %s18 = ssub.s32 %s10, %s17
    %p19 = scmp.eq.s32.totalorder %s18, 0
    %s21 = sadd.s32 %s20, 1
    %s22 = scalar_select %p19, %s20, %s21
    %p25 = pneg %p19
    %p26 = scmp.eq.s32.totalorder %s10, 1
    %p27 = por %p25, %p26
    %p28 = scmp.ne.s32.totalorder %s20, %s23
    %p29 = scmp.eq.s32.totalorder %s10, 0
    %p30 = por %p28, %p29
    %p31 = scmp.ne.s32.totalorder %s20, %s23
    %p32 = scmp.eq.s32.totalorder %s15, 1
    %p33 = por %p31, %p32
    %p34 = scmp.ne.s32.totalorder %s23, %s24
    %p35 = scmp.eq.s32.totalorder %s15, 0
    %p36 = por %p34, %p35
    %p37 = scmp.ne.s32.totalorder %s23, %s24
    %p38 = scmp.eq.s32.totalorder %s16, 1
    %p39 = por %p37, %p38
    %p41 = scmp.ne.s32.totalorder %s24, %s40
    %p42 = scmp.eq.s32.totalorder %s16, 0
    %p43 = por %p41, %p42
    %s45 = sadd.s32 %s44, 1
    %p48 = scmp.eq.s32.totalorder %s10, 1
    %p49 = scmp.ne.s32.totalorder %s44, %s46
    %p50 = scmp.eq.s32.totalorder %s10, 0
    %p51 = por %p49, %p50
    %p52 = scmp.ne.s32.totalorder %s44, %s46
    %p53 = scmp.eq.s32.totalorder %s15, 1
    %p54 = por %p52, %p53
    %p55 = scmp.ne.s32.totalorder %s46, %s47
    %p56 = scmp.eq.s32.totalorder %s15, 0
    %p57 = por %p55, %p56
    %p58 = scmp.ne.s32.totalorder %s46, %s47
    %p59 = scmp.eq.s32.totalorder %s16, 1
    %p60 = por %p58, %p59
    %p62 = scmp.ne.s32.totalorder %s47, %s61
    %p63 = scmp.eq.s32.totalorder %s16, 0
    %p64 = por %p62, %p63
    %s66 = sadd.s32 %s65, 1
    %p69 = scmp.eq.s32.totalorder %s10, 1
    %p70 = scmp.ne.s32.totalorder %s65, %s67
    %p71 = scmp.eq.s32.totalorder %s10, 0
    %p72 = por %p70, %p71
    %p73 = scmp.ne.s32.totalorder %s65, %s67
    %p74 = scmp.eq.s32.totalorder %s15, 1
    %p75 = por %p73, %p74
    %p76 = scmp.ne.s32.totalorder %s67, %s68
    %p77 = scmp.eq.s32.totalorder %s15, 0
    %p78 = por %p76, %p77
    %p79 = scmp.ne.s32.totalorder %s67, %s68
    %p80 = scmp.eq.s32.totalorder %s16, 1
    %p81 = por %p79, %p80
    %p83 = scmp.ne.s32.totalorder %s68, %s82
    %p84 = scmp.eq.s32.totalorder %s16, 0
    %p85 = por %p83, %p84
    %s87 = sadd.s32 %s86, 1
    %p90 = scmp.eq.s32.totalorder %s10, 1
    %p91 = scmp.ne.s32.totalorder %s86, %s88
    %p92 = scmp.eq.s32.totalorder %s10, 0
    %p93 = por %p91, %p92
    %p94 = scmp.ne.s32.totalorder %s86, %s88
    %p95 = scmp.eq.s32.totalorder %s15, 1
    %p96 = por %p94, %p95
    %p97 = scmp.ne.s32.totalorder %s88, %s89
    %p98 = scmp.eq.s32.totalorder %s15, 0
    %p99 = por %p97, %p98
    %p100 = scmp.ne.s32.totalorder %s88, %s89
    %p101 = scmp.eq.s32.totalorder %s16, 1
    %p102 = por %p100, %p101
    %p104 = scmp.ne.s32.totalorder %s89, %s103
    %p105 = scmp.eq.s32.totalorder %s16, 0
    %p106 = por %p104, %p105
    %s107 = ssub.s32 %s10, %s17
    %p108 = scmp.eq.s32.totalorder %s107, 0
    %s110 = sadd.s32 %s109, 1
    %s111 = scalar_select %p108, %s109, %s110
    %p114 = pneg %p108
    %p115 = scmp.eq.s32.totalorder %s10, 1
    %p116 = por %p114, %p115
    %p117 = scmp.ne.s32.totalorder %s109, %s112
    %p118 = scmp.eq.s32.totalorder %s10, 0
    %p119 = por %p117, %p118
    %p120 = scmp.ne.s32.totalorder %s109, %s112
    %p121 = scmp.eq.s32.totalorder %s15, 1
    %p122 = por %p120, %p121
    %p123 = scmp.ne.s32.totalorder %s112, %s113
    %p124 = scmp.eq.s32.totalorder %s15, 0
    %p125 = por %p123, %p124
    %p126 = scmp.ne.s32.totalorder %s112, %s113
    %p127 = scmp.eq.s32.totalorder %s16, 1
    %p128 = por %p126, %p127
    %p130 = scmp.ne.s32.totalorder %s113, %s129
    %p131 = scmp.eq.s32.totalorder %s16, 0
    %p132 = por %p130, %p131
    %p133 = scmp.le.s32.totalorder 1, %s10
    %p134 = scmp.lt.s32.totalorder %s10, 3
    %p135 = pnand %p133, %p134
    %p136 = pneg %p135
    // Predicated region
    $region9: #{drunet_var_forward.20} parent=5 // pred_check
      _
    $region10: #{drunet_var_forward.20} parent=5 // pred_check_branch
      %138 = sbr.rel (%p135) target = $region12
    $region11: #{drunet_var_forward.20} parent=5 // pred_region
      %s139 = ssub.s32 %s10, 1
      // Predicated region
      $region13: #{drunet_var_forward.20} parent=11 // pred_check
        %p140 = pneg %p57
      $region14: #{drunet_var_forward.20} parent=11 // pred_check_branch
        %142 = sbr.rel (%p140) target = $region16
      $region15: #{drunet_var_forward.20} parent=11 // pred_region
        _
      $region16: #{drunet_var_forward.20} parent=11 // pred_fallthru
        _
      // Predicated region
      $region17: #{drunet_var_forward.20} parent=11 // pred_check
        %p143 = pneg %p78
      $region18: #{drunet_var_forward.20} parent=11 // pred_check_branch
        %145 = sbr.rel (%p143) target = $region20
      $region19: #{drunet_var_forward.20} parent=11 // pred_region
        _
      $region20: #{drunet_var_forward.20} parent=11 // pred_fallthru
        _
      // Predicated region
      $region21: #{drunet_var_forward.20} parent=11 // pred_check
        %p146 = pneg %p99
      $region22: #{drunet_var_forward.20} parent=11 // pred_check_branch
        %148 = sbr.rel (%p146) target = $region24
      $region23: #{drunet_var_forward.20} parent=11 // pred_region
        _
      $region24: #{drunet_var_forward.20} parent=11 // pred_fallthru
        _
    $region12: #{drunet_var_forward.20} parent=5 // pred_fallthru
      _
    %p149 = scmp.lt.s32.totalorder %s10, 2
    // Predicated region
    $region25: #{drunet_var_forward.20} parent=5 // pred_check
      %p150 = pneg %p149
    $region26: #{drunet_var_forward.20} parent=5 // pred_check_branch
      %152 = sbr.rel (%p150) target = $region28
    $region27: #{drunet_var_forward.20} parent=5 // pred_region
      // Predicated region
      $region29: #{drunet_var_forward.20} parent=27 // pred_check
        %p153 = pneg %p30
      $region30: #{drunet_var_forward.20} parent=27 // pred_check_branch
        %155 = sbr.rel (%p153) target = $region32
      $region31: #{drunet_var_forward.20} parent=27 // pred_region
        %p156 = scmp.lt.s32.totalorder %s10, 1
        %s157 = scalar_select %p156, %s10, 1
        %s158 = smul.addr %s157, 18
        %s159 = smul.addr %s158, 4
        %s160 = scalar_lea.vmem %s0, %s159
      $region32: #{drunet_var_forward.20} parent=27 // pred_fallthru
        _
    $region28: #{drunet_var_forward.20} parent=5 // pred_fallthru
      _
    %p161 = scmp.le.s32.totalorder 1, %s10
    %p162 = scmp.lt.s32.totalorder %s10, 3
    %p163 = pnand %p161, %p162
    %p164 = pneg %p163
    // Predicated region
    $region33: #{drunet_var_forward.20} parent=5 // pred_check
      _
    $region34: #{drunet_var_forward.20} parent=5 // pred_check_branch
      %166 = sbr.rel (%p163) target = $region36
    $region35: #{drunet_var_forward.20} parent=5 // pred_region
      %s167 = ssub.s32 %s10, 1
      %p168 = scmp.lt.s32.totalorder %s15, 1
      %s169 = scalar_select %p168, %s15, 1
      %s170 = smul.addr %s169, 18
      %s171 = smul.addr %s170, 4
      %s172 = scalar_lea.vmem %s0, %s171
      %p173 = pneg %p36
      %p174 = pneg %p33
      %p175 = pneg %p57
      %p176 = pneg %p54
      %p177 = pneg %p78
      %p178 = pneg %p75
      %p179 = pneg %p99
      %p180 = pneg %p96
      %p181 = pneg %p125
      %p182 = pneg %p122
      %p183 = scmp.lt.s32.totalorder %s15, 1
      %s184 = scalar_select %p183, %s15, 1
      %s185 = smul.addr %s184, 4
      %s186 = smul.addr %s185, 4
      %s187 = scalar_lea.vmem %s4, %s186
      %p188 = scmp.lt.s32.totalorder %s15, 1
      %s189 = scalar_select %p188, %s15, 1
      %s190 = smul.addr %s189, 18
      %s191 = smul.addr %s190, 4
      %s192 = scalar_lea.vmem %s0, %s191
      %p193 = scmp.lt.s32.totalorder %s15, 1
      %s194 = scalar_select %p193, %s15, 1
      %s195 = smul.addr %s194, 4
      %s196 = smul.addr %s195, 4
      %s197 = scalar_lea.vmem %s4, %s196
      %v199 = vld [vmem:[%s192] sm:$0xff]
      %v200 = vld [vmem:[%s192 + $0x8] sm:$0xf]
      %v201 = vld [vmem:[%s192 + $0xc] sm:$0xff]
      %v202 = vld [vmem:[%s192 + $0x14] sm:$0xf]
      %v203 = vld [vmem:[%s192 + $0x18] sm:$0xff]
      %v204 = vld [vmem:[%s192 + $0x20] sm:$0xf]
      %v205 = vld [vmem:[%s192 + $0x24] sm:$0xff]
      %v206 = vld [vmem:[%s192 + $0x2c] sm:$0xf]
      %v207 = vld [vmem:[%s1] sm:$0xf]
      %v208 = vld [vmem:[%s1 + $0x4] sm:$0xf]
      %v209 = vld [vmem:[%s1 + $0x8] sm:$0xf]
      %v210 = vld [vmem:[%s1 + $0xc] sm:$0xf]
      %v211 = vld [vmem:[%s1 + $0x10] sm:$0xf]
      %v212 = vld [vmem:[%s1 + $0x14] sm:$0xf]
      %v213 = vld [vmem:[%s1 + $0x18] sm:$0xf]
      %v214 = vld [vmem:[%s1 + $0x1c] sm:$0xf]
      %v215 = vld [vmem:[%s1 + $0x20] sm:$0xf]
      %v216 = vld [vmem:[%s1 + $0x24] sm:$0xf]
      %v217 = vld [vmem:[%s1 + $0x28] sm:$0xf]
      %v218 = vld [vmem:[%s1 + $0x2c] sm:$0xf]
      %v219 = vld [vmem:[%s1 + $0x30] sm:$0xf]
      %v220 = vld [vmem:[%s1 + $0x34] sm:$0xf]
      %v221 = vld [vmem:[%s1 + $0x38] sm:$0xf]
      %v222 = vld [vmem:[%s1 + $0x3c] sm:$0xf]
      %v223 = vld [vmem:[%s1 + $0x40] sm:$0xf]
      %v224 = vld [vmem:[%s1 + $0x44] sm:$0xf]
      %v225 = vld [vmem:[%s1 + $0x48] sm:$0xf]
      %v226 = vld [vmem:[%s1 + $0x4c] sm:$0xf]
      %v227 = vld [vmem:[%s1 + $0x50] sm:$0xf]
      %v228 = vld [vmem:[%s1 + $0x54] sm:$0xf]
      %v229 = vld [vmem:[%s1 + $0x58] sm:$0xf]
      %v230 = vld [vmem:[%s1 + $0x5c] sm:$0xf]
      %v231 = vld [vmem:[%s1 + $0x60] sm:$0xf]
      %v232 = vld [vmem:[%s1 + $0x64] sm:$0xf]
      %v233 = vld [vmem:[%s1 + $0x68] sm:$0xf]
      %v234 = vld [vmem:[%s1 + $0x6c] sm:$0xf]
      %v235 = vld [vmem:[%s1 + $0x70] sm:$0xf]
      %v236 = vld [vmem:[%s1 + $0x74] sm:$0xf]
      %v237 = vld [vmem:[%s1 + $0x78] sm:$0xf]
      %v238 = vld [vmem:[%s1 + $0x7c] sm:$0xf]
      %v239 = vld [vmem:[%s1 + $0x80] sm:$0xf]
      %v240 = vld [vmem:[%s1 + $0x84] sm:$0xf]
      %v241 = vld [vmem:[%s1 + $0x88] sm:$0xf]
      %v242 = vld [vmem:[%s1 + $0x8c] sm:$0xf]
      %v243 = vld [vmem:[%s1 + $0x90] sm:$0xf]
      %v244 = vld [vmem:[%s1 + $0x94] sm:$0xf]
      %v245 = vld [vmem:[%s1 + $0x98] sm:$0xf]
      %v246 = vld [vmem:[%s1 + $0x9c] sm:$0xf]
      %v247 = vld [vmem:[%s1 + $0xa0] sm:$0xf]
      %v248 = vld [vmem:[%s1 + $0xa4] sm:$0xf]
      %v249 = vld [vmem:[%s1 + $0xa8] sm:$0xf]
      %v250 = vld [vmem:[%s1 + $0xac] sm:$0xf]
      %v251 = vld [vmem:[%s1 + $0xb0] sm:$0xf]
      %v252 = vld [vmem:[%s1 + $0xb4] sm:$0xf]
      %v253 = vld [vmem:[%s1 + $0xb8] sm:$0xf]
      %v254 = vld [vmem:[%s1 + $0xbc] sm:$0xf]
      %v255 = vld [vmem:[%s192 + $0x30] sm:$0xff]
      %v256 = vld [vmem:[%s192 + $0x38] sm:$0xf]
      %s257 = scalar_lea.vmem %s1, 192
      %v258 = vld [vmem:[%s257] sm:$0xf]
      %v259 = vld [vmem:[%s257 + $0x4] sm:$0xf]
      %v260 = vld [vmem:[%s257 + $0x8] sm:$0xf]
      %v261 = vld [vmem:[%s257 + $0xc] sm:$0xf]
      %v262 = vld [vmem:[%s257 + $0x10] sm:$0xf]
      %v263 = vld [vmem:[%s257 + $0x14] sm:$0xf]
      %v264 = vld [vmem:[%s257 + $0x18] sm:$0xf]
      %v265 = vld [vmem:[%s257 + $0x1c] sm:$0xf]
      %v266 = vld [vmem:[%s257 + $0x20] sm:$0xf]
      %v267 = vld [vmem:[%s257 + $0x24] sm:$0xf]
      %v268 = vld [vmem:[%s257 + $0x28] sm:$0xf]
      %v269 = vld [vmem:[%s257 + $0x2c] sm:$0xf]
      %v270 = vld [vmem:[%s257 + $0x30] sm:$0xf]
      %v271 = vld [vmem:[%s257 + $0x34] sm:$0xf]
      %v272 = vld [vmem:[%s257 + $0x38] sm:$0xf]
      %v273 = vld [vmem:[%s257 + $0x3c] sm:$0xf]
      %v274 = vld [vmem:[%s257 + $0x40] sm:$0xf]
      %v275 = vld [vmem:[%s257 + $0x44] sm:$0xf]
      %v276 = vld [vmem:[%s257 + $0x48] sm:$0xf]
      %v277 = vld [vmem:[%s257 + $0x4c] sm:$0xf]
      %v278 = vld [vmem:[%s257 + $0x50] sm:$0xf]
      %v279 = vld [vmem:[%s257 + $0x54] sm:$0xf]
      %v280 = vld [vmem:[%s257 + $0x58] sm:$0xf]
      %v281 = vld [vmem:[%s257 + $0x5c] sm:$0xf]
      %v282 = vld [vmem:[%s257 + $0x60] sm:$0xf]
      %v283 = vld [vmem:[%s257 + $0x64] sm:$0xf]
      %v284 = vld [vmem:[%s257 + $0x68] sm:$0xf]
      %v285 = vld [vmem:[%s257 + $0x6c] sm:$0xf]
      %v286 = vld [vmem:[%s257 + $0x70] sm:$0xf]
      %v287 = vld [vmem:[%s257 + $0x74] sm:$0xf]
      %v288 = vld [vmem:[%s257 + $0x78] sm:$0xf]
      %v289 = vld [vmem:[%s257 + $0x7c] sm:$0xf]
      %v290 = vld [vmem:[%s257 + $0x80] sm:$0xf]
      %v291 = vld [vmem:[%s257 + $0x84] sm:$0xf]
      %v292 = vld [vmem:[%s257 + $0x88] sm:$0xf]
      %v293 = vld [vmem:[%s257 + $0x8c] sm:$0xf]
      %v294 = vld [vmem:[%s257 + $0x90] sm:$0xf]
      %v295 = vld [vmem:[%s257 + $0x94] sm:$0xf]
      %v296 = vld [vmem:[%s257 + $0x98] sm:$0xf]
      %v297 = vld [vmem:[%s257 + $0x9c] sm:$0xf]
      %v298 = vld [vmem:[%s257 + $0xa0] sm:$0xf]
      %v299 = vld [vmem:[%s257 + $0xa4] sm:$0xf]
      %v300 = vld [vmem:[%s257 + $0xa8] sm:$0xf]
      %v301 = vld [vmem:[%s257 + $0xac] sm:$0xf]
      %v302 = vld [vmem:[%s257 + $0xb0] sm:$0xf]
      %v303 = vld [vmem:[%s257 + $0xb4] sm:$0xf]
      %v304 = vld [vmem:[%s257 + $0xb8] sm:$0xf]
      %v305 = vld [vmem:[%s257 + $0xbc] sm:$0xf]
      %v314 = vunpack.c.l.b16 %v201
      %v315 = vunpack.c.h.b16 %v201
      %v316 = vunpack.c.l.b16 %v202
      %v317 = vunpack.c.l.b16 %v203
      %v318 = vunpack.c.h.b16 %v203
      %v319 = vunpack.c.l.b16 %v204
      %v320 = vunpack.c.l.b16 %v205
      %v321 = vunpack.c.h.b16 %v205
      %v322 = vunpack.c.l.b16 %v206
      %v323 = vunpack.c.l.b16 %v255
      %v324 = vunpack.c.h.b16 %v255
      %v325 = vunpack.c.l.b16 %v256
      %v326 = vpack.c.b16 %v317, %v314
      %v327 = vpack.c.b16 %v318, %v315
      %v328 = vpack.c.b16 %v319, %v316
      %v329 = vpack.c.b16 %v323, %v320
      %v330 = vpack.c.b16 %v324, %v321
      %v331 = vpack.c.b16 %v325, %v322
      %v386 = vunpack.c.l.b16 %v258
      %v387 = vunpack.c.l.b16 %v259
      %v388 = vunpack.c.l.b16 %v260
      %v389 = vunpack.c.l.b16 %v261
      %v390 = vunpack.c.l.b16 %v262
      %v391 = vunpack.c.l.b16 %v263
      %v392 = vunpack.c.l.b16 %v264
      %v393 = vunpack.c.l.b16 %v265
      %v394 = vunpack.c.l.b16 %v266
      %v395 = vunpack.c.l.b16 %v267
      %v396 = vunpack.c.l.b16 %v268
      %v397 = vunpack.c.l.b16 %v269
      %v398 = vunpack.c.l.b16 %v270
      %v399 = vunpack.c.l.b16 %v271
      %v400 = vunpack.c.l.b16 %v272
      %v401 = vunpack.c.l.b16 %v273
      %v402 = vunpack.c.l.b16 %v274
      %v403 = vunpack.c.l.b16 %v275
      %v404 = vunpack.c.l.b16 %v276
      %v405 = vunpack.c.l.b16 %v277
      %v406 = vunpack.c.l.b16 %v278
      %v407 = vunpack.c.l.b16 %v279
      %v408 = vunpack.c.l.b16 %v280
      %v409 = vunpack.c.l.b16 %v281
      %v410 = vunpack.c.l.b16 %v282
      %v411 = vunpack.c.l.b16 %v283
      %v412 = vunpack.c.l.b16 %v284
      %v413 = vunpack.c.l.b16 %v285
      %v414 = vunpack.c.l.b16 %v286
      %v415 = vunpack.c.l.b16 %v287
      %v416 = vunpack.c.l.b16 %v288
      %v417 = vunpack.c.l.b16 %v289
      %v418 = vunpack.c.l.b16 %v290
      %v419 = vunpack.c.l.b16 %v291
      %v420 = vunpack.c.l.b16 %v292
      %v421 = vunpack.c.l.b16 %v293
      %v422 = vunpack.c.l.b16 %v294
      %v423 = vunpack.c.l.b16 %v295
      %v424 = vunpack.c.l.b16 %v296
      %v425 = vunpack.c.l.b16 %v297
      %v426 = vunpack.c.l.b16 %v298
      %v427 = vunpack.c.l.b16 %v299
      %v428 = vunpack.c.l.b16 %v300
      %v429 = vunpack.c.l.b16 %v301
      %v430 = vunpack.c.l.b16 %v302
      %v431 = vunpack.c.l.b16 %v303
      %v432 = vunpack.c.l.b16 %v304
      %v433 = vunpack.c.l.b16 %v305
      %v434 = vpack.c.b16 %v387, %v386
      %v435 = vpack.c.b16 %v389, %v388
      %v436 = vpack.c.b16 %v391, %v390
      %v437 = vpack.c.b16 %v393, %v392
      %v438 = vpack.c.b16 %v395, %v394
      %v439 = vpack.c.b16 %v397, %v396
      %v440 = vpack.c.b16 %v399, %v398
      %v441 = vpack.c.b16 %v401, %v400
      %v442 = vpack.c.b16 %v403, %v402
      %v443 = vpack.c.b16 %v405, %v404
      %v444 = vpack.c.b16 %v407, %v406
      %v445 = vpack.c.b16 %v409, %v408
      %v446 = vpack.c.b16 %v411, %v410
      %v447 = vpack.c.b16 %v413, %v412
      %v448 = vpack.c.b16 %v415, %v414
      %v449 = vpack.c.b16 %v417, %v416
      %v450 = vpack.c.b16 %v419, %v418
      %v451 = vpack.c.b16 %v421, %v420
      %v452 = vpack.c.b16 %v423, %v422
      %v453 = vpack.c.b16 %v425, %v424
      %v454 = vpack.c.b16 %v427, %v426
      %v455 = vpack.c.b16 %v429, %v428
      %v456 = vpack.c.b16 %v431, %v430
      %v457 = vpack.c.b16 %v433, %v432
      %482 = vmatprep.subr.bf16.mxu0 0
      %483 = vmatpush1.bf16.msra.mxu0 %v441
      %484 = vmatprep.subr.bf16.mxu0 0
      %485 = vmatpush1.bf16.msra.mxu0 %v440
      %486 = vmatprep.subr.bf16.mxu0 0
      %487 = vmatpush1.bf16.msra.mxu0 %v439
      %488 = vmatprep.subr.bf16.mxu0 0
      %489 = vmatpush1.bf16.msra.mxu0 %v438
      %490 = vmatprep.subr.bf16.mxu0 0
      %491 = vmatpush1.bf16.msra.mxu0 %v437
      %492 = vmatprep.subr.bf16.mxu0 0
      %493 = vmatpush1.bf16.msra.mxu0 %v436
      %494 = vmatprep.subr.bf16.mxu0 0
      %495 = vmatpush1.bf16.msra.mxu0 %v435
      %496 = vmatprep.subr.bf16.mxu0 0
      %497 = vmatpush1.bf16.msra.mxu0 %v434
      %498 = vmatprep.subr.bf16.mxu0 0
      %499 = vmatpush2.bf16.msra.mxu0 %v449
      %500 = vmatprep.subr.bf16.mxu0 0
      %501 = vmatpush2.bf16.msra.mxu0 %v448
      %502 = vmatprep.subr.bf16.mxu0 0
      %503 = vmatpush2.bf16.msra.mxu0 %v447
      %504 = vmatprep.subr.bf16.mxu0 0
      %505 = vmatpush2.bf16.msra.mxu0 %v446
      %506 = vmatprep.subr.bf16.mxu0 0
      %507 = vmatpush2.bf16.msra.mxu0 %v445
      %508 = vmatprep.subr.bf16.mxu0 0
      %509 = vmatpush2.bf16.msra.mxu0 %v444
      %510 = vmatprep.subr.bf16.mxu0 0
      %511 = vmatpush2.bf16.msra.mxu0 %v443
      %512 = vmatprep.subr.bf16.mxu0 0
      %513 = vmatpush2.bf16.msra.mxu0 %v442
      %514 = vmatprep.mubr.bf16.mxu0 %v327
      %515 = vmatmul.mubr.bf16.gmra.mxu0 %v326
      %v516 = vpop.f32.mrf.mxu0
      %v517 = vadd.f32 0.0, %v516
      %v518 = vpop.f32.mrf.mxu0
      %v519 = vpop.f32.mrf.mxu0
      %v520 = vadd.f32 0.0, %v519
      %v521 = vpop.f32.mrf.mxu0
      %522 = vmatprep.mubr.bf16.mxu0 %v330
      %523 = vmatmul.mubr.bf16.gmra.mxu0 %v329
      %v524 = vpop.f32.mrf.mxu0
      %v525 = vadd.f32 0.0, %v524
      %v526 = vpop.f32.mrf.mxu0
      %v527 = vpop.f32.mrf.mxu0
      %v528 = vadd.f32 0.0, %v527
      %v529 = vpop.f32.mrf.mxu0
      %530 = vdwg.mxu0
      %531 = vmatprep.subr.bf16.mxu0 0
      %532 = vmatpush1.bf16.msra.mxu0 %v457
      %533 = vmatprep.subr.bf16.mxu0 0
      %534 = vmatpush1.bf16.msra.mxu0 %v456
      %535 = vmatprep.subr.bf16.mxu0 0
      %536 = vmatpush1.bf16.msra.mxu0 %v455
      %537 = vmatprep.subr.bf16.mxu0 0
      %538 = vmatpush1.bf16.msra.mxu0 %v454
      %539 = vmatprep.subr.bf16.mxu0 0
      %540 = vmatpush1.bf16.msra.mxu0 %v453
      %541 = vmatprep.subr.bf16.mxu0 0
      %542 = vmatpush1.bf16.msra.mxu0 %v452
      %543 = vmatprep.subr.bf16.mxu0 0
      %544 = vmatpush1.bf16.msra.mxu0 %v451
      %545 = vmatprep.subr.bf16.mxu0 0
      %546 = vmatpush1.bf16.msra.mxu0 %v450
      %547 = vmatprep.subr.bf16.mxu0 0
      %548 = vmatpush2.bf16.msra.mxu0 0
      %549 = vmatprep.subr.bf16.mxu0 0
      %550 = vmatpush2.bf16.msra.mxu0 0
      %551 = vmatprep.subr.bf16.mxu0 0
      %552 = vmatpush2.bf16.msra.mxu0 0
      %553 = vmatprep.subr.bf16.mxu0 0
      %554 = vmatpush2.bf16.msra.mxu0 0
      %555 = vmatprep.subr.bf16.mxu0 0
      %556 = vmatpush2.bf16.msra.mxu0 0
      %557 = vmatprep.subr.bf16.mxu0 0
      %558 = vmatpush2.bf16.msra.mxu0 0
      %559 = vmatprep.subr.bf16.mxu0 0
      %560 = vmatpush2.bf16.msra.mxu0 0
      %561 = vmatprep.subr.bf16.mxu0 0
      %562 = vmatpush2.bf16.msra.mxu0 0
      %563 = vmatprep.mubr.bf16.mxu0 0
      %564 = vmatmul.mubr.bf16.gmra.mxu0 %v328
      %v565 = vpop.f32.mrf.mxu0
      %v566 = vadd.f32 %v517, %v565
      %v567 = vpop.f32.mrf.mxu0
      %v568 = vpop.f32.mrf.mxu0
      %v569 = vadd.f32 %v520, %v568
      %v570 = vpop.f32.mrf.mxu0
      %571 = vmatprep.mubr.bf16.mxu0 0
      %572 = vmatmul.mubr.bf16.gmra.mxu0 %v331
      %v573 = vpop.f32.mrf.mxu0
      %v574 = vadd.f32 %v525, %v573
      %v575 = vpop.f32.mrf.mxu0
      %v576 = vpop.f32.mrf.mxu0
      %v577 = vadd.f32 %v528, %v576
      %v578 = vpop.f32.mrf.mxu0
      %579 = vdwg.mxu0
      %v582 = vunpack.c.l.b16 %v199
      %v583 = vunpack.c.h.b16 %v199
      %v584 = vunpack.c.l.b16 %v200
      %v585 = vpack.c.b16 %v314, %v582
      %v586 = vpack.c.b16 %v315, %v583
      %v587 = vpack.c.b16 %v316, %v584
      %v588 = vpack.c.b16 %v320, %v317
      %v589 = vpack.c.b16 %v321, %v318
      %v590 = vpack.c.b16 %v322, %v319
      %v645 = vunpack.c.l.b16 %v207
      %v646 = vunpack.c.l.b16 %v208
      %v647 = vunpack.c.l.b16 %v209
      %v648 = vunpack.c.l.b16 %v210
      %v649 = vunpack.c.l.b16 %v211
      %v650 = vunpack.c.l.b16 %v212
      %v651 = vunpack.c.l.b16 %v213
      %v652 = vunpack.c.l.b16 %v214
      %v653 = vunpack.c.l.b16 %v215
      %v654 = vunpack.c.l.b16 %v216
      %v655 = vunpack.c.l.b16 %v217
      %v656 = vunpack.c.l.b16 %v218
      %v657 = vunpack.c.l.b16 %v219
      %v658 = vunpack.c.l.b16 %v220
      %v659 = vunpack.c.l.b16 %v221
      %v660 = vunpack.c.l.b16 %v222
      %v661 = vunpack.c.l.b16 %v223
      %v662 = vunpack.c.l.b16 %v224
      %v663 = vunpack.c.l.b16 %v225
      %v664 = vunpack.c.l.b16 %v226
      %v665 = vunpack.c.l.b16 %v227
      %v666 = vunpack.c.l.b16 %v228
      %v667 = vunpack.c.l.b16 %v229
      %v668 = vunpack.c.l.b16 %v230
      %v669 = vunpack.c.l.b16 %v231
      %v670 = vunpack.c.l.b16 %v232
      %v671 = vunpack.c.l.b16 %v233
      %v672 = vunpack.c.l.b16 %v234
      %v673 = vunpack.c.l.b16 %v235
      %v674 = vunpack.c.l.b16 %v236
      %v675 = vunpack.c.l.b16 %v237
      %v676 = vunpack.c.l.b16 %v238
      %v677 = vunpack.c.l.b16 %v239
      %v678 = vunpack.c.l.b16 %v240
      %v679 = vunpack.c.l.b16 %v241
      %v680 = vunpack.c.l.b16 %v242
      %v681 = vunpack.c.l.b16 %v243
      %v682 = vunpack.c.l.b16 %v244
      %v683 = vunpack.c.l.b16 %v245
      %v684 = vunpack.c.l.b16 %v246
      %v685 = vunpack.c.l.b16 %v247
      %v686 = vunpack.c.l.b16 %v248
      %v687 = vunpack.c.l.b16 %v249
      %v688 = vunpack.c.l.b16 %v250
      %v689 = vunpack.c.l.b16 %v251
      %v690 = vunpack.c.l.b16 %v252
      %v691 = vunpack.c.l.b16 %v253
      %v692 = vunpack.c.l.b16 %v254
      %v693 = vpack.c.b16 %v646, %v645
      %v694 = vpack.c.b16 %v648, %v647
      %v695 = vpack.c.b16 %v650, %v649
      %v696 = vpack.c.b16 %v652, %v651
      %v697 = vpack.c.b16 %v654, %v653
      %v698 = vpack.c.b16 %v656, %v655
      %v699 = vpack.c.b16 %v658, %v657
      %v700 = vpack.c.b16 %v660, %v659
      %v701 = vpack.c.b16 %v662, %v661
      %v702 = vpack.c.b16 %v664, %v663
      %v703 = vpack.c.b16 %v666, %v665
      %v704 = vpack.c.b16 %v668, %v667
      %v705 = vpack.c.b16 %v670, %v669
      %v706 = vpack.c.b16 %v672, %v671
      %v707 = vpack.c.b16 %v674, %v673
      %v708 = vpack.c.b16 %v676, %v675
      %v709 = vpack.c.b16 %v678, %v677
      %v710 = vpack.c.b16 %v680, %v679
      %v711 = vpack.c.b16 %v682, %v681
      %v712 = vpack.c.b16 %v684, %v683
      %v713 = vpack.c.b16 %v686, %v685
      %v714 = vpack.c.b16 %v688, %v687
      %v715 = vpack.c.b16 %v690, %v689
      %v716 = vpack.c.b16 %v692, %v691
      %741 = vmatprep.subr.bf16.mxu0 0
      %742 = vmatpush1.bf16.msra.mxu0 %v700
      %743 = vmatprep.subr.bf16.mxu0 0
      %744 = vmatpush1.bf16.msra.mxu0 %v699
      %745 = vmatprep.subr.bf16.mxu0 0
      %746 = vmatpush1.bf16.msra.mxu0 %v698
      %747 = vmatprep.subr.bf16.mxu0 0
      %748 = vmatpush1.bf16.msra.mxu0 %v697
      %749 = vmatprep.subr.bf16.mxu0 0
      %750 = vmatpush1.bf16.msra.mxu0 %v696
      %751 = vmatprep.subr.bf16.mxu0 0
      %752 = vmatpush1.bf16.msra.mxu0 %v695
      %753 = vmatprep.subr.bf16.mxu0 0
      %754 = vmatpush1.bf16.msra.mxu0 %v694
      %755 = vmatprep.subr.bf16.mxu0 0
      %756 = vmatpush1.bf16.msra.mxu0 %v693
      %757 = vmatprep.subr.bf16.mxu0 0
      %758 = vmatpush2.bf16.msra.mxu0 %v708
      %759 = vmatprep.subr.bf16.mxu0 0
      %760 = vmatpush2.bf16.msra.mxu0 %v707
      %761 = vmatprep.subr.bf16.mxu0 0
      %762 = vmatpush2.bf16.msra.mxu0 %v706
      %763 = vmatprep.subr.bf16.mxu0 0
      %764 = vmatpush2.bf16.msra.mxu0 %v705
      %765 = vmatprep.subr.bf16.mxu0 0
      %766 = vmatpush2.bf16.msra.mxu0 %v704
      %767 = vmatprep.subr.bf16.mxu0 0
      %768 = vmatpush2.bf16.msra.mxu0 %v703
      %769 = vmatprep.subr.bf16.mxu0 0
      %770 = vmatpush2.bf16.msra.mxu0 %v702
      %771 = vmatprep.subr.bf16.mxu0 0
      %772 = vmatpush2.bf16.msra.mxu0 %v701
      %773 = vmatprep.mubr.bf16.mxu0 %v586
      %774 = vmatmul.mubr.bf16.gmra.mxu0 %v585
      %v775 = vpop.f32.mrf.mxu0
      %v776 = vadd.f32 %v566, %v775
      %v777 = vpop.f32.mrf.mxu0
      %v778 = vpop.f32.mrf.mxu0
      %v779 = vadd.f32 %v569, %v778
      %v780 = vpop.f32.mrf.mxu0
      %781 = vmatprep.mubr.bf16.mxu0 %v589
      %782 = vmatmul.mubr.bf16.gmra.mxu0 %v588
      %v783 = vpop.f32.mrf.mxu0
      %v784 = vadd.f32 %v574, %v783
      %v785 = vpop.f32.mrf.mxu0
      %v786 = vpop.f32.mrf.mxu0
      %v787 = vadd.f32 %v577, %v786
      %v788 = vpop.f32.mrf.mxu0
      %789 = vdwg.mxu0
      %790 = vmatprep.subr.bf16.mxu0 0
      %791 = vmatpush1.bf16.msra.mxu0 %v716
      %792 = vmatprep.subr.bf16.mxu0 0
      %793 = vmatpush1.bf16.msra.mxu0 %v715
      %794 = vmatprep.subr.bf16.mxu0 0
      %795 = vmatpush1.bf16.msra.mxu0 %v714
      %796 = vmatprep.subr.bf16.mxu0 0
      %797 = vmatpush1.bf16.msra.mxu0 %v713
      %798 = vmatprep.subr.bf16.mxu0 0
      %799 = vmatpush1.bf16.msra.mxu0 %v712
      %800 = vmatprep.subr.bf16.mxu0 0
      %801 = vmatpush1.bf16.msra.mxu0 %v711
      %802 = vmatprep.subr.bf16.mxu0 0
      %803 = vmatpush1.bf16.msra.mxu0 %v710
      %804 = vmatprep.subr.bf16.mxu0 0
      %805 = vmatpush1.bf16.msra.mxu0 %v709
      %806 = vmatprep.subr.bf16.mxu0 0
      %807 = vmatpush2.bf16.msra.mxu0 0
      %808 = vmatprep.subr.bf16.mxu0 0
      %809 = vmatpush2.bf16.msra.mxu0 0
      %810 = vmatprep.subr.bf16.mxu0 0
      %811 = vmatpush2.bf16.msra.mxu0 0
      %812 = vmatprep.subr.bf16.mxu0 0
      %813 = vmatpush2.bf16.msra.mxu0 0
      %814 = vmatprep.subr.bf16.mxu0 0
      %815 = vmatpush2.bf16.msra.mxu0 0
      %816 = vmatprep.subr.bf16.mxu0 0
      %817 = vmatpush2.bf16.msra.mxu0 0
      %818 = vmatprep.subr.bf16.mxu0 0
      %819 = vmatpush2.bf16.msra.mxu0 0
      %820 = vmatprep.subr.bf16.mxu0 0
      %821 = vmatpush2.bf16.msra.mxu0 0
      %822 = vmatprep.mubr.bf16.mxu0 0
      %823 = vmatmul.mubr.bf16.gmra.mxu0 %v587
      %v824 = vpop.f32.mrf.mxu0
      %v825 = vadd.f32 %v776, %v824
      %v826 = vpop.f32.mrf.mxu0
      %v827 = vpop.f32.mrf.mxu0
      %v828 = vadd.f32 %v779, %v827
      %v829 = vpop.f32.mrf.mxu0
      %830 = vmatprep.mubr.bf16.mxu0 0
      %831 = vmatmul.mubr.bf16.gmra.mxu0 %v590
      %v832 = vpop.f32.mrf.mxu0
      %v833 = vadd.f32 %v784, %v832
      %v834 = vpop.f32.mrf.mxu0
      %v835 = vpop.f32.mrf.mxu0
      %v836 = vadd.f32 %v787, %v835
      %v837 = vpop.f32.mrf.mxu0
      %838 = vdwg.mxu0
      %v839 = vld [vmem:[%s192 + $0x18] sm:$0xff]
      %v840 = vld [vmem:[%s192 + $0x20] sm:$0xf]
      %v841 = vld [vmem:[%s192 + $0x24] sm:$0xff]
      %v842 = vld [vmem:[%s192 + $0x2c] sm:$0xf]
      %v843 = vld [vmem:[%s192 + $0x30] sm:$0xff]
      %v844 = vld [vmem:[%s192 + $0x38] sm:$0xf]
      %v845 = vld [vmem:[%s192 + $0x3c] sm:$0xff]
      %v846 = vld [vmem:[%s192 + $0x44] sm:$0xf]
      %s847 = scalar_lea.vmem %s1, 384
      %v848 = vld [vmem:[%s847] sm:$0xf]
      %v849 = vld [vmem:[%s847 + $0x4] sm:$0xf]
      %v850 = vld [vmem:[%s847 + $0x8] sm:$0xf]
      %v851 = vld [vmem:[%s847 + $0xc] sm:$0xf]
      %v852 = vld [vmem:[%s847 + $0x10] sm:$0xf]
      %v853 = vld [vmem:[%s847 + $0x14] sm:$0xf]
      %v854 = vld [vmem:[%s847 + $0x18] sm:$0xf]
      %v855 = vld [vmem:[%s847 + $0x1c] sm:$0xf]
      %v856 = vld [vmem:[%s847 + $0x20] sm:$0xf]
      %v857 = vld [vmem:[%s847 + $0x24] sm:$0xf]
      %v858 = vld [vmem:[%s847 + $0x28] sm:$0xf]
      %v859 = vld [vmem:[%s847 + $0x2c] sm:$0xf]
      %v860 = vld [vmem:[%s847 + $0x30] sm:$0xf]
      %v861 = vld [vmem:[%s847 + $0x34] sm:$0xf]
      %v862 = vld [vmem:[%s847 + $0x38] sm:$0xf]
      %v863 = vld [vmem:[%s847 + $0x3c] sm:$0xf]
      %v864 = vld [vmem:[%s847 + $0x40] sm:$0xf]
      %v865 = vld [vmem:[%s847 + $0x44] sm:$0xf]
      %v866 = vld [vmem:[%s847 + $0x48] sm:$0xf]
      %v867 = vld [vmem:[%s847 + $0x4c] sm:$0xf]
      %v868 = vld [vmem:[%s847 + $0x50] sm:$0xf]
      %v869 = vld [vmem:[%s847 + $0x54] sm:$0xf]
      %v870 = vld [vmem:[%s847 + $0x58] sm:$0xf]
      %v871 = vld [vmem:[%s847 + $0x5c] sm:$0xf]
      %v872 = vld [vmem:[%s847 + $0x60] sm:$0xf]
      %v873 = vld [vmem:[%s847 + $0x64] sm:$0xf]
      %v874 = vld [vmem:[%s847 + $0x68] sm:$0xf]
      %v875 = vld [vmem:[%s847 + $0x6c] sm:$0xf]
      %v876 = vld [vmem:[%s847 + $0x70] sm:$0xf]
      %v877 = vld [vmem:[%s847 + $0x74] sm:$0xf]
      %v878 = vld [vmem:[%s847 + $0x78] sm:$0xf]
      %v879 = vld [vmem:[%s847 + $0x7c] sm:$0xf]
      %v880 = vld [vmem:[%s847 + $0x80] sm:$0xf]
      %v881 = vld [vmem:[%s847 + $0x84] sm:$0xf]
      %v882 = vld [vmem:[%s847 + $0x88] sm:$0xf]
      %v883 = vld [vmem:[%s847 + $0x8c] sm:$0xf]
      %v884 = vld [vmem:[%s847 + $0x90] sm:$0xf]
      %v885 = vld [vmem:[%s847 + $0x94] sm:$0xf]
      %v886 = vld [vmem:[%s847 + $0x98] sm:$0xf]
      %v887 = vld [vmem:[%s847 + $0x9c] sm:$0xf]
      %v888 = vld [vmem:[%s847 + $0xa0] sm:$0xf]
      %v889 = vld [vmem:[%s847 + $0xa4] sm:$0xf]
      %v890 = vld [vmem:[%s847 + $0xa8] sm:$0xf]
      %v891 = vld [vmem:[%s847 + $0xac] sm:$0xf]
      %v892 = vld [vmem:[%s847 + $0xb0] sm:$0xf]
      %v893 = vld [vmem:[%s847 + $0xb4] sm:$0xf]
      %v894 = vld [vmem:[%s847 + $0xb8] sm:$0xf]
      %v895 = vld [vmem:[%s847 + $0xbc] sm:$0xf]
      %v904 = vunpack.c.l.b16 %v839
      %v905 = vunpack.c.h.b16 %v839
      %v906 = vunpack.c.l.b16 %v840
      %v907 = vunpack.c.l.b16 %v841
      %v908 = vunpack.c.h.b16 %v841
      %v909 = vunpack.c.l.b16 %v842
      %v910 = vunpack.c.l.b16 %v843
      %v911 = vunpack.c.h.b16 %v843
      %v912 = vunpack.c.l.b16 %v844
      %v913 = vunpack.c.l.b16 %v845
      %v914 = vunpack.c.h.b16 %v845
      %v915 = vunpack.c.l.b16 %v846
      %v916 = vpack.c.b16 %v907, %v904
      %v917 = vpack.c.b16 %v908, %v905
      %v918 = vpack.c.b16 %v909, %v906
      %v919 = vpack.c.b16 %v913, %v910
      %v920 = vpack.c.b16 %v914, %v911
      %v921 = vpack.c.b16 %v915, %v912
      %v976 = vunpack.c.l.b16 %v848
      %v977 = vunpack.c.l.b16 %v849
      %v978 = vunpack.c.l.b16 %v850
      %v979 = vunpack.c.l.b16 %v851
      %v980 = vunpack.c.l.b16 %v852
      %v981 = vunpack.c.l.b16 %v853
      %v982 = vunpack.c.l.b16 %v854
      %v983 = vunpack.c.l.b16 %v855
      %v984 = vunpack.c.l.b16 %v856
      %v985 = vunpack.c.l.b16 %v857
      %v986 = vunpack.c.l.b16 %v858
      %v987 = vunpack.c.l.b16 %v859
      %v988 = vunpack.c.l.b16 %v860
      %v989 = vunpack.c.l.b16 %v861
      %v990 = vunpack.c.l.b16 %v862
      %v991 = vunpack.c.l.b16 %v863
      %v992 = vunpack.c.l.b16 %v864
      %v993 = vunpack.c.l.b16 %v865
      %v994 = vunpack.c.l.b16 %v866
      %v995 = vunpack.c.l.b16 %v867
      %v996 = vunpack.c.l.b16 %v868
      %v997 = vunpack.c.l.b16 %v869
      %v998 = vunpack.c.l.b16 %v870
      %v999 = vunpack.c.l.b16 %v871
      %v1000 = vunpack.c.l.b16 %v872
      %v1001 = vunpack.c.l.b16 %v873
      %v1002 = vunpack.c.l.b16 %v874
      %v1003 = vunpack.c.l.b16 %v875
      %v1004 = vunpack.c.l.b16 %v876
      %v1005 = vunpack.c.l.b16 %v877
      %v1006 = vunpack.c.l.b16 %v878
      %v1007 = vunpack.c.l.b16 %v879
      %v1008 = vunpack.c.l.b16 %v880
      %v1009 = vunpack.c.l.b16 %v881
      %v1010 = vunpack.c.l.b16 %v882
      %v1011 = vunpack.c.l.b16 %v883
      %v1012 = vunpack.c.l.b16 %v884
      %v1013 = vunpack.c.l.b16 %v885
      %v1014 = vunpack.c.l.b16 %v886
      %v1015 = vunpack.c.l.b16 %v887
      %v1016 = vunpack.c.l.b16 %v888
      %v1017 = vunpack.c.l.b16 %v889
      %v1018 = vunpack.c.l.b16 %v890
      %v1019 = vunpack.c.l.b16 %v891
      %v1020 = vunpack.c.l.b16 %v892
      %v1021 = vunpack.c.l.b16 %v893
      %v1022 = vunpack.c.l.b16 %v894
      %v1023 = vunpack.c.l.b16 %v895
      %v1024 = vpack.c.b16 %v977, %v976
      %v1025 = vpack.c.b16 %v979, %v978
      %v1026 = vpack.c.b16 %v981, %v980
      %v1027 = vpack.c.b16 %v983, %v982
      %v1028 = vpack.c.b16 %v985, %v984
      %v1029 = vpack.c.b16 %v987, %v986
      %v1030 = vpack.c.b16 %v989, %v988
      %v1031 = vpack.c.b16 %v991, %v990
      %v1032 = vpack.c.b16 %v993, %v992
      %v1033 = vpack.c.b16 %v995, %v994
      %v1034 = vpack.c.b16 %v997, %v996
      %v1035 = vpack.c.b16 %v999, %v998
      %v1036 = vpack.c.b16 %v1001, %v1000
      %v1037 = vpack.c.b16 %v1003, %v1002
      %v1038 = vpack.c.b16 %v1005, %v1004
      %v1039 = vpack.c.b16 %v1007, %v1006
      %v1040 = vpack.c.b16 %v1009, %v1008
      %v1041 = vpack.c.b16 %v1011, %v1010
      %v1042 = vpack.c.b16 %v1013, %v1012
      %v1043 = vpack.c.b16 %v1015, %v1014
      %v1044 = vpack.c.b16 %v1017, %v1016
      %v1045 = vpack.c.b16 %v1019, %v1018
      %v1046 = vpack.c.b16 %v1021, %v1020
      %v1047 = vpack.c.b16 %v1023, %v1022
      %1072 = vmatprep.subr.bf16.mxu0 0
      %1073 = vmatpush1.bf16.msra.mxu0 %v1031
      %1074 = vmatprep.subr.bf16.mxu0 0
      %1075 = vmatpush1.bf16.msra.mxu0 %v1030
      %1076 = vmatprep.subr.bf16.mxu0 0
      %1077 = vmatpush1.bf16.msra.mxu0 %v1029
      %1078 = vmatprep.subr.bf16.mxu0 0
      %1079 = vmatpush1.bf16.msra.mxu0 %v1028
      %1080 = vmatprep.subr.bf16.mxu0 0
      %1081 = vmatpush1.bf16.msra.mxu0 %v1027
      %1082 = vmatprep.subr.bf16.mxu0 0
      %1083 = vmatpush1.bf16.msra.mxu0 %v1026
      %1084 = vmatprep.subr.bf16.mxu0 0
      %1085 = vmatpush1.bf16.msra.mxu0 %v1025
      %1086 = vmatprep.subr.bf16.mxu0 0
      %1087 = vmatpush1.bf16.msra.mxu0 %v1024
      %1088 = vmatprep.subr.bf16.mxu0 0
      %1089 = vmatpush2.bf16.msra.mxu0 %v1039
      %1090 = vmatprep.subr.bf16.mxu0 0
      %1091 = vmatpush2.bf16.msra.mxu0 %v1038
      %1092 = vmatprep.subr.bf16.mxu0 0
      %1093 = vmatpush2.bf16.msra.mxu0 %v1037
      %1094 = vmatprep.subr.bf16.mxu0 0
      %1095 = vmatpush2.bf16.msra.mxu0 %v1036
      %1096 = vmatprep.subr.bf16.mxu0 0
      %1097 = vmatpush2.bf16.msra.mxu0 %v1035
      %1098 = vmatprep.subr.bf16.mxu0 0
      %1099 = vmatpush2.bf16.msra.mxu0 %v1034
      %1100 = vmatprep.subr.bf16.mxu0 0
      %1101 = vmatpush2.bf16.msra.mxu0 %v1033
      %1102 = vmatprep.subr.bf16.mxu0 0
      %1103 = vmatpush2.bf16.msra.mxu0 %v1032
      %1104 = vmatprep.mubr.bf16.mxu0 %v917
      %1105 = vmatmul.mubr.bf16.gmra.mxu0 %v916
      %v1106 = vpop.f32.mrf.mxu0
      %v1107 = vadd.f32 0.0, %v1106
      %v1108 = vpop.f32.mrf.mxu0
      %v1109 = vpop.f32.mrf.mxu0
      %v1110 = vadd.f32 0.0, %v1109
      %v1111 = vpop.f32.mrf.mxu0
      %1112 = vmatprep.mubr.bf16.mxu0 %v920
      %1113 = vmatmul.mubr.bf16.gmra.mxu0 %v919
      %v1114 = vpop.f32.mrf.mxu0
      %v1115 = vadd.f32 0.0, %v1114
      %v1116 = vpop.f32.mrf.mxu0
      %v1117 = vpop.f32.mrf.mxu0
      %v1118 = vadd.f32 0.0, %v1117
      %v1119 = vpop.f32.mrf.mxu0
      %1120 = vdwg.mxu0
      %1121 = vmatprep.subr.bf16.mxu0 0
      %1122 = vmatpush1.bf16.msra.mxu0 %v1047
      %1123 = vmatprep.subr.bf16.mxu0 0
      %1124 = vmatpush1.bf16.msra.mxu0 %v1046
      %1125 = vmatprep.subr.bf16.mxu0 0
      %1126 = vmatpush1.bf16.msra.mxu0 %v1045
      %1127 = vmatprep.subr.bf16.mxu0 0
      %1128 = vmatpush1.bf16.msra.mxu0 %v1044
      %1129 = vmatprep.subr.bf16.mxu0 0
      %1130 = vmatpush1.bf16.msra.mxu0 %v1043
      %1131 = vmatprep.subr.bf16.mxu0 0
      %1132 = vmatpush1.bf16.msra.mxu0 %v1042
      %1133 = vmatprep.subr.bf16.mxu0 0
      %1134 = vmatpush1.bf16.msra.mxu0 %v1041
      %1135 = vmatprep.subr.bf16.mxu0 0
      %1136 = vmatpush1.bf16.msra.mxu0 %v1040
      %1137 = vmatprep.subr.bf16.mxu0 0
      %1138 = vmatpush2.bf16.msra.mxu0 0
      %1139 = vmatprep.subr.bf16.mxu0 0
      %1140 = vmatpush2.bf16.msra.mxu0 0
      %1141 = vmatprep.subr.bf16.mxu0 0
      %1142 = vmatpush2.bf16.msra.mxu0 0
      %1143 = vmatprep.subr.bf16.mxu0 0
      %1144 = vmatpush2.bf16.msra.mxu0 0
      %1145 = vmatprep.subr.bf16.mxu0 0
      %1146 = vmatpush2.bf16.msra.mxu0 0
      %1147 = vmatprep.subr.bf16.mxu0 0
      %1148 = vmatpush2.bf16.msra.mxu0 0
      %1149 = vmatprep.subr.bf16.mxu0 0
      %1150 = vmatpush2.bf16.msra.mxu0 0
      %1151 = vmatprep.subr.bf16.mxu0 0
      %1152 = vmatpush2.bf16.msra.mxu0 0
      %1153 = vmatprep.mubr.bf16.mxu0 0
      %1154 = vmatmul.mubr.bf16.gmra.mxu0 %v918
      %v1155 = vpop.f32.mrf.mxu0
      %v1156 = vadd.f32 %v1107, %v1155
      %v1157 = vpop.f32.mrf.mxu0
      %v1158 = vpop.f32.mrf.mxu0
      %v1159 = vadd.f32 %v1110, %v1158
      %v1160 = vpop.f32.mrf.mxu0
      %1161 = vmatprep.mubr.bf16.mxu0 0
      %1162 = vmatmul.mubr.bf16.gmra.mxu0 %v921
      %v1163 = vpop.f32.mrf.mxu0
      %v1164 = vadd.f32 %v1115, %v1163
      %v1165 = vpop.f32.mrf.mxu0
      %v1166 = vpop.f32.mrf.mxu0
      %v1167 = vadd.f32 %v1118, %v1166
      %v1168 = vpop.f32.mrf.mxu0
      %1169 = vdwg.mxu0
      %v1170 = vadd.f32 %v825, %v1156
      %v1171 = vadd.f32 %v828, %v1159
      %v1172 = vadd.f32 %v833, %v1164
      %v1173 = vadd.f32 %v836, %v1167
      %v1174 = vld [vmem:[%s2] sm:$0x1]
      %v1176 = vlaneseq
      %v1177 = vshrl.u32 %v1176, 7
      %v1178 = vsub.s32 0, %v1177
      %v1179 = vrot.slane %v1174, %v1178
      %v1181 = vmul.f32 %v1170, %v1179
      %v1182 = vmul.f32 %v1171, %v1179
      %v1183 = vmul.f32 %v1172, %v1179
      %v1184 = vmul.f32 %v1173, %v1179
      %v1185 = vld [vmem:[%s3] sm:$0x1]
      %v1187 = vlaneseq
      %v1188 = vshrl.u32 %v1187, 7
      %v1189 = vsub.s32 0, %v1188
      %v1190 = vrot.slane %v1185, %v1189
      %v1192 = vadd.f32 %v1181, %v1190
      %v1193 = vadd.f32 %v1182, %v1190
      %v1194 = vadd.f32 %v1183, %v1190
      %v1195 = vadd.f32 %v1184, %v1190
      %v1196 = vmax.f32 %v1192, 0.0
      %v1197 = vmax.f32 %v1193, 0.0
      %v1198 = vmax.f32 %v1194, 0.0
      %v1199 = vmax.f32 %v1195, 0.0
      %v1200 = vpack.c.bf16 %v1197, %v1196
      %v1201 = vpack.c.bf16 %v1199, %v1198
      %v1204 = vunpack.c.l.b16 %v1200
      %v1205 = vunpack.c.h.b16 %v1200
      %v1206 = vunpack.c.l.b16 %v1201
      %v1207 = vunpack.c.h.b16 %v1201
      %v1208 = vpack.c.b16 %v1204, %v1204
      %v1209 = vpack.c.b16 %v1205, %v1205
      %v1210 = vpack.c.b16 %v1206, %v1206
      %v1211 = vpack.c.b16 %v1207, %v1207
      %vm1216 = vcmask 519168
      %1217 = vst.msk [vmem:[%s197] sm:$0xf] %vm1216, %v1208
      %1218 = vst.msk [vmem:[%s197 + $0x4] sm:$0xf] %vm1216, %v1209
      %1219 = vst.msk [vmem:[%s197 + $0x8] sm:$0xf] %vm1216, %v1210
      %1220 = vst.msk [vmem:[%s197 + $0xc] sm:$0xf] %vm1216, %v1211
      %p1221 = scmp.lt.s32.totalorder %s15, 1
      %s1222 = scalar_select %p1221, %s15, 1
      %s1223 = smul.addr %s1222, 4
      %s1224 = smul.addr %s1223, 4
      %s1225 = scalar_lea.vmem %s4, %s1224
      // Predicated region
      $region37: #{drunet_var_forward.20} parent=35 // pred_check
        %p1226 = pneg %p122
      $region38: #{drunet_var_forward.20} parent=35 // pred_check_branch
        %1228 = sbr.rel (%p1226) target = $region40
      $region39: #{drunet_var_forward.20} parent=35 // pred_region
        _
      $region40: #{drunet_var_forward.20} parent=35 // pred_fallthru
        _
    $region36: #{drunet_var_forward.20} parent=5 // pred_fallthru
      _
    %p1229 = scmp.le.s32.totalorder 2, %s10
    // Predicated region
    $region41: #{drunet_var_forward.20} parent=5 // pred_check
      %p1230 = pneg %p1229
    $region42: #{drunet_var_forward.20} parent=5 // pred_check_branch
      %1232 = sbr.rel (%p1230) target = $region44
    $region43: #{drunet_var_forward.20} parent=5 // pred_region
      %s1233 = ssub.s32 %s10, 2
      // Predicated region
      $region45: #{drunet_var_forward.20} parent=43 // pred_check
        %p1234 = pneg %p128
      $region46: #{drunet_var_forward.20} parent=43 // pred_check_branch
        %1236 = sbr.rel (%p1234) target = $region48
      $region47: #{drunet_var_forward.20} parent=43 // pred_region
        %p1237 = scmp.lt.s32.totalorder %s16, 1
        %s1238 = scalar_select %p1237, %s16, 1
        %s1239 = smul.addr %s1238, 4
        %s1240 = smul.addr %s1239, 4
        %s1241 = scalar_lea.vmem %s4, %s1240
      $region48: #{drunet_var_forward.20} parent=43 // pred_fallthru
        _
    $region44: #{drunet_var_forward.20} parent=5 // pred_fallthru
      _
  $region6: #{drunet_var_forward.20} parent=0 // loop_footer
    %s14 = sadd.s32 1, %s10
  $region7: #{drunet_var_forward.20} parent=0 // loop_footer_branch
    %9 = sbr.rel target = $region3
  $region8: #{drunet_var_forward.20} parent=0 // loop_exit
    _

// kernel: drunet_var_forward.22
$region0: #{drunet_var_forward.22}
  #allocation0 [shape = 'u32[]', space=smem, size = 0x4, offset = 0x4, fixed_abs, tag = 'smem constant byte address 0x4 - core index']
  #allocation1 [shape = 'u32[144,128]{1,0:T(1,128)}', space=vmem, size = 0x12000, scoped, tag = 'internal scratch']
  %s0 = inlined_call_operand.vmem [shape: bf16[2,80,192], index: 0, kind: input, shape index: {}]
  %s1 = inlined_call_operand.vmem [shape: bf16[3,192,32], index: 1, kind: input, shape index: {}]
  %s2 = inlined_call_operand.vmem [shape: f32[1,32], index: 2, kind: input, shape index: {}]
  %s3 = inlined_call_operand.vmem [shape: f32[1,32], index: 3, kind: input, shape index: {}]
  %s4 = inlined_call_operand.vmem [shape: bf16[2,64,32], index: 4, kind: output, shape index: {}]
  %s5 = sld [smem:[#allocation0]]
  $region49: #{drunet_var_forward.22} parent=0
    _
  %s7 = ssub.s32 1, %s5
  %s8 = scalar_select 0, %s7, %s5
  loop: start=0, step=1, limit=4
  $region2: #{drunet_var_forward.22} parent=0 // loop_pre_header
    _
  $region3: #{drunet_var_forward.22} parent=0 // loop_header
    %s10 = sphi 0, %s14
    %p11 = scmp.ge.s32.totalorder %s10, 4
    %s20 = sphi 0, %s22
    %s23 = sphi 0, %s20
    %s24 = sphi 0, %s23
    %s40 = sphi 0, %s24
    %s44 = sphi 0, %s44
    %s46 = sphi 0, %s44
    %s47 = sphi 0, %s46
    %s61 = sphi 0, %s47
    %s65 = sphi 0, %s65
    %s67 = sphi 0, %s65
    %s68 = sphi 0, %s67
    %s82 = sphi 0, %s68
    %s86 = sphi 0, %s86
    %s88 = sphi 0, %s86
    %s89 = sphi 0, %s88
    %s103 = sphi 0, %s89
    %s109 = sphi 0, %s111
    %s112 = sphi 0, %s109
    %s113 = sphi 0, %s112
    %s129 = sphi 0, %s113
  $region4: #{drunet_var_forward.22} parent=0 // loop_header_branch
    %13 = sbr.rel (%p11) target = $region8
  $region5: #{drunet_var_forward.22} parent=0 // loop_body
    %s15 = ssub.s32 %s10, 1
    %s16 = ssub.s32 %s10, 2
    %s17 = sadd.s32 %s10, 1
    %s18 = ssub.s32 %s10, %s17
    %p19 = scmp.eq.s32.totalorder %s18, 0
    %s21 = sadd.s32 %s20, 1
    %s22 = scalar_select %p19, %s20, %s21
    %p25 = pneg %p19
    %p26 = scmp.eq.s32.totalorder %s10, 1
    %p27 = por %p25, %p26
    %p28 = scmp.ne.s32.totalorder %s20, %s23
    %p29 = scmp.eq.s32.totalorder %s10, 0
    %p30 = por %p28, %p29
    %p31 = scmp.ne.s32.totalorder %s20, %s23
    %p32 = scmp.eq.s32.totalorder %s15, 1
    %p33 = por %p31, %p32
    %p34 = scmp.ne.s32.totalorder %s23, %s24
    %p35 = scmp.eq.s32.totalorder %s15, 0
    %p36 = por %p34, %p35
    %p37 = scmp.ne.s32.totalorder %s23, %s24
    %p38 = scmp.eq.s32.totalorder %s16, 1
    %p39 = por %p37, %p38
    %p41 = scmp.ne.s32.totalorder %s24, %s40
    %p42 = scmp.eq.s32.totalorder %s16, 0
    %p43 = por %p41, %p42
    %s45 = sadd.s32 %s44, 1
    %p48 = scmp.eq.s32.totalorder %s10, 1
    %p49 = scmp.ne.s32.totalorder %s44, %s46
    %p50 = scmp.eq.s32.totalorder %s10, 0
    %p51 = por %p49, %p50
    %p52 = scmp.ne.s32.totalorder %s44, %s46
    %p53 = scmp.eq.s32.totalorder %s15, 1
    %p54 = por %p52, %p53
    %p55 = scmp.ne.s32.totalorder %s46, %s47
    %p56 = scmp.eq.s32.totalorder %s15, 0
    %p57 = por %p55, %p56
    %p58 = scmp.ne.s32.totalorder %s46, %s47
    %p59 = scmp.eq.s32.totalorder %s16, 1
    %p60 = por %p58, %p59
    %p62 = scmp.ne.s32.totalorder %s47, %s61
    %p63 = scmp.eq.s32.totalorder %s16, 0
    %p64 = por %p62, %p63
    %s66 = sadd.s32 %s65, 1
    %p69 = scmp.eq.s32.totalorder %s10, 1
    %p70 = scmp.ne.s32.totalorder %s65, %s67
    %p71 = scmp.eq.s32.totalorder %s10, 0
    %p72 = por %p70, %p71
    %p73 = scmp.ne.s32.totalorder %s65, %s67
    %p74 = scmp.eq.s32.totalorder %s15, 1
    %p75 = por %p73, %p74
    %p76 = scmp.ne.s32.totalorder %s67, %s68
    %p77 = scmp.eq.s32.totalorder %s15, 0
    %p78 = por %p76, %p77
    %p79 = scmp.ne.s32.totalorder %s67, %s68
    %p80 = scmp.eq.s32.totalorder %s16, 1
    %p81 = por %p79, %p80
    %p83 = scmp.ne.s32.totalorder %s68, %s82
    %p84 = scmp.eq.s32.totalorder %s16, 0
    %p85 = por %p83, %p84
    %s87 = sadd.s32 %s86, 1
    %p90 = scmp.eq.s32.totalorder %s10, 1
    %p91 = scmp.ne.s32.totalorder %s86, %s88
    %p92 = scmp.eq.s32.totalorder %s10, 0
    %p93 = por %p91, %p92
    %p94 = scmp.ne.s32.totalorder %s86, %s88
    %p95 = scmp.eq.s32.totalorder %s15, 1
    %p96 = por %p94, %p95
    %p97 = scmp.ne.s32.totalorder %s88, %s89
    %p98 = scmp.eq.s32.totalorder %s15, 0
    %p99 = por %p97, %p98
    %p100 = scmp.ne.s32.totalorder %s88, %s89
    %p101 = scmp.eq.s32.totalorder %s16, 1
    %p102 = por %p100, %p101
    %p104 = scmp.ne.s32.totalorder %s89, %s103
    %p105 = scmp.eq.s32.totalorder %s16, 0
    %p106 = por %p104, %p105
    %s107 = ssub.s32 %s10, %s17
    %p108 = scmp.eq.s32.totalorder %s107, 0
    %s110 = sadd.s32 %s109, 1
    %s111 = scalar_select %p108, %s109, %s110
    %p114 = pneg %p108
    %p115 = scmp.eq.s32.totalorder %s10, 1
    %p116 = por %p114, %p115
    %p117 = scmp.ne.s32.totalorder %s109, %s112
    %p118 = scmp.eq.s32.totalorder %s10, 0
    %p119 = por %p117, %p118
    %p120 = scmp.ne.s32.totalorder %s109, %s112
    %p121 = scmp.eq.s32.totalorder %s15, 1
    %p122 = por %p120, %p121
    %p123 = scmp.ne.s32.totalorder %s112, %s113
    %p124 = scmp.eq.s32.totalorder %s15, 0
    %p125 = por %p123, %p124
    %p126 = scmp.ne.s32.totalorder %s112, %s113
    %p127 = scmp.eq.s32.totalorder %s16, 1
    %p128 = por %p126, %p127
    %p130 = scmp.ne.s32.totalorder %s113, %s129
    %p131 = scmp.eq.s32.totalorder %s16, 0
    %p132 = por %p130, %p131
    %p133 = scmp.le.s32.totalorder 1, %s10
    %p134 = scmp.lt.s32.totalorder %s10, 3
    %p135 = pnand %p133, %p134
    %p136 = pneg %p135
    // Predicated region
    $region9: #{drunet_var_forward.22} parent=5 // pred_check
      _
    $region10: #{drunet_var_forward.22} parent=5 // pred_check_branch
      %138 = sbr.rel (%p135) target = $region12
    $region11: #{drunet_var_forward.22} parent=5 // pred_region
      %s139 = ssub.s32 %s10, 1
      // Predicated region
      $region13: #{drunet_var_forward.22} parent=11 // pred_check
        %p140 = pneg %p57
      $region14: #{drunet_var_forward.22} parent=11 // pred_check_branch
        %142 = sbr.rel (%p140) target = $region16
      $region15: #{drunet_var_forward.22} parent=11 // pred_region
        _
      $region16: #{drunet_var_forward.22} parent=11 // pred_fallthru
        _
      // Predicated region
      $region17: #{drunet_var_forward.22} parent=11 // pred_check
        %p143 = pneg %p78
      $region18: #{drunet_var_forward.22} parent=11 // pred_check_branch
        %145 = sbr.rel (%p143) target = $region20
      $region19: #{drunet_var_forward.22} parent=11 // pred_region
        _
      $region20: #{drunet_var_forward.22} parent=11 // pred_fallthru
        _
      // Predicated region
      $region21: #{drunet_var_forward.22} parent=11 // pred_check
        %p146 = pneg %p99
      $region22: #{drunet_var_forward.22} parent=11 // pred_check_branch
        %148 = sbr.rel (%p146) target = $region24
      $region23: #{drunet_var_forward.22} parent=11 // pred_region
        _
      $region24: #{drunet_var_forward.22} parent=11 // pred_fallthru
        _
    $region12: #{drunet_var_forward.22} parent=5 // pred_fallthru
      _
    %p149 = scmp.lt.s32.totalorder %s10, 2
    // Predicated region
    $region25: #{drunet_var_forward.22} parent=5 // pred_check
      %p150 = pneg %p149
    $region26: #{drunet_var_forward.22} parent=5 // pred_check_branch
      %152 = sbr.rel (%p150) target = $region28
    $region27: #{drunet_var_forward.22} parent=5 // pred_region
      // Predicated region
      $region29: #{drunet_var_forward.22} parent=27 // pred_check
        %p153 = pneg %p30
      $region30: #{drunet_var_forward.22} parent=27 // pred_check_branch
        %155 = sbr.rel (%p153) target = $region32
      $region31: #{drunet_var_forward.22} parent=27 // pred_region
        %p156 = scmp.lt.s32.totalorder %s10, 1
        %s157 = scalar_select %p156, %s10, 1
        %s158 = smul.addr %s157, 20
        %s159 = smul.addr %s158, 4
        %s160 = scalar_lea.vmem %s0, %s159
      $region32: #{drunet_var_forward.22} parent=27 // pred_fallthru
        _
    $region28: #{drunet_var_forward.22} parent=5 // pred_fallthru
      _
    %p161 = scmp.le.s32.totalorder 1, %s10
    %p162 = scmp.lt.s32.totalorder %s10, 3
    %p163 = pnand %p161, %p162
    %p164 = pneg %p163
    // Predicated region
    $region33: #{drunet_var_forward.22} parent=5 // pred_check
      _
    $region34: #{drunet_var_forward.22} parent=5 // pred_check_branch
      %166 = sbr.rel (%p163) target = $region36
    $region35: #{drunet_var_forward.22} parent=5 // pred_region
      %s167 = ssub.s32 %s10, 1
      %p168 = scmp.lt.s32.totalorder %s15, 1
      %s169 = scalar_select %p168, %s15, 1
      %s170 = smul.addr %s169, 20
      %s171 = smul.addr %s170, 4
      %s172 = scalar_lea.vmem %s0, %s171
      %p173 = pneg %p36
      %p174 = pneg %p33
      %p175 = pneg %p57
      %p176 = pneg %p54
      %p177 = pneg %p78
      %p178 = pneg %p75
      %p179 = pneg %p99
      %p180 = pneg %p96
      %p181 = pneg %p125
      %p182 = pneg %p122
      %p183 = scmp.lt.s32.totalorder %s15, 1
      %s184 = scalar_select %p183, %s15, 1
      %s185 = smul.addr %s184, 8
      %s186 = smul.addr %s185, 4
      %s187 = scalar_lea.vmem %s4, %s186
      %p188 = scmp.lt.s32.totalorder %s15, 1
      %s189 = scalar_select %p188, %s15, 1
      %s190 = smul.addr %s189, 20
      %s191 = smul.addr %s190, 4
      %s192 = scalar_lea.vmem %s0, %s191
      %p193 = scmp.lt.s32.totalorder %s15, 1
      %s194 = scalar_select %p193, %s15, 1
      %s195 = smul.addr %s194, 8
      %s196 = smul.addr %s195, 4
      %s197 = scalar_lea.vmem %s4, %s196
      %v199 = vld [vmem:[%s192] sm:$0xff]
      %v200 = vld [vmem:[%s192 + $0x8] sm:$0xff]
      %v201 = vld [vmem:[%s192 + $0x10] sm:$0xff]
      %v202 = vld [vmem:[%s192 + $0x18] sm:$0xff]
      %v203 = vld [vmem:[%s192 + $0x20] sm:$0xff]
      %v204 = vld [vmem:[%s192 + $0x28] sm:$0xff]
      %v205 = vld [vmem:[%s192 + $0x30] sm:$0xff]
      %v206 = vld [vmem:[%s192 + $0x38] sm:$0xff]
      %v207 = vld [vmem:[%s1] sm:$0xf]
      %v208 = vld [vmem:[%s1 + $0x4] sm:$0xf]
      %v209 = vld [vmem:[%s1 + $0x8] sm:$0xf]
      %v210 = vld [vmem:[%s1 + $0xc] sm:$0xf]
      %v211 = vld [vmem:[%s1 + $0x10] sm:$0xf]
      %v212 = vld [vmem:[%s1 + $0x14] sm:$0xf]
      %v213 = vld [vmem:[%s1 + $0x18] sm:$0xf]
      %v214 = vld [vmem:[%s1 + $0x1c] sm:$0xf]
      %v215 = vld [vmem:[%s1 + $0x20] sm:$0xf]
      %v216 = vld [vmem:[%s1 + $0x24] sm:$0xf]
      %v217 = vld [vmem:[%s1 + $0x28] sm:$0xf]
      %v218 = vld [vmem:[%s1 + $0x2c] sm:$0xf]
      %v219 = vld [vmem:[%s1 + $0x30] sm:$0xf]
      %v220 = vld [vmem:[%s1 + $0x34] sm:$0xf]
      %v221 = vld [vmem:[%s1 + $0x38] sm:$0xf]
      %v222 = vld [vmem:[%s1 + $0x3c] sm:$0xf]
      %v223 = vld [vmem:[%s1 + $0x40] sm:$0xf]
      %v224 = vld [vmem:[%s1 + $0x44] sm:$0xf]
      %v225 = vld [vmem:[%s1 + $0x48] sm:$0xf]
      %v226 = vld [vmem:[%s1 + $0x4c] sm:$0xf]
      %v227 = vld [vmem:[%s1 + $0x50] sm:$0xf]
      %v228 = vld [vmem:[%s1 + $0x54] sm:$0xf]
      %v229 = vld [vmem:[%s1 + $0x58] sm:$0xf]
      %v230 = vld [vmem:[%s1 + $0x5c] sm:$0xf]
      %v231 = vld [vmem:[%s192 + $0x40] sm:$0xff]
      %s232 = scalar_lea.vmem %s1, 96
      %v233 = vld [vmem:[%s232] sm:$0xf]
      %v234 = vld [vmem:[%s232 + $0x4] sm:$0xf]
      %v235 = vld [vmem:[%s232 + $0x8] sm:$0xf]
      %v236 = vld [vmem:[%s232 + $0xc] sm:$0xf]
      %v237 = vld [vmem:[%s232 + $0x10] sm:$0xf]
      %v238 = vld [vmem:[%s232 + $0x14] sm:$0xf]
      %v239 = vld [vmem:[%s232 + $0x18] sm:$0xf]
      %v240 = vld [vmem:[%s232 + $0x1c] sm:$0xf]
      %v241 = vld [vmem:[%s232 + $0x20] sm:$0xf]
      %v242 = vld [vmem:[%s232 + $0x24] sm:$0xf]
      %v243 = vld [vmem:[%s232 + $0x28] sm:$0xf]
      %v244 = vld [vmem:[%s232 + $0x2c] sm:$0xf]
      %v245 = vld [vmem:[%s232 + $0x30] sm:$0xf]
      %v246 = vld [vmem:[%s232 + $0x34] sm:$0xf]
      %v247 = vld [vmem:[%s232 + $0x38] sm:$0xf]
      %v248 = vld [vmem:[%s232 + $0x3c] sm:$0xf]
      %v249 = vld [vmem:[%s232 + $0x40] sm:$0xf]
      %v250 = vld [vmem:[%s232 + $0x44] sm:$0xf]
      %v251 = vld [vmem:[%s232 + $0x48] sm:$0xf]
      %v252 = vld [vmem:[%s232 + $0x4c] sm:$0xf]
      %v253 = vld [vmem:[%s232 + $0x50] sm:$0xf]
      %v254 = vld [vmem:[%s232 + $0x54] sm:$0xf]
      %v255 = vld [vmem:[%s232 + $0x58] sm:$0xf]
      %v256 = vld [vmem:[%s232 + $0x5c] sm:$0xf]
      %v265 = vunpack.c.l.b16 %v200
      %v266 = vunpack.c.h.b16 %v200
      %v267 = vunpack.c.l.b16 %v201
      %v268 = vunpack.c.h.b16 %v201
      %v269 = vunpack.c.l.b16 %v202
      %v270 = vunpack.c.h.b16 %v202
      %v271 = vunpack.c.l.b16 %v203
      %v272 = vunpack.c.h.b16 %v203
      %v273 = vunpack.c.l.b16 %v204
      %v274 = vunpack.c.h.b16 %v204
      %v275 = vunpack.c.l.b16 %v205
      %v276 = vunpack.c.h.b16 %v205
      %v277 = vunpack.c.l.b16 %v206
      %v278 = vunpack.c.h.b16 %v206
      %v279 = vunpack.c.l.b16 %v231
      %v280 = vunpack.c.h.b16 %v231
      %v281 = vpack.c.b16 %v267, %v265
      %v282 = vpack.c.b16 %v268, %v266
      %v283 = vpack.c.b16 %v271, %v269
      %v284 = vpack.c.b16 %v272, %v270
      %v285 = vpack.c.b16 %v275, %v273
      %v286 = vpack.c.b16 %v276, %v274
      %v287 = vpack.c.b16 %v279, %v277
      %v288 = vpack.c.b16 %v280, %v278
      %v317 = vunpack.c.l.b16 %v233
      %v318 = vunpack.c.l.b16 %v234
      %v319 = vunpack.c.l.b16 %v235
      %v320 = vunpack.c.l.b16 %v236
      %v321 = vunpack.c.l.b16 %v237
      %v322 = vunpack.c.l.b16 %v238
      %v323 = vunpack.c.l.b16 %v239
      %v324 = vunpack.c.l.b16 %v240
      %v325 = vunpack.c.l.b16 %v241
      %v326 = vunpack.c.l.b16 %v242
      %v327 = vunpack.c.l.b16 %v243
      %v328 = vunpack.c.l.b16 %v244
      %v329 = vunpack.c.l.b16 %v245
      %v330 = vunpack.c.l.b16 %v246
      %v331 = vunpack.c.l.b16 %v247
      %v332 = vunpack.c.l.b16 %v248
      %v333 = vunpack.c.l.b16 %v249
      %v334 = vunpack.c.l.b16 %v250
      %v335 = vunpack.c.l.b16 %v251
      %v336 = vunpack.c.l.b16 %v252
      %v337 = vunpack.c.l.b16 %v253
      %v338 = vunpack.c.l.b16 %v254
      %v339 = vunpack.c.l.b16 %v255
      %v340 = vunpack.c.l.b16 %v256
      %v341 = vpack.c.b16 %v318, %v317
      %v342 = vpack.c.b16 %v320, %v319
      %v343 = vpack.c.b16 %v322, %v321
      %v344 = vpack.c.b16 %v324, %v323
      %v345 = vpack.c.b16 %v326, %v325
      %v346 = vpack.c.b16 %v328, %v327
      %v347 = vpack.c.b16 %v330, %v329
      %v348 = vpack.c.b16 %v332, %v331
      %v349 = vpack.c.b16 %v334, %v333
      %v350 = vpack.c.b16 %v336, %v335
      %v351 = vpack.c.b16 %v338, %v337
      %v352 = vpack.c.b16 %v340, %v339
      %vm365 = vcmask 523264
      %v367 = vsel %vm365, %v282, 0
      %v370 = vsel %vm365, %v284, 0
      %v373 = vsel %vm365, %v286, 0
      %v376 = vsel %vm365, %v288, 0
      %378 = vmatprep.subr.bf16.mxu0 0
      %379 = vmatpush1.bf16.msra.mxu0 %v348
      %380 = vmatprep.subr.bf16.mxu0 0
      %381 = vmatpush1.bf16.msra.mxu0 %v347
      %382 = vmatprep.subr.bf16.mxu0 0
      %383 = vmatpush1.bf16.msra.mxu0 %v346
      %384 = vmatprep.subr.bf16.mxu0 0
      %385 = vmatpush1.bf16.msra.mxu0 %v345
      %386 = vmatprep.subr.bf16.mxu0 0
      %387 = vmatpush1.bf16.msra.mxu0 %v344
      %388 = vmatprep.subr.bf16.mxu0 0
      %389 = vmatpush1.bf16.msra.mxu0 %v343
      %390 = vmatprep.subr.bf16.mxu0 0
      %391 = vmatpush1.bf16.msra.mxu0 %v342
      %392 = vmatprep.subr.bf16.mxu0 0
      %393 = vmatpush1.bf16.msra.mxu0 %v341
      %394 = vmatprep.subr.bf16.mxu0 0
      %395 = vmatpush2.bf16.msra.mxu0 0
      %396 = vmatprep.subr.bf16.mxu0 0
      %397 = vmatpush2.bf16.msra.mxu0 0
      %398 = vmatprep.subr.bf16.mxu0 0
      %399 = vmatpush2.bf16.msra.mxu0 0
      %400 = vmatprep.subr.bf16.mxu0 0
      %401 = vmatpush2.bf16.msra.mxu0 0
      %402 = vmatprep.subr.bf16.mxu0 0
      %403 = vmatpush2.bf16.msra.mxu0 %v352
      %404 = vmatprep.subr.bf16.mxu0 0
      %405 = vmatpush2.bf16.msra.mxu0 %v351
      %406 = vmatprep.subr.bf16.mxu0 0
      %407 = vmatpush2.bf16.msra.mxu0 %v350
      %408 = vmatprep.subr.bf16.mxu0 0
      %409 = vmatpush2.bf16.msra.mxu0 %v349
      %410 = vmatprep.mubr.bf16.mxu0 %v367
      %411 = vmatmul.mubr.bf16.gmra.mxu0 %v281
      %v412 = vpop.f32.mrf.mxu0
      %v413 = vadd.f32 0.0, %v412
      %v414 = vpop.f32.mrf.mxu0
      %v415 = vpop.f32.mrf.mxu0
      %v416 = vadd.f32 0.0, %v415
      %v417 = vpop.f32.mrf.mxu0
      %418 = vmatprep.mubr.bf16.mxu0 %v370
      %419 = vmatmul.mubr.bf16.gmra.mxu0 %v283
      %v420 = vpop.f32.mrf.mxu0
      %v421 = vadd.f32 0.0, %v420
      %v422 = vpop.f32.mrf.mxu0
      %v423 = vpop.f32.mrf.mxu0
      %v424 = vadd.f32 0.0, %v423
      %v425 = vpop.f32.mrf.mxu0
      %426 = vmatprep.mubr.bf16.mxu0 %v373
      %427 = vmatmul.mubr.bf16.gmra.mxu0 %v285
      %v428 = vpop.f32.mrf.mxu0
      %v429 = vadd.f32 0.0, %v428
      %v430 = vpop.f32.mrf.mxu0
      %v431 = vpop.f32.mrf.mxu0
      %v432 = vadd.f32 0.0, %v431
      %v433 = vpop.f32.mrf.mxu0
      %434 = vmatprep.mubr.bf16.mxu0 %v376
      %435 = vmatmul.mubr.bf16.gmra.mxu0 %v287
      %v436 = vpop.f32.mrf.mxu0
      %v437 = vadd.f32 0.0, %v436
      %v438 = vpop.f32.mrf.mxu0
      %v439 = vpop.f32.mrf.mxu0
      %v440 = vadd.f32 0.0, %v439
      %v441 = vpop.f32.mrf.mxu0
      %442 = vdwg.mxu0
      %v444 = vunpack.c.l.b16 %v199
      %v445 = vunpack.c.h.b16 %v199
      %v446 = vpack.c.b16 %v265, %v444
      %v447 = vpack.c.b16 %v266, %v445
      %v448 = vpack.c.b16 %v269, %v267
      %v449 = vpack.c.b16 %v270, %v268
      %v450 = vpack.c.b16 %v273, %v271
      %v451 = vpack.c.b16 %v274, %v272
      %v452 = vpack.c.b16 %v277, %v275
      %v453 = vpack.c.b16 %v278, %v276
      %v482 = vunpack.c.l.b16 %v207
      %v483 = vunpack.c.l.b16 %v208
      %v484 = vunpack.c.l.b16 %v209
      %v485 = vunpack.c.l.b16 %v210
      %v486 = vunpack.c.l.b16 %v211
      %v487 = vunpack.c.l.b16 %v212
      %v488 = vunpack.c.l.b16 %v213
      %v489 = vunpack.c.l.b16 %v214
      %v490 = vunpack.c.l.b16 %v215
      %v491 = vunpack.c.l.b16 %v216
      %v492 = vunpack.c.l.b16 %v217
      %v493 = vunpack.c.l.b16 %v218
      %v494 = vunpack.c.l.b16 %v219
      %v495 = vunpack.c.l.b16 %v220
      %v496 = vunpack.c.l.b16 %v221
      %v497 = vunpack.c.l.b16 %v222
      %v498 = vunpack.c.l.b16 %v223
      %v499 = vunpack.c.l.b16 %v224
      %v500 = vunpack.c.l.b16 %v225
      %v501 = vunpack.c.l.b16 %v226
      %v502 = vunpack.c.l.b16 %v227
      %v503 = vunpack.c.l.b16 %v228
      %v504 = vunpack.c.l.b16 %v229
      %v505 = vunpack.c.l.b16 %v230
      %v506 = vpack.c.b16 %v483, %v482
      %v507 = vpack.c.b16 %v485, %v484
      %v508 = vpack.c.b16 %v487, %v486
      %v509 = vpack.c.b16 %v489, %v488
      %v510 = vpack.c.b16 %v491, %v490
      %v511 = vpack.c.b16 %v493, %v492
      %v512 = vpack.c.b16 %v495, %v494
      %v513 = vpack.c.b16 %v497, %v496
      %v514 = vpack.c.b16 %v499, %v498
      %v515 = vpack.c.b16 %v501, %v500
      %v516 = vpack.c.b16 %v503, %v502
      %v517 = vpack.c.b16 %v505, %v504
      %v531 = vsel %vm365, %v447, 0
      %v534 = vsel %vm365, %v449, 0
      %v537 = vsel %vm365, %v451, 0
      %v540 = vsel %vm365, %v453, 0
      %542 = vmatprep.subr.bf16.mxu0 0
      %543 = vmatpush1.bf16.msra.mxu0 %v513
      %544 = vmatprep.subr.bf16.mxu0 0
      %545 = vmatpush1.bf16.msra.mxu0 %v512
      %546 = vmatprep.subr.bf16.mxu0 0
      %547 = vmatpush1.bf16.msra.mxu0 %v511
      %548 = vmatprep.subr.bf16.mxu0 0
      %549 = vmatpush1.bf16.msra.mxu0 %v510
      %550 = vmatprep.subr.bf16.mxu0 0
      %551 = vmatpush1.bf16.msra.mxu0 %v509
      %552 = vmatprep.subr.bf16.mxu0 0
      %553 = vmatpush1.bf16.msra.mxu0 %v508
      %554 = vmatprep.subr.bf16.mxu0 0
      %555 = vmatpush1.bf16.msra.mxu0 %v507
      %556 = vmatprep.subr.bf16.mxu0 0
      %557 = vmatpush1.bf16.msra.mxu0 %v506
      %558 = vmatprep.subr.bf16.mxu0 0
      %559 = vmatpush2.bf16.msra.mxu0 0
      %560 = vmatprep.subr.bf16.mxu0 0
      %561 = vmatpush2.bf16.msra.mxu0 0
      %562 = vmatprep.subr.bf16.mxu0 0
      %563 = vmatpush2.bf16.msra.mxu0 0
      %564 = vmatprep.subr.bf16.mxu0 0
      %565 = vmatpush2.bf16.msra.mxu0 0
      %566 = vmatprep.subr.bf16.mxu0 0
      %567 = vmatpush2.bf16.msra.mxu0 %v517
      %568 = vmatprep.subr.bf16.mxu0 0
      %569 = vmatpush2.bf16.msra.mxu0 %v516
      %570 = vmatprep.subr.bf16.mxu0 0
      %571 = vmatpush2.bf16.msra.mxu0 %v515
      %572 = vmatprep.subr.bf16.mxu0 0
      %573 = vmatpush2.bf16.msra.mxu0 %v514
      %574 = vmatprep.mubr.bf16.mxu0 %v531
      %575 = vmatmul.mubr.bf16.gmra.mxu0 %v446
      %v576 = vpop.f32.mrf.mxu0
      %v577 = vadd.f32 %v413, %v576
      %v578 = vpop.f32.mrf.mxu0
      %v579 = vpop.f32.mrf.mxu0
      %v580 = vadd.f32 %v416, %v579
      %v581 = vpop.f32.mrf.mxu0
      %582 = vmatprep.mubr.bf16.mxu0 %v534
      %583 = vmatmul.mubr.bf16.gmra.mxu0 %v448
      %v584 = vpop.f32.mrf.mxu0
      %v585 = vadd.f32 %v421, %v584
      %v586 = vpop.f32.mrf.mxu0
      %v587 = vpop.f32.mrf.mxu0
      %v588 = vadd.f32 %v424, %v587
      %v589 = vpop.f32.mrf.mxu0
      %590 = vmatprep.mubr.bf16.mxu0 %v537
      %591 = vmatmul.mubr.bf16.gmra.mxu0 %v450
      %v592 = vpop.f32.mrf.mxu0
      %v593 = vadd.f32 %v429, %v592
      %v594 = vpop.f32.mrf.mxu0
      %v595 = vpop.f32.mrf.mxu0
      %v596 = vadd.f32 %v432, %v595
      %v597 = vpop.f32.mrf.mxu0
      %598 = vmatprep.mubr.bf16.mxu0 %v540
      %599 = vmatmul.mubr.bf16.gmra.mxu0 %v452
      %v600 = vpop.f32.mrf.mxu0
      %v601 = vadd.f32 %v437, %v600
      %v602 = vpop.f32.mrf.mxu0
      %v603 = vpop.f32.mrf.mxu0
      %v604 = vadd.f32 %v440, %v603
      %v605 = vpop.f32.mrf.mxu0
      %606 = vdwg.mxu0
      %v607 = vld [vmem:[%s192 + $0x10] sm:$0xff]
      %v608 = vld [vmem:[%s192 + $0x18] sm:$0xff]
      %v609 = vld [vmem:[%s192 + $0x20] sm:$0xff]
      %v610 = vld [vmem:[%s192 + $0x28] sm:$0xff]
      %v611 = vld [vmem:[%s192 + $0x30] sm:$0xff]
      %v612 = vld [vmem:[%s192 + $0x38] sm:$0xff]
      %v613 = vld [vmem:[%s192 + $0x40] sm:$0xff]
      %v614 = vld [vmem:[%s192 + $0x48] sm:$0xff]
      %s615 = scalar_lea.vmem %s1, 192
      %v616 = vld [vmem:[%s615] sm:$0xf]
      %v617 = vld [vmem:[%s615 + $0x4] sm:$0xf]
      %v618 = vld [vmem:[%s615 + $0x8] sm:$0xf]
      %v619 = vld [vmem:[%s615 + $0xc] sm:$0xf]
      %v620 = vld [vmem:[%s615 + $0x10] sm:$0xf]
      %v621 = vld [vmem:[%s615 + $0x14] sm:$0xf]
      %v622 = vld [vmem:[%s615 + $0x18] sm:$0xf]
      %v623 = vld [vmem:[%s615 + $0x1c] sm:$0xf]
      %v624 = vld [vmem:[%s615 + $0x20] sm:$0xf]
      %v625 = vld [vmem:[%s615 + $0x24] sm:$0xf]
      %v626 = vld [vmem:[%s615 + $0x28] sm:$0xf]
      %v627 = vld [vmem:[%s615 + $0x2c] sm:$0xf]
      %v628 = vld [vmem:[%s615 + $0x30] sm:$0xf]
      %v629 = vld [vmem:[%s615 + $0x34] sm:$0xf]
      %v630 = vld [vmem:[%s615 + $0x38] sm:$0xf]
      %v631 = vld [vmem:[%s615 + $0x3c] sm:$0xf]
      %v632 = vld [vmem:[%s615 + $0x40] sm:$0xf]
      %v633 = vld [vmem:[%s615 + $0x44] sm:$0xf]
      %v634 = vld [vmem:[%s615 + $0x48] sm:$0xf]
      %v635 = vld [vmem:[%s615 + $0x4c] sm:$0xf]
      %v636 = vld [vmem:[%s615 + $0x50] sm:$0xf]
      %v637 = vld [vmem:[%s615 + $0x54] sm:$0xf]
      %v638 = vld [vmem:[%s615 + $0x58] sm:$0xf]
      %v639 = vld [vmem:[%s615 + $0x5c] sm:$0xf]
      %v648 = vunpack.c.l.b16 %v607
      %v649 = vunpack.c.h.b16 %v607
      %v650 = vunpack.c.l.b16 %v608
      %v651 = vunpack.c.h.b16 %v608
      %v652 = vunpack.c.l.b16 %v609
      %v653 = vunpack.c.h.b16 %v609
      %v654 = vunpack.c.l.b16 %v610
      %v655 = vunpack.c.h.b16 %v610
      %v656 = vunpack.c.l.b16 %v611
      %v657 = vunpack.c.h.b16 %v611
      %v658 = vunpack.c.l.b16 %v612
      %v659 = vunpack.c.h.b16 %v612
      %v660 = vunpack.c.l.b16 %v613
      %v661 = vunpack.c.h.b16 %v613
      %v662 = vunpack.c.l.b16 %v614
      %v663 = vunpack.c.h.b16 %v614
      %v664 = vpack.c.b16 %v650, %v648
      %v665 = vpack.c.b16 %v651, %v649
      %v666 = vpack.c.b16 %v654, %v652
      %v667 = vpack.c.b16 %v655, %v653
      %v668 = vpack.c.b16 %v658, %v656
      %v669 = vpack.c.b16 %v659, %v657
      %v670 = vpack.c.b16 %v662, %v660
      %v671 = vpack.c.b16 %v663, %v661
      %v700 = vunpack.c.l.b16 %v616
      %v701 = vunpack.c.l.b16 %v617
      %v702 = vunpack.c.l.b16 %v618
      %v703 = vunpack.c.l.b16 %v619
      %v704 = vunpack.c.l.b16 %v620
      %v705 = vunpack.c.l.b16 %v621
      %v706 = vunpack.c.l.b16 %v622
      %v707 = vunpack.c.l.b16 %v623
      %v708 = vunpack.c.l.b16 %v624
      %v709 = vunpack.c.l.b16 %v625
      %v710 = vunpack.c.l.b16 %v626
      %v711 = vunpack.c.l.b16 %v627
      %v712 = vunpack.c.l.b16 %v628
      %v713 = vunpack.c.l.b16 %v629
      %v714 = vunpack.c.l.b16 %v630
      %v715 = vunpack.c.l.b16 %v631
      %v716 = vunpack.c.l.b16 %v632
      %v717 = vunpack.c.l.b16 %v633
      %v718 = vunpack.c.l.b16 %v634
      %v719 = vunpack.c.l.b16 %v635
      %v720 = vunpack.c.l.b16 %v636
      %v721 = vunpack.c.l.b16 %v637
      %v722 = vunpack.c.l.b16 %v638
      %v723 = vunpack.c.l.b16 %v639
      %v724 = vpack.c.b16 %v701, %v700
      %v725 = vpack.c.b16 %v703, %v702
      %v726 = vpack.c.b16 %v705, %v704
      %v727 = vpack.c.b16 %v707, %v706
      %v728 = vpack.c.b16 %v709, %v708
      %v729 = vpack.c.b16 %v711, %v710
      %v730 = vpack.c.b16 %v713, %v712
      %v731 = vpack.c.b16 %v715, %v714
      %v732 = vpack.c.b16 %v717, %v716
      %v733 = vpack.c.b16 %v719, %v718
      %v734 = vpack.c.b16 %v721, %v720
      %v735 = vpack.c.b16 %v723, %v722
      %v749 = vsel %vm365, %v665, 0
      %v752 = vsel %vm365, %v667, 0
      %v755 = vsel %vm365, %v669, 0
      %v758 = vsel %vm365, %v671, 0
      %760 = vmatprep.subr.bf16.mxu0 0
      %761 = vmatpush1.bf16.msra.mxu0 %v731
      %762 = vmatprep.subr.bf16.mxu0 0
      %763 = vmatpush1.bf16.msra.mxu0 %v730
      %764 = vmatprep.subr.bf16.mxu0 0
      %765 = vmatpush1.bf16.msra.mxu0 %v729
      %766 = vmatprep.subr.bf16.mxu0 0
      %767 = vmatpush1.bf16.msra.mxu0 %v728
      %768 = vmatprep.subr.bf16.mxu0 0
      %769 = vmatpush1.bf16.msra.mxu0 %v727
      %770 = vmatprep.subr.bf16.mxu0 0
      %771 = vmatpush1.bf16.msra.mxu0 %v726
      %772 = vmatprep.subr.bf16.mxu0 0
      %773 = vmatpush1.bf16.msra.mxu0 %v725
      %774 = vmatprep.subr.bf16.mxu0 0
      %775 = vmatpush1.bf16.msra.mxu0 %v724
      %776 = vmatprep.subr.bf16.mxu0 0
      %777 = vmatpush2.bf16.msra.mxu0 0
      %778 = vmatprep.subr.bf16.mxu0 0
      %779 = vmatpush2.bf16.msra.mxu0 0
      %780 = vmatprep.subr.bf16.mxu0 0
      %781 = vmatpush2.bf16.msra.mxu0 0
      %782 = vmatprep.subr.bf16.mxu0 0
      %783 = vmatpush2.bf16.msra.mxu0 0
      %784 = vmatprep.subr.bf16.mxu0 0
      %785 = vmatpush2.bf16.msra.mxu0 %v735
      %786 = vmatprep.subr.bf16.mxu0 0
      %787 = vmatpush2.bf16.msra.mxu0 %v734
      %788 = vmatprep.subr.bf16.mxu0 0
      %789 = vmatpush2.bf16.msra.mxu0 %v733
      %790 = vmatprep.subr.bf16.mxu0 0
      %791 = vmatpush2.bf16.msra.mxu0 %v732
      %792 = vmatprep.mubr.bf16.mxu0 %v749
      %793 = vmatmul.mubr.bf16.gmra.mxu0 %v664
      %v794 = vpop.f32.mrf.mxu0
      %v795 = vadd.f32 0.0, %v794
      %v796 = vpop.f32.mrf.mxu0
      %v797 = vpop.f32.mrf.mxu0
      %v798 = vadd.f32 0.0, %v797
      %v799 = vpop.f32.mrf.mxu0
      %800 = vmatprep.mubr.bf16.mxu0 %v752
      %801 = vmatmul.mubr.bf16.gmra.mxu0 %v666
      %v802 = vpop.f32.mrf.mxu0
      %v803 = vadd.f32 0.0, %v802
      %v804 = vpop.f32.mrf.mxu0
      %v805 = vpop.f32.mrf.mxu0
      %v806 = vadd.f32 0.0, %v805
      %v807 = vpop.f32.mrf.mxu0
      %808 = vmatprep.mubr.bf16.mxu0 %v755
      %809 = vmatmul.mubr.bf16.gmra.mxu0 %v668
      %v810 = vpop.f32.mrf.mxu0
      %v811 = vadd.f32 0.0, %v810
      %v812 = vpop.f32.mrf.mxu0
      %v813 = vpop.f32.mrf.mxu0
      %v814 = vadd.f32 0.0, %v813
      %v815 = vpop.f32.mrf.mxu0
      %816 = vmatprep.mubr.bf16.mxu0 %v758
      %817 = vmatmul.mubr.bf16.gmra.mxu0 %v670
      %v818 = vpop.f32.mrf.mxu0
      %v819 = vadd.f32 0.0, %v818
      %v820 = vpop.f32.mrf.mxu0
      %v821 = vpop.f32.mrf.mxu0
      %v822 = vadd.f32 0.0, %v821
      %v823 = vpop.f32.mrf.mxu0
      %824 = vdwg.mxu0
      %v825 = vadd.f32 %v577, %v795
      %v826 = vadd.f32 %v580, %v798
      %v827 = vadd.f32 %v585, %v803
      %v828 = vadd.f32 %v588, %v806
      %v829 = vadd.f32 %v593, %v811
      %v830 = vadd.f32 %v596, %v814
      %v831 = vadd.f32 %v601, %v819
      %v832 = vadd.f32 %v604, %v822
      %v833 = vld [vmem:[%s2] sm:$0x1]
      %v835 = vlaneseq
      %v836 = vshrl.u32 %v835, 7
      %v837 = vsub.s32 0, %v836
      %v838 = vrot.slane %v833, %v837
      %v840 = vmul.f32 %v825, %v838
      %v841 = vmul.f32 %v826, %v838
      %v842 = vmul.f32 %v827, %v838
      %v843 = vmul.f32 %v828, %v838
      %v844 = vmul.f32 %v829, %v838
      %v845 = vmul.f32 %v830, %v838
      %v846 = vmul.f32 %v831, %v838
      %v847 = vmul.f32 %v832, %v838
      %v848 = vld [vmem:[%s3] sm:$0x1]
      %v850 = vlaneseq
      %v851 = vshrl.u32 %v850, 7
      %v852 = vsub.s32 0, %v851
      %v853 = vrot.slane %v848, %v852
      %v855 = vadd.f32 %v840, %v853
      %v856 = vadd.f32 %v841, %v853
      %v857 = vadd.f32 %v842, %v853
      %v858 = vadd.f32 %v843, %v853
      %v859 = vadd.f32 %v844, %v853
      %v860 = vadd.f32 %v845, %v853
      %v861 = vadd.f32 %v846, %v853
      %v862 = vadd.f32 %v847, %v853
      %v863 = vmax.f32 %v855, 0.0
      %v864 = vmax.f32 %v856, 0.0
      %v865 = vmax.f32 %v857, 0.0
      %v866 = vmax.f32 %v858, 0.0
      %v867 = vmax.f32 %v859, 0.0
      %v868 = vmax.f32 %v860, 0.0
      %v869 = vmax.f32 %v861, 0.0
      %v870 = vmax.f32 %v862, 0.0
      %v871 = vpack.c.bf16 %v864, %v863
      %v872 = vpack.c.bf16 %v866, %v865
      %v873 = vpack.c.bf16 %v868, %v867
      %v874 = vpack.c.bf16 %v870, %v869
      %v879 = vunpack.c.l.b16 %v871
      %v880 = vunpack.c.h.b16 %v871
      %v881 = vunpack.c.l.b16 %v872
      %v882 = vunpack.c.h.b16 %v872
      %v883 = vunpack.c.l.b16 %v873
      %v884 = vunpack.c.h.b16 %v873
      %v885 = vunpack.c.l.b16 %v874
      %v886 = vunpack.c.h.b16 %v874
      %v887 = vpack.c.b16 %v879, %v879
      %v888 = vpack.c.b16 %v880, %v880
      %v889 = vpack.c.b16 %v881, %v881
      %v890 = vpack.c.b16 %v882, %v882
      %v891 = vpack.c.b16 %v883, %v883
      %v892 = vpack.c.b16 %v884, %v884
      %v893 = vpack.c.b16 %v885, %v885
      %v894 = vpack.c.b16 %v886, %v886
      %vm903 = vcmask 257024
      %904 = vst.msk [vmem:[%s197] sm:$0xf] %vm903, %v887
      %905 = vst.msk [vmem:[%s197 + $0x4] sm:$0xf] %vm903, %v888
      %906 = vst.msk [vmem:[%s197 + $0x8] sm:$0xf] %vm903, %v889
      %907 = vst.msk [vmem:[%s197 + $0xc] sm:$0xf] %vm903, %v890
      %908 = vst.msk [vmem:[%s197 + $0x10] sm:$0xf] %vm903, %v891
      %909 = vst.msk [vmem:[%s197 + $0x14] sm:$0xf] %vm903, %v892
      %910 = vst.msk [vmem:[%s197 + $0x18] sm:$0xf] %vm903, %v893
      %911 = vst.msk [vmem:[%s197 + $0x1c] sm:$0xf] %vm903, %v894
      %p912 = scmp.lt.s32.totalorder %s15, 1
      %s913 = scalar_select %p912, %s15, 1
      %s914 = smul.addr %s913, 8
      %s915 = smul.addr %s914, 4
      %s916 = scalar_lea.vmem %s4, %s915
      // Predicated region
      $region37: #{drunet_var_forward.22} parent=35 // pred_check
        %p917 = pneg %p122
      $region38: #{drunet_var_forward.22} parent=35 // pred_check_branch
        %919 = sbr.rel (%p917) target = $region40
      $region39: #{drunet_var_forward.22} parent=35 // pred_region
        _
      $region40: #{drunet_var_forward.22} parent=35 // pred_fallthru
        _
    $region36: #{drunet_var_forward.22} parent=5 // pred_fallthru
      _
    %p920 = scmp.le.s32.totalorder 2, %s10
    // Predicated region
    $region41: #{drunet_var_forward.22} parent=5 // pred_check
      %p921 = pneg %p920
    $region42: #{drunet_var_forward.22} parent=5 // pred_check_branch
      %923 = sbr.rel (%p921) target = $region44
    $region43: #{drunet_var_forward.22} parent=5 // pred_region
      %s924 = ssub.s32 %s10, 2
      // Predicated region
      $region45: #{drunet_var_forward.22} parent=43 // pred_check
        %p925 = pneg %p128
      $region46: #{drunet_var_forward.22} parent=43 // pred_check_branch
        %927 = sbr.rel (%p925) target = $region48
      $region47: #{drunet_var_forward.22} parent=43 // pred_region
        %p928 = scmp.lt.s32.totalorder %s16, 1
        %s929 = scalar_select %p928, %s16, 1
        %s930 = smul.addr %s929, 8
        %s931 = smul.addr %s930, 4
        %s932 = scalar_lea.vmem %s4, %s931
      $region48: #{drunet_var_forward.22} parent=43 // pred_fallthru
        _
    $region44: #{drunet_var_forward.22} parent=5 // pred_fallthru
      _
  $region6: #{drunet_var_forward.22} parent=0 // loop_footer
    %s14 = sadd.s32 1, %s10
  $region7: #{drunet_var_forward.22} parent=0 // loop_footer_branch
    %9 = sbr.rel target = $region3
  $region8: #{drunet_var_forward.22} parent=0 // loop_exit
    _

// kernel: drunet_var_forward.25
$region0: #{drunet_var_forward.25}
  #allocation0 [shape = 'u32[]', space=smem, size = 0x4, offset = 0x4, fixed_abs, tag = 'smem constant byte address 0x4 - core index']
  #allocation1 [shape = 'u32[144,128]{1,0:T(1,128)}', space=vmem, size = 0x12000, scoped, tag = 'internal scratch']
  %s0 = inlined_call_operand.vmem [shape: bf16[2,288,96], index: 0, kind: input, shape index: {}]
  %s1 = inlined_call_operand.vmem [shape: bf16[3,96,128], index: 1, kind: input, shape index: {}]
  %s2 = inlined_call_operand.vmem [shape: f32[1,128], index: 2, kind: input, shape index: {}]
  %s3 = inlined_call_operand.vmem [shape: f32[1,128], index: 3, kind: input, shape index: {}]
  %s4 = inlined_call_operand.vmem [shape: bf16[2,256,128], index: 4, kind: output, shape index: {}]
  %s5 = sld [smem:[#allocation0]]
  $region49: #{drunet_var_forward.25} parent=0
    _
  %s7 = ssub.s32 1, %s5
  %s8 = scalar_select 0, %s7, %s5
  loop: start=0, step=1, limit=4
  $region2: #{drunet_var_forward.25} parent=0 // loop_pre_header
    _
  $region3: #{drunet_var_forward.25} parent=0 // loop_header
    %s10 = sphi 0, %s14
    %p11 = scmp.ge.s32.totalorder %s10, 4
    %s20 = sphi 0, %s22
    %s23 = sphi 0, %s20
    %s24 = sphi 0, %s23
    %s40 = sphi 0, %s24
    %s44 = sphi 0, %s44
    %s46 = sphi 0, %s44
    %s47 = sphi 0, %s46
    %s61 = sphi 0, %s47
    %s65 = sphi 0, %s65
    %s67 = sphi 0, %s65
    %s68 = sphi 0, %s67
    %s82 = sphi 0, %s68
    %s86 = sphi 0, %s86
    %s88 = sphi 0, %s86
    %s89 = sphi 0, %s88
    %s103 = sphi 0, %s89
    %s109 = sphi 0, %s111
    %s112 = sphi 0, %s109
    %s113 = sphi 0, %s112
    %s129 = sphi 0, %s113
  $region4: #{drunet_var_forward.25} parent=0 // loop_header_branch
    %13 = sbr.rel (%p11) target = $region8
  $region5: #{drunet_var_forward.25} parent=0 // loop_body
    %s15 = ssub.s32 %s10, 1
    %s16 = ssub.s32 %s10, 2
    %s17 = sadd.s32 %s10, 1
    %s18 = ssub.s32 %s10, %s17
    %p19 = scmp.eq.s32.totalorder %s18, 0
    %s21 = sadd.s32 %s20, 1
    %s22 = scalar_select %p19, %s20, %s21
    %p25 = pneg %p19
    %p26 = scmp.eq.s32.totalorder %s10, 1
    %p27 = por %p25, %p26
    %p28 = scmp.ne.s32.totalorder %s20, %s23
    %p29 = scmp.eq.s32.totalorder %s10, 0
    %p30 = por %p28, %p29
    %p31 = scmp.ne.s32.totalorder %s20, %s23
    %p32 = scmp.eq.s32.totalorder %s15, 1
    %p33 = por %p31, %p32
    %p34 = scmp.ne.s32.totalorder %s23, %s24
    %p35 = scmp.eq.s32.totalorder %s15, 0
    %p36 = por %p34, %p35
    %p37 = scmp.ne.s32.totalorder %s23, %s24
    %p38 = scmp.eq.s32.totalorder %s16, 1
    %p39 = por %p37, %p38
    %p41 = scmp.ne.s32.totalorder %s24, %s40
    %p42 = scmp.eq.s32.totalorder %s16, 0
    %p43 = por %p41, %p42
    %s45 = sadd.s32 %s44, 1
    %p48 = scmp.eq.s32.totalorder %s10, 1
    %p49 = scmp.ne.s32.totalorder %s44, %s46
    %p50 = scmp.eq.s32.totalorder %s10, 0
    %p51 = por %p49, %p50
    %p52 = scmp.ne.s32.totalorder %s44, %s46
    %p53 = scmp.eq.s32.totalorder %s15, 1
    %p54 = por %p52, %p53
    %p55 = scmp.ne.s32.totalorder %s46, %s47
    %p56 = scmp.eq.s32.totalorder %s15, 0
    %p57 = por %p55, %p56
    %p58 = scmp.ne.s32.totalorder %s46, %s47
    %p59 = scmp.eq.s32.totalorder %s16, 1
    %p60 = por %p58, %p59
    %p62 = scmp.ne.s32.totalorder %s47, %s61
    %p63 = scmp.eq.s32.totalorder %s16, 0
    %p64 = por %p62, %p63
    %s66 = sadd.s32 %s65, 1
    %p69 = scmp.eq.s32.totalorder %s10, 1
    %p70 = scmp.ne.s32.totalorder %s65, %s67
    %p71 = scmp.eq.s32.totalorder %s10, 0
    %p72 = por %p70, %p71
    %p73 = scmp.ne.s32.totalorder %s65, %s67
    %p74 = scmp.eq.s32.totalorder %s15, 1
    %p75 = por %p73, %p74
    %p76 = scmp.ne.s32.totalorder %s67, %s68
    %p77 = scmp.eq.s32.totalorder %s15, 0
    %p78 = por %p76, %p77
    %p79 = scmp.ne.s32.totalorder %s67, %s68
    %p80 = scmp.eq.s32.totalorder %s16, 1
    %p81 = por %p79, %p80
    %p83 = scmp.ne.s32.totalorder %s68, %s82
    %p84 = scmp.eq.s32.totalorder %s16, 0
    %p85 = por %p83, %p84
    %s87 = sadd.s32 %s86, 1
    %p90 = scmp.eq.s32.totalorder %s10, 1
    %p91 = scmp.ne.s32.totalorder %s86, %s88
    %p92 = scmp.eq.s32.totalorder %s10, 0
    %p93 = por %p91, %p92
    %p94 = scmp.ne.s32.totalorder %s86, %s88
    %p95 = scmp.eq.s32.totalorder %s15, 1
    %p96 = por %p94, %p95
    %p97 = scmp.ne.s32.totalorder %s88, %s89
    %p98 = scmp.eq.s32.totalorder %s15, 0
    %p99 = por %p97, %p98
    %p100 = scmp.ne.s32.totalorder %s88, %s89
    %p101 = scmp.eq.s32.totalorder %s16, 1
    %p102 = por %p100, %p101
    %p104 = scmp.ne.s32.totalorder %s89, %s103
    %p105 = scmp.eq.s32.totalorder %s16, 0
    %p106 = por %p104, %p105
    %s107 = ssub.s32 %s10, %s17
    %p108 = scmp.eq.s32.totalorder %s107, 0
    %s110 = sadd.s32 %s109, 1
    %s111 = scalar_select %p108, %s109, %s110
    %p114 = pneg %p108
    %p115 = scmp.eq.s32.totalorder %s10, 1
    %p116 = por %p114, %p115
    %p117 = scmp.ne.s32.totalorder %s109, %s112
    %p118 = scmp.eq.s32.totalorder %s10, 0
    %p119 = por %p117, %p118
    %p120 = scmp.ne.s32.totalorder %s109, %s112
    %p121 = scmp.eq.s32.totalorder %s15, 1
    %p122 = por %p120, %p121
    %p123 = scmp.ne.s32.totalorder %s112, %s113
    %p124 = scmp.eq.s32.totalorder %s15, 0
    %p125 = por %p123, %p124
    %p126 = scmp.ne.s32.totalorder %s112, %s113
    %p127 = scmp.eq.s32.totalorder %s16, 1
    %p128 = por %p126, %p127
    %p130 = scmp.ne.s32.totalorder %s113, %s129
    %p131 = scmp.eq.s32.totalorder %s16, 0
    %p132 = por %p130, %p131
    %p133 = scmp.le.s32.totalorder 1, %s10
    %p134 = scmp.lt.s32.totalorder %s10, 3
    %p135 = pnand %p133, %p134
    %p136 = pneg %p135
    // Predicated region
    $region9: #{drunet_var_forward.25} parent=5 // pred_check
      _
    $region10: #{drunet_var_forward.25} parent=5 // pred_check_branch
      %138 = sbr.rel (%p135) target = $region12
    $region11: #{drunet_var_forward.25} parent=5 // pred_region
      %s139 = ssub.s32 %s10, 1
      // Predicated region
      $region13: #{drunet_var_forward.25} parent=11 // pred_check
        %p140 = pneg %p57
      $region14: #{drunet_var_forward.25} parent=11 // pred_check_branch
        %142 = sbr.rel (%p140) target = $region16
      $region15: #{drunet_var_forward.25} parent=11 // pred_region
        _
      $region16: #{drunet_var_forward.25} parent=11 // pred_fallthru
        _
      // Predicated region
      $region17: #{drunet_var_forward.25} parent=11 // pred_check
        %p143 = pneg %p78
      $region18: #{drunet_var_forward.25} parent=11 // pred_check_branch
        %145 = sbr.rel (%p143) target = $region20
      $region19: #{drunet_var_forward.25} parent=11 // pred_region
        _
      $region20: #{drunet_var_forward.25} parent=11 // pred_fallthru
        _
      // Predicated region
      $region21: #{drunet_var_forward.25} parent=11 // pred_check
        %p146 = pneg %p99
      $region22: #{drunet_var_forward.25} parent=11 // pred_check_branch
        %148 = sbr.rel (%p146) target = $region24
      $region23: #{drunet_var_forward.25} parent=11 // pred_region
        _
      $region24: #{drunet_var_forward.25} parent=11 // pred_fallthru
        _
    $region12: #{drunet_var_forward.25} parent=5 // pred_fallthru
      _
    %p149 = scmp.lt.s32.totalorder %s10, 2
    // Predicated region
    $region25: #{drunet_var_forward.25} parent=5 // pred_check
      %p150 = pneg %p149
    $region26: #{drunet_var_forward.25} parent=5 // pred_check_branch
      %152 = sbr.rel (%p150) target = $region28
    $region27: #{drunet_var_forward.25} parent=5 // pred_region
      // Predicated region
      $region29: #{drunet_var_forward.25} parent=27 // pred_check
        %p153 = pneg %p30
      $region30: #{drunet_var_forward.25} parent=27 // pred_check_branch
        %155 = sbr.rel (%p153) target = $region32
      $region31: #{drunet_var_forward.25} parent=27 // pred_region
        %p156 = scmp.lt.s32.totalorder %s10, 1
        %s157 = scalar_select %p156, %s10, 1
        %s158 = smul.addr %s157, 36
        %s159 = smul.addr %s158, 4
        %s160 = scalar_lea.vmem %s0, %s159
      $region32: #{drunet_var_forward.25} parent=27 // pred_fallthru
        _
    $region28: #{drunet_var_forward.25} parent=5 // pred_fallthru
      _
    %p161 = scmp.le.s32.totalorder 1, %s10
    %p162 = scmp.lt.s32.totalorder %s10, 3
    %p163 = pnand %p161, %p162
    %p164 = pneg %p163
    // Predicated region
    $region33: #{drunet_var_forward.25} parent=5 // pred_check
      _
    $region34: #{drunet_var_forward.25} parent=5 // pred_check_branch
      %166 = sbr.rel (%p163) target = $region36
    $region35: #{drunet_var_forward.25} parent=5 // pred_region
      %s167 = ssub.s32 %s10, 1
      %p168 = scmp.lt.s32.totalorder %s15, 1
      %s169 = scalar_select %p168, %s15, 1
      %s170 = smul.addr %s169, 36
      %s171 = smul.addr %s170, 4
      %s172 = scalar_lea.vmem %s0, %s171
      %p173 = pneg %p36
      %p174 = pneg %p33
      %p175 = pneg %p57
      %p176 = pneg %p54
      %p177 = pneg %p78
      %p178 = pneg %p75
      %p179 = pneg %p99
      %p180 = pneg %p96
      %p181 = pneg %p125
      %p182 = pneg %p122
      %p183 = scmp.lt.s32.totalorder %s15, 1
      %s184 = scalar_select %p183, %s15, 1
      %s185 = smul.addr %s184, 32
      %s186 = smul.addr %s185, 4
      %s187 = scalar_lea.vmem %s4, %s186
      %p188 = scmp.lt.s32.totalorder %s15, 1
      %s189 = scalar_select %p188, %s15, 1
      %s190 = smul.addr %s189, 36
      %s191 = smul.addr %s190, 4
      %s192 = scalar_lea.vmem %s0, %s191
      %p193 = scmp.lt.s32.totalorder %s15, 1
      %s194 = scalar_select %p193, %s15, 1
      %s195 = smul.addr %s194, 32
      %s196 = smul.addr %s195, 4
      %s197 = scalar_lea.vmem %s4, %s196
      %v199 = vld [vmem:[%s192] sm:$0xf]
      %v200 = vld [vmem:[%s192 + $0x4] sm:$0xf]
      %v201 = vld [vmem:[%s192 + $0x8] sm:$0xf]
      %v202 = vld [vmem:[%s192 + $0xc] sm:$0xf]
      %v203 = vld [vmem:[%s192 + $0x10] sm:$0xf]
      %v204 = vld [vmem:[%s192 + $0x14] sm:$0xf]
      %v205 = vld [vmem:[%s192 + $0x18] sm:$0xf]
      %v206 = vld [vmem:[%s192 + $0x1c] sm:$0xf]
      %v207 = vld [vmem:[%s192 + $0x20] sm:$0xf]
      %v208 = vld [vmem:[%s192 + $0x24] sm:$0xf]
      %v209 = vld [vmem:[%s192 + $0x28] sm:$0xf]
      %v210 = vld [vmem:[%s192 + $0x2c] sm:$0xf]
      %v211 = vld [vmem:[%s192 + $0x30] sm:$0xf]
      %v212 = vld [vmem:[%s192 + $0x34] sm:$0xf]
      %v213 = vld [vmem:[%s192 + $0x38] sm:$0xf]
      %v214 = vld [vmem:[%s192 + $0x3c] sm:$0xf]
      %v215 = vld [vmem:[%s192 + $0x40] sm:$0xf]
      %v216 = vld [vmem:[%s192 + $0x44] sm:$0xf]
      %v217 = vld [vmem:[%s192 + $0x48] sm:$0xf]
      %v218 = vld [vmem:[%s192 + $0x4c] sm:$0xf]
      %v219 = vld [vmem:[%s192 + $0x50] sm:$0xf]
      %v220 = vld [vmem:[%s192 + $0x54] sm:$0xf]
      %v221 = vld [vmem:[%s192 + $0x58] sm:$0xf]
      %v222 = vld [vmem:[%s192 + $0x5c] sm:$0xf]
      %v223 = vld [vmem:[%s192 + $0x60] sm:$0xf]
      %v224 = vld [vmem:[%s192 + $0x64] sm:$0xf]
      %v225 = vld [vmem:[%s192 + $0x68] sm:$0xf]
      %v226 = vld [vmem:[%s192 + $0x6c] sm:$0xf]
      %v227 = vld [vmem:[%s192 + $0x70] sm:$0xf]
      %v228 = vld [vmem:[%s192 + $0x74] sm:$0xf]
      %v229 = vld [vmem:[%s192 + $0x78] sm:$0xf]
      %v230 = vld [vmem:[%s192 + $0x7c] sm:$0xf]
      %v231 = vld [vmem:[%s1] sm:$0xf]
      %v232 = vld [vmem:[%s1 + $0x4] sm:$0xf]
      %v233 = vld [vmem:[%s1 + $0x8] sm:$0xf]
      %v234 = vld [vmem:[%s1 + $0xc] sm:$0xf]
      %v235 = vld [vmem:[%s1 + $0x10] sm:$0xf]
      %v236 = vld [vmem:[%s1 + $0x14] sm:$0xf]
      %v237 = vld [vmem:[%s1 + $0x18] sm:$0xf]
      %v238 = vld [vmem:[%s1 + $0x1c] sm:$0xf]
      %v239 = vld [vmem:[%s1 + $0x20] sm:$0xf]
      %v240 = vld [vmem:[%s1 + $0x24] sm:$0xf]
      %v241 = vld [vmem:[%s1 + $0x28] sm:$0xf]
      %v242 = vld [vmem:[%s1 + $0x2c] sm:$0xf]
      %v243 = vld [vmem:[%s192 + $0x80] sm:$0xf]
      %v244 = vld [vmem:[%s192 + $0x84] sm:$0xf]
      %s245 = scalar_lea.vmem %s1, 48
      %v246 = vld [vmem:[%s245] sm:$0xf]
      %v247 = vld [vmem:[%s245 + $0x4] sm:$0xf]
      %v248 = vld [vmem:[%s245 + $0x8] sm:$0xf]
      %v249 = vld [vmem:[%s245 + $0xc] sm:$0xf]
      %v250 = vld [vmem:[%s245 + $0x10] sm:$0xf]
      %v251 = vld [vmem:[%s245 + $0x14] sm:$0xf]
      %v252 = vld [vmem:[%s245 + $0x18] sm:$0xf]
      %v253 = vld [vmem:[%s245 + $0x1c] sm:$0xf]
      %v254 = vld [vmem:[%s245 + $0x20] sm:$0xf]
      %v255 = vld [vmem:[%s245 + $0x24] sm:$0xf]
      %v256 = vld [vmem:[%s245 + $0x28] sm:$0xf]
      %v257 = vld [vmem:[%s245 + $0x2c] sm:$0xf]
      %v290 = vunpack.c.l.b16 %v201
      %v291 = vunpack.c.l.b16 %v202
      %v292 = vunpack.c.l.b16 %v203
      %v293 = vunpack.c.l.b16 %v204
      %v294 = vunpack.c.l.b16 %v205
      %v295 = vunpack.c.l.b16 %v206
      %v296 = vunpack.c.l.b16 %v207
      %v297 = vunpack.c.l.b16 %v208
      %v298 = vunpack.c.l.b16 %v209
      %v299 = vunpack.c.l.b16 %v210
      %v300 = vunpack.c.l.b16 %v211
      %v301 = vunpack.c.l.b16 %v212
      %v302 = vunpack.c.l.b16 %v213
      %v303 = vunpack.c.l.b16 %v214
      %v304 = vunpack.c.l.b16 %v215
      %v305 = vunpack.c.l.b16 %v216
      %v306 = vunpack.c.l.b16 %v217
      %v307 = vunpack.c.l.b16 %v218
      %v308 = vunpack.c.l.b16 %v219
      %v309 = vunpack.c.l.b16 %v220
      %v310 = vunpack.c.l.b16 %v221
      %v311 = vunpack.c.l.b16 %v222
      %v312 = vunpack.c.l.b16 %v223
      %v313 = vunpack.c.l.b16 %v224
      %v314 = vunpack.c.l.b16 %v225
      %v315 = vunpack.c.l.b16 %v226
      %v316 = vunpack.c.l.b16 %v227
      %v317 = vunpack.c.l.b16 %v228
      %v318 = vunpack.c.l.b16 %v229
      %v319 = vunpack.c.l.b16 %v230
      %v320 = vunpack.c.l.b16 %v243
      %v321 = vunpack.c.l.b16 %v244
      %v322 = vpack.c.b16 %v291, %v290
      %v323 = vpack.c.b16 %v293, %v292
      %v324 = vpack.c.b16 %v295, %v294
      %v325 = vpack.c.b16 %v297, %v296
      %v326 = vpack.c.b16 %v299, %v298
      %v327 = vpack.c.b16 %v301, %v300
      %v328 = vpack.c.b16 %v303, %v302
      %v329 = vpack.c.b16 %v305, %v304
      %v330 = vpack.c.b16 %v307, %v306
      %v331 = vpack.c.b16 %v309, %v308
      %v332 = vpack.c.b16 %v311, %v310
      %v333 = vpack.c.b16 %v313, %v312
      %v334 = vpack.c.b16 %v315, %v314
      %v335 = vpack.c.b16 %v317, %v316
      %v336 = vpack.c.b16 %v319, %v318
      %v337 = vpack.c.b16 %v321, %v320
      %v350 = vunpack.c.l.b16 %v246
      %v351 = vunpack.c.l.b16 %v247
      %v352 = vunpack.c.l.b16 %v248
      %v353 = vunpack.c.l.b16 %v249
      %v354 = vunpack.c.l.b16 %v250
      %v355 = vunpack.c.l.b16 %v251
      %v356 = vunpack.c.l.b16 %v252
      %v357 = vunpack.c.l.b16 %v253
      %v358 = vunpack.c.l.b16 %v254
      %v359 = vunpack.c.l.b16 %v255
      %v360 = vunpack.c.l.b16 %v256
      %v361 = vunpack.c.l.b16 %v257
      %v362 = vpack.c.b16 %v351, %v350
      %v363 = vpack.c.b16 %v353, %v352
      %v364 = vpack.c.b16 %v355, %v354
      %v365 = vpack.c.b16 %v357, %v356
      %v366 = vpack.c.b16 %v359, %v358
      %v367 = vpack.c.b16 %v361, %v360
      %vm374 = vcmask 785408
      %v376 = vsel %vm374, %v322, 0
      %v379 = vsel %vm374, %v323, 0
      %v382 = vsel %vm374, %v324, 0
      %v385 = vsel %vm374, %v325, 0
      %v388 = vsel %vm374, %v326, 0
      %v391 = vsel %vm374, %v327, 0
      %v394 = vsel %vm374, %v328, 0
      %v397 = vsel %vm374, %v329, 0
      %v400 = vsel %vm374, %v330, 0
      %v403 = vsel %vm374, %v331, 0
      %v406 = vsel %vm374, %v332, 0
      %v409 = vsel %vm374, %v333, 0
      %v412 = vsel %vm374, %v334, 0
      %v415 = vsel %vm374, %v335, 0
      %v418 = vsel %vm374, %v336, 0
      %v421 = vsel %vm374, %v337, 0
      %423 = vmatprep.subr.bf16.mxu0 0
      %424 = vmatpush1.bf16.msra.mxu0 0
      %425 = vmatprep.subr.bf16.mxu0 0
      %426 = vmatpush1.bf16.msra.mxu0 0
      %427 = vmatprep.subr.bf16.mxu0 0
      %428 = vmatpush1.bf16.msra.mxu0 %v367
      %429 = vmatprep.subr.bf16.mxu0 0
      %430 = vmatpush1.bf16.msra.mxu0 %v366
      %431 = vmatprep.subr.bf16.mxu0 0
      %432 = vmatpush1.bf16.msra.mxu0 %v365
      %433 = vmatprep.subr.bf16.mxu0 0
      %434 = vmatpush1.bf16.msra.mxu0 %v364
      %435 = vmatprep.subr.bf16.mxu0 0
      %436 = vmatpush1.bf16.msra.mxu0 %v363
      %437 = vmatprep.subr.bf16.mxu0 0
      %438 = vmatpush1.bf16.msra.mxu0 %v362
      %439 = vmatprep.subr.bf16.mxu0 0
      %440 = vmatpush2.bf16.msra.mxu0 0
      %441 = vmatprep.subr.bf16.mxu0 0
      %442 = vmatpush2.bf16.msra.mxu0 0
      %443 = vmatprep.subr.bf16.mxu0 0
      %444 = vmatpush2.bf16.msra.mxu0 0
      %445 = vmatprep.subr.bf16.mxu0 0
      %446 = vmatpush2.bf16.msra.mxu0 0
      %447 = vmatprep.subr.bf16.mxu0 0
      %448 = vmatpush2.bf16.msra.mxu0 0
      %449 = vmatprep.subr.bf16.mxu0 0
      %450 = vmatpush2.bf16.msra.mxu0 0
      %451 = vmatprep.subr.bf16.mxu0 0
      %452 = vmatpush2.bf16.msra.mxu0 0
      %453 = vmatprep.subr.bf16.mxu0 0
      %454 = vmatpush2.bf16.msra.mxu0 0
      %455 = vmatprep.mubr.bf16.mxu0 0
      %456 = vmatmul.mubr.bf16.gmra.mxu0 %v376
      %v457 = vpop.f32.mrf.mxu0
      %v458 = vadd.f32 0.0, %v457
      %v459 = vpop.f32.mrf.mxu0
      %v460 = vpop.f32.mrf.mxu0
      %v461 = vadd.f32 0.0, %v460
      %v462 = vpop.f32.mrf.mxu0
      %463 = vmatprep.mubr.bf16.mxu0 0
      %464 = vmatmul.mubr.bf16.gmra.mxu0 %v379
      %v465 = vpop.f32.mrf.mxu0
      %v466 = vadd.f32 0.0, %v465
      %v467 = vpop.f32.mrf.mxu0
      %v468 = vpop.f32.mrf.mxu0
      %v469 = vadd.f32 0.0, %v468
      %v470 = vpop.f32.mrf.mxu0
      %471 = vmatprep.mubr.bf16.mxu0 0
      %472 = vmatmul.mubr.bf16.gmra.mxu0 %v382
      %v473 = vpop.f32.mrf.mxu0
      %v474 = vadd.f32 0.0, %v473
      %v475 = vpop.f32.mrf.mxu0
      %v476 = vpop.f32.mrf.mxu0
      %v477 = vadd.f32 0.0, %v476
      %v478 = vpop.f32.mrf.mxu0
      %479 = vmatprep.mubr.bf16.mxu0 0
      %480 = vmatmul.mubr.bf16.gmra.mxu0 %v385
      %v481 = vpop.f32.mrf.mxu0
      %v482 = vadd.f32 0.0, %v481
      %v483 = vpop.f32.mrf.mxu0
      %v484 = vpop.f32.mrf.mxu0
      %v485 = vadd.f32 0.0, %v484
      %v486 = vpop.f32.mrf.mxu0
      %487 = vmatprep.mubr.bf16.mxu0 0
      %488 = vmatmul.mubr.bf16.gmra.mxu0 %v388
      %v489 = vpop.f32.mrf.mxu0
      %v490 = vadd.f32 0.0, %v489
      %v491 = vpop.f32.mrf.mxu0
      %v492 = vpop.f32.mrf.mxu0
      %v493 = vadd.f32 0.0, %v492
      %v494 = vpop.f32.mrf.mxu0
      %495 = vmatprep.mubr.bf16.mxu0 0
      %496 = vmatmul.mubr.bf16.gmra.mxu0 %v391
      %v497 = vpop.f32.mrf.mxu0
      %v498 = vadd.f32 0.0, %v497
      %v499 = vpop.f32.mrf.mxu0
      %v500 = vpop.f32.mrf.mxu0
      %v501 = vadd.f32 0.0, %v500
      %v502 = vpop.f32.mrf.mxu0
      %503 = vmatprep.mubr.bf16.mxu0 0
      %504 = vmatmul.mubr.bf16.gmra.mxu0 %v394
      %v505 = vpop.f32.mrf.mxu0
      %v506 = vadd.f32 0.0, %v505
      %v507 = vpop.f32.mrf.mxu0
      %v508 = vpop.f32.mrf.mxu0
      %v509 = vadd.f32 0.0, %v508
      %v510 = vpop.f32.mrf.mxu0
      %511 = vmatprep.mubr.bf16.mxu0 0
      %512 = vmatmul.mubr.bf16.gmra.mxu0 %v397
      %v513 = vpop.f32.mrf.mxu0
      %v514 = vadd.f32 0.0, %v513
      %v515 = vpop.f32.mrf.mxu0
      %v516 = vpop.f32.mrf.mxu0
      %v517 = vadd.f32 0.0, %v516
      %v518 = vpop.f32.mrf.mxu0
      %519 = vmatprep.mubr.bf16.mxu0 0
      %520 = vmatmul.mubr.bf16.gmra.mxu0 %v400
      %v521 = vpop.f32.mrf.mxu0
      %v522 = vadd.f32 0.0, %v521
      %v523 = vpop.f32.mrf.mxu0
      %v524 = vpop.f32.mrf.mxu0
      %v525 = vadd.f32 0.0, %v524
      %v526 = vpop.f32.mrf.mxu0
      %527 = vmatprep.mubr.bf16.mxu0 0
      %528 = vmatmul.mubr.bf16.gmra.mxu0 %v403
      %v529 = vpop.f32.mrf.mxu0
      %v530 = vadd.f32 0.0, %v529
      %v531 = vpop.f32.mrf.mxu0
      %v532 = vpop.f32.mrf.mxu0
      %v533 = vadd.f32 0.0, %v532
      %v534 = vpop.f32.mrf.mxu0
      %535 = vmatprep.mubr.bf16.mxu0 0
      %536 = vmatmul.mubr.bf16.gmra.mxu0 %v406
      %v537 = vpop.f32.mrf.mxu0
      %v538 = vadd.f32 0.0, %v537
      %v539 = vpop.f32.mrf.mxu0
      %v540 = vpop.f32.mrf.mxu0
      %v541 = vadd.f32 0.0, %v540
      %v542 = vpop.f32.mrf.mxu0
      %543 = vmatprep.mubr.bf16.mxu0 0
      %544 = vmatmul.mubr.bf16.gmra.mxu0 %v409
      %v545 = vpop.f32.mrf.mxu0
      %v546 = vadd.f32 0.0, %v545
      %v547 = vpop.f32.mrf.mxu0
      %v548 = vpop.f32.mrf.mxu0
      %v549 = vadd.f32 0.0, %v548
      %v550 = vpop.f32.mrf.mxu0
      %551 = vmatprep.mubr.bf16.mxu0 0
      %552 = vmatmul.mubr.bf16.gmra.mxu0 %v412
      %v553 = vpop.f32.mrf.mxu0
      %v554 = vadd.f32 0.0, %v553
      %v555 = vpop.f32.mrf.mxu0
      %v556 = vpop.f32.mrf.mxu0
      %v557 = vadd.f32 0.0, %v556
      %v558 = vpop.f32.mrf.mxu0
      %559 = vmatprep.mubr.bf16.mxu0 0
      %560 = vmatmul.mubr.bf16.gmra.mxu0 %v415
      %v561 = vpop.f32.mrf.mxu0
      %v562 = vadd.f32 0.0, %v561
      %v563 = vpop.f32.mrf.mxu0
      %v564 = vpop.f32.mrf.mxu0
      %v565 = vadd.f32 0.0, %v564
      %v566 = vpop.f32.mrf.mxu0
      %567 = vmatprep.mubr.bf16.mxu0 0
      %568 = vmatmul.mubr.bf16.gmra.mxu0 %v418
      %v569 = vpop.f32.mrf.mxu0
      %v570 = vadd.f32 0.0, %v569
      %v571 = vpop.f32.mrf.mxu0
      %v572 = vpop.f32.mrf.mxu0
      %v573 = vadd.f32 0.0, %v572
      %v574 = vpop.f32.mrf.mxu0
      %575 = vmatprep.mubr.bf16.mxu0 0
      %576 = vmatmul.mubr.bf16.gmra.mxu0 %v421
      %v577 = vpop.f32.mrf.mxu0
      %v578 = vadd.f32 0.0, %v577
      %v579 = vpop.f32.mrf.mxu0
      %v580 = vpop.f32.mrf.mxu0
      %v581 = vadd.f32 0.0, %v580
      %v582 = vpop.f32.mrf.mxu0
      %583 = vdwg.mxu0
      %v586 = vunpack.c.l.b16 %v199
      %v587 = vunpack.c.l.b16 %v200
      %v588 = vpack.c.b16 %v587, %v586
      %v601 = vunpack.c.l.b16 %v231
      %v602 = vunpack.c.l.b16 %v232
      %v603 = vunpack.c.l.b16 %v233
      %v604 = vunpack.c.l.b16 %v234
      %v605 = vunpack.c.l.b16 %v235
      %v606 = vunpack.c.l.b16 %v236
      %v607 = vunpack.c.l.b16 %v237
      %v608 = vunpack.c.l.b16 %v238
      %v609 = vunpack.c.l.b16 %v239
      %v610 = vunpack.c.l.b16 %v240
      %v611 = vunpack.c.l.b16 %v241
      %v612 = vunpack.c.l.b16 %v242
      %v613 = vpack.c.b16 %v602, %v601
      %v614 = vpack.c.b16 %v604, %v603
      %v615 = vpack.c.b16 %v606, %v605
      %v616 = vpack.c.b16 %v608, %v607
      %v617 = vpack.c.b16 %v610, %v609
      %v618 = vpack.c.b16 %v612, %v611
      %v626 = vsel %vm374, %v588, 0
      %628 = vmatprep.subr.bf16.mxu0 0
      %629 = vmatpush1.bf16.msra.mxu0 0
      %630 = vmatprep.subr.bf16.mxu0 0
      %631 = vmatpush1.bf16.msra.mxu0 0
      %632 = vmatprep.subr.bf16.mxu0 0
      %633 = vmatpush1.bf16.msra.mxu0 %v618
      %634 = vmatprep.subr.bf16.mxu0 0
      %635 = vmatpush1.bf16.msra.mxu0 %v617
      %636 = vmatprep.subr.bf16.mxu0 0
      %637 = vmatpush1.bf16.msra.mxu0 %v616
      %638 = vmatprep.subr.bf16.mxu0 0
      %639 = vmatpush1.bf16.msra.mxu0 %v615
      %640 = vmatprep.subr.bf16.mxu0 0
      %641 = vmatpush1.bf16.msra.mxu0 %v614
      %642 = vmatprep.subr.bf16.mxu0 0
      %643 = vmatpush1.bf16.msra.mxu0 %v613
      %644 = vmatprep.subr.bf16.mxu0 0
      %645 = vmatpush2.bf16.msra.mxu0 0
      %646 = vmatprep.subr.bf16.mxu0 0
      %647 = vmatpush2.bf16.msra.mxu0 0
      %648 = vmatprep.subr.bf16.mxu0 0
      %649 = vmatpush2.bf16.msra.mxu0 0
      %650 = vmatprep.subr.bf16.mxu0 0
      %651 = vmatpush2.bf16.msra.mxu0 0
      %652 = vmatprep.subr.bf16.mxu0 0
      %653 = vmatpush2.bf16.msra.mxu0 0
      %654 = vmatprep.subr.bf16.mxu0 0
      %655 = vmatpush2.bf16.msra.mxu0 0
      %656 = vmatprep.subr.bf16.mxu0 0
      %657 = vmatpush2.bf16.msra.mxu0 0
      %658 = vmatprep.subr.bf16.mxu0 0
      %659 = vmatpush2.bf16.msra.mxu0 0
      %660 = vmatprep.mubr.bf16.mxu0 0
      %661 = vmatmul.mubr.bf16.gmra.mxu0 %v626
      %v662 = vpop.f32.mrf.mxu0
      %v663 = vadd.f32 %v458, %v662
      %v664 = vpop.f32.mrf.mxu0
      %v665 = vpop.f32.mrf.mxu0
      %v666 = vadd.f32 %v461, %v665
      %v667 = vpop.f32.mrf.mxu0
      %668 = vmatprep.mubr.bf16.mxu0 0
      %669 = vmatmul.mubr.bf16.gmra.mxu0 %v376
      %v670 = vpop.f32.mrf.mxu0
      %v671 = vadd.f32 %v466, %v670
      %v672 = vpop.f32.mrf.mxu0
      %v673 = vpop.f32.mrf.mxu0
      %v674 = vadd.f32 %v469, %v673
      %v675 = vpop.f32.mrf.mxu0
      %676 = vmatprep.mubr.bf16.mxu0 0
      %677 = vmatmul.mubr.bf16.gmra.mxu0 %v379
      %v678 = vpop.f32.mrf.mxu0
      %v679 = vadd.f32 %v474, %v678
      %v680 = vpop.f32.mrf.mxu0
      %v681 = vpop.f32.mrf.mxu0
      %v682 = vadd.f32 %v477, %v681
      %v683 = vpop.f32.mrf.mxu0
      %684 = vmatprep.mubr.bf16.mxu0 0
      %685 = vmatmul.mubr.bf16.gmra.mxu0 %v382
      %v686 = vpop.f32.mrf.mxu0
      %v687 = vadd.f32 %v482, %v686
      %v688 = vpop.f32.mrf.mxu0
      %v689 = vpop.f32.mrf.mxu0
      %v690 = vadd.f32 %v485, %v689
      %v691 = vpop.f32.mrf.mxu0
      %692 = vmatprep.mubr.bf16.mxu0 0
      %693 = vmatmul.mubr.bf16.gmra.mxu0 %v385
      %v694 = vpop.f32.mrf.mxu0
      %v695 = vadd.f32 %v490, %v694
      %v696 = vpop.f32.mrf.mxu0
      %v697 = vpop.f32.mrf.mxu0
      %v698 = vadd.f32 %v493, %v697
      %v699 = vpop.f32.mrf.mxu0
      %700 = vmatprep.mubr.bf16.mxu0 0
      %701 = vmatmul.mubr.bf16.gmra.mxu0 %v388
      %v702 = vpop.f32.mrf.mxu0
      %v703 = vadd.f32 %v498, %v702
      %v704 = vpop.f32.mrf.mxu0
      %v705 = vpop.f32.mrf.mxu0
      %v706 = vadd.f32 %v501, %v705
      %v707 = vpop.f32.mrf.mxu0
      %708 = vmatprep.mubr.bf16.mxu0 0
      %709 = vmatmul.mubr.bf16.gmra.mxu0 %v391
      %v710 = vpop.f32.mrf.mxu0
      %v711 = vadd.f32 %v506, %v710
      %v712 = vpop.f32.mrf.mxu0
      %v713 = vpop.f32.mrf.mxu0
      %v714 = vadd.f32 %v509, %v713
      %v715 = vpop.f32.mrf.mxu0
      %716 = vmatprep.mubr.bf16.mxu0 0
      %717 = vmatmul.mubr.bf16.gmra.mxu0 %v394
      %v718 = vpop.f32.mrf.mxu0
      %v719 = vadd.f32 %v514, %v718
      %v720 = vpop.f32.mrf.mxu0
      %v721 = vpop.f32.mrf.mxu0
      %v722 = vadd.f32 %v517, %v721
      %v723 = vpop.f32.mrf.mxu0
      %724 = vmatprep.mubr.bf16.mxu0 0
      %725 = vmatmul.mubr.bf16.gmra.mxu0 %v397
      %v726 = vpop.f32.mrf.mxu0
      %v727 = vadd.f32 %v522, %v726
      %v728 = vpop.f32.mrf.mxu0
      %v729 = vpop.f32.mrf.mxu0
      %v730 = vadd.f32 %v525, %v729
      %v731 = vpop.f32.mrf.mxu0
      %732 = vmatprep.mubr.bf16.mxu0 0
      %733 = vmatmul.mubr.bf16.gmra.mxu0 %v400
      %v734 = vpop.f32.mrf.mxu0
      %v735 = vadd.f32 %v530, %v734
      %v736 = vpop.f32.mrf.mxu0
      %v737 = vpop.f32.mrf.mxu0
      %v738 = vadd.f32 %v533, %v737
      %v739 = vpop.f32.mrf.mxu0
      %740 = vmatprep.mubr.bf16.mxu0 0
      %741 = vmatmul.mubr.bf16.gmra.mxu0 %v403
      %v742 = vpop.f32.mrf.mxu0
      %v743 = vadd.f32 %v538, %v742
      %v744 = vpop.f32.mrf.mxu0
      %v745 = vpop.f32.mrf.mxu0
      %v746 = vadd.f32 %v541, %v745
      %v747 = vpop.f32.mrf.mxu0
      %748 = vmatprep.mubr.bf16.mxu0 0
      %749 = vmatmul.mubr.bf16.gmra.mxu0 %v406
      %v750 = vpop.f32.mrf.mxu0
      %v751 = vadd.f32 %v546, %v750
      %v752 = vpop.f32.mrf.mxu0
      %v753 = vpop.f32.mrf.mxu0
      %v754 = vadd.f32 %v549, %v753
      %v755 = vpop.f32.mrf.mxu0
      %756 = vmatprep.mubr.bf16.mxu0 0
      %757 = vmatmul.mubr.bf16.gmra.mxu0 %v409
      %v758 = vpop.f32.mrf.mxu0
      %v759 = vadd.f32 %v554, %v758
      %v760 = vpop.f32.mrf.mxu0
      %v761 = vpop.f32.mrf.mxu0
      %v762 = vadd.f32 %v557, %v761
      %v763 = vpop.f32.mrf.mxu0
      %764 = vmatprep.mubr.bf16.mxu0 0
      %765 = vmatmul.mubr.bf16.gmra.mxu0 %v412
      %v766 = vpop.f32.mrf.mxu0
      %v767 = vadd.f32 %v562, %v766
      %v768 = vpop.f32.mrf.mxu0
      %v769 = vpop.f32.mrf.mxu0
      %v770 = vadd.f32 %v565, %v769
      %v771 = vpop.f32.mrf.mxu0
      %772 = vmatprep.mubr.bf16.mxu0 0
      %773 = vmatmul.mubr.bf16.gmra.mxu0 %v415
      %v774 = vpop.f32.mrf.mxu0
      %v775 = vadd.f32 %v570, %v774
      %v776 = vpop.f32.mrf.mxu0
      %v777 = vpop.f32.mrf.mxu0
      %v778 = vadd.f32 %v573, %v777
      %v779 = vpop.f32.mrf.mxu0
      %780 = vmatprep.mubr.bf16.mxu0 0
      %781 = vmatmul.mubr.bf16.gmra.mxu0 %v418
      %v782 = vpop.f32.mrf.mxu0
      %v783 = vadd.f32 %v578, %v782
      %v784 = vpop.f32.mrf.mxu0
      %v785 = vpop.f32.mrf.mxu0
      %v786 = vadd.f32 %v581, %v785
      %v787 = vpop.f32.mrf.mxu0
      %788 = vdwg.mxu0
      %v789 = vld [vmem:[%s192 + $0x10] sm:$0xf]
      %v790 = vld [vmem:[%s192 + $0x14] sm:$0xf]
      %v791 = vld [vmem:[%s192 + $0x18] sm:$0xf]
      %v792 = vld [vmem:[%s192 + $0x1c] sm:$0xf]
      %v793 = vld [vmem:[%s192 + $0x20] sm:$0xf]
      %v794 = vld [vmem:[%s192 + $0x24] sm:$0xf]
      %v795 = vld [vmem:[%s192 + $0x28] sm:$0xf]
      %v796 = vld [vmem:[%s192 + $0x2c] sm:$0xf]
      %v797 = vld [vmem:[%s192 + $0x30] sm:$0xf]
      %v798 = vld [vmem:[%s192 + $0x34] sm:$0xf]
      %v799 = vld [vmem:[%s192 + $0x38] sm:$0xf]
      %v800 = vld [vmem:[%s192 + $0x3c] sm:$0xf]
      %v801 = vld [vmem:[%s192 + $0x40] sm:$0xf]
      %v802 = vld [vmem:[%s192 + $0x44] sm:$0xf]
      %v803 = vld [vmem:[%s192 + $0x48] sm:$0xf]
      %v804 = vld [vmem:[%s192 + $0x4c] sm:$0xf]
      %v805 = vld [vmem:[%s192 + $0x50] sm:$0xf]
      %v806 = vld [vmem:[%s192 + $0x54] sm:$0xf]
      %v807 = vld [vmem:[%s192 + $0x58] sm:$0xf]
      %v808 = vld [vmem:[%s192 + $0x5c] sm:$0xf]
      %v809 = vld [vmem:[%s192 + $0x60] sm:$0xf]
      %v810 = vld [vmem:[%s192 + $0x64] sm:$0xf]
      %v811 = vld [vmem:[%s192 + $0x68] sm:$0xf]
      %v812 = vld [vmem:[%s192 + $0x6c] sm:$0xf]
      %v813 = vld [vmem:[%s192 + $0x70] sm:$0xf]
      %v814 = vld [vmem:[%s192 + $0x74] sm:$0xf]
      %v815 = vld [vmem:[%s192 + $0x78] sm:$0xf]
      %v816 = vld [vmem:[%s192 + $0x7c] sm:$0xf]
      %v817 = vld [vmem:[%s192 + $0x80] sm:$0xf]
      %v818 = vld [vmem:[%s192 + $0x84] sm:$0xf]
      %v819 = vld [vmem:[%s192 + $0x88] sm:$0xf]
      %v820 = vld [vmem:[%s192 + $0x8c] sm:$0xf]
      %s821 = scalar_lea.vmem %s1, 96
      %v822 = vld [vmem:[%s821] sm:$0xf]
      %v823 = vld [vmem:[%s821 + $0x4] sm:$0xf]
      %v824 = vld [vmem:[%s821 + $0x8] sm:$0xf]
      %v825 = vld [vmem:[%s821 + $0xc] sm:$0xf]
      %v826 = vld [vmem:[%s821 + $0x10] sm:$0xf]
      %v827 = vld [vmem:[%s821 + $0x14] sm:$0xf]
      %v828 = vld [vmem:[%s821 + $0x18] sm:$0xf]
      %v829 = vld [vmem:[%s821 + $0x1c] sm:$0xf]
      %v830 = vld [vmem:[%s821 + $0x20] sm:$0xf]
      %v831 = vld [vmem:[%s821 + $0x24] sm:$0xf]
      %v832 = vld [vmem:[%s821 + $0x28] sm:$0xf]
      %v833 = vld [vmem:[%s821 + $0x2c] sm:$0xf]
      %v866 = vunpack.c.l.b16 %v789
      %v867 = vunpack.c.l.b16 %v790
      %v868 = vunpack.c.l.b16 %v791
      %v869 = vunpack.c.l.b16 %v792
      %v870 = vunpack.c.l.b16 %v793
      %v871 = vunpack.c.l.b16 %v794
      %v872 = vunpack.c.l.b16 %v795
      %v873 = vunpack.c.l.b16 %v796
      %v874 = vunpack.c.l.b16 %v797
      %v875 = vunpack.c.l.b16 %v798
      %v876 = vunpack.c.l.b16 %v799
      %v877 = vunpack.c.l.b16 %v800
      %v878 = vunpack.c.l.b16 %v801
      %v879 = vunpack.c.l.b16 %v802
      %v880 = vunpack.c.l.b16 %v803
      %v881 = vunpack.c.l.b16 %v804
      %v882 = vunpack.c.l.b16 %v805
      %v883 = vunpack.c.l.b16 %v806
      %v884 = vunpack.c.l.b16 %v807
      %v885 = vunpack.c.l.b16 %v808
      %v886 = vunpack.c.l.b16 %v809
      %v887 = vunpack.c.l.b16 %v810
      %v888 = vunpack.c.l.b16 %v811
      %v889 = vunpack.c.l.b16 %v812
      %v890 = vunpack.c.l.b16 %v813
      %v891 = vunpack.c.l.b16 %v814
      %v892 = vunpack.c.l.b16 %v815
      %v893 = vunpack.c.l.b16 %v816
      %v894 = vunpack.c.l.b16 %v817
      %v895 = vunpack.c.l.b16 %v818
      %v896 = vunpack.c.l.b16 %v819
      %v897 = vunpack.c.l.b16 %v820
      %v898 = vpack.c.b16 %v867, %v866
      %v899 = vpack.c.b16 %v869, %v868
      %v900 = vpack.c.b16 %v871, %v870
      %v901 = vpack.c.b16 %v873, %v872
      %v902 = vpack.c.b16 %v875, %v874
      %v903 = vpack.c.b16 %v877, %v876
      %v904 = vpack.c.b16 %v879, %v878
      %v905 = vpack.c.b16 %v881, %v880
      %v906 = vpack.c.b16 %v883, %v882
      %v907 = vpack.c.b16 %v885, %v884
      %v908 = vpack.c.b16 %v887, %v886
      %v909 = vpack.c.b16 %v889, %v888
      %v910 = vpack.c.b16 %v891, %v890
      %v911 = vpack.c.b16 %v893, %v892
      %v912 = vpack.c.b16 %v895, %v894
      %v913 = vpack.c.b16 %v897, %v896
      %v926 = vunpack.c.l.b16 %v822
      %v927 = vunpack.c.l.b16 %v823
      %v928 = vunpack.c.l.b16 %v824
      %v929 = vunpack.c.l.b16 %v825
      %v930 = vunpack.c.l.b16 %v826
      %v931 = vunpack.c.l.b16 %v827
      %v932 = vunpack.c.l.b16 %v828
      %v933 = vunpack.c.l.b16 %v829
      %v934 = vunpack.c.l.b16 %v830
      %v935 = vunpack.c.l.b16 %v831
      %v936 = vunpack.c.l.b16 %v832
      %v937 = vunpack.c.l.b16 %v833
      %v938 = vpack.c.b16 %v927, %v926
      %v939 = vpack.c.b16 %v929, %v928
      %v940 = vpack.c.b16 %v931, %v930
      %v941 = vpack.c.b16 %v933, %v932
      %v942 = vpack.c.b16 %v935, %v934
      %v943 = vpack.c.b16 %v937, %v936
      %v951 = vsel %vm374, %v898, 0
      %v954 = vsel %vm374, %v899, 0
      %v957 = vsel %vm374, %v900, 0
      %v960 = vsel %vm374, %v901, 0
      %v963 = vsel %vm374, %v902, 0
      %v966 = vsel %vm374, %v903, 0
      %v969 = vsel %vm374, %v904, 0
      %v972 = vsel %vm374, %v905, 0
      %v975 = vsel %vm374, %v906, 0
      %v978 = vsel %vm374, %v907, 0
      %v981 = vsel %vm374, %v908, 0
      %v984 = vsel %vm374, %v909, 0
      %v987 = vsel %vm374, %v910, 0
      %v990 = vsel %vm374, %v911, 0
      %v993 = vsel %vm374, %v912, 0
      %v996 = vsel %vm374, %v913, 0
      %998 = vmatprep.subr.bf16.mxu0 0
      %999 = vmatpush1.bf16.msra.mxu0 0
      %1000 = vmatprep.subr.bf16.mxu0 0
      %1001 = vmatpush1.bf16.msra.mxu0 0
      %1002 = vmatprep.subr.bf16.mxu0 0
      %1003 = vmatpush1.bf16.msra.mxu0 %v943
      %1004 = vmatprep.subr.bf16.mxu0 0
      %1005 = vmatpush1.bf16.msra.mxu0 %v942
      %1006 = vmatprep.subr.bf16.mxu0 0
      %1007 = vmatpush1.bf16.msra.mxu0 %v941
      %1008 = vmatprep.subr.bf16.mxu0 0
      %1009 = vmatpush1.bf16.msra.mxu0 %v940
      %1010 = vmatprep.subr.bf16.mxu0 0
      %1011 = vmatpush1.bf16.msra.mxu0 %v939
      %1012 = vmatprep.subr.bf16.mxu0 0
      %1013 = vmatpush1.bf16.msra.mxu0 %v938
      %1014 = vmatprep.subr.bf16.mxu0 0
      %1015 = vmatpush2.bf16.msra.mxu0 0
      %1016 = vmatprep.subr.bf16.mxu0 0
      %1017 = vmatpush2.bf16.msra.mxu0 0
      %1018 = vmatprep.subr.bf16.mxu0 0
      %1019 = vmatpush2.bf16.msra.mxu0 0
      %1020 = vmatprep.subr.bf16.mxu0 0
      %1021 = vmatpush2.bf16.msra.mxu0 0
      %1022 = vmatprep.subr.bf16.mxu0 0
      %1023 = vmatpush2.bf16.msra.mxu0 0
      %1024 = vmatprep.subr.bf16.mxu0 0
      %1025 = vmatpush2.bf16.msra.mxu0 0
      %1026 = vmatprep.subr.bf16.mxu0 0
      %1027 = vmatpush2.bf16.msra.mxu0 0
      %1028 = vmatprep.subr.bf16.mxu0 0
      %1029 = vmatpush2.bf16.msra.mxu0 0
      %1030 = vmatprep.mubr.bf16.mxu0 0
      %1031 = vmatmul.mubr.bf16.gmra.mxu0 %v951
      %v1032 = vpop.f32.mrf.mxu0
      %v1033 = vadd.f32 0.0, %v1032
      %v1034 = vpop.f32.mrf.mxu0
      %v1035 = vpop.f32.mrf.mxu0
      %v1036 = vadd.f32 0.0, %v1035
      %v1037 = vpop.f32.mrf.mxu0
      %1038 = vmatprep.mubr.bf16.mxu0 0
      %1039 = vmatmul.mubr.bf16.gmra.mxu0 %v954
      %v1040 = vpop.f32.mrf.mxu0
      %v1041 = vadd.f32 0.0, %v1040
      %v1042 = vpop.f32.mrf.mxu0
      %v1043 = vpop.f32.mrf.mxu0
      %v1044 = vadd.f32 0.0, %v1043
      %v1045 = vpop.f32.mrf.mxu0
      %1046 = vmatprep.mubr.bf16.mxu0 0
      %1047 = vmatmul.mubr.bf16.gmra.mxu0 %v957
      %v1048 = vpop.f32.mrf.mxu0
      %v1049 = vadd.f32 0.0, %v1048
      %v1050 = vpop.f32.mrf.mxu0
      %v1051 = vpop.f32.mrf.mxu0
      %v1052 = vadd.f32 0.0, %v1051
      %v1053 = vpop.f32.mrf.mxu0
      %1054 = vmatprep.mubr.bf16.mxu0 0
      %1055 = vmatmul.mubr.bf16.gmra.mxu0 %v960
      %v1056 = vpop.f32.mrf.mxu0
      %v1057 = vadd.f32 0.0, %v1056
      %v1058 = vpop.f32.mrf.mxu0
      %v1059 = vpop.f32.mrf.mxu0
      %v1060 = vadd.f32 0.0, %v1059
      %v1061 = vpop.f32.mrf.mxu0
      %1062 = vmatprep.mubr.bf16.mxu0 0
      %1063 = vmatmul.mubr.bf16.gmra.mxu0 %v963
      %v1064 = vpop.f32.mrf.mxu0
      %v1065 = vadd.f32 0.0, %v1064
      %v1066 = vpop.f32.mrf.mxu0
      %v1067 = vpop.f32.mrf.mxu0
      %v1068 = vadd.f32 0.0, %v1067
      %v1069 = vpop.f32.mrf.mxu0
      %1070 = vmatprep.mubr.bf16.mxu0 0
      %1071 = vmatmul.mubr.bf16.gmra.mxu0 %v966
      %v1072 = vpop.f32.mrf.mxu0
      %v1073 = vadd.f32 0.0, %v1072
      %v1074 = vpop.f32.mrf.mxu0
      %v1075 = vpop.f32.mrf.mxu0
      %v1076 = vadd.f32 0.0, %v1075
      %v1077 = vpop.f32.mrf.mxu0
      %1078 = vmatprep.mubr.bf16.mxu0 0
      %1079 = vmatmul.mubr.bf16.gmra.mxu0 %v969
      %v1080 = vpop.f32.mrf.mxu0
      %v1081 = vadd.f32 0.0, %v1080
      %v1082 = vpop.f32.mrf.mxu0
      %v1083 = vpop.f32.mrf.mxu0
      %v1084 = vadd.f32 0.0, %v1083
      %v1085 = vpop.f32.mrf.mxu0
      %1086 = vmatprep.mubr.bf16.mxu0 0
      %1087 = vmatmul.mubr.bf16.gmra.mxu0 %v972
      %v1088 = vpop.f32.mrf.mxu0
      %v1089 = vadd.f32 0.0, %v1088
      %v1090 = vpop.f32.mrf.mxu0
      %v1091 = vpop.f32.mrf.mxu0
      %v1092 = vadd.f32 0.0, %v1091
      %v1093 = vpop.f32.mrf.mxu0
      %1094 = vmatprep.mubr.bf16.mxu0 0
      %1095 = vmatmul.mubr.bf16.gmra.mxu0 %v975
      %v1096 = vpop.f32.mrf.mxu0
      %v1097 = vadd.f32 0.0, %v1096
      %v1098 = vpop.f32.mrf.mxu0
      %v1099 = vpop.f32.mrf.mxu0
      %v1100 = vadd.f32 0.0, %v1099
      %v1101 = vpop.f32.mrf.mxu0
      %1102 = vmatprep.mubr.bf16.mxu0 0
      %1103 = vmatmul.mubr.bf16.gmra.mxu0 %v978
      %v1104 = vpop.f32.mrf.mxu0
      %v1105 = vadd.f32 0.0, %v1104
      %v1106 = vpop.f32.mrf.mxu0
      %v1107 = vpop.f32.mrf.mxu0
      %v1108 = vadd.f32 0.0, %v1107
      %v1109 = vpop.f32.mrf.mxu0
      %1110 = vmatprep.mubr.bf16.mxu0 0
      %1111 = vmatmul.mubr.bf16.gmra.mxu0 %v981
      %v1112 = vpop.f32.mrf.mxu0
      %v1113 = vadd.f32 0.0, %v1112
      %v1114 = vpop.f32.mrf.mxu0
      %v1115 = vpop.f32.mrf.mxu0
      %v1116 = vadd.f32 0.0, %v1115
      %v1117 = vpop.f32.mrf.mxu0
      %1118 = vmatprep.mubr.bf16.mxu0 0
      %1119 = vmatmul.mubr.bf16.gmra.mxu0 %v984
      %v1120 = vpop.f32.mrf.mxu0
      %v1121 = vadd.f32 0.0, %v1120
      %v1122 = vpop.f32.mrf.mxu0
      %v1123 = vpop.f32.mrf.mxu0
      %v1124 = vadd.f32 0.0, %v1123
      %v1125 = vpop.f32.mrf.mxu0
      %1126 = vmatprep.mubr.bf16.mxu0 0
      %1127 = vmatmul.mubr.bf16.gmra.mxu0 %v987
      %v1128 = vpop.f32.mrf.mxu0
      %v1129 = vadd.f32 0.0, %v1128
      %v1130 = vpop.f32.mrf.mxu0
      %v1131 = vpop.f32.mrf.mxu0
      %v1132 = vadd.f32 0.0, %v1131
      %v1133 = vpop.f32.mrf.mxu0
      %1134 = vmatprep.mubr.bf16.mxu0 0
      %1135 = vmatmul.mubr.bf16.gmra.mxu0 %v990
      %v1136 = vpop.f32.mrf.mxu0
      %v1137 = vadd.f32 0.0, %v1136
      %v1138 = vpop.f32.mrf.mxu0
      %v1139 = vpop.f32.mrf.mxu0
      %v1140 = vadd.f32 0.0, %v1139
      %v1141 = vpop.f32.mrf.mxu0
      %1142 = vmatprep.mubr.bf16.mxu0 0
      %1143 = vmatmul.mubr.bf16.gmra.mxu0 %v993
      %v1144 = vpop.f32.mrf.mxu0
      %v1145 = vadd.f32 0.0, %v1144
      %v1146 = vpop.f32.mrf.mxu0
      %v1147 = vpop.f32.mrf.mxu0
      %v1148 = vadd.f32 0.0, %v1147
      %v1149 = vpop.f32.mrf.mxu0
      %1150 = vmatprep.mubr.bf16.mxu0 0
      %1151 = vmatmul.mubr.bf16.gmra.mxu0 %v996
      %v1152 = vpop.f32.mrf.mxu0
      %v1153 = vadd.f32 0.0, %v1152
      %v1154 = vpop.f32.mrf.mxu0
      %v1155 = vpop.f32.mrf.mxu0
      %v1156 = vadd.f32 0.0, %v1155
      %v1157 = vpop.f32.mrf.mxu0
      %1158 = vdwg.mxu0
      %v1159 = vadd.f32 %v663, %v1033
      %v1160 = vadd.f32 %v666, %v1036
      %v1161 = vadd.f32 %v671, %v1041
      %v1162 = vadd.f32 %v674, %v1044
      %v1163 = vadd.f32 %v679, %v1049
      %v1164 = vadd.f32 %v682, %v1052
      %v1165 = vadd.f32 %v687, %v1057
      %v1166 = vadd.f32 %v690, %v1060
      %v1167 = vadd.f32 %v695, %v1065
      %v1168 = vadd.f32 %v698, %v1068
      %v1169 = vadd.f32 %v703, %v1073
      %v1170 = vadd.f32 %v706, %v1076
      %v1171 = vadd.f32 %v711, %v1081
      %v1172 = vadd.f32 %v714, %v1084
      %v1173 = vadd.f32 %v719, %v1089
      %v1174 = vadd.f32 %v722, %v1092
      %v1175 = vadd.f32 %v727, %v1097
      %v1176 = vadd.f32 %v730, %v1100
      %v1177 = vadd.f32 %v735, %v1105
      %v1178 = vadd.f32 %v738, %v1108
      %v1179 = vadd.f32 %v743, %v1113
      %v1180 = vadd.f32 %v746, %v1116
      %v1181 = vadd.f32 %v751, %v1121
      %v1182 = vadd.f32 %v754, %v1124
      %v1183 = vadd.f32 %v759, %v1129
      %v1184 = vadd.f32 %v762, %v1132
      %v1185 = vadd.f32 %v767, %v1137
      %v1186 = vadd.f32 %v770, %v1140
      %v1187 = vadd.f32 %v775, %v1145
      %v1188 = vadd.f32 %v778, %v1148
      %v1189 = vadd.f32 %v783, %v1153
      %v1190 = vadd.f32 %v786, %v1156
      %v1191 = vld [vmem:[%s2] sm:$0x1]
      %v1193 = vlaneseq
      %v1194 = vshrl.u32 %v1193, 7
      %v1195 = vsub.s32 0, %v1194
      %v1196 = vrot.slane %v1191, %v1195
      %v1198 = vmul.f32 %v1159, %v1196
      %v1199 = vmul.f32 %v1160, %v1196
      %v1200 = vmul.f32 %v1161, %v1196
      %v1201 = vmul.f32 %v1162, %v1196
      %v1202 = vmul.f32 %v1163, %v1196
      %v1203 = vmul.f32 %v1164, %v1196
      %v1204 = vmul.f32 %v1165, %v1196
      %v1205 = vmul.f32 %v1166, %v1196
      %v1206 = vmul.f32 %v1167, %v1196
      %v1207 = vmul.f32 %v1168, %v1196
      %v1208 = vmul.f32 %v1169, %v1196
      %v1209 = vmul.f32 %v1170, %v1196
      %v1210 = vmul.f32 %v1171, %v1196
      %v1211 = vmul.f32 %v1172, %v1196
      %v1212 = vmul.f32 %v1173, %v1196
      %v1213 = vmul.f32 %v1174, %v1196
      %v1214 = vmul.f32 %v1175, %v1196
      %v1215 = vmul.f32 %v1176, %v1196
      %v1216 = vmul.f32 %v1177, %v1196
      %v1217 = vmul.f32 %v1178, %v1196
      %v1218 = vmul.f32 %v1179, %v1196
      %v1219 = vmul.f32 %v1180, %v1196
      %v1220 = vmul.f32 %v1181, %v1196
      %v1221 = vmul.f32 %v1182, %v1196
      %v1222 = vmul.f32 %v1183, %v1196
      %v1223 = vmul.f32 %v1184, %v1196
      %v1224 = vmul.f32 %v1185, %v1196
      %v1225 = vmul.f32 %v1186, %v1196
      %v1226 = vmul.f32 %v1187, %v1196
      %v1227 = vmul.f32 %v1188, %v1196
      %v1228 = vmul.f32 %v1189, %v1196
      %v1229 = vmul.f32 %v1190, %v1196
      %v1230 = vld [vmem:[%s3] sm:$0x1]
      %v1232 = vlaneseq
      %v1233 = vshrl.u32 %v1232, 7
      %v1234 = vsub.s32 0, %v1233
      %v1235 = vrot.slane %v1230, %v1234
      %v1237 = vadd.f32 %v1198, %v1235
      %v1238 = vadd.f32 %v1199, %v1235
      %v1239 = vadd.f32 %v1200, %v1235
      %v1240 = vadd.f32 %v1201, %v1235
      %v1241 = vadd.f32 %v1202, %v1235
      %v1242 = vadd.f32 %v1203, %v1235
      %v1243 = vadd.f32 %v1204, %v1235
      %v1244 = vadd.f32 %v1205, %v1235
      %v1245 = vadd.f32 %v1206, %v1235
      %v1246 = vadd.f32 %v1207, %v1235
      %v1247 = vadd.f32 %v1208, %v1235
      %v1248 = vadd.f32 %v1209, %v1235
      %v1249 = vadd.f32 %v1210, %v1235
      %v1250 = vadd.f32 %v1211, %v1235
      %v1251 = vadd.f32 %v1212, %v1235
      %v1252 = vadd.f32 %v1213, %v1235
      %v1253 = vadd.f32 %v1214, %v1235
      %v1254 = vadd.f32 %v1215, %v1235
      %v1255 = vadd.f32 %v1216, %v1235
      %v1256 = vadd.f32 %v1217, %v1235
      %v1257 = vadd.f32 %v1218, %v1235
      %v1258 = vadd.f32 %v1219, %v1235
      %v1259 = vadd.f32 %v1220, %v1235
      %v1260 = vadd.f32 %v1221, %v1235
      %v1261 = vadd.f32 %v1222, %v1235
      %v1262 = vadd.f32 %v1223, %v1235
      %v1263 = vadd.f32 %v1224, %v1235
      %v1264 = vadd.f32 %v1225, %v1235
      %v1265 = vadd.f32 %v1226, %v1235
      %v1266 = vadd.f32 %v1227, %v1235
      %v1267 = vadd.f32 %v1228, %v1235
      %v1268 = vadd.f32 %v1229, %v1235
      %v1269 = vmax.f32 %v1237, 0.0
      %v1270 = vmax.f32 %v1238, 0.0
      %v1271 = vmax.f32 %v1239, 0.0
      %v1272 = vmax.f32 %v1240, 0.0
      %v1273 = vmax.f32 %v1241, 0.0
      %v1274 = vmax.f32 %v1242, 0.0
      %v1275 = vmax.f32 %v1243, 0.0
      %v1276 = vmax.f32 %v1244, 0.0
      %v1277 = vmax.f32 %v1245, 0.0
      %v1278 = vmax.f32 %v1246, 0.0
      %v1279 = vmax.f32 %v1247, 0.0
      %v1280 = vmax.f32 %v1248, 0.0
      %v1281 = vmax.f32 %v1249, 0.0
      %v1282 = vmax.f32 %v1250, 0.0
      %v1283 = vmax.f32 %v1251, 0.0
      %v1284 = vmax.f32 %v1252, 0.0
      %v1285 = vmax.f32 %v1253, 0.0
      %v1286 = vmax.f32 %v1254, 0.0
      %v1287 = vmax.f32 %v1255, 0.0
      %v1288 = vmax.f32 %v1256, 0.0
      %v1289 = vmax.f32 %v1257, 0.0
      %v1290 = vmax.f32 %v1258, 0.0
      %v1291 = vmax.f32 %v1259, 0.0
      %v1292 = vmax.f32 %v1260, 0.0
      %v1293 = vmax.f32 %v1261, 0.0
      %v1294 = vmax.f32 %v1262, 0.0
      %v1295 = vmax.f32 %v1263, 0.0
      %v1296 = vmax.f32 %v1264, 0.0
      %v1297 = vmax.f32 %v1265, 0.0
      %v1298 = vmax.f32 %v1266, 0.0
      %v1299 = vmax.f32 %v1267, 0.0
      %v1300 = vmax.f32 %v1268, 0.0
      %v1301 = vpack.c.bf16 %v1270, %v1269
      %v1302 = vpack.c.bf16 %v1272, %v1271
      %v1303 = vpack.c.bf16 %v1274, %v1273
      %v1304 = vpack.c.bf16 %v1276, %v1275
      %v1305 = vpack.c.bf16 %v1278, %v1277
      %v1306 = vpack.c.bf16 %v1280, %v1279
      %v1307 = vpack.c.bf16 %v1282, %v1281
      %v1308 = vpack.c.bf16 %v1284, %v1283
      %v1309 = vpack.c.bf16 %v1286, %v1285
      %v1310 = vpack.c.bf16 %v1288, %v1287
      %v1311 = vpack.c.bf16 %v1290, %v1289
      %v1312 = vpack.c.bf16 %v1292, %v1291
      %v1313 = vpack.c.bf16 %v1294, %v1293
      %v1314 = vpack.c.bf16 %v1296, %v1295
      %v1315 = vpack.c.bf16 %v1298, %v1297
      %v1316 = vpack.c.bf16 %v1300, %v1299
      %v1333 = vunpack.c.l.b16 %v1301
      %v1334 = vunpack.c.h.b16 %v1301
      %v1335 = vunpack.c.l.b16 %v1302
      %v1336 = vunpack.c.h.b16 %v1302
      %v1337 = vunpack.c.l.b16 %v1303
      %v1338 = vunpack.c.h.b16 %v1303
      %v1339 = vunpack.c.l.b16 %v1304
      %v1340 = vunpack.c.h.b16 %v1304
      %v1341 = vunpack.c.l.b16 %v1305
      %v1342 = vunpack.c.h.b16 %v1305
      %v1343 = vunpack.c.l.b16 %v1306
      %v1344 = vunpack.c.h.b16 %v1306
      %v1345 = vunpack.c.l.b16 %v1307
      %v1346 = vunpack.c.h.b16 %v1307
      %v1347 = vunpack.c.l.b16 %v1308
      %v1348 = vunpack.c.h.b16 %v1308
      %v1349 = vunpack.c.l.b16 %v1309
      %v1350 = vunpack.c.h.b16 %v1309
      %v1351 = vunpack.c.l.b16 %v1310
      %v1352 = vunpack.c.h.b16 %v1310
      %v1353 = vunpack.c.l.b16 %v1311
      %v1354 = vunpack.c.h.b16 %v1311
      %v1355 = vunpack.c.l.b16 %v1312
      %v1356 = vunpack.c.h.b16 %v1312
      %v1357 = vunpack.c.l.b16 %v1313
      %v1358 = vunpack.c.h.b16 %v1313
      %v1359 = vunpack.c.l.b16 %v1314
      %v1360 = vunpack.c.h.b16 %v1314
      %v1361 = vunpack.c.l.b16 %v1315
      %v1362 = vunpack.c.h.b16 %v1315
      %v1363 = vunpack.c.l.b16 %v1316
      %v1364 = vunpack.c.h.b16 %v1316
      %v1365 = vpack.c.b16 %v1333, %v1333
      %v1366 = vpack.c.b16 %v1334, %v1334
      %v1367 = vpack.c.b16 %v1335, %v1335
      %v1368 = vpack.c.b16 %v1336, %v1336
      %v1369 = vpack.c.b16 %v1337, %v1337
      %v1370 = vpack.c.b16 %v1338, %v1338
      %v1371 = vpack.c.b16 %v1339, %v1339
      %v1372 = vpack.c.b16 %v1340, %v1340
      %v1373 = vpack.c.b16 %v1341, %v1341
      %v1374 = vpack.c.b16 %v1342, %v1342
      %v1375 = vpack.c.b16 %v1343, %v1343
      %v1376 = vpack.c.b16 %v1344, %v1344
      %v1377 = vpack.c.b16 %v1345, %v1345
      %v1378 = vpack.c.b16 %v1346, %v1346
      %v1379 = vpack.c.b16 %v1347, %v1347
      %v1380 = vpack.c.b16 %v1348, %v1348
      %v1381 = vpack.c.b16 %v1349, %v1349
      %v1382 = vpack.c.b16 %v1350, %v1350
      %v1383 = vpack.c.b16 %v1351, %v1351
      %v1384 = vpack.c.b16 %v1352, %v1352
      %v1385 = vpack.c.b16 %v1353, %v1353
      %v1386 = vpack.c.b16 %v1354, %v1354
      %v1387 = vpack.c.b16 %v1355, %v1355
      %v1388 = vpack.c.b16 %v1356, %v1356
      %v1389 = vpack.c.b16 %v1357, %v1357
      %v1390 = vpack.c.b16 %v1358, %v1358
      %v1391 = vpack.c.b16 %v1359, %v1359
      %v1392 = vpack.c.b16 %v1360, %v1360
      %v1393 = vpack.c.b16 %v1361, %v1361
      %v1394 = vpack.c.b16 %v1362, %v1362
      %v1395 = vpack.c.b16 %v1363, %v1363
      %v1396 = vpack.c.b16 %v1364, %v1364
      %1429 = vst [vmem:[%s197] sm:$0xf] %v1365
      %1430 = vst [vmem:[%s197 + $0x4] sm:$0xf] %v1366
      %1431 = vst [vmem:[%s197 + $0x8] sm:$0xf] %v1367
      %1432 = vst [vmem:[%s197 + $0xc] sm:$0xf] %v1368
      %1433 = vst [vmem:[%s197 + $0x10] sm:$0xf] %v1369
      %1434 = vst [vmem:[%s197 + $0x14] sm:$0xf] %v1370
      %1435 = vst [vmem:[%s197 + $0x18] sm:$0xf] %v1371
      %1436 = vst [vmem:[%s197 + $0x1c] sm:$0xf] %v1372
      %1437 = vst [vmem:[%s197 + $0x20] sm:$0xf] %v1373
      %1438 = vst [vmem:[%s197 + $0x24] sm:$0xf] %v1374
      %1439 = vst [vmem:[%s197 + $0x28] sm:$0xf] %v1375
      %1440 = vst [vmem:[%s197 + $0x2c] sm:$0xf] %v1376
      %1441 = vst [vmem:[%s197 + $0x30] sm:$0xf] %v1377
      %1442 = vst [vmem:[%s197 + $0x34] sm:$0xf] %v1378
      %1443 = vst [vmem:[%s197 + $0x38] sm:$0xf] %v1379
      %1444 = vst [vmem:[%s197 + $0x3c] sm:$0xf] %v1380
      %1445 = vst [vmem:[%s197 + $0x40] sm:$0xf] %v1381
      %1446 = vst [vmem:[%s197 + $0x44] sm:$0xf] %v1382
      %1447 = vst [vmem:[%s197 + $0x48] sm:$0xf] %v1383
      %1448 = vst [vmem:[%s197 + $0x4c] sm:$0xf] %v1384
      %1449 = vst [vmem:[%s197 + $0x50] sm:$0xf] %v1385
      %1450 = vst [vmem:[%s197 + $0x54] sm:$0xf] %v1386
      %1451 = vst [vmem:[%s197 + $0x58] sm:$0xf] %v1387
      %1452 = vst [vmem:[%s197 + $0x5c] sm:$0xf] %v1388
      %1453 = vst [vmem:[%s197 + $0x60] sm:$0xf] %v1389
      %1454 = vst [vmem:[%s197 + $0x64] sm:$0xf] %v1390
      %1455 = vst [vmem:[%s197 + $0x68] sm:$0xf] %v1391
      %1456 = vst [vmem:[%s197 + $0x6c] sm:$0xf] %v1392
      %1457 = vst [vmem:[%s197 + $0x70] sm:$0xf] %v1393
      %1458 = vst [vmem:[%s197 + $0x74] sm:$0xf] %v1394
      %1459 = vst [vmem:[%s197 + $0x78] sm:$0xf] %v1395
      %1460 = vst [vmem:[%s197 + $0x7c] sm:$0xf] %v1396
      %p1461 = scmp.lt.s32.totalorder %s15, 1
      %s1462 = scalar_select %p1461, %s15, 1
      %s1463 = smul.addr %s1462, 32
      %s1464 = smul.addr %s1463, 4
      %s1465 = scalar_lea.vmem %s4, %s1464
      // Predicated region
      $region37: #{drunet_var_forward.25} parent=35 // pred_check
        %p1466 = pneg %p122
      $region38: #{drunet_var_forward.25} parent=35 // pred_check_branch
        %1468 = sbr.rel (%p1466) target = $region40
      $region39: #{drunet_var_forward.25} parent=35 // pred_region
        _
      $region40: #{drunet_var_forward.25} parent=35 // pred_fallthru
        _
    $region36: #{drunet_var_forward.25} parent=5 // pred_fallthru
      _
    %p1469 = scmp.le.s32.totalorder 2, %s10
    // Predicated region
    $region41: #{drunet_var_forward.25} parent=5 // pred_check
      %p1470 = pneg %p1469
    $region42: #{drunet_var_forward.25} parent=5 // pred_check_branch
      %1472 = sbr.rel (%p1470) target = $region44
    $region43: #{drunet_var_forward.25} parent=5 // pred_region
      %s1473 = ssub.s32 %s10, 2
      // Predicated region
      $region45: #{drunet_var_forward.25} parent=43 // pred_check
        %p1474 = pneg %p128
      $region46: #{drunet_var_forward.25} parent=43 // pred_check_branch
        %1476 = sbr.rel (%p1474) target = $region48
      $region47: #{drunet_var_forward.25} parent=43 // pred_region
        %p1477 = scmp.lt.s32.totalorder %s16, 1
        %s1478 = scalar_select %p1477, %s16, 1
        %s1479 = smul.addr %s1478, 32
        %s1480 = smul.addr %s1479, 4
        %s1481 = scalar_lea.vmem %s4, %s1480
      $region48: #{drunet_var_forward.25} parent=43 // pred_fallthru
        _
    $region44: #{drunet_var_forward.25} parent=5 // pred_fallthru
      _
  $region6: #{drunet_var_forward.25} parent=0 // loop_footer
    %s14 = sadd.s32 1, %s10
  $region7: #{drunet_var_forward.25} parent=0 // loop_footer_branch
    %9 = sbr.rel target = $region3
  $region8: #{drunet_var_forward.25} parent=0 // loop_exit
    _

</llo_original>
